<compile_context>
chip_gen: v5e
topology: v5e:2x2
jax: 0.10.0
libtpu: 0.0.40
codegen_flags: <defaults>
</compile_context>

<pallas_src>
import math

import jax
import jax.numpy as jnp
from jax.experimental import pallas as pl
from jax.experimental.pallas import tpu as pltpu


# ----------------------------- config ---------------------------------------
CFG = dict(
    vocab_size=128,        # lane-dense logits
    context_length=16,
    emb_dim=256,           # lane-dense activations (multiple of 128)
    n_heads=4,
    n_kv_groups=2,         # GQA: 2 heads per kv group
    hidden_dim=512,        # lane-dense FFN
    n_layers=2,
    rope_base=10000.0,
    rope_freq=None,
    dtype=jnp.bfloat16,
)


# ----------------------------- fused transformer-block kernel ----------------
def make_block_kernel(T, D, H, KV, hd, Hid):
    gs = H // KV           # heads per kv group
    hd2 = hd // 2
    D2 = D // 2
    KVhd = KV * hd
    KVhd2 = KVhd // 2

    def kernel(x_ref, n1_ref, wqkv_ref, wo_ref, n2_ref, w12_ref, w3_ref,
               cosq_ref, sinq_ref, cosk_ref, sink_ref, mask_ref, o_ref):
        xf = x_ref[...].astype(jnp.float32)                          # (T, D)

        # ---- RMSNorm1 (f32) -> bf16 for the MXU ----
        xn1 = xf * jax.lax.rsqrt(jnp.mean(xf * xf, axis=-1, keepdims=True) + 1e-5)
        xn1 = (xn1 * n1_ref[...]).astype(jnp.bfloat16)

        # ---- fused QKV matmul (Wq pre-scaled by 1/sqrt(hd), Wq/Wk columns in
        #      halves-separated RoPE layout) ----
        qkv = jnp.dot(xn1, wqkv_ref[...], preferred_element_type=jnp.float32)
        q = qkv[:, :D]                                               # (T, D)     f32
        k = qkv[:, D:D + KVhd]                                       # (T, KV*hd) f32
        v = qkv[:, D + KVhd:].astype(jnp.bfloat16)                   # (T, KV*hd) bf16

        # ---- RoPE: one lane-dense pass per tensor.  In the halves-separated
        #      layout rotate-half == roll by half the full width (direction-
        #      agnostic) times a sign folded into the sin table. ----
        q = q * cosq_ref[...] + pltpu.roll(q, D2, axis=1) * sinq_ref[...]
        k = k * cosk_ref[...] + pltpu.roll(k, KVhd2, axis=1) * sink_ref[...]
        q = q.astype(jnp.bfloat16)
        k = k.astype(jnp.bfloat16)

        # ---- stage per-head views (undo the halves-separated column order)
        #      and batch all heads into single einsums / one softmax ----
        qh = [jnp.concatenate([q[:, h * hd2:(h + 1) * hd2],
                               q[:, D2 + h * hd2:D2 + (h + 1) * hd2]], axis=-1)
              for h in range(H)]                                     # each (T, hd)
        kg = [jnp.concatenate([k[:, g * hd2:(g + 1) * hd2],
                               k[:, KVhd2 + g * hd2:KVhd2 + (g + 1) * hd2]], axis=-1)
              for g in range(KV)]
        vg = [v[:, g * hd:(g + 1) * hd] for g in range(KV)]
        q_s = jnp.stack(qh, axis=0)                                  # (H, T, hd)
        k_s = jnp.stack([kg[h // gs] for h in range(H)], axis=0)     # GQA repeat
        v_s = jnp.stack([vg[h // gs] for h in range(H)], axis=0)

        s = jnp.einsum('hqd,hkd->hqk', q_s, k_s,
                       preferred_element_type=jnp.float32)           # (H, T, T)
        s = s + mask_ref[...][None, :, :]                            # additive causal mask
        m = jnp.max(s, axis=-1, keepdims=True)
        e = jnp.exp(s - m)
        inv = pl.reciprocal(jnp.sum(e, axis=-1, keepdims=True), approx=True)
        p = (e * inv).astype(jnp.bfloat16)
        ctx = jnp.einsum('hqk,hkd->hqd', p, v_s,
                         preferred_element_type=jnp.float32)         # (H, T, hd)
        ctx = jnp.concatenate([ctx[h] for h in range(H)],
                              axis=-1).astype(jnp.bfloat16)          # (T, D)

        # ---- Wo projection + residual (f32 residual stream) ----
        h1 = jnp.dot(ctx, wo_ref[...], preferred_element_type=jnp.float32) + xf

        # ---- RMSNorm2 + SwiGLU FFN + residual ----
        xn2 = h1 * jax.lax.rsqrt(jnp.mean(h1 * h1, axis=-1, keepdims=True) + 1e-5)
        xn2 = (xn2 * n2_ref[...]).astype(jnp.bfloat16)
        fc = jnp.dot(xn2, w12_ref[...], preferred_element_type=jnp.float32)  # (T, 2*Hid)
        a = fc[:, :Hid]
        b = fc[:, Hid:]
        hmid = (a * jax.nn.sigmoid(a) * b).astype(jnp.bfloat16)
        ffn = jnp.dot(hmid, w3_ref[...], preferred_element_type=jnp.float32)
        o_ref[...] = (ffn + h1).astype(jnp.bfloat16)                 # single downcast

    return kernel


def transformer_block(x2d, blk, rope, mask, cfg, T):
    R, D = x2d.shape                     # R = B*T
    H, KV = cfg["n_heads"], cfg["n_kv_groups"]
    hd = D // H
    Hid = cfg["hidden_dim"]
    B = R // T                           # one sequence per row tile
    cos_q, sin_q, cos_k, sin_k = rope
    kern = make_block_kernel(T, D, H, KV, hd, Hid)
    return pl.pallas_call(
        kern,
        out_shape=jax.ShapeDtypeStruct((R, D), jnp.bfloat16),
        grid=(B,),
        in_specs=[
            pl.BlockSpec((T, D), lambda b: (b, 0)),                  # x rows of seq b
            pl.BlockSpec((1, D), lambda b: (0, 0)),                  # norm1 w
            pl.BlockSpec((D, D + 2 * KV * hd), lambda b: (0, 0)),    # wq|wk|wv
            pl.BlockSpec((D, D), lambda b: (0, 0)),                  # wo
            pl.BlockSpec((1, D), lambda b: (0, 0)),                  # norm2 w
            pl.BlockSpec((D, 2 * Hid), lambda b: (0, 0)),            # w1|w2
            pl.BlockSpec((Hid, D), lambda b: (0, 0)),                # w3
            pl.BlockSpec((T, D), lambda b: (0, 0)),                  # cos_q (tiled)
            pl.BlockSpec((T, D), lambda b: (0, 0)),                  # sin_q (signed)
            pl.BlockSpec((T, KV * hd), lambda b: (0, 0)),            # cos_k
            pl.BlockSpec((T, KV * hd), lambda b: (0, 0)),            # sin_k (signed)
            pl.BlockSpec((T, T), lambda b: (0, 0)),                  # causal mask
        ],
        out_specs=pl.BlockSpec((T, D), lambda b: (b, 0)),
        compiler_params=pltpu.CompilerParams(
            dimension_semantics=("parallel",)),
    )(x2d, blk["norm1_w"], blk["wqkv"], blk["wo"], blk["norm2_w"],
      blk["w12"], blk["w3"], cos_q, sin_q, cos_k, sin_k, mask)


# ----------------------------- fused final-norm + LM head kernel -------------
def _head_kernel(x_ref, nw_ref, w_ref, o_ref):
    x = x_ref[...].astype(jnp.float32)
    xn = x * jax.lax.rsqrt(jnp.mean(x * x, axis=-1, keepdims=True) + 1e-5)
    xn = (xn * nw_ref[...]).astype(jnp.bfloat16)
    o_ref[...] = jnp.dot(xn, w_ref[...],
                         preferred_element_type=jnp.float32).astype(o_ref.dtype)


def lm_head(x2d, final_norm_w, out_head_w, cfg, rows_per_tile):
    R, D = x2d.shape
    V = cfg["vocab_size"]
    n_tiles = R // rows_per_tile
    return pl.pallas_call(
        _head_kernel,
        out_shape=jax.ShapeDtypeStruct((R, V), jnp.bfloat16),
        grid=(n_tiles,),
        in_specs=[
            pl.BlockSpec((rows_per_tile, D), lambda i: (i, 0)),
            pl.BlockSpec((1, D), lambda i: (0, 0)),
            pl.BlockSpec((D, V), lambda i: (0, 0)),
        ],
        out_specs=pl.BlockSpec((rows_per_tile, V), lambda i: (i, 0)),
        compiler_params=pltpu.CompilerParams(
            dimension_semantics=("parallel",)),
    )(x2d, final_norm_w, out_head_w)


# ----------------------------- glue (plain JAX) ------------------------------
def precompute_rope_params(head_dim, theta_base, context_length):
    inv_freq = 1.0 / (theta_base ** (jnp.arange(0, head_dim, 2, dtype=jnp.float32) / head_dim))
    positions = jnp.arange(context_length, dtype=jnp.float32)
    angles = positions[:, None] * inv_freq[None, :]            # (ctx, hd/2)
    return jnp.cos(angles), jnp.sin(angles)


def build_rope_tables(cfg, T):
    """cos/sin tiled to the full Q / K widths in the halves-separated layout,
    with the rotate-half sign folded into sin."""
    D, H, KV = cfg["emb_dim"], cfg["n_heads"], cfg["n_kv_groups"]
    hd = D // H
    c, s = precompute_rope_params(hd, cfg["rope_base"], cfg["context_length"])
    c, s = c[:T], s[:T]                                        # (T, hd/2)
    cos_q = jnp.tile(c, (1, 2 * H))                            # (T, D)
    sin_q = jnp.concatenate([-jnp.tile(s, (1, H)), jnp.tile(s, (1, H))], axis=1)
    cos_k = jnp.tile(c, (1, 2 * KV))                           # (T, KV*hd)
    sin_k = jnp.concatenate([-jnp.tile(s, (1, KV)), jnp.tile(s, (1, KV))], axis=1)
    return cos_q, sin_q, cos_k, sin_k


def build_causal_mask(T):
    row = jnp.arange(T)[:, None]
    col = jnp.arange(T)[None, :]
    return jnp.where(col > row, -1e30, 0.0).astype(jnp.float32)   # (T, T) additive


def _halves_perm(n_blocks, hd):
    """Column permutation: [blk0_1st_half, blk1_1st_half, ... | blk0_2nd_half, ...]."""
    hd2 = hd // 2
    first = jnp.concatenate([jnp.arange(b * hd, b * hd + hd2) for b in range(n_blocks)])
    second = jnp.concatenate([jnp.arange(b * hd + hd2, (b + 1) * hd) for b in range(n_blocks)])
    return jnp.concatenate([first, second])


def init_params(cfg, key):
    D, V, Hid = cfg["emb_dim"], cfg["vocab_size"], cfg["hidden_dim"]
    H, KV = cfg["n_heads"], cfg["n_kv_groups"]
    hd = D // H
    dt = cfg["dtype"]
    scale = 1.0 / math.sqrt(hd)

    def dense(k, shape):
        return (0.02 * jax.random.normal(k, shape, dtype=jnp.float32)).astype(dt)

    perm_q = _halves_perm(H, hd)
    perm_k = _halves_perm(KV, hd)

    keys = jax.random.split(key, 2 + 7 * cfg["n_layers"])
    params = {
        "tok_emb": dense(keys[0], (V, D)),
        "out_head": dense(keys[1], (D, V)),
        "final_norm_w": jnp.ones((1, D), jnp.float32),
        "blocks": [],
    }
    k_i = 2
    for _ in range(cfg["n_layers"]):
        wq = dense(keys[k_i + 0], (D, D))
        wk = dense(keys[k_i + 1], (D, KV * hd))
        wv = dense(keys[k_i + 2], (D, KV * hd))
        wo = dense(keys[k_i + 3], (D, D))
        w1 = dense(keys[k_i + 4], (D, Hid))
        w2 = dense(keys[k_i + 5], (D, Hid))
        w3 = dense(keys[k_i + 6], (Hid, D))
        # fold 1/sqrt(hd) into Wq and permute Wq/Wk columns into the
        # halves-separated RoPE layout (init-time only; zero runtime cost).
        wq_p = (wq.astype(jnp.float32)[:, perm_q] * scale).astype(dt)
        wk_p = wk[:, perm_k]
        params["blocks"].append({
            "norm1_w": jnp.ones((1, D), jnp.float32),
            "norm2_w": jnp.ones((1, D), jnp.float32),
            "wqkv": jnp.concatenate([wq_p, wk_p, wv], axis=1),   # (D, D + 2*KV*hd)
            "wo": wo,
            "w12": jnp.concatenate([w1, w2], axis=1),            # (D, 2*Hid)
            "w3": w3,
        })
        k_i += 7
    return params


def llama3_forward(params, in_idx, cfg):
    B, T = in_idx.shape
    D = cfg["emb_dim"]
    rope = build_rope_tables(cfg, T)
    mask = build_causal_mask(T)

    # token embedding gather (plain JAX glue)
    x = jnp.take(params["tok_emb"], in_idx, axis=0)            # (B, T, D) bf16
    x2d = x.reshape(B * T, D)                                  # fold batch into matmul M

    for blk in params["blocks"]:
        x2d = transformer_block(x2d, blk, rope, mask, cfg, T)  # one fused kernel / layer

    logits2d = lm_head(x2d, params["final_norm_w"], params["out_head"],
                       cfg, rows_per_tile=T)
    return logits2d.reshape(B, T, cfg["vocab_size"])           # (B, T, V) bf16


# ----------------------------- main ------------------------------------------
if __name__ == "__main__":
    key = jax.random.PRNGKey(0)
    k_param, k_idx = jax.random.split(key)

    params = init_params(CFG, k_param)
    B, T = 2, 8
    in_idx = jax.random.randint(k_idx, (B, T), 0, CFG["vocab_size"], dtype=jnp.int32)

    forward = jax.jit(lambda p, idx: llama3_forward(p, idx, CFG))
    logits = forward(params, in_idx)
    logits = jax.block_until_ready(logits)

    assert logits.shape == (B, T, CFG["vocab_size"])
    assert logits.dtype == jnp.bfloat16
    assert bool(jnp.all(jnp.isfinite(logits.astype(jnp.float32))))
    print("KERNEL_OK")
</pallas_src>

<mosaic_0001>
module attributes {stable_mosaic.version = 11 : i64} {
  func.func @kernel(%arg0: i32, %arg1: memref<8x256xbf16, #tpu.memory_space<vmem>>, %arg2: memref<1x256xf32, #tpu.memory_space<vmem>>, %arg3: memref<256x512xbf16, #tpu.memory_space<vmem>>, %arg4: memref<256x256xbf16, #tpu.memory_space<vmem>>, %arg5: memref<1x256xf32, #tpu.memory_space<vmem>>, %arg6: memref<256x1024xbf16, #tpu.memory_space<vmem>>, %arg7: memref<512x256xbf16, #tpu.memory_space<vmem>>, %arg8: memref<8x256xf32, #tpu.memory_space<vmem>>, %arg9: memref<8x256xf32, #tpu.memory_space<vmem>>, %arg10: memref<8x128xf32, #tpu.memory_space<vmem>>, %arg11: memref<8x128xf32, #tpu.memory_space<vmem>>, %arg12: memref<8x8xf32, #tpu.memory_space<vmem>>, %arg13: memref<8x256xbf16, #tpu.memory_space<vmem>>) attributes {dimension_semantics = [#tpu.dimension_semantics<parallel>], iteration_bounds = array<i64: 2>, scalar_prefetch = 0 : i64, scratch_operands = 0 : i64, tpu.core_type = #tpu.core_type<tc>, window_params = [{transform_indices = @transform_0, window_bounds = array<i64: 8, 256>}, {pipeline_mode = #tpu.pipeline_mode<synchronous>, transform_indices = @transform_1, window_bounds = array<i64: 1, 256>}, {pipeline_mode = #tpu.pipeline_mode<synchronous>, transform_indices = @transform_2, window_bounds = array<i64: 256, 512>}, {pipeline_mode = #tpu.pipeline_mode<synchronous>, transform_indices = @transform_3, window_bounds = array<i64: 256, 256>}, {pipeline_mode = #tpu.pipeline_mode<synchronous>, transform_indices = @transform_4, window_bounds = array<i64: 1, 256>}, {pipeline_mode = #tpu.pipeline_mode<synchronous>, transform_indices = @transform_5, window_bounds = array<i64: 256, 1024>}, {pipeline_mode = #tpu.pipeline_mode<synchronous>, transform_indices = @transform_6, window_bounds = array<i64: 512, 256>}, {pipeline_mode = #tpu.pipeline_mode<synchronous>, transform_indices = @transform_7, window_bounds = array<i64: 8, 256>}, {pipeline_mode = #tpu.pipeline_mode<synchronous>, transform_indices = @transform_8, window_bounds = array<i64: 8, 256>}, {pipeline_mode = #tpu.pipeline_mode<synchronous>, transform_indices = @transform_9, window_bounds = array<i64: 8, 128>}, {pipeline_mode = #tpu.pipeline_mode<synchronous>, transform_indices = @transform_10, window_bounds = array<i64: 8, 128>}, {pipeline_mode = #tpu.pipeline_mode<synchronous>, transform_indices = @transform_11, window_bounds = array<i64: 8, 8>}, {transform_indices = @transform_12, window_bounds = array<i64: 8, 256>}]} {
    %c0 = arith.constant 0 : index
    %c0_0 = arith.constant 0 : index
    %0 = vector.load %arg1[%c0, %c0_0] : memref<8x256xbf16, #tpu.memory_space<vmem>>, vector<8x256xbf16>
    %1 = arith.extf %0 : vector<8x256xbf16> to vector<8x256xf32>
    %2 = arith.mulf %1, %1 : vector<8x256xf32>
    %cst = arith.constant dense<0.000000e+00> : vector<8xf32>
    %3 = vector.multi_reduction <add>, %2, %cst [1] : vector<8x256xf32> to vector<8xf32>
    %4 = vector.shape_cast %3 : vector<8xf32> to vector<8x1xf32>
    %cst_1 = arith.constant 2.560000e+02 : f32
    %5 = vector.broadcast %cst_1 : f32 to vector<8x1xf32>
    %6 = arith.divf %4, %5 : vector<8x1xf32>
    %cst_2 = arith.constant 9.99999974E-6 : f32
    %7 = vector.broadcast %cst_2 : f32 to vector<8x1xf32>
    %8 = arith.addf %6, %7 : vector<8x1xf32>
    %9 = math.rsqrt %8 : vector<8x1xf32>
    %10 = vector.broadcast %9 : vector<8x1xf32> to vector<8x256xf32>
    %11 = arith.mulf %1, %10 : vector<8x256xf32>
    %c0_3 = arith.constant 0 : index
    %c0_4 = arith.constant 0 : index
    %12 = vector.load %arg2[%c0_3, %c0_4] : memref<1x256xf32, #tpu.memory_space<vmem>>, vector<1x256xf32>
    %13 = vector.broadcast %12 : vector<1x256xf32> to vector<8x256xf32>
    %14 = arith.mulf %11, %13 : vector<8x256xf32>
    %15 = arith.truncf %14 : vector<8x256xf32> to vector<8x256xbf16>
    %c0_5 = arith.constant 0 : index
    %c0_6 = arith.constant 0 : index
    %16 = vector.load %arg3[%c0_5, %c0_6] : memref<256x512xbf16, #tpu.memory_space<vmem>>, vector<256x512xbf16>
    %cst_7 = arith.constant dense<0.000000e+00> : vector<8x512xf32>
    %17 = tpu.matmul %15, %16, %cst_7 {dimension_numbers = #tpu.dot_dimension_numbers<[1], [0], [0], [1], [0, 0, 1, 1], [], []>} : vector<8x256xbf16>, vector<256x512xbf16>, vector<8x512xf32> -> vector<8x512xf32>
    %18 = vector.extract_strided_slice %17 {offsets = [0, 0], sizes = [8, 256], strides = [1, 1]} : vector<8x512xf32> to vector<8x256xf32>
    %19 = vector.extract_strided_slice %17 {offsets = [0, 256], sizes = [8, 128], strides = [1, 1]} : vector<8x512xf32> to vector<8x128xf32>
    %20 = vector.extract_strided_slice %17 {offsets = [0, 384], sizes = [8, 128], strides = [1, 1]} : vector<8x512xf32> to vector<8x128xf32>
    %21 = arith.truncf %20 : vector<8x128xf32> to vector<8x128xbf16>
    %c0_8 = arith.constant 0 : index
    %c0_9 = arith.constant 0 : index
    %22 = vector.load %arg8[%c0_8, %c0_9] : memref<8x256xf32, #tpu.memory_space<vmem>>, vector<8x256xf32>
    %23 = arith.mulf %18, %22 : vector<8x256xf32>
    %c128_i32 = arith.constant 128 : i32
    %24 = tpu.dynamic_rotate %18 by %c128_i32 dim 1 : vector<8x256xf32>, i32 -> vector<8x256xf32>
    %c0_10 = arith.constant 0 : index
    %c0_11 = arith.constant 0 : index
    %25 = vector.load %arg9[%c0_10, %c0_11] : memref<8x256xf32, #tpu.memory_space<vmem>>, vector<8x256xf32>
    %26 = arith.mulf %24, %25 : vector<8x256xf32>
    %27 = arith.addf %23, %26 : vector<8x256xf32>
    %c0_12 = arith.constant 0 : index
    %c0_13 = arith.constant 0 : index
    %28 = vector.load %arg10[%c0_12, %c0_13] : memref<8x128xf32, #tpu.memory_space<vmem>>, vector<8x128xf32>
    %29 = arith.mulf %19, %28 : vector<8x128xf32>
    %c64_i32 = arith.constant 64 : i32
    %30 = tpu.dynamic_rotate %19 by %c64_i32 dim 1 : vector<8x128xf32>, i32 -> vector<8x128xf32>
    %c0_14 = arith.constant 0 : index
    %c0_15 = arith.constant 0 : index
    %31 = vector.load %arg11[%c0_14, %c0_15] : memref<8x128xf32, #tpu.memory_space<vmem>>, vector<8x128xf32>
    %32 = arith.mulf %30, %31 : vector<8x128xf32>
    %33 = arith.addf %29, %32 : vector<8x128xf32>
    %34 = arith.truncf %27 : vector<8x256xf32> to vector<8x256xbf16>
    %35 = arith.truncf %33 : vector<8x128xf32> to vector<8x128xbf16>
    %36 = vector.extract_strided_slice %34 {offsets = [0, 0], sizes = [8, 32], strides = [1, 1]} : vector<8x256xbf16> to vector<8x32xbf16>
    %37 = vector.extract_strided_slice %34 {offsets = [0, 128], sizes = [8, 32], strides = [1, 1]} : vector<8x256xbf16> to vector<8x32xbf16>
    %38 = tpu.concatenate %36, %37 in 1 : vector<8x32xbf16>, vector<8x32xbf16> -> vector<8x64xbf16>
    %39 = vector.extract_strided_slice %34 {offsets = [0, 32], sizes = [8, 32], strides = [1, 1]} : vector<8x256xbf16> to vector<8x32xbf16>
    %40 = vector.extract_strided_slice %34 {offsets = [0, 160], sizes = [8, 32], strides = [1, 1]} : vector<8x256xbf16> to vector<8x32xbf16>
    %41 = tpu.concatenate %39, %40 in 1 : vector<8x32xbf16>, vector<8x32xbf16> -> vector<8x64xbf16>
    %42 = vector.extract_strided_slice %34 {offsets = [0, 64], sizes = [8, 32], strides = [1, 1]} : vector<8x256xbf16> to vector<8x32xbf16>
    %43 = vector.extract_strided_slice %34 {offsets = [0, 192], sizes = [8, 32], strides = [1, 1]} : vector<8x256xbf16> to vector<8x32xbf16>
    %44 = tpu.concatenate %42, %43 in 1 : vector<8x32xbf16>, vector<8x32xbf16> -> vector<8x64xbf16>
    %45 = vector.extract_strided_slice %34 {offsets = [0, 96], sizes = [8, 32], strides = [1, 1]} : vector<8x256xbf16> to vector<8x32xbf16>
    %46 = vector.extract_strided_slice %34 {offsets = [0, 224], sizes = [8, 32], strides = [1, 1]} : vector<8x256xbf16> to vector<8x32xbf16>
    %47 = tpu.concatenate %45, %46 in 1 : vector<8x32xbf16>, vector<8x32xbf16> -> vector<8x64xbf16>
    %48 = vector.extract_strided_slice %35 {offsets = [0, 0], sizes = [8, 32], strides = [1, 1]} : vector<8x128xbf16> to vector<8x32xbf16>
    %49 = vector.extract_strided_slice %35 {offsets = [0, 64], sizes = [8, 32], strides = [1, 1]} : vector<8x128xbf16> to vector<8x32xbf16>
    %50 = tpu.concatenate %48, %49 in 1 : vector<8x32xbf16>, vector<8x32xbf16> -> vector<8x64xbf16>
    %51 = vector.extract_strided_slice %35 {offsets = [0, 32], sizes = [8, 32], strides = [1, 1]} : vector<8x128xbf16> to vector<8x32xbf16>
    %52 = vector.extract_strided_slice %35 {offsets = [0, 96], sizes = [8, 32], strides = [1, 1]} : vector<8x128xbf16> to vector<8x32xbf16>
    %53 = tpu.concatenate %51, %52 in 1 : vector<8x32xbf16>, vector<8x32xbf16> -> vector<8x64xbf16>
    %54 = vector.extract_strided_slice %21 {offsets = [0, 0], sizes = [8, 64], strides = [1, 1]} : vector<8x128xbf16> to vector<8x64xbf16>
    %55 = vector.extract_strided_slice %21 {offsets = [0, 64], sizes = [8, 64], strides = [1, 1]} : vector<8x128xbf16> to vector<8x64xbf16>
    %56 = vector.shape_cast %38 : vector<8x64xbf16> to vector<1x8x64xbf16>
    %57 = vector.shape_cast %41 : vector<8x64xbf16> to vector<1x8x64xbf16>
    %58 = vector.shape_cast %44 : vector<8x64xbf16> to vector<1x8x64xbf16>
    %59 = vector.shape_cast %47 : vector<8x64xbf16> to vector<1x8x64xbf16>
    %60 = tpu.concatenate %56, %57, %58, %59 in 0 : vector<1x8x64xbf16>, vector<1x8x64xbf16>, vector<1x8x64xbf16>, vector<1x8x64xbf16> -> vector<4x8x64xbf16>
    %61 = vector.shape_cast %50 : vector<8x64xbf16> to vector<1x8x64xbf16>
    %62 = vector.shape_cast %50 : vector<8x64xbf16> to vector<1x8x64xbf16>
    %63 = vector.shape_cast %53 : vector<8x64xbf16> to vector<1x8x64xbf16>
    %64 = vector.shape_cast %53 : vector<8x64xbf16> to vector<1x8x64xbf16>
    %65 = tpu.concatenate %61, %62, %63, %64 in 0 : vector<1x8x64xbf16>, vector<1x8x64xbf16>, vector<1x8x64xbf16>, vector<1x8x64xbf16> -> vector<4x8x64xbf16>
    %66 = vector.shape_cast %54 : vector<8x64xbf16> to vector<1x8x64xbf16>
    %67 = vector.shape_cast %54 : vector<8x64xbf16> to vector<1x8x64xbf16>
    %68 = vector.shape_cast %55 : vector<8x64xbf16> to vector<1x8x64xbf16>
    %69 = vector.shape_cast %55 : vector<8x64xbf16> to vector<1x8x64xbf16>
    %70 = tpu.concatenate %66, %67, %68, %69 in 0 : vector<1x8x64xbf16>, vector<1x8x64xbf16>, vector<1x8x64xbf16>, vector<1x8x64xbf16> -> vector<4x8x64xbf16>
    "tpu.trace_start"() <{level = 10 : i32, message = "hqd,hkd->hqk"}> : () -> ()
    %cst_16 = arith.constant dense<0.000000e+00> : vector<4x8x8xf32>
    %71 = tpu.matmul %60, %65, %cst_16 {dimension_numbers = #tpu.dot_dimension_numbers<[2], [2], [1], [1], [0, 0, 0, 1, 1, 1], [0], [0]>} : vector<4x8x64xbf16>, vector<4x8x64xbf16>, vector<4x8x8xf32> -> vector<4x8x8xf32>
    "tpu.trace_stop"() : () -> ()
    %c0_17 = arith.constant 0 : index
    %c0_18 = arith.constant 0 : index
    %72 = vector.load %arg12[%c0_17, %c0_18] : memref<8x8xf32, #tpu.memory_space<vmem>>, vector<8x8xf32>
    %73 = vector.shape_cast %72 : vector<8x8xf32> to vector<1x8x8xf32>
    %74 = vector.broadcast %73 : vector<1x8x8xf32> to vector<4x8x8xf32>
    %75 = arith.addf %71, %74 : vector<4x8x8xf32>
    %cst_19 = arith.constant dense<0xFF800000> : vector<4x8xf32>
    %76 = vector.multi_reduction <maximumf>, %75, %cst_19 [2] : vector<4x8x8xf32> to vector<4x8xf32>
    %77 = vector.shape_cast %76 : vector<4x8xf32> to vector<4x8x1xf32>
    %78 = vector.broadcast %77 : vector<4x8x1xf32> to vector<4x8x8xf32>
    %79 = arith.subf %75, %78 : vector<4x8x8xf32>
    %80 = math.exp %79 : vector<4x8x8xf32>
    %cst_20 = arith.constant dense<0.000000e+00> : vector<4x8xf32>
    %81 = vector.multi_reduction <add>, %80, %cst_20 [2] : vector<4x8x8xf32> to vector<4x8xf32>
    %82 = vector.shape_cast %81 : vector<4x8xf32> to vector<4x8x1xf32>
    %83 = tpu.reciprocal %82 {approx = true} : vector<4x8x1xf32> -> vector<4x8x1xf32>
    %84 = vector.broadcast %83 : vector<4x8x1xf32> to vector<4x8x8xf32>
    %85 = arith.mulf %80, %84 : vector<4x8x8xf32>
    %86 = arith.truncf %85 : vector<4x8x8xf32> to vector<4x8x8xbf16>
    "tpu.trace_start"() <{level = 10 : i32, message = "hqk,hkd->hqd"}> : () -> ()
    %cst_21 = arith.constant dense<0.000000e+00> : vector<4x8x64xf32>
    %87 = tpu.matmul %86, %70, %cst_21 {dimension_numbers = #tpu.dot_dimension_numbers<[2], [1], [1], [2], [0, 0, 0, 1, 1, 2], [0], [0]>} : vector<4x8x8xbf16>, vector<4x8x64xbf16>, vector<4x8x64xf32> -> vector<4x8x64xf32>
    "tpu.trace_stop"() : () -> ()
    %88 = vector.extract_strided_slice %87 {offsets = [0, 0, 0], sizes = [1, 8, 64], strides = [1, 1, 1]} : vector<4x8x64xf32> to vector<1x8x64xf32>
    %89 = vector.shape_cast %88 : vector<1x8x64xf32> to vector<8x64xf32>
    %90 = vector.extract_strided_slice %87 {offsets = [1, 0, 0], sizes = [1, 8, 64], strides = [1, 1, 1]} : vector<4x8x64xf32> to vector<1x8x64xf32>
    %91 = vector.shape_cast %90 : vector<1x8x64xf32> to vector<8x64xf32>
    %92 = vector.extract_strided_slice %87 {offsets = [2, 0, 0], sizes = [1, 8, 64], strides = [1, 1, 1]} : vector<4x8x64xf32> to vector<1x8x64xf32>
    %93 = vector.shape_cast %92 : vector<1x8x64xf32> to vector<8x64xf32>
    %94 = vector.extract_strided_slice %87 {offsets = [3, 0, 0], sizes = [1, 8, 64], strides = [1, 1, 1]} : vector<4x8x64xf32> to vector<1x8x64xf32>
    %95 = vector.shape_cast %94 : vector<1x8x64xf32> to vector<8x64xf32>
    %96 = tpu.concatenate %89, %91, %93, %95 in 1 : vector<8x64xf32>, vector<8x64xf32>, vector<8x64xf32>, vector<8x64xf32> -> vector<8x256xf32>
    %97 = arith.truncf %96 : vector<8x256xf32> to vector<8x256xbf16>
    %c0_22 = arith.constant 0 : index
    %c0_23 = arith.constant 0 : index
    %98 = vector.load %arg4[%c0_22, %c0_23] : memref<256x256xbf16, #tpu.memory_space<vmem>>, vector<256x256xbf16>
    %cst_24 = arith.constant dense<0.000000e+00> : vector<8x256xf32>
    %99 = tpu.matmul %97, %98, %cst_24 {dimension_numbers = #tpu.dot_dimension_numbers<[1], [0], [0], [1], [0, 0, 1, 1], [], []>} : vector<8x256xbf16>, vector<256x256xbf16>, vector<8x256xf32> -> vector<8x256xf32>
    %100 = arith.addf %99, %1 : vector<8x256xf32>
    %101 = arith.mulf %100, %100 : vector<8x256xf32>
    %cst_25 = arith.constant dense<0.000000e+00> : vector<8xf32>
    %102 = vector.multi_reduction <add>, %101, %cst_25 [1] : vector<8x256xf32> to vector<8xf32>
    %103 = vector.shape_cast %102 : vector<8xf32> to vector<8x1xf32>
    %cst_26 = arith.constant 2.560000e+02 : f32
    %104 = vector.broadcast %cst_26 : f32 to vector<8x1xf32>
    %105 = arith.divf %103, %104 : vector<8x1xf32>
    %cst_27 = arith.constant 9.99999974E-6 : f32
    %106 = vector.broadcast %cst_27 : f32 to vector<8x1xf32>
    %107 = arith.addf %105, %106 : vector<8x1xf32>
    %108 = math.rsqrt %107 : vector<8x1xf32>
    %109 = vector.broadcast %108 : vector<8x1xf32> to vector<8x256xf32>
    %110 = arith.mulf %100, %109 : vector<8x256xf32>
    %c0_28 = arith.constant 0 : index
    %c0_29 = arith.constant 0 : index
    %111 = vector.load %arg5[%c0_28, %c0_29] : memref<1x256xf32, #tpu.memory_space<vmem>>, vector<1x256xf32>
    %112 = vector.broadcast %111 : vector<1x256xf32> to vector<8x256xf32>
    %113 = arith.mulf %110, %112 : vector<8x256xf32>
    %114 = arith.truncf %113 : vector<8x256xf32> to vector<8x256xbf16>
    %c0_30 = arith.constant 0 : index
    %c0_31 = arith.constant 0 : index
    %115 = vector.load %arg6[%c0_30, %c0_31] : memref<256x1024xbf16, #tpu.memory_space<vmem>>, vector<256x1024xbf16>
    %cst_32 = arith.constant dense<0.000000e+00> : vector<8x1024xf32>
    %116 = tpu.matmul %114, %115, %cst_32 {dimension_numbers = #tpu.dot_dimension_numbers<[1], [0], [0], [1], [0, 0, 1, 1], [], []>} : vector<8x256xbf16>, vector<256x1024xbf16>, vector<8x1024xf32> -> vector<8x1024xf32>
    %117 = vector.extract_strided_slice %116 {offsets = [0, 0], sizes = [8, 512], strides = [1, 1]} : vector<8x1024xf32> to vector<8x512xf32>
    %118 = vector.extract_strided_slice %116 {offsets = [0, 512], sizes = [8, 512], strides = [1, 1]} : vector<8x1024xf32> to vector<8x512xf32>
    %119 = arith.negf %117 : vector<8x512xf32>
    %120 = math.exp %119 : vector<8x512xf32>
    %cst_33 = arith.constant 1.000000e+00 : f32
    %121 = vector.broadcast %cst_33 : f32 to vector<8x512xf32>
    %122 = arith.addf %121, %120 : vector<8x512xf32>
    %123 = arith.divf %121, %122 : vector<8x512xf32>
    %124 = arith.mulf %117, %123 : vector<8x512xf32>
    %125 = arith.mulf %124, %118 : vector<8x512xf32>
    %126 = arith.truncf %125 : vector<8x512xf32> to vector<8x512xbf16>
    %c0_34 = arith.constant 0 : index
    %c0_35 = arith.constant 0 : index
    %127 = vector.load %arg7[%c0_34, %c0_35] : memref<512x256xbf16, #tpu.memory_space<vmem>>, vector<512x256xbf16>
    %cst_36 = arith.constant dense<0.000000e+00> : vector<8x256xf32>
    %128 = tpu.matmul %126, %127, %cst_36 {dimension_numbers = #tpu.dot_dimension_numbers<[1], [0], [0], [1], [0, 0, 1, 1], [], []>} : vector<8x512xbf16>, vector<512x256xbf16>, vector<8x256xf32> -> vector<8x256xf32>
    %129 = arith.addf %128, %100 : vector<8x256xf32>
    %130 = arith.truncf %129 : vector<8x256xf32> to vector<8x256xbf16>
    %c0_37 = arith.constant 0 : index
    %c0_38 = arith.constant 0 : index
    %131 = vector.load %arg13[%c0_37, %c0_38] : memref<8x256xbf16, #tpu.memory_space<vmem>>, vector<8x256xbf16>
    tpu.vector_store %arg13[%c0_37, %c0_38], %130 {strides = array<i32>} : memref<8x256xbf16, #tpu.memory_space<vmem>>, vector<8x256xbf16>,
    return
  }
  func.func @transform_0(%arg0: i32) -> (i32, i32) {
    %c0_i32 = arith.constant 0 : i32
    %c0_i32_0 = arith.constant 0 : i32
    return %arg0, %c0_i32 : i32, i32
  }
  func.func @transform_1(%arg0: i32) -> (i32, i32) {
    %c0_i32 = arith.constant 0 : i32
    %c0_i32_0 = arith.constant 0 : i32
    %c0_i32_1 = arith.constant 0 : i32
    return %c0_i32, %c0_i32_0 : i32, i32
  }
  func.func @transform_2(%arg0: i32) -> (i32, i32) {
    %c0_i32 = arith.constant 0 : i32
    %c0_i32_0 = arith.constant 0 : i32
    %c0_i32_1 = arith.constant 0 : i32
    return %c0_i32, %c0_i32_0 : i32, i32
  }
  func.func @transform_3(%arg0: i32) -> (i32, i32) {
    %c0_i32 = arith.constant 0 : i32
    %c0_i32_0 = arith.constant 0 : i32
    %c0_i32_1 = arith.constant 0 : i32
    return %c0_i32, %c0_i32_0 : i32, i32
  }
  func.func @transform_4(%arg0: i32) -> (i32, i32) {
    %c0_i32 = arith.constant 0 : i32
    %c0_i32_0 = arith.constant 0 : i32
    %c0_i32_1 = arith.constant 0 : i32
    return %c0_i32, %c0_i32_0 : i32, i32
  }
  func.func @transform_5(%arg0: i32) -> (i32, i32) {
    %c0_i32 = arith.constant 0 : i32
    %c0_i32_0 = arith.constant 0 : i32
    %c0_i32_1 = arith.constant 0 : i32
    return %c0_i32, %c0_i32_0 : i32, i32
  }
  func.func @transform_6(%arg0: i32) -> (i32, i32) {
    %c0_i32 = arith.constant 0 : i32
    %c0_i32_0 = arith.constant 0 : i32
    %c0_i32_1 = arith.constant 0 : i32
    return %c0_i32, %c0_i32_0 : i32, i32
  }
  func.func @transform_7(%arg0: i32) -> (i32, i32) {
    %c0_i32 = arith.constant 0 : i32
    %c0_i32_0 = arith.constant 0 : i32
    %c0_i32_1 = arith.constant 0 : i32
    return %c0_i32, %c0_i32_0 : i32, i32
  }
  func.func @transform_8(%arg0: i32) -> (i32, i32) {
    %c0_i32 = arith.constant 0 : i32
    %c0_i32_0 = arith.constant 0 : i32
    %c0_i32_1 = arith.constant 0 : i32
    return %c0_i32, %c0_i32_0 : i32, i32
  }
  func.func @transform_9(%arg0: i32) -> (i32, i32) {
    %c0_i32 = arith.constant 0 : i32
    %c0_i32_0 = arith.constant 0 : i32
    %c0_i32_1 = arith.constant 0 : i32
    return %c0_i32, %c0_i32_0 : i32, i32
  }
  func.func @transform_10(%arg0: i32) -> (i32, i32) {
    %c0_i32 = arith.constant 0 : i32
    %c0_i32_0 = arith.constant 0 : i32
    %c0_i32_1 = arith.constant 0 : i32
    return %c0_i32, %c0_i32_0 : i32, i32
  }
  func.func @transform_11(%arg0: i32) -> (i32, i32) {
    %c0_i32 = arith.constant 0 : i32
    %c0_i32_0 = arith.constant 0 : i32
    %c0_i32_1 = arith.constant 0 : i32
    return %c0_i32, %c0_i32_0 : i32, i32
  }
  func.func @transform_12(%arg0: i32) -> (i32, i32) {
    %c0_i32 = arith.constant 0 : i32
    %c0_i32_0 = arith.constant 0 : i32
    return %arg0, %c0_i32 : i32, i32
  }
}

module attributes {stable_mosaic.version = 11 : i64} {
  func.func @kernel(%arg0: i32, %arg1: memref<8x256xbf16, #tpu.memory_space<vmem>>, %arg2: memref<1x256xf32, #tpu.memory_space<vmem>>, %arg3: memref<256x512xbf16, #tpu.memory_space<vmem>>, %arg4: memref<256x256xbf16, #tpu.memory_space<vmem>>, %arg5: memref<1x256xf32, #tpu.memory_space<vmem>>, %arg6: memref<256x1024xbf16, #tpu.memory_space<vmem>>, %arg7: memref<512x256xbf16, #tpu.memory_space<vmem>>, %arg8: memref<8x256xf32, #tpu.memory_space<vmem>>, %arg9: memref<8x256xf32, #tpu.memory_space<vmem>>, %arg10: memref<8x128xf32, #tpu.memory_space<vmem>>, %arg11: memref<8x128xf32, #tpu.memory_space<vmem>>, %arg12: memref<8x8xf32, #tpu.memory_space<vmem>>, %arg13: memref<8x256xbf16, #tpu.memory_space<vmem>>) attributes {dimension_semantics = [#tpu.dimension_semantics<parallel>], iteration_bounds = array<i64: 2>, scalar_prefetch = 0 : i64, scratch_operands = 0 : i64, tpu.core_type = #tpu.core_type<tc>, window_params = [{transform_indices = @transform_0, window_bounds = array<i64: 8, 256>}, {pipeline_mode = #tpu.pipeline_mode<synchronous>, transform_indices = @transform_1, window_bounds = array<i64: 1, 256>}, {pipeline_mode = #tpu.pipeline_mode<synchronous>, transform_indices = @transform_2, window_bounds = array<i64: 256, 512>}, {pipeline_mode = #tpu.pipeline_mode<synchronous>, transform_indices = @transform_3, window_bounds = array<i64: 256, 256>}, {pipeline_mode = #tpu.pipeline_mode<synchronous>, transform_indices = @transform_4, window_bounds = array<i64: 1, 256>}, {pipeline_mode = #tpu.pipeline_mode<synchronous>, transform_indices = @transform_5, window_bounds = array<i64: 256, 1024>}, {pipeline_mode = #tpu.pipeline_mode<synchronous>, transform_indices = @transform_6, window_bounds = array<i64: 512, 256>}, {pipeline_mode = #tpu.pipeline_mode<synchronous>, transform_indices = @transform_7, window_bounds = array<i64: 8, 256>}, {pipeline_mode = #tpu.pipeline_mode<synchronous>, transform_indices = @transform_8, window_bounds = array<i64: 8, 256>}, {pipeline_mode = #tpu.pipeline_mode<synchronous>, transform_indices = @transform_9, window_bounds = array<i64: 8, 128>}, {pipeline_mode = #tpu.pipeline_mode<synchronous>, transform_indices = @transform_10, window_bounds = array<i64: 8, 128>}, {pipeline_mode = #tpu.pipeline_mode<synchronous>, transform_indices = @transform_11, window_bounds = array<i64: 8, 8>}, {transform_indices = @transform_12, window_bounds = array<i64: 8, 256>}]} {
    %c0 = arith.constant 0 : index
    %c0_0 = arith.constant 0 : index
    %0 = vector.load %arg1[%c0, %c0_0] : memref<8x256xbf16, #tpu.memory_space<vmem>>, vector<8x256xbf16>
    %1 = arith.extf %0 : vector<8x256xbf16> to vector<8x256xf32>
    %2 = arith.mulf %1, %1 : vector<8x256xf32>
    %cst = arith.constant dense<0.000000e+00> : vector<8xf32>
    %3 = vector.multi_reduction <add>, %2, %cst [1] : vector<8x256xf32> to vector<8xf32>
    %4 = vector.shape_cast %3 : vector<8xf32> to vector<8x1xf32>
    %cst_1 = arith.constant 2.560000e+02 : f32
    %5 = vector.broadcast %cst_1 : f32 to vector<8x1xf32>
    %6 = arith.divf %4, %5 : vector<8x1xf32>
    %cst_2 = arith.constant 9.99999974E-6 : f32
    %7 = vector.broadcast %cst_2 : f32 to vector<8x1xf32>
    %8 = arith.addf %6, %7 : vector<8x1xf32>
    %9 = math.rsqrt %8 : vector<8x1xf32>
    %10 = vector.broadcast %9 : vector<8x1xf32> to vector<8x256xf32>
    %11 = arith.mulf %1, %10 : vector<8x256xf32>
    %c0_3 = arith.constant 0 : index
    %c0_4 = arith.constant 0 : index
    %12 = vector.load %arg2[%c0_3, %c0_4] : memref<1x256xf32, #tpu.memory_space<vmem>>, vector<1x256xf32>
    %13 = vector.broadcast %12 : vector<1x256xf32> to vector<8x256xf32>
    %14 = arith.mulf %11, %13 : vector<8x256xf32>
    %15 = arith.truncf %14 : vector<8x256xf32> to vector<8x256xbf16>
    %c0_5 = arith.constant 0 : index
    %c0_6 = arith.constant 0 : index
    %16 = vector.load %arg3[%c0_5, %c0_6] : memref<256x512xbf16, #tpu.memory_space<vmem>>, vector<256x512xbf16>
    %cst_7 = arith.constant dense<0.000000e+00> : vector<8x512xf32>
    %17 = tpu.matmul %15, %16, %cst_7 {dimension_numbers = #tpu.dot_dimension_numbers<[1], [0], [0], [1], [0, 0, 1, 1], [], []>} : vector<8x256xbf16>, vector<256x512xbf16>, vector<8x512xf32> -> vector<8x512xf32>
    %18 = vector.extract_strided_slice %17 {offsets = [0, 0], sizes = [8, 256], strides = [1, 1]} : vector<8x512xf32> to vector<8x256xf32>
    %19 = vector.extract_strided_slice %17 {offsets = [0, 256], sizes = [8, 128], strides = [1, 1]} : vector<8x512xf32> to vector<8x128xf32>
    %20 = vector.extract_strided_slice %17 {offsets = [0, 384], sizes = [8, 128], strides = [1, 1]} : vector<8x512xf32> to vector<8x128xf32>
    %21 = arith.truncf %20 : vector<8x128xf32> to vector<8x128xbf16>
    %c0_8 = arith.constant 0 : index
    %c0_9 = arith.constant 0 : index
    %22 = vector.load %arg8[%c0_8, %c0_9] : memref<8x256xf32, #tpu.memory_space<vmem>>, vector<8x256xf32>
    %23 = arith.mulf %18, %22 : vector<8x256xf32>
    %c128_i32 = arith.constant 128 : i32
    %24 = tpu.dynamic_rotate %18 by %c128_i32 dim 1 : vector<8x256xf32>, i32 -> vector<8x256xf32>
    %c0_10 = arith.constant 0 : index
    %c0_11 = arith.constant 0 : index
    %25 = vector.load %arg9[%c0_10, %c0_11] : memref<8x256xf32, #tpu.memory_space<vmem>>, vector<8x256xf32>
    %26 = arith.mulf %24, %25 : vector<8x256xf32>
    %27 = arith.addf %23, %26 : vector<8x256xf32>
    %c0_12 = arith.constant 0 : index
    %c0_13 = arith.constant 0 : index
    %28 = vector.load %arg10[%c0_12, %c0_13] : memref<8x128xf32, #tpu.memory_space<vmem>>, vector<8x128xf32>
    %29 = arith.mulf %19, %28 : vector<8x128xf32>
    %c64_i32 = arith.constant 64 : i32
    %30 = tpu.dynamic_rotate %19 by %c64_i32 dim 1 : vector<8x128xf32>, i32 -> vector<8x128xf32>
    %c0_14 = arith.constant 0 : index
    %c0_15 = arith.constant 0 : index
    %31 = vector.load %arg11[%c0_14, %c0_15] : memref<8x128xf32, #tpu.memory_space<vmem>>, vector<8x128xf32>
    %32 = arith.mulf %30, %31 : vector<8x128xf32>
    %33 = arith.addf %29, %32 : vector<8x128xf32>
    %34 = arith.truncf %27 : vector<8x256xf32> to vector<8x256xbf16>
    %35 = arith.truncf %33 : vector<8x128xf32> to vector<8x128xbf16>
    %36 = vector.extract_strided_slice %34 {offsets = [0, 0], sizes = [8, 32], strides = [1, 1]} : vector<8x256xbf16> to vector<8x32xbf16>
    %37 = vector.extract_strided_slice %34 {offsets = [0, 128], sizes = [8, 32], strides = [1, 1]} : vector<8x256xbf16> to vector<8x32xbf16>
    %38 = tpu.concatenate %36, %37 in 1 : vector<8x32xbf16>, vector<8x32xbf16> -> vector<8x64xbf16>
    %39 = vector.extract_strided_slice %34 {offsets = [0, 32], sizes = [8, 32], strides = [1, 1]} : vector<8x256xbf16> to vector<8x32xbf16>
    %40 = vector.extract_strided_slice %34 {offsets = [0, 160], sizes = [8, 32], strides = [1, 1]} : vector<8x256xbf16> to vector<8x32xbf16>
    %41 = tpu.concatenate %39, %40 in 1 : vector<8x32xbf16>, vector<8x32xbf16> -> vector<8x64xbf16>
    %42 = vector.extract_strided_slice %34 {offsets = [0, 64], sizes = [8, 32], strides = [1, 1]} : vector<8x256xbf16> to vector<8x32xbf16>
    %43 = vector.extract_strided_slice %34 {offsets = [0, 192], sizes = [8, 32], strides = [1, 1]} : vector<8x256xbf16> to vector<8x32xbf16>
    %44 = tpu.concatenate %42, %43 in 1 : vector<8x32xbf16>, vector<8x32xbf16> -> vector<8x64xbf16>
    %45 = vector.extract_strided_slice %34 {offsets = [0, 96], sizes = [8, 32], strides = [1, 1]} : vector<8x256xbf16> to vector<8x32xbf16>
    %46 = vector.extract_strided_slice %34 {offsets = [0, 224], sizes = [8, 32], strides = [1, 1]} : vector<8x256xbf16> to vector<8x32xbf16>
    %47 = tpu.concatenate %45, %46 in 1 : vector<8x32xbf16>, vector<8x32xbf16> -> vector<8x64xbf16>
    %48 = vector.extract_strided_slice %35 {offsets = [0, 0], sizes = [8, 32], strides = [1, 1]} : vector<8x128xbf16> to vector<8x32xbf16>
    %49 = vector.extract_strided_slice %35 {offsets = [0, 64], sizes = [8, 32], strides = [1, 1]} : vector<8x128xbf16> to vector<8x32xbf16>
    %50 = tpu.concatenate %48, %49 in 1 : vector<8x32xbf16>, vector<8x32xbf16> -> vector<8x64xbf16>
    %51 = vector.extract_strided_slice %35 {offsets = [0, 32], sizes = [8, 32], strides = [1, 1]} : vector<8x128xbf16> to vector<8x32xbf16>
    %52 = vector.extract_strided_slice %35 {offsets = [0, 96], sizes = [8, 32], strides = [1, 1]} : vector<8x128xbf16> to vector<8x32xbf16>
    %53 = tpu.concatenate %51, %52 in 1 : vector<8x32xbf16>, vector<8x32xbf16> -> vector<8x64xbf16>
    %54 = vector.extract_strided_slice %21 {offsets = [0, 0], sizes = [8, 64], strides = [1, 1]} : vector<8x128xbf16> to vector<8x64xbf16>
    %55 = vector.extract_strided_slice %21 {offsets = [0, 64], sizes = [8, 64], strides = [1, 1]} : vector<8x128xbf16> to vector<8x64xbf16>
    %56 = vector.shape_cast %38 : vector<8x64xbf16> to vector<1x8x64xbf16>
    %57 = vector.shape_cast %41 : vector<8x64xbf16> to vector<1x8x64xbf16>
    %58 = vector.shape_cast %44 : vector<8x64xbf16> to vector<1x8x64xbf16>
    %59 = vector.shape_cast %47 : vector<8x64xbf16> to vector<1x8x64xbf16>
    %60 = tpu.concatenate %56, %57, %58, %59 in 0 : vector<1x8x64xbf16>, vector<1x8x64xbf16>, vector<1x8x64xbf16>, vector<1x8x64xbf16> -> vector<4x8x64xbf16>
    %61 = vector.shape_cast %50 : vector<8x64xbf16> to vector<1x8x64xbf16>
    %62 = vector.shape_cast %50 : vector<8x64xbf16> to vector<1x8x64xbf16>
    %63 = vector.shape_cast %53 : vector<8x64xbf16> to vector<1x8x64xbf16>
    %64 = vector.shape_cast %53 : vector<8x64xbf16> to vector<1x8x64xbf16>
    %65 = tpu.concatenate %61, %62, %63, %64 in 0 : vector<1x8x64xbf16>, vector<1x8x64xbf16>, vector<1x8x64xbf16>, vector<1x8x64xbf16> -> vector<4x8x64xbf16>
    %66 = vector.shape_cast %54 : vector<8x64xbf16> to vector<1x8x64xbf16>
    %67 = vector.shape_cast %54 : vector<8x64xbf16> to vector<1x8x64xbf16>
    %68 = vector.shape_cast %55 : vector<8x64xbf16> to vector<1x8x64xbf16>
    %69 = vector.shape_cast %55 : vector<8x64xbf16> to vector<1x8x64xbf16>
    %70 = tpu.concatenate %66, %67, %68, %69 in 0 : vector<1x8x64xbf16>, vector<1x8x64xbf16>, vector<1x8x64xbf16>, vector<1x8x64xbf16> -> vector<4x8x64xbf16>
    "tpu.trace_start"() <{level = 10 : i32, message = "hqd,hkd->hqk"}> : () -> ()
    %cst_16 = arith.constant dense<0.000000e+00> : vector<4x8x8xf32>
    %71 = tpu.matmul %60, %65, %cst_16 {dimension_numbers = #tpu.dot_dimension_numbers<[2], [2], [1], [1], [0, 0, 0, 1, 1, 1], [0], [0]>} : vector<4x8x64xbf16>, vector<4x8x64xbf16>, vector<4x8x8xf32> -> vector<4x8x8xf32>
    "tpu.trace_stop"() : () -> ()
    %c0_17 = arith.constant 0 : index
    %c0_18 = arith.constant 0 : index
    %72 = vector.load %arg12[%c0_17, %c0_18] : memref<8x8xf32, #tpu.memory_space<vmem>>, vector<8x8xf32>
    %73 = vector.shape_cast %72 : vector<8x8xf32> to vector<1x8x8xf32>
    %74 = vector.broadcast %73 : vector<1x8x8xf32> to vector<4x8x8xf32>
    %75 = arith.addf %71, %74 : vector<4x8x8xf32>
    %cst_19 = arith.constant dense<0xFF800000> : vector<4x8xf32>
    %76 = vector.multi_reduction <maximumf>, %75, %cst_19 [2] : vector<4x8x8xf32> to vector<4x8xf32>
    %77 = vector.shape_cast %76 : vector<4x8xf32> to vector<4x8x1xf32>
    %78 = vector.broadcast %77 : vector<4x8x1xf32> to vector<4x8x8xf32>
    %79 = arith.subf %75, %78 : vector<4x8x8xf32>
    %80 = math.exp %79 : vector<4x8x8xf32>
    %cst_20 = arith.constant dense<0.000000e+00> : vector<4x8xf32>
    %81 = vector.multi_reduction <add>, %80, %cst_20 [2] : vector<4x8x8xf32> to vector<4x8xf32>
    %82 = vector.shape_cast %81 : vector<4x8xf32> to vector<4x8x1xf32>
    %83 = tpu.reciprocal %82 {approx = true} : vector<4x8x1xf32> -> vector<4x8x1xf32>
    %84 = vector.broadcast %83 : vector<4x8x1xf32> to vector<4x8x8xf32>
    %85 = arith.mulf %80, %84 : vector<4x8x8xf32>
    %86 = arith.truncf %85 : vector<4x8x8xf32> to vector<4x8x8xbf16>
    "tpu.trace_start"() <{level = 10 : i32, message = "hqk,hkd->hqd"}> : () -> ()
    %cst_21 = arith.constant dense<0.000000e+00> : vector<4x8x64xf32>
    %87 = tpu.matmul %86, %70, %cst_21 {dimension_numbers = #tpu.dot_dimension_numbers<[2], [1], [1], [2], [0, 0, 0, 1, 1, 2], [0], [0]>} : vector<4x8x8xbf16>, vector<4x8x64xbf16>, vector<4x8x64xf32> -> vector<4x8x64xf32>
    "tpu.trace_stop"() : () -> ()
    %88 = vector.extract_strided_slice %87 {offsets = [0, 0, 0], sizes = [1, 8, 64], strides = [1, 1, 1]} : vector<4x8x64xf32> to vector<1x8x64xf32>
    %89 = vector.shape_cast %88 : vector<1x8x64xf32> to vector<8x64xf32>
    %90 = vector.extract_strided_slice %87 {offsets = [1, 0, 0], sizes = [1, 8, 64], strides = [1, 1, 1]} : vector<4x8x64xf32> to vector<1x8x64xf32>
    %91 = vector.shape_cast %90 : vector<1x8x64xf32> to vector<8x64xf32>
    %92 = vector.extract_strided_slice %87 {offsets = [2, 0, 0], sizes = [1, 8, 64], strides = [1, 1, 1]} : vector<4x8x64xf32> to vector<1x8x64xf32>
    %93 = vector.shape_cast %92 : vector<1x8x64xf32> to vector<8x64xf32>
    %94 = vector.extract_strided_slice %87 {offsets = [3, 0, 0], sizes = [1, 8, 64], strides = [1, 1, 1]} : vector<4x8x64xf32> to vector<1x8x64xf32>
    %95 = vector.shape_cast %94 : vector<1x8x64xf32> to vector<8x64xf32>
    %96 = tpu.concatenate %89, %91, %93, %95 in 1 : vector<8x64xf32>, vector<8x64xf32>, vector<8x64xf32>, vector<8x64xf32> -> vector<8x256xf32>
    %97 = arith.truncf %96 : vector<8x256xf32> to vector<8x256xbf16>
    %c0_22 = arith.constant 0 : index
    %c0_23 = arith.constant 0 : index
    %98 = vector.load %arg4[%c0_22, %c0_23] : memref<256x256xbf16, #tpu.memory_space<vmem>>, vector<256x256xbf16>
    %cst_24 = arith.constant dense<0.000000e+00> : vector<8x256xf32>
    %99 = tpu.matmul %97, %98, %cst_24 {dimension_numbers = #tpu.dot_dimension_numbers<[1], [0], [0], [1], [0, 0, 1, 1], [], []>} : vector<8x256xbf16>, vector<256x256xbf16>, vector<8x256xf32> -> vector<8x256xf32>
    %100 = arith.addf %99, %1 : vector<8x256xf32>
    %101 = arith.mulf %100, %100 : vector<8x256xf32>
    %cst_25 = arith.constant dense<0.000000e+00> : vector<8xf32>
    %102 = vector.multi_reduction <add>, %101, %cst_25 [1] : vector<8x256xf32> to vector<8xf32>
    %103 = vector.shape_cast %102 : vector<8xf32> to vector<8x1xf32>
    %cst_26 = arith.constant 2.560000e+02 : f32
    %104 = vector.broadcast %cst_26 : f32 to vector<8x1xf32>
    %105 = arith.divf %103, %104 : vector<8x1xf32>
    %cst_27 = arith.constant 9.99999974E-6 : f32
    %106 = vector.broadcast %cst_27 : f32 to vector<8x1xf32>
    %107 = arith.addf %105, %106 : vector<8x1xf32>
    %108 = math.rsqrt %107 : vector<8x1xf32>
    %109 = vector.broadcast %108 : vector<8x1xf32> to vector<8x256xf32>
    %110 = arith.mulf %100, %109 : vector<8x256xf32>
    %c0_28 = arith.constant 0 : index
    %c0_29 = arith.constant 0 : index
    %111 = vector.load %arg5[%c0_28, %c0_29] : memref<1x256xf32, #tpu.memory_space<vmem>>, vector<1x256xf32>
    %112 = vector.broadcast %111 : vector<1x256xf32> to vector<8x256xf32>
    %113 = arith.mulf %110, %112 : vector<8x256xf32>
    %114 = arith.truncf %113 : vector<8x256xf32> to vector<8x256xbf16>
    %c0_30 = arith.constant 0 : index
    %c0_31 = arith.constant 0 : index
    %115 = vector.load %arg6[%c0_30, %c0_31] : memref<256x1024xbf16, #tpu.memory_space<vmem>>, vector<256x1024xbf16>
    %cst_32 = arith.constant dense<0.000000e+00> : vector<8x1024xf32>
    %116 = tpu.matmul %114, %115, %cst_32 {dimension_numbers = #tpu.dot_dimension_numbers<[1], [0], [0], [1], [0, 0, 1, 1], [], []>} : vector<8x256xbf16>, vector<256x1024xbf16>, vector<8x1024xf32> -> vector<8x1024xf32>
    %117 = vector.extract_strided_slice %116 {offsets = [0, 0], sizes = [8, 512], strides = [1, 1]} : vector<8x1024xf32> to vector<8x512xf32>
    %118 = vector.extract_strided_slice %116 {offsets = [0, 512], sizes = [8, 512], strides = [1, 1]} : vector<8x1024xf32> to vector<8x512xf32>
    %119 = arith.negf %117 : vector<8x512xf32>
    %120 = math.exp %119 : vector<8x512xf32>
    %cst_33 = arith.constant 1.000000e+00 : f32
    %121 = vector.broadcast %cst_33 : f32 to vector<8x512xf32>
    %122 = arith.addf %121, %120 : vector<8x512xf32>
    %123 = arith.divf %121, %122 : vector<8x512xf32>
    %124 = arith.mulf %117, %123 : vector<8x512xf32>
    %125 = arith.mulf %124, %118 : vector<8x512xf32>
    %126 = arith.truncf %125 : vector<8x512xf32> to vector<8x512xbf16>
    %c0_34 = arith.constant 0 : index
    %c0_35 = arith.constant 0 : index
    %127 = vector.load %arg7[%c0_34, %c0_35] : memref<512x256xbf16, #tpu.memory_space<vmem>>, vector<512x256xbf16>
    %cst_36 = arith.constant dense<0.000000e+00> : vector<8x256xf32>
    %128 = tpu.matmul %126, %127, %cst_36 {dimension_numbers = #tpu.dot_dimension_numbers<[1], [0], [0], [1], [0, 0, 1, 1], [], []>} : vector<8x512xbf16>, vector<512x256xbf16>, vector<8x256xf32> -> vector<8x256xf32>
    %129 = arith.addf %128, %100 : vector<8x256xf32>
    %130 = arith.truncf %129 : vector<8x256xf32> to vector<8x256xbf16>
    %c0_37 = arith.constant 0 : index
    %c0_38 = arith.constant 0 : index
    %131 = vector.load %arg13[%c0_37, %c0_38] : memref<8x256xbf16, #tpu.memory_space<vmem>>, vector<8x256xbf16>
    tpu.vector_store %arg13[%c0_37, %c0_38], %130 {strides = array<i32>} : memref<8x256xbf16, #tpu.memory_space<vmem>>, vector<8x256xbf16>,
    return
  }
  func.func @transform_0(%arg0: i32) -> (i32, i32) {
    %c0_i32 = arith.constant 0 : i32
    %c0_i32_0 = arith.constant 0 : i32
    return %arg0, %c0_i32 : i32, i32
  }
  func.func @transform_1(%arg0: i32) -> (i32, i32) {
    %c0_i32 = arith.constant 0 : i32
    %c0_i32_0 = arith.constant 0 : i32
    %c0_i32_1 = arith.constant 0 : i32
    return %c0_i32, %c0_i32_0 : i32, i32
  }
  func.func @transform_2(%arg0: i32) -> (i32, i32) {
    %c0_i32 = arith.constant 0 : i32
    %c0_i32_0 = arith.constant 0 : i32
    %c0_i32_1 = arith.constant 0 : i32
    return %c0_i32, %c0_i32_0 : i32, i32
  }
  func.func @transform_3(%arg0: i32) -> (i32, i32) {
    %c0_i32 = arith.constant 0 : i32
    %c0_i32_0 = arith.constant 0 : i32
    %c0_i32_1 = arith.constant 0 : i32
    return %c0_i32, %c0_i32_0 : i32, i32
  }
  func.func @transform_4(%arg0: i32) -> (i32, i32) {
    %c0_i32 = arith.constant 0 : i32
    %c0_i32_0 = arith.constant 0 : i32
    %c0_i32_1 = arith.constant 0 : i32
    return %c0_i32, %c0_i32_0 : i32, i32
  }
  func.func @transform_5(%arg0: i32) -> (i32, i32) {
    %c0_i32 = arith.constant 0 : i32
    %c0_i32_0 = arith.constant 0 : i32
    %c0_i32_1 = arith.constant 0 : i32
    return %c0_i32, %c0_i32_0 : i32, i32
  }
  func.func @transform_6(%arg0: i32) -> (i32, i32) {
    %c0_i32 = arith.constant 0 : i32
    %c0_i32_0 = arith.constant 0 : i32
    %c0_i32_1 = arith.constant 0 : i32
    return %c0_i32, %c0_i32_0 : i32, i32
  }
  func.func @transform_7(%arg0: i32) -> (i32, i32) {
    %c0_i32 = arith.constant 0 : i32
    %c0_i32_0 = arith.constant 0 : i32
    %c0_i32_1 = arith.constant 0 : i32
    return %c0_i32, %c0_i32_0 : i32, i32
  }
  func.func @transform_8(%arg0: i32) -> (i32, i32) {
    %c0_i32 = arith.constant 0 : i32
    %c0_i32_0 = arith.constant 0 : i32
    %c0_i32_1 = arith.constant 0 : i32
    return %c0_i32, %c0_i32_0 : i32, i32
  }
  func.func @transform_9(%arg0: i32) -> (i32, i32) {
    %c0_i32 = arith.constant 0 : i32
    %c0_i32_0 = arith.constant 0 : i32
    %c0_i32_1 = arith.constant 0 : i32
    return %c0_i32, %c0_i32_0 : i32, i32
  }
  func.func @transform_10(%arg0: i32) -> (i32, i32) {
    %c0_i32 = arith.constant 0 : i32
    %c0_i32_0 = arith.constant 0 : i32
    %c0_i32_1 = arith.constant 0 : i32
    return %c0_i32, %c0_i32_0 : i32, i32
  }
  func.func @transform_11(%arg0: i32) -> (i32, i32) {
    %c0_i32 = arith.constant 0 : i32
    %c0_i32_0 = arith.constant 0 : i32
    %c0_i32_1 = arith.constant 0 : i32
    return %c0_i32, %c0_i32_0 : i32, i32
  }
  func.func @transform_12(%arg0: i32) -> (i32, i32) {
    %c0_i32 = arith.constant 0 : i32
    %c0_i32_0 = arith.constant 0 : i32
    return %arg0, %c0_i32 : i32, i32
  }
}

module attributes {stable_mosaic.version = 11 : i64} {
  func.func @_head_kernel(%arg0: i32, %arg1: memref<8x256xbf16, #tpu.memory_space<vmem>>, %arg2: memref<1x256xf32, #tpu.memory_space<vmem>>, %arg3: memref<256x128xbf16, #tpu.memory_space<vmem>>, %arg4: memref<8x128xbf16, #tpu.memory_space<vmem>>) attributes {dimension_semantics = [#tpu.dimension_semantics<parallel>], iteration_bounds = array<i64: 2>, scalar_prefetch = 0 : i64, scratch_operands = 0 : i64, tpu.core_type = #tpu.core_type<tc>, window_params = [{transform_indices = @transform_0, window_bounds = array<i64: 8, 256>}, {pipeline_mode = #tpu.pipeline_mode<synchronous>, transform_indices = @transform_1, window_bounds = array<i64: 1, 256>}, {pipeline_mode = #tpu.pipeline_mode<synchronous>, transform_indices = @transform_2, window_bounds = array<i64: 256, 128>}, {transform_indices = @transform_3, window_bounds = array<i64: 8, 128>}]} {
    %c0 = arith.constant 0 : index
    %c0_0 = arith.constant 0 : index
    %0 = vector.load %arg1[%c0, %c0_0] : memref<8x256xbf16, #tpu.memory_space<vmem>>, vector<8x256xbf16>
    %1 = arith.extf %0 : vector<8x256xbf16> to vector<8x256xf32>
    %2 = arith.mulf %1, %1 : vector<8x256xf32>
    %cst = arith.constant dense<0.000000e+00> : vector<8xf32>
    %3 = vector.multi_reduction <add>, %2, %cst [1] : vector<8x256xf32> to vector<8xf32>
    %4 = vector.shape_cast %3 : vector<8xf32> to vector<8x1xf32>
    %cst_1 = arith.constant 2.560000e+02 : f32
    %5 = vector.broadcast %cst_1 : f32 to vector<8x1xf32>
    %6 = arith.divf %4, %5 : vector<8x1xf32>
    %cst_2 = arith.constant 9.99999974E-6 : f32
    %7 = vector.broadcast %cst_2 : f32 to vector<8x1xf32>
    %8 = arith.addf %6, %7 : vector<8x1xf32>
    %9 = math.rsqrt %8 : vector<8x1xf32>
    %10 = vector.broadcast %9 : vector<8x1xf32> to vector<8x256xf32>
    %11 = arith.mulf %1, %10 : vector<8x256xf32>
    %c0_3 = arith.constant 0 : index
    %c0_4 = arith.constant 0 : index
    %12 = vector.load %arg2[%c0_3, %c0_4] : memref<1x256xf32, #tpu.memory_space<vmem>>, vector<1x256xf32>
    %13 = vector.broadcast %12 : vector<1x256xf32> to vector<8x256xf32>
    %14 = arith.mulf %11, %13 : vector<8x256xf32>
    %15 = arith.truncf %14 : vector<8x256xf32> to vector<8x256xbf16>
    %c0_5 = arith.constant 0 : index
    %c0_6 = arith.constant 0 : index
    %16 = vector.load %arg3[%c0_5, %c0_6] : memref<256x128xbf16, #tpu.memory_space<vmem>>, vector<256x128xbf16>
    %cst_7 = arith.constant dense<0.000000e+00> : vector<8x128xf32>
    %17 = tpu.matmul %15, %16, %cst_7 {dimension_numbers = #tpu.dot_dimension_numbers<[1], [0], [0], [1], [0, 0, 1, 1], [], []>} : vector<8x256xbf16>, vector<256x128xbf16>, vector<8x128xf32> -> vector<8x128xf32>
    %18 = arith.truncf %17 : vector<8x128xf32> to vector<8x128xbf16>
    %c0_8 = arith.constant 0 : index
    %c0_9 = arith.constant 0 : index
    %19 = vector.load %arg4[%c0_8, %c0_9] : memref<8x128xbf16, #tpu.memory_space<vmem>>, vector<8x128xbf16>
    tpu.vector_store %arg4[%c0_8, %c0_9], %18 {strides = array<i32>} : memref<8x128xbf16, #tpu.memory_space<vmem>>, vector<8x128xbf16>,
    return
  }
  func.func @transform_0(%arg0: i32) -> (i32, i32) {
    %c0_i32 = arith.constant 0 : i32
    %c0_i32_0 = arith.constant 0 : i32
    return %arg0, %c0_i32 : i32, i32
  }
  func.func @transform_1(%arg0: i32) -> (i32, i32) {
    %c0_i32 = arith.constant 0 : i32
    %c0_i32_0 = arith.constant 0 : i32
    %c0_i32_1 = arith.constant 0 : i32
    return %c0_i32, %c0_i32_0 : i32, i32
  }
  func.func @transform_2(%arg0: i32) -> (i32, i32) {
    %c0_i32 = arith.constant 0 : i32
    %c0_i32_0 = arith.constant 0 : i32
    %c0_i32_1 = arith.constant 0 : i32
    return %c0_i32, %c0_i32_0 : i32, i32
  }
  func.func @transform_3(%arg0: i32) -> (i32, i32) {
    %c0_i32 = arith.constant 0 : i32
    %c0_i32_0 = arith.constant 0 : i32
    return %arg0, %c0_i32 : i32, i32
  }
}

</mosaic_0001>

<llo_original>
// kernel: tile.39
$region0: #{tile.39}
  %s0 = inlined_call_operand.vmem [shape: f32[8,4,32], index: 0, kind: input, shape index: {}]
  %s1 = inlined_call_operand.vmem [shape: f32[8,128], index: 1, kind: output, shape index: {}]
  $region1: #{tile.39} parent=0
    #allocation0 [shape = 'u8[32768]{0}', space=vmem, size = 0x8000, scoped, tag = 'scoped mem for input reshape']
    %s3 = ssub.s32 16, 1
    %s4 = scalar_lea.vmem %s0, 28
    %v5 = vld [vmem:[%s4] sm:%s3]
    %s6 = scalar_lea.vmem [#allocation0], 56
    %7 = vst [vmem:[%s6] sm:%s3] %v5
    %s8 = scalar_lea.vmem %s0, 24
    %v9 = vld [vmem:[%s8] sm:%s3]
    %s10 = scalar_lea.vmem [#allocation0], 48
    %11 = vst [vmem:[%s10] sm:%s3] %v9
    %s12 = scalar_lea.vmem %s0, 20
    %v13 = vld [vmem:[%s12] sm:%s3]
    %s14 = scalar_lea.vmem [#allocation0], 40
    %15 = vst [vmem:[%s14] sm:%s3] %v13
    %s16 = scalar_lea.vmem %s0, 16
    %v17 = vld [vmem:[%s16] sm:%s3]
    %s18 = scalar_lea.vmem [#allocation0], 32
    %19 = vst [vmem:[%s18] sm:%s3] %v17
    %s20 = scalar_lea.vmem %s0, 12
    %v21 = vld [vmem:[%s20] sm:%s3]
    %s22 = scalar_lea.vmem [#allocation0], 24
    %23 = vst [vmem:[%s22] sm:%s3] %v21
    %s24 = scalar_lea.vmem %s0, 8
    %v25 = vld [vmem:[%s24] sm:%s3]
    %s26 = scalar_lea.vmem [#allocation0], 16
    %27 = vst [vmem:[%s26] sm:%s3] %v25
    %s28 = scalar_lea.vmem %s0, 4
    %v29 = vld [vmem:[%s28] sm:%s3]
    %s30 = scalar_lea.vmem [#allocation0], 8
    %31 = vst [vmem:[%s30] sm:%s3] %v29
    %v32 = vld [vmem:[%s0] sm:%s3]
    %33 = vst [vmem:[#allocation0] sm:%s3] %v32
    %v34 = vld [vmem:[#allocation0] ss:$8 sm:$0xf]
    %v35 = vld [vmem:[#allocation0] ss:$8 sm:$0xf0]
    %vm36 = vcmask 1047556
    %v37 = vsel %vm36, %v35, %v34
    %vm38 = vcmask 261120
    %39 = vst.msk [vmem:[%s1] sm:$0xff] %vm38, %v37
    %s40 = scalar_lea.vmem [#allocation0], 3
    %v41 = vld [vmem:[%s40] ss:$8 sm:$0xf]
    %s42 = scalar_lea.vmem [#allocation0], 3
    %v43 = vld [vmem:[%s42] ss:$8 sm:$0xf0]
    %vm44 = vcmask 1047556
    %v45 = vsel %vm44, %v43, %v41
    %46 = vrot.lane.b32.xlu0 %v45, 96
    %v47 = vpop.permute.xlu0 %46
    %vm48 = vcmask 1048320
    %49 = vst.msk [vmem:[%s1] sm:$0xff] %vm48, %v47
    %s50 = scalar_lea.vmem [#allocation0], 2
    %v51 = vld [vmem:[%s50] ss:$8 sm:$0xf]
    %s52 = scalar_lea.vmem [#allocation0], 2
    %v53 = vld [vmem:[%s52] ss:$8 sm:$0xf0]
    %vm54 = vcmask 1047556
    %v55 = vsel %vm54, %v53, %v51
    %56 = vrot.lane.b32.xlu0 %v55, 64
    %v57 = vpop.permute.xlu0 %56
    %vm58 = vcmask 785920
    %59 = vst.msk [vmem:[%s1] sm:$0xff] %vm58, %v57
    %s60 = scalar_lea.vmem [#allocation0], 1
    %v61 = vld [vmem:[%s60] ss:$8 sm:$0xf]
    %s62 = scalar_lea.vmem [#allocation0], 1
    %v63 = vld [vmem:[%s62] ss:$8 sm:$0xf0]
    %vm64 = vcmask 1047556
    %v65 = vsel %vm64, %v63, %v61
    %66 = vrot.lane.b32.xlu0 %v65, 32
    %v67 = vpop.permute.xlu0 %66
    %vm68 = vcmask 523520
    %69 = vst.msk [vmem:[%s1] sm:$0xff] %vm68, %v67

// kernel: neg.2
$region0: #{neg.2}
  #allocation0 [shape = 's32[1]{0}', space=sflag, size = 0x4, scoped, tag = 'scoped memory for neg.2']
  %s0 = inlined_call_operand.vmem [shape: f32[8,128], index: 0, kind: input, shape index: {}]
  %s1 = inlined_call_operand.vmem [shape: f32[8,128], index: 1, kind: output, shape index: {}]
  %v2 = vld [vmem:[%s0] sm:$0xff]
  %3 = xla_tuple %v2
  %4 = xla_tuple %3
  %v5 = vxor.u32 %v2, 2147483648
  %6 = xla_tuple %v5
  %7 = vst [vmem:[%s1] sm:$0xff] %v5

// kernel: tile.54
$region0: #{tile.54}
  %s0 = inlined_call_operand.vmem [shape: f32[8,2,32], index: 0, kind: input, shape index: {}]
  %s1 = inlined_call_operand.vmem [shape: f32[8,64], index: 1, kind: output, shape index: {}]
  $region1: #{tile.54} parent=0
    #allocation0 [shape = 'u8[32768]{0}', space=vmem, size = 0x8000, scoped, tag = 'scoped mem for input reshape']
    %s3 = ssub.s32 4, 1
    %s4 = scalar_lea.vmem %s0, 14
    %v5 = vld [vmem:[%s4] sm:%s3]
    %s6 = scalar_lea.vmem [#allocation0], 56
    %7 = vst [vmem:[%s6] sm:%s3] %v5
    %s8 = scalar_lea.vmem %s0, 12
    %v9 = vld [vmem:[%s8] sm:%s3]
    %s10 = scalar_lea.vmem [#allocation0], 48
    %11 = vst [vmem:[%s10] sm:%s3] %v9
    %s12 = scalar_lea.vmem %s0, 10
    %v13 = vld [vmem:[%s12] sm:%s3]
    %s14 = scalar_lea.vmem [#allocation0], 40
    %15 = vst [vmem:[%s14] sm:%s3] %v13
    %s16 = scalar_lea.vmem %s0, 8
    %v17 = vld [vmem:[%s16] sm:%s3]
    %s18 = scalar_lea.vmem [#allocation0], 32
    %19 = vst [vmem:[%s18] sm:%s3] %v17
    %s20 = scalar_lea.vmem %s0, 6
    %v21 = vld [vmem:[%s20] sm:%s3]
    %s22 = scalar_lea.vmem [#allocation0], 24
    %23 = vst [vmem:[%s22] sm:%s3] %v21
    %s24 = scalar_lea.vmem %s0, 4
    %v25 = vld [vmem:[%s24] sm:%s3]
    %s26 = scalar_lea.vmem [#allocation0], 16
    %27 = vst [vmem:[%s26] sm:%s3] %v25
    %s28 = scalar_lea.vmem %s0, 2
    %v29 = vld [vmem:[%s28] sm:%s3]
    %s30 = scalar_lea.vmem [#allocation0], 8
    %31 = vst [vmem:[%s30] sm:%s3] %v29
    %v32 = vld [vmem:[%s0] sm:%s3]
    %33 = vst [vmem:[#allocation0] sm:%s3] %v32
    %v34 = vld [vmem:[#allocation0] ss:$8 sm:$0xf]
    %v35 = vld [vmem:[#allocation0] ss:$8 sm:$0xf0]
    %vm36 = vcmask 1047556
    %v37 = vsel %vm36, %v35, %v34
    %vm38 = vcmask 261120
    %39 = vst.msk [vmem:[%s1] sm:$0xff] %vm38, %v37
    %s40 = scalar_lea.vmem [#allocation0], 1
    %v41 = vld [vmem:[%s40] ss:$8 sm:$0xf]
    %s42 = scalar_lea.vmem [#allocation0], 1
    %v43 = vld [vmem:[%s42] ss:$8 sm:$0xf0]
    %vm44 = vcmask 1047556
    %v45 = vsel %vm44, %v43, %v41
    %46 = vrot.lane.b32.xlu0 %v45, 32
    %v47 = vpop.permute.xlu0 %46
    %vm48 = vcmask 523520
    %49 = vst.msk [vmem:[%s1] sm:$0xff] %vm48, %v47

// kernel: neg.3
$region0: #{neg.3}
  #allocation0 [shape = 's32[1]{0}', space=sflag, size = 0x4, scoped, tag = 'scoped memory for neg.3']
  %s0 = inlined_call_operand.vmem [shape: f32[8,64], index: 0, kind: input, shape index: {}]
  %s1 = inlined_call_operand.vmem [shape: f32[8,64], index: 1, kind: output, shape index: {}]
  %v2 = vld [vmem:[%s0] sm:$0xff]
  %3 = xla_tuple %v2
  %4 = xla_tuple %3
  %v5 = vxor.u32 %v2, 2147483648
  %6 = xla_tuple %v5
  %7 = vst [vmem:[%s1] sm:$0xff] %v5

// kernel: tile.34
$region0: #{tile.34}
  %s0 = inlined_call_operand.vmem [shape: f32[8,8,32], index: 0, kind: input, shape index: {}]
  %s1 = inlined_call_operand.vmem [shape: f32[8,256], index: 1, kind: output, shape index: {}]
  %v2 = vld [vmem:[%s0] ss:$4 sm:$0xff]
  %vm3 = vcmask 261120
  %4 = vst.msk [vmem:[%s1] ss:$8 sm:$0x3] %vm3, %v2
  %s5 = scalar_lea.vmem %s1, 4294967281
  %6 = vst.msk [vmem:[%s5] ss:$8 sm:$0xc] %vm3, %v2
  %s7 = scalar_lea.vmem %s1, 4294967266
  %8 = vst.msk [vmem:[%s7] ss:$8 sm:$0x30] %vm3, %v2
  %s9 = scalar_lea.vmem %s1, 4294967251
  %10 = vst.msk [vmem:[%s9] ss:$8 sm:$0xc0] %vm3, %v2
  %s11 = scalar_lea.vmem %s0, 32
  %v12 = vld [vmem:[%s11] ss:$4 sm:$0xff]
  %vm13 = vcmask 261120
  %s14 = scalar_lea.vmem %s1, 4
  %15 = vst.msk [vmem:[%s14] ss:$8 sm:$0x3] %vm13, %v12
  %s16 = scalar_lea.vmem %s1, 4294967285
  %17 = vst.msk [vmem:[%s16] ss:$8 sm:$0xc] %vm13, %v12
  %s18 = scalar_lea.vmem %s1, 4294967270
  %19 = vst.msk [vmem:[%s18] ss:$8 sm:$0x30] %vm13, %v12
  %s20 = scalar_lea.vmem %s1, 4294967255
  %21 = vst.msk [vmem:[%s20] ss:$8 sm:$0xc0] %vm13, %v12
  %s22 = scalar_lea.vmem %s0, 3
  %v23 = vld [vmem:[%s22] ss:$8 sm:$0xf]
  %s24 = scalar_lea.vmem %s0, 3
  %v25 = vld [vmem:[%s24] ss:$8 sm:$0xf0]
  %vm26 = vcmask 1047556
  %v27 = vsel %vm26, %v25, %v23
  %28 = vrot.lane.b32.xlu0 %v27, 96
  %v29 = vpop.permute.xlu0 %28
  %vm30 = vcmask 1048320
  %31 = vst.msk [vmem:[%s1] sm:$0xff] %vm30, %v29
  %s32 = scalar_lea.vmem %s0, 7
  %v33 = vld [vmem:[%s32] ss:$8 sm:$0xf]
  %s34 = scalar_lea.vmem %s0, 7
  %v35 = vld [vmem:[%s34] ss:$8 sm:$0xf0]
  %vm36 = vcmask 1047556
  %v37 = vsel %vm36, %v35, %v33
  %38 = vrot.lane.b32.xlu0 %v37, 96
  %v39 = vpop.permute.xlu0 %38
  %vm40 = vcmask 1048320
  %s41 = scalar_lea.vmem %s1, 8
  %42 = vst.msk [vmem:[%s41] sm:$0xff] %vm40, %v39
  %s43 = scalar_lea.vmem %s0, 2
  %v44 = vld [vmem:[%s43] ss:$8 sm:$0xf]
  %s45 = scalar_lea.vmem %s0, 2
  %v46 = vld [vmem:[%s45] ss:$8 sm:$0xf0]
  %vm47 = vcmask 1047556
  %v48 = vsel %vm47, %v46, %v44
  %49 = vrot.lane.b32.xlu0 %v48, 64
  %v50 = vpop.permute.xlu0 %49
  %vm51 = vcmask 785920
  %52 = vst.msk [vmem:[%s1] sm:$0xff] %vm51, %v50
  %s53 = scalar_lea.vmem %s0, 6
  %v54 = vld [vmem:[%s53] ss:$8 sm:$0xf]
  %s55 = scalar_lea.vmem %s0, 6
  %v56 = vld [vmem:[%s55] ss:$8 sm:$0xf0]
  %vm57 = vcmask 1047556
  %v58 = vsel %vm57, %v56, %v54
  %59 = vrot.lane.b32.xlu0 %v58, 64
  %v60 = vpop.permute.xlu0 %59
  %vm61 = vcmask 785920
  %s62 = scalar_lea.vmem %s1, 8
  %63 = vst.msk [vmem:[%s62] sm:$0xff] %vm61, %v60
  %s64 = scalar_lea.vmem %s0, 1
  %v65 = vld [vmem:[%s64] ss:$8 sm:$0xf]
  %s66 = scalar_lea.vmem %s0, 1
  %v67 = vld [vmem:[%s66] ss:$8 sm:$0xf0]
  %vm68 = vcmask 1047556
  %v69 = vsel %vm68, %v67, %v65
  %70 = vrot.lane.b32.xlu0 %v69, 32
  %v71 = vpop.permute.xlu0 %70
  %vm72 = vcmask 523520
  %73 = vst.msk [vmem:[%s1] sm:$0xff] %vm72, %v71
  %s74 = scalar_lea.vmem %s0, 5
  %v75 = vld [vmem:[%s74] ss:$8 sm:$0xf]
  %s76 = scalar_lea.vmem %s0, 5
  %v77 = vld [vmem:[%s76] ss:$8 sm:$0xf0]
  %vm78 = vcmask 1047556
  %v79 = vsel %vm78, %v77, %v75
  %80 = vrot.lane.b32.xlu0 %v79, 32
  %v81 = vpop.permute.xlu0 %80
  %vm82 = vcmask 523520
  %s83 = scalar_lea.vmem %s1, 8
  %84 = vst.msk [vmem:[%s83] sm:$0xff] %vm82, %v81

// kernel: _lambda_.5
$region0: #{_lambda_.5}
  #allocation0 [shape = 'u32[]', space=smem, size = 0x4, offset = 0x4, fixed_abs, tag = 'smem constant byte address 0x4 - core index']
  #allocation1 [shape = 'u32[72,128]{1,0:T(1,128)}', space=vmem, size = 0x9000, scoped, tag = 'internal scratch']
  %s0 = inlined_call_operand.vmem [shape: bf16[16,256], index: 0, kind: input, shape index: {}]
  %s1 = inlined_call_operand.vmem [shape: f32[1,256], index: 1, kind: input, shape index: {}]
  %s2 = inlined_call_operand.vmem [shape: bf16[256,128], index: 2, kind: input, shape index: {}]
  %s3 = inlined_call_operand.hbm [shape: bf16[16,128], index: 3, kind: output, shape index: {}]
  %s4 = sld [smem:[#allocation0]]
  $region45: #{_lambda_.5} parent=0
    _
  %s6 = ssub.s32 1, %s4
  %s7 = scalar_select 0, %s6, %s4
  $region1: #{_lambda_.5} parent=0
    #allocation2 [shape = 'u8[4096]{0}', space=vmem, size = 0x1000, scoped, tag = 'output window, operand 0']
    #allocation3 [shape = 's32[2]{0}', space=sflag, size = 0x8, scoped, tag = 'scoped memory for _lambda_.5']
    %8 = vsyncpa [#allocation3], 0
    %s9 = scalar_lea.sflag [#allocation3], 1
    %10 = vsyncpa %s9, 0
    loop: start=0, step=1, limit=4
    $region2: #{_lambda_.5} parent=1 // loop_pre_header
      _
    $region3: #{_lambda_.5} parent=1 // loop_header
      %s12 = sphi 0, %s16
      %p13 = scmp.ge.s32.totalorder %s12, 4
      %s22 = sphi 0, %s24
      %s25 = sphi 0, %s22
      %s26 = sphi 0, %s25
      %s42 = sphi 0, %s26
      %s46 = sphi 0, %s46
      %s48 = sphi 0, %s46
      %s49 = sphi 0, %s48
      %s63 = sphi 0, %s49
      %s67 = sphi 0, %s67
      %s69 = sphi 0, %s67
      %s70 = sphi 0, %s69
      %s84 = sphi 0, %s70
      %s90 = sphi 0, %s92
      %s93 = sphi 0, %s90
      %s94 = sphi 0, %s93
      %s110 = sphi 0, %s94
    $region4: #{_lambda_.5} parent=1 // loop_header_branch
      %15 = sbr.rel (%p13) target = $region8
    $region5: #{_lambda_.5} parent=1 // loop_body
      %s17 = ssub.s32 %s12, 1
      %s18 = ssub.s32 %s12, 2
      %s19 = sadd.s32 %s12, 1
      %s20 = ssub.s32 %s12, %s19
      %p21 = scmp.eq.s32.totalorder %s20, 0
      %s23 = sadd.s32 %s22, 1
      %s24 = scalar_select %p21, %s22, %s23
      %p27 = pneg %p21
      %p28 = scmp.eq.s32.totalorder %s12, 1
      %p29 = por %p27, %p28
      %p30 = scmp.ne.s32.totalorder %s22, %s25
      %p31 = scmp.eq.s32.totalorder %s12, 0
      %p32 = por %p30, %p31
      %p33 = scmp.ne.s32.totalorder %s22, %s25
      %p34 = scmp.eq.s32.totalorder %s17, 1
      %p35 = por %p33, %p34
      %p36 = scmp.ne.s32.totalorder %s25, %s26
      %p37 = scmp.eq.s32.totalorder %s17, 0
      %p38 = por %p36, %p37
      %p39 = scmp.ne.s32.totalorder %s25, %s26
      %p40 = scmp.eq.s32.totalorder %s18, 1
      %p41 = por %p39, %p40
      %p43 = scmp.ne.s32.totalorder %s26, %s42
      %p44 = scmp.eq.s32.totalorder %s18, 0
      %p45 = por %p43, %p44
      %s47 = sadd.s32 %s46, 1
      %p50 = scmp.eq.s32.totalorder %s12, 1
      %p51 = scmp.ne.s32.totalorder %s46, %s48
      %p52 = scmp.eq.s32.totalorder %s12, 0
      %p53 = por %p51, %p52
      %p54 = scmp.ne.s32.totalorder %s46, %s48
      %p55 = scmp.eq.s32.totalorder %s17, 1
      %p56 = por %p54, %p55
      %p57 = scmp.ne.s32.totalorder %s48, %s49
      %p58 = scmp.eq.s32.totalorder %s17, 0
      %p59 = por %p57, %p58
      %p60 = scmp.ne.s32.totalorder %s48, %s49
      %p61 = scmp.eq.s32.totalorder %s18, 1
      %p62 = por %p60, %p61
      %p64 = scmp.ne.s32.totalorder %s49, %s63
      %p65 = scmp.eq.s32.totalorder %s18, 0
      %p66 = por %p64, %p65
      %s68 = sadd.s32 %s67, 1
      %p71 = scmp.eq.s32.totalorder %s12, 1
      %p72 = scmp.ne.s32.totalorder %s67, %s69
      %p73 = scmp.eq.s32.totalorder %s12, 0
      %p74 = por %p72, %p73
      %p75 = scmp.ne.s32.totalorder %s67, %s69
      %p76 = scmp.eq.s32.totalorder %s17, 1
      %p77 = por %p75, %p76
      %p78 = scmp.ne.s32.totalorder %s69, %s70
      %p79 = scmp.eq.s32.totalorder %s17, 0
      %p80 = por %p78, %p79
      %p81 = scmp.ne.s32.totalorder %s69, %s70
      %p82 = scmp.eq.s32.totalorder %s18, 1
      %p83 = por %p81, %p82
      %p85 = scmp.ne.s32.totalorder %s70, %s84
      %p86 = scmp.eq.s32.totalorder %s18, 0
      %p87 = por %p85, %p86
      %s88 = ssub.s32 %s12, %s19
      %p89 = scmp.eq.s32.totalorder %s88, 0
      %s91 = sadd.s32 %s90, 1
      %s92 = scalar_select %p89, %s90, %s91
      %p95 = pneg %p89
      %p96 = scmp.eq.s32.totalorder %s12, 1
      %p97 = por %p95, %p96
      %p98 = scmp.ne.s32.totalorder %s90, %s93
      %p99 = scmp.eq.s32.totalorder %s12, 0
      %p100 = por %p98, %p99
      %p101 = scmp.ne.s32.totalorder %s90, %s93
      %p102 = scmp.eq.s32.totalorder %s17, 1
      %p103 = por %p101, %p102
      %p104 = scmp.ne.s32.totalorder %s93, %s94
      %p105 = scmp.eq.s32.totalorder %s17, 0
      %p106 = por %p104, %p105
      %p107 = scmp.ne.s32.totalorder %s93, %s94
      %p108 = scmp.eq.s32.totalorder %s18, 1
      %p109 = por %p107, %p108
      %p111 = scmp.ne.s32.totalorder %s94, %s110
      %p112 = scmp.eq.s32.totalorder %s18, 0
      %p113 = por %p111, %p112
      %p114 = scmp.le.s32.totalorder 1, %s12
      %p115 = scmp.lt.s32.totalorder %s12, 3
      %p116 = pnand %p114, %p115
      %p117 = pneg %p116
      // Predicated region
      $region9: #{_lambda_.5} parent=5 // pred_check
        _
      $region10: #{_lambda_.5} parent=5 // pred_check_branch
        %119 = sbr.rel (%p116) target = $region12
      $region11: #{_lambda_.5} parent=5 // pred_region
        %s120 = ssub.s32 %s12, 1
        // Predicated region
        $region13: #{_lambda_.5} parent=11 // pred_check
          %p121 = pneg %p59
        $region14: #{_lambda_.5} parent=11 // pred_check_branch
          %123 = sbr.rel (%p121) target = $region16
        $region15: #{_lambda_.5} parent=11 // pred_region
          _
        $region16: #{_lambda_.5} parent=11 // pred_fallthru
          _
        // Predicated region
        $region17: #{_lambda_.5} parent=11 // pred_check
          %p124 = pneg %p80
        $region18: #{_lambda_.5} parent=11 // pred_check_branch
          %126 = sbr.rel (%p124) target = $region20
        $region19: #{_lambda_.5} parent=11 // pred_region
          _
        $region20: #{_lambda_.5} parent=11 // pred_fallthru
          _
      $region12: #{_lambda_.5} parent=5 // pred_fallthru
        _
      %p127 = scmp.lt.s32.totalorder %s12, 2
      // Predicated region
      $region21: #{_lambda_.5} parent=5 // pred_check
        %p128 = pneg %p127
      $region22: #{_lambda_.5} parent=5 // pred_check_branch
        %130 = sbr.rel (%p128) target = $region24
      $region23: #{_lambda_.5} parent=5 // pred_region
        // Predicated region
        $region25: #{_lambda_.5} parent=23 // pred_check
          %p131 = pneg %p32
        $region26: #{_lambda_.5} parent=23 // pred_check_branch
          %133 = sbr.rel (%p131) target = $region28
        $region27: #{_lambda_.5} parent=23 // pred_region
          %p134 = scmp.lt.s32.totalorder %s12, 1
          %s135 = scalar_select %p134, %s12, 1
          %s136 = smul.addr %s135, 2
          %s137 = smul.addr %s136, 4
          %s138 = scalar_lea.vmem %s0, %s137
        $region28: #{_lambda_.5} parent=23 // pred_fallthru
          _
      $region24: #{_lambda_.5} parent=5 // pred_fallthru
        _
      %p139 = scmp.le.s32.totalorder 1, %s12
      %p140 = scmp.lt.s32.totalorder %s12, 3
      %p141 = pnand %p139, %p140
      %p142 = pneg %p141
      // Predicated region
      $region29: #{_lambda_.5} parent=5 // pred_check
        _
      $region30: #{_lambda_.5} parent=5 // pred_check_branch
        %144 = sbr.rel (%p141) target = $region32
      $region31: #{_lambda_.5} parent=5 // pred_region
        %s145 = ssub.s32 %s12, 1
        %p146 = scmp.lt.s32.totalorder %s17, 1
        %s147 = scalar_select %p146, %s17, 1
        %s148 = smul.addr %s147, 2
        %s149 = smul.addr %s148, 4
        %s150 = scalar_lea.vmem %s0, %s149
        %p151 = pneg %p38
        %p152 = pneg %p35
        %p153 = pneg %p59
        %p154 = pneg %p56
        %p155 = pneg %p80
        %p156 = pneg %p77
        %p157 = pneg %p106
        %p158 = pneg %p103
        %s159 = sand.u32 %s93, 1
        %s160 = scalar_lea.sflag [#allocation3], %s159
        %s161 = sand.u32 %s93, 1
        %s162 = smul.addr %s161, 4
        %s163 = scalar_lea.vmem [#allocation2], %s162
        %p164 = scmp.lt.s32.totalorder %s17, 1
        %s165 = scalar_select %p164, %s17, 1
        %s166 = smul.addr %s165, 2
        %s167 = smul.addr %s166, 4
        %s168 = scalar_lea.vmem %s0, %s167
        %v169 = vld [vmem:[%s168] sm:$0xff]
        %v170 = vunpack.c.l.bf16 %v169
        %v171 = vunpack.c.h.bf16 %v169
        %v172 = vmul.f32 %v170, %v170
        %v173 = vmul.f32 %v171, %v171
        %v174 = vadd.f32 %v172, %v173
        %175 = vadd.xlane.f32.xlu0 %v174
        %v176 = vpop.xlane.xlu0 %175
        %v177 = vrcp.pop 256.0
        %v178 = vmul.f32 256.0, %v177
        %v179 = vsub.f32 1.0, %v178
        %v180 = vmul.f32 %v177, %v179
        %v181 = vadd.f32 %v177, %v180
        %vm182 = vweird.f32 %v177
        %v183 = vsel %vm182, %v177, %v181
        %v184 = vmul.f32 %v176, %v183
        %v185 = vadd.f32 %v184, 1e-05
        %v186 = vrsqrt.pop %v185
        %v187 = vmul.f32 %v186, %v185
        %v188 = vmul.f32 %v187, %v186
        %v189 = vmul.f32 0.5, %v188
        %v190 = vsub.f32 1.5, %v189
        %v191 = vmul.f32 %v186, %v190
        %vm192 = vweird.f32 %v185
        %vm193 = vweird.f32 %v186
        %vm194 = vmor %vm192, %vm193
        %v195 = vsel %vm194, %v186, %v191
        %v196 = vmul.f32 %v170, %v195
        %v197 = vmul.f32 %v171, %v195
        %v198 = vld [vmem:[%s1] sm:$0x3]
        %v200 = vperm.slane %v198, 0
        %v201 = vperm.slane %v198, 1
        %v204 = vmul.f32 %v196, %v200
        %v205 = vmul.f32 %v197, %v201
        %v206 = vpack.c.bf16 %v204, %v204
        %v207 = vpack.c.bf16 %v205, %v205
        %v208 = vld [vmem:[%s2] sm:$0xf]
        %v209 = vld [vmem:[%s2 + $0x4] sm:$0xf]
        %v210 = vld [vmem:[%s2 + $0x8] sm:$0xf]
        %v211 = vld [vmem:[%s2 + $0xc] sm:$0xf]
        %v212 = vld [vmem:[%s2 + $0x10] sm:$0xf]
        %v213 = vld [vmem:[%s2 + $0x14] sm:$0xf]
        %v214 = vld [vmem:[%s2 + $0x18] sm:$0xf]
        %v215 = vld [vmem:[%s2 + $0x1c] sm:$0xf]
        %v216 = vld [vmem:[%s2 + $0x20] sm:$0xf]
        %v217 = vld [vmem:[%s2 + $0x24] sm:$0xf]
        %v218 = vld [vmem:[%s2 + $0x28] sm:$0xf]
        %v219 = vld [vmem:[%s2 + $0x2c] sm:$0xf]
        %v220 = vld [vmem:[%s2 + $0x30] sm:$0xf]
        %v221 = vld [vmem:[%s2 + $0x34] sm:$0xf]
        %v222 = vld [vmem:[%s2 + $0x38] sm:$0xf]
        %v223 = vld [vmem:[%s2 + $0x3c] sm:$0xf]
        %v224 = vld [vmem:[%s2 + $0x40] sm:$0xf]
        %v225 = vld [vmem:[%s2 + $0x44] sm:$0xf]
        %v226 = vld [vmem:[%s2 + $0x48] sm:$0xf]
        %v227 = vld [vmem:[%s2 + $0x4c] sm:$0xf]
        %v228 = vld [vmem:[%s2 + $0x50] sm:$0xf]
        %v229 = vld [vmem:[%s2 + $0x54] sm:$0xf]
        %v230 = vld [vmem:[%s2 + $0x58] sm:$0xf]
        %v231 = vld [vmem:[%s2 + $0x5c] sm:$0xf]
        %v232 = vld [vmem:[%s2 + $0x60] sm:$0xf]
        %v233 = vld [vmem:[%s2 + $0x64] sm:$0xf]
        %v234 = vld [vmem:[%s2 + $0x68] sm:$0xf]
        %v235 = vld [vmem:[%s2 + $0x6c] sm:$0xf]
        %v236 = vld [vmem:[%s2 + $0x70] sm:$0xf]
        %v237 = vld [vmem:[%s2 + $0x74] sm:$0xf]
        %v238 = vld [vmem:[%s2 + $0x78] sm:$0xf]
        %v239 = vld [vmem:[%s2 + $0x7c] sm:$0xf]
        %v272 = vunpack.c.l.b16 %v208
        %v273 = vunpack.c.l.b16 %v209
        %v274 = vunpack.c.l.b16 %v210
        %v275 = vunpack.c.l.b16 %v211
        %v276 = vunpack.c.l.b16 %v212
        %v277 = vunpack.c.l.b16 %v213
        %v278 = vunpack.c.l.b16 %v214
        %v279 = vunpack.c.l.b16 %v215
        %v280 = vunpack.c.l.b16 %v216
        %v281 = vunpack.c.l.b16 %v217
        %v282 = vunpack.c.l.b16 %v218
        %v283 = vunpack.c.l.b16 %v219
        %v284 = vunpack.c.l.b16 %v220
        %v285 = vunpack.c.l.b16 %v221
        %v286 = vunpack.c.l.b16 %v222
        %v287 = vunpack.c.l.b16 %v223
        %v288 = vunpack.c.l.b16 %v224
        %v289 = vunpack.c.l.b16 %v225
        %v290 = vunpack.c.l.b16 %v226
        %v291 = vunpack.c.l.b16 %v227
        %v292 = vunpack.c.l.b16 %v228
        %v293 = vunpack.c.l.b16 %v229
        %v294 = vunpack.c.l.b16 %v230
        %v295 = vunpack.c.l.b16 %v231
        %v296 = vunpack.c.l.b16 %v232
        %v297 = vunpack.c.l.b16 %v233
        %v298 = vunpack.c.l.b16 %v234
        %v299 = vunpack.c.l.b16 %v235
        %v300 = vunpack.c.l.b16 %v236
        %v301 = vunpack.c.l.b16 %v237
        %v302 = vunpack.c.l.b16 %v238
        %v303 = vunpack.c.l.b16 %v239
        %v304 = vpack.c.b16 %v273, %v272
        %v305 = vpack.c.b16 %v275, %v274
        %v306 = vpack.c.b16 %v277, %v276
        %v307 = vpack.c.b16 %v279, %v278
        %v308 = vpack.c.b16 %v281, %v280
        %v309 = vpack.c.b16 %v283, %v282
        %v310 = vpack.c.b16 %v285, %v284
        %v311 = vpack.c.b16 %v287, %v286
        %v312 = vpack.c.b16 %v289, %v288
        %v313 = vpack.c.b16 %v291, %v290
        %v314 = vpack.c.b16 %v293, %v292
        %v315 = vpack.c.b16 %v295, %v294
        %v316 = vpack.c.b16 %v297, %v296
        %v317 = vpack.c.b16 %v299, %v298
        %v318 = vpack.c.b16 %v301, %v300
        %v319 = vpack.c.b16 %v303, %v302
        %336 = vmatpush.bf16.msra.mxu0 %v311
        %337 = vmatpush.bf16.msra.mxu0 %v310
        %338 = vmatpush.bf16.msra.mxu0 %v309
        %339 = vmatpush.bf16.msra.mxu0 %v308
        %340 = vmatpush.bf16.msra.mxu0 %v307
        %341 = vmatpush.bf16.msra.mxu0 %v306
        %342 = vmatpush.bf16.msra.mxu0 %v305
        %343 = vmatpush.bf16.msra.mxu0 %v304
        %344 = vmatmul.bf16.gmra.mxu0 %v206
        %v345 = vpop.f32.mrf.mxu0
        %v346 = vadd.f32 0.0, %v345
        %v347 = vpop.f32.mrf.mxu0
        %348 = vdwg.mxu0
        %349 = vmatpush.bf16.msra.mxu0 %v319
        %350 = vmatpush.bf16.msra.mxu0 %v318
        %351 = vmatpush.bf16.msra.mxu0 %v317
        %352 = vmatpush.bf16.msra.mxu0 %v316
        %353 = vmatpush.bf16.msra.mxu0 %v315
        %354 = vmatpush.bf16.msra.mxu0 %v314
        %355 = vmatpush.bf16.msra.mxu0 %v313
        %356 = vmatpush.bf16.msra.mxu0 %v312
        %357 = vmatmul.bf16.gmra.mxu0 %v207
        %v358 = vpop.f32.mrf.mxu0
        %v359 = vadd.f32 %v346, %v358
        %v360 = vpop.f32.mrf.mxu0
        %361 = vdwg.mxu0
        %v362 = vpack.c.bf16 %v359, %v359
        %363 = vst [vmem:[%s163] sm:$0xf] %v362
        %s364 = sand.u32 %s93, 1
        %s365 = scalar_lea.sflag [#allocation3], %s364
        %s366 = sand.u32 %s93, 1
        %s367 = smul.addr %s366, 4
        %s368 = scalar_lea.vmem [#allocation2], %s367
        // Predicated region
        $region33: #{_lambda_.5} parent=31 // pred_check
          %p369 = pneg %p103
        $region34: #{_lambda_.5} parent=31 // pred_check_branch
          %371 = sbr.rel (%p369) target = $region36
        $region35: #{_lambda_.5} parent=31 // pred_region
          %373 = vsyncadd %s365, 0
          %s374 = smul.addr %s17, 4
          %s375 = scalar_lea.hbm %s3, %s374
          %s377 = sshll.u32 %s368, 4
          %s378 = int_to_ptr.vmem [resolvable:$true] %s377
          %s379 = sshll.u32 %s375, 4
          %s380 = int_to_ptr.hbm [resolvable:$true] %s379
          %382 = dma.vmem_to_hbm [thread:$0]  %s378, 64, %s380, %s365
        $region36: #{_lambda_.5} parent=31 // pred_fallthru
          _
      $region32: #{_lambda_.5} parent=5 // pred_fallthru
        _
      %p383 = scmp.le.s32.totalorder 2, %s12
      // Predicated region
      $region37: #{_lambda_.5} parent=5 // pred_check
        %p384 = pneg %p383
      $region38: #{_lambda_.5} parent=5 // pred_check_branch
        %386 = sbr.rel (%p384) target = $region40
      $region39: #{_lambda_.5} parent=5 // pred_region
        %s387 = ssub.s32 %s12, 2
        // Predicated region
        $region41: #{_lambda_.5} parent=39 // pred_check
          %p388 = pneg %p109
        $region42: #{_lambda_.5} parent=39 // pred_check_branch
          %390 = sbr.rel (%p388) target = $region44
        $region43: #{_lambda_.5} parent=39 // pred_region
          %s391 = sand.u32 %s94, 1
          %s392 = scalar_lea.sflag [#allocation3], %s391
          %s393 = sand.u32 %s94, 1
          %s394 = smul.addr %s393, 4
          %s395 = scalar_lea.vmem [#allocation2], %s394
          %397 = dma.done %s392, 64
        $region44: #{_lambda_.5} parent=39 // pred_fallthru
          _
      $region40: #{_lambda_.5} parent=5 // pred_fallthru
        _
    $region6: #{_lambda_.5} parent=1 // loop_footer
      %s16 = sadd.s32 1, %s12
    $region7: #{_lambda_.5} parent=1 // loop_footer_branch
      %11 = sbr.rel target = $region3
    $region8: #{_lambda_.5} parent=1 // loop_exit
      _
    %398 = vsyncpa [#allocation3], 1
    %s399 = scalar_lea.sflag [#allocation3], 1
    %400 = vsyncpa %s399, 1

// kernel: _lambda_.4
$region0: #{_lambda_.4}
  #allocation0 [shape = 'u32[]', space=smem, size = 0x4, offset = 0x4, fixed_abs, tag = 'smem constant byte address 0x4 - core index']
  #allocation1 [shape = 'u32[72,128]{1,0:T(1,128)}', space=vmem, size = 0x9000, scoped, tag = 'internal scratch']
  %s0 = inlined_call_operand.vmem [shape: bf16[16,256], index: 0, kind: input, shape index: {}]
  %s1 = inlined_call_operand.vmem [shape: f32[1,256], index: 1, kind: input, shape index: {}]
  %s2 = inlined_call_operand.hbm [shape: bf16[256,512], index: 2, kind: input, shape index: {}]
  %s3 = inlined_call_operand.hbm [shape: bf16[256,256], index: 3, kind: input, shape index: {}]
  %s4 = inlined_call_operand.vmem [shape: f32[1,256], index: 4, kind: input, shape index: {}]
  %s5 = inlined_call_operand.hbm [shape: bf16[256,1024], index: 5, kind: input, shape index: {}]
  %s6 = inlined_call_operand.hbm [shape: bf16[512,256], index: 6, kind: input, shape index: {}]
  %s7 = inlined_call_operand.vmem [shape: f32[8,256], index: 7, kind: input, shape index: {}]
  %s8 = inlined_call_operand.vmem [shape: f32[8,256], index: 8, kind: input, shape index: {}]
  %s9 = inlined_call_operand.vmem [shape: f32[8,128], index: 9, kind: input, shape index: {}]
  %s10 = inlined_call_operand.vmem [shape: f32[8,128], index: 10, kind: input, shape index: {}]
  %s11 = inlined_call_operand.vmem [shape: f32[8,8], index: 11, kind: input, shape index: {}]
  %s12 = inlined_call_operand.vmem [shape: bf16[16,256], index: 12, kind: output, shape index: {}]
  %s13 = sld [smem:[#allocation0]]
  $region97: #{_lambda_.4} parent=0
    _
  %s15 = ssub.s32 1, %s13
  %s16 = scalar_select 0, %s15, %s13
  $region1: #{_lambda_.4} parent=0
    #allocation2 [shape = 'u8[262144]{0}', space=vmem, size = 0x40000, scoped, tag = 'input window, operand 2, single buffered']
    #allocation3 [shape = 's32[2]{0}', space=sflag, size = 0x8, scoped, tag = 'scoped memory for _lambda_.4']
    #allocation4 [shape = 'u8[131072]{0}', space=vmem, size = 0x20000, scoped, tag = 'input window, operand 3, single buffered']
    #allocation5 [shape = 's32[1]{0}', space=sflag, size = 0x4, scoped, tag = 'scoped memory for _lambda_.4']
    #allocation6 [shape = 'u8[524288]{0}', space=vmem, size = 0x80000, scoped, tag = 'input window, operand 5, single buffered']
    #allocation7 [shape = 'u8[262144]{0}', space=vmem, size = 0x40000, scoped, tag = 'input window, operand 6, single buffered']
    #allocation8 [shape = 's32[1]{0}', space=sflag, size = 0x4, scoped, tag = 'scoped memory for _lambda_.4']
    %17 = vsyncpa [#allocation3], 0
    %18 = vsyncpa [#allocation5], 0
    %19 = vsyncpa [#allocation8], 0
    loop: start=0, step=1, limit=4
    $region2: #{_lambda_.4} parent=1 // loop_pre_header
      _
    $region3: #{_lambda_.4} parent=1 // loop_header
      %s21 = sphi 0, %s25
      %p22 = scmp.ge.s32.totalorder %s21, 4
      %s31 = sphi 0, %s33
      %s34 = sphi 0, %s31
      %s35 = sphi 0, %s34
      %s51 = sphi 0, %s35
      %s55 = sphi 0, %s55
      %s57 = sphi 0, %s55
      %s58 = sphi 0, %s57
      %s72 = sphi 0, %s58
      %s76 = sphi 0, %s76
      %s78 = sphi 0, %s76
      %s79 = sphi 0, %s78
      %s93 = sphi 0, %s79
      %s97 = sphi 0, %s97
      %s99 = sphi 0, %s97
      %s100 = sphi 0, %s99
      %s114 = sphi 0, %s100
      %s118 = sphi 0, %s118
      %s120 = sphi 0, %s118
      %s121 = sphi 0, %s120
      %s135 = sphi 0, %s121
      %s139 = sphi 0, %s139
      %s141 = sphi 0, %s139
      %s142 = sphi 0, %s141
      %s156 = sphi 0, %s142
      %s160 = sphi 0, %s160
      %s162 = sphi 0, %s160
      %s163 = sphi 0, %s162
      %s177 = sphi 0, %s163
      %s181 = sphi 0, %s181
      %s183 = sphi 0, %s181
      %s184 = sphi 0, %s183
      %s198 = sphi 0, %s184
      %s202 = sphi 0, %s202
      %s204 = sphi 0, %s202
      %s205 = sphi 0, %s204
      %s219 = sphi 0, %s205
      %s223 = sphi 0, %s223
      %s225 = sphi 0, %s223
      %s226 = sphi 0, %s225
      %s240 = sphi 0, %s226
      %s244 = sphi 0, %s244
      %s246 = sphi 0, %s244
      %s247 = sphi 0, %s246
      %s261 = sphi 0, %s247
      %s265 = sphi 0, %s265
      %s267 = sphi 0, %s265
      %s268 = sphi 0, %s267
      %s282 = sphi 0, %s268
      %s288 = sphi 0, %s290
      %s291 = sphi 0, %s288
      %s292 = sphi 0, %s291
      %s308 = sphi 0, %s292
    $region4: #{_lambda_.4} parent=1 // loop_header_branch
      %24 = sbr.rel (%p22) target = $region8
    $region5: #{_lambda_.4} parent=1 // loop_body
      %s26 = ssub.s32 %s21, 1
      %s27 = ssub.s32 %s21, 2
      %s28 = sadd.s32 %s21, 1
      %s29 = ssub.s32 %s21, %s28
      %p30 = scmp.eq.s32.totalorder %s29, 0
      %s32 = sadd.s32 %s31, 1
      %s33 = scalar_select %p30, %s31, %s32
      %p36 = pneg %p30
      %p37 = scmp.eq.s32.totalorder %s21, 1
      %p38 = por %p36, %p37
      %p39 = scmp.ne.s32.totalorder %s31, %s34
      %p40 = scmp.eq.s32.totalorder %s21, 0
      %p41 = por %p39, %p40
      %p42 = scmp.ne.s32.totalorder %s31, %s34
      %p43 = scmp.eq.s32.totalorder %s26, 1
      %p44 = por %p42, %p43
      %p45 = scmp.ne.s32.totalorder %s34, %s35
      %p46 = scmp.eq.s32.totalorder %s26, 0
      %p47 = por %p45, %p46
      %p48 = scmp.ne.s32.totalorder %s34, %s35
      %p49 = scmp.eq.s32.totalorder %s27, 1
      %p50 = por %p48, %p49
      %p52 = scmp.ne.s32.totalorder %s35, %s51
      %p53 = scmp.eq.s32.totalorder %s27, 0
      %p54 = por %p52, %p53
      %s56 = sadd.s32 %s55, 1
      %p59 = scmp.eq.s32.totalorder %s21, 1
      %p60 = scmp.ne.s32.totalorder %s55, %s57
      %p61 = scmp.eq.s32.totalorder %s21, 0
      %p62 = por %p60, %p61
      %p63 = scmp.ne.s32.totalorder %s55, %s57
      %p64 = scmp.eq.s32.totalorder %s26, 1
      %p65 = por %p63, %p64
      %p66 = scmp.ne.s32.totalorder %s57, %s58
      %p67 = scmp.eq.s32.totalorder %s26, 0
      %p68 = por %p66, %p67
      %p69 = scmp.ne.s32.totalorder %s57, %s58
      %p70 = scmp.eq.s32.totalorder %s27, 1
      %p71 = por %p69, %p70
      %p73 = scmp.ne.s32.totalorder %s58, %s72
      %p74 = scmp.eq.s32.totalorder %s27, 0
      %p75 = por %p73, %p74
      %s77 = sadd.s32 %s76, 1
      %p80 = scmp.eq.s32.totalorder %s21, 1
      %p81 = scmp.ne.s32.totalorder %s76, %s78
      %p82 = scmp.eq.s32.totalorder %s21, 0
      %p83 = por %p81, %p82
      %p84 = scmp.ne.s32.totalorder %s76, %s78
      %p85 = scmp.eq.s32.totalorder %s26, 1
      %p86 = por %p84, %p85
      %p87 = scmp.ne.s32.totalorder %s78, %s79
      %p88 = scmp.eq.s32.totalorder %s26, 0
      %p89 = por %p87, %p88
      %p90 = scmp.ne.s32.totalorder %s78, %s79
      %p91 = scmp.eq.s32.totalorder %s27, 1
      %p92 = por %p90, %p91
      %p94 = scmp.ne.s32.totalorder %s79, %s93
      %p95 = scmp.eq.s32.totalorder %s27, 0
      %p96 = por %p94, %p95
      %s98 = sadd.s32 %s97, 1
      %p101 = scmp.eq.s32.totalorder %s21, 1
      %p102 = scmp.ne.s32.totalorder %s97, %s99
      %p103 = scmp.eq.s32.totalorder %s21, 0
      %p104 = por %p102, %p103
      %p105 = scmp.ne.s32.totalorder %s97, %s99
      %p106 = scmp.eq.s32.totalorder %s26, 1
      %p107 = por %p105, %p106
      %p108 = scmp.ne.s32.totalorder %s99, %s100
      %p109 = scmp.eq.s32.totalorder %s26, 0
      %p110 = por %p108, %p109
      %p111 = scmp.ne.s32.totalorder %s99, %s100
      %p112 = scmp.eq.s32.totalorder %s27, 1
      %p113 = por %p111, %p112
      %p115 = scmp.ne.s32.totalorder %s100, %s114
      %p116 = scmp.eq.s32.totalorder %s27, 0
      %p117 = por %p115, %p116
      %s119 = sadd.s32 %s118, 1
      %p122 = scmp.eq.s32.totalorder %s21, 1
      %p123 = scmp.ne.s32.totalorder %s118, %s120
      %p124 = scmp.eq.s32.totalorder %s21, 0
      %p125 = por %p123, %p124
      %p126 = scmp.ne.s32.totalorder %s118, %s120
      %p127 = scmp.eq.s32.totalorder %s26, 1
      %p128 = por %p126, %p127
      %p129 = scmp.ne.s32.totalorder %s120, %s121
      %p130 = scmp.eq.s32.totalorder %s26, 0
      %p131 = por %p129, %p130
      %p132 = scmp.ne.s32.totalorder %s120, %s121
      %p133 = scmp.eq.s32.totalorder %s27, 1
      %p134 = por %p132, %p133
      %p136 = scmp.ne.s32.totalorder %s121, %s135
      %p137 = scmp.eq.s32.totalorder %s27, 0
      %p138 = por %p136, %p137
      %s140 = sadd.s32 %s139, 1
      %p143 = scmp.eq.s32.totalorder %s21, 1
      %p144 = scmp.ne.s32.totalorder %s139, %s141
      %p145 = scmp.eq.s32.totalorder %s21, 0
      %p146 = por %p144, %p145
      %p147 = scmp.ne.s32.totalorder %s139, %s141
      %p148 = scmp.eq.s32.totalorder %s26, 1
      %p149 = por %p147, %p148
      %p150 = scmp.ne.s32.totalorder %s141, %s142
      %p151 = scmp.eq.s32.totalorder %s26, 0
      %p152 = por %p150, %p151
      %p153 = scmp.ne.s32.totalorder %s141, %s142
      %p154 = scmp.eq.s32.totalorder %s27, 1
      %p155 = por %p153, %p154
      %p157 = scmp.ne.s32.totalorder %s142, %s156
      %p158 = scmp.eq.s32.totalorder %s27, 0
      %p159 = por %p157, %p158
      %s161 = sadd.s32 %s160, 1
      %p164 = scmp.eq.s32.totalorder %s21, 1
      %p165 = scmp.ne.s32.totalorder %s160, %s162
      %p166 = scmp.eq.s32.totalorder %s21, 0
      %p167 = por %p165, %p166
      %p168 = scmp.ne.s32.totalorder %s160, %s162
      %p169 = scmp.eq.s32.totalorder %s26, 1
      %p170 = por %p168, %p169
      %p171 = scmp.ne.s32.totalorder %s162, %s163
      %p172 = scmp.eq.s32.totalorder %s26, 0
      %p173 = por %p171, %p172
      %p174 = scmp.ne.s32.totalorder %s162, %s163
      %p175 = scmp.eq.s32.totalorder %s27, 1
      %p176 = por %p174, %p175
      %p178 = scmp.ne.s32.totalorder %s163, %s177
      %p179 = scmp.eq.s32.totalorder %s27, 0
      %p180 = por %p178, %p179
      %s182 = sadd.s32 %s181, 1
      %p185 = scmp.eq.s32.totalorder %s21, 1
      %p186 = scmp.ne.s32.totalorder %s181, %s183
      %p187 = scmp.eq.s32.totalorder %s21, 0
      %p188 = por %p186, %p187
      %p189 = scmp.ne.s32.totalorder %s181, %s183
      %p190 = scmp.eq.s32.totalorder %s26, 1
      %p191 = por %p189, %p190
      %p192 = scmp.ne.s32.totalorder %s183, %s184
      %p193 = scmp.eq.s32.totalorder %s26, 0
      %p194 = por %p192, %p193
      %p195 = scmp.ne.s32.totalorder %s183, %s184
      %p196 = scmp.eq.s32.totalorder %s27, 1
      %p197 = por %p195, %p196
      %p199 = scmp.ne.s32.totalorder %s184, %s198
      %p200 = scmp.eq.s32.totalorder %s27, 0
      %p201 = por %p199, %p200
      %s203 = sadd.s32 %s202, 1
      %p206 = scmp.eq.s32.totalorder %s21, 1
      %p207 = scmp.ne.s32.totalorder %s202, %s204
      %p208 = scmp.eq.s32.totalorder %s21, 0
      %p209 = por %p207, %p208
      %p210 = scmp.ne.s32.totalorder %s202, %s204
      %p211 = scmp.eq.s32.totalorder %s26, 1
      %p212 = por %p210, %p211
      %p213 = scmp.ne.s32.totalorder %s204, %s205
      %p214 = scmp.eq.s32.totalorder %s26, 0
      %p215 = por %p213, %p214
      %p216 = scmp.ne.s32.totalorder %s204, %s205
      %p217 = scmp.eq.s32.totalorder %s27, 1
      %p218 = por %p216, %p217
      %p220 = scmp.ne.s32.totalorder %s205, %s219
      %p221 = scmp.eq.s32.totalorder %s27, 0
      %p222 = por %p220, %p221
      %s224 = sadd.s32 %s223, 1
      %p227 = scmp.eq.s32.totalorder %s21, 1
      %p228 = scmp.ne.s32.totalorder %s223, %s225
      %p229 = scmp.eq.s32.totalorder %s21, 0
      %p230 = por %p228, %p229
      %p231 = scmp.ne.s32.totalorder %s223, %s225
      %p232 = scmp.eq.s32.totalorder %s26, 1
      %p233 = por %p231, %p232
      %p234 = scmp.ne.s32.totalorder %s225, %s226
      %p235 = scmp.eq.s32.totalorder %s26, 0
      %p236 = por %p234, %p235
      %p237 = scmp.ne.s32.totalorder %s225, %s226
      %p238 = scmp.eq.s32.totalorder %s27, 1
      %p239 = por %p237, %p238
      %p241 = scmp.ne.s32.totalorder %s226, %s240
      %p242 = scmp.eq.s32.totalorder %s27, 0
      %p243 = por %p241, %p242
      %s245 = sadd.s32 %s244, 1
      %p248 = scmp.eq.s32.totalorder %s21, 1
      %p249 = scmp.ne.s32.totalorder %s244, %s246
      %p250 = scmp.eq.s32.totalorder %s21, 0
      %p251 = por %p249, %p250
      %p252 = scmp.ne.s32.totalorder %s244, %s246
      %p253 = scmp.eq.s32.totalorder %s26, 1
      %p254 = por %p252, %p253
      %p255 = scmp.ne.s32.totalorder %s246, %s247
      %p256 = scmp.eq.s32.totalorder %s26, 0
      %p257 = por %p255, %p256
      %p258 = scmp.ne.s32.totalorder %s246, %s247
      %p259 = scmp.eq.s32.totalorder %s27, 1
      %p260 = por %p258, %p259
      %p262 = scmp.ne.s32.totalorder %s247, %s261
      %p263 = scmp.eq.s32.totalorder %s27, 0
      %p264 = por %p262, %p263
      %s266 = sadd.s32 %s265, 1
      %p269 = scmp.eq.s32.totalorder %s21, 1
      %p270 = scmp.ne.s32.totalorder %s265, %s267
      %p271 = scmp.eq.s32.totalorder %s21, 0
      %p272 = por %p270, %p271
      %p273 = scmp.ne.s32.totalorder %s265, %s267
      %p274 = scmp.eq.s32.totalorder %s26, 1
      %p275 = por %p273, %p274
      %p276 = scmp.ne.s32.totalorder %s267, %s268
      %p277 = scmp.eq.s32.totalorder %s26, 0
      %p278 = por %p276, %p277
      %p279 = scmp.ne.s32.totalorder %s267, %s268
      %p280 = scmp.eq.s32.totalorder %s27, 1
      %p281 = por %p279, %p280
      %p283 = scmp.ne.s32.totalorder %s268, %s282
      %p284 = scmp.eq.s32.totalorder %s27, 0
      %p285 = por %p283, %p284
      %s286 = ssub.s32 %s21, %s28
      %p287 = scmp.eq.s32.totalorder %s286, 0
      %s289 = sadd.s32 %s288, 1
      %s290 = scalar_select %p287, %s288, %s289
      %p293 = pneg %p287
      %p294 = scmp.eq.s32.totalorder %s21, 1
      %p295 = por %p293, %p294
      %p296 = scmp.ne.s32.totalorder %s288, %s291
      %p297 = scmp.eq.s32.totalorder %s21, 0
      %p298 = por %p296, %p297
      %p299 = scmp.ne.s32.totalorder %s288, %s291
      %p300 = scmp.eq.s32.totalorder %s26, 1
      %p301 = por %p299, %p300
      %p302 = scmp.ne.s32.totalorder %s291, %s292
      %p303 = scmp.eq.s32.totalorder %s26, 0
      %p304 = por %p302, %p303
      %p305 = scmp.ne.s32.totalorder %s291, %s292
      %p306 = scmp.eq.s32.totalorder %s27, 1
      %p307 = por %p305, %p306
      %p309 = scmp.ne.s32.totalorder %s292, %s308
      %p310 = scmp.eq.s32.totalorder %s27, 0
      %p311 = por %p309, %p310
      %p312 = scmp.le.s32.totalorder 1, %s21
      %p313 = scmp.lt.s32.totalorder %s21, 3
      %p314 = pnand %p312, %p313
      %p315 = pneg %p314
      // Predicated region
      $region9: #{_lambda_.4} parent=5 // pred_check
        _
      $region10: #{_lambda_.4} parent=5 // pred_check_branch
        %317 = sbr.rel (%p314) target = $region12
      $region11: #{_lambda_.4} parent=5 // pred_region
        %s318 = ssub.s32 %s21, 1
        // Predicated region
        $region13: #{_lambda_.4} parent=11 // pred_check
          %p319 = pneg %p68
        $region14: #{_lambda_.4} parent=11 // pred_check_branch
          %321 = sbr.rel (%p319) target = $region16
        $region15: #{_lambda_.4} parent=11 // pred_region
          _
        $region16: #{_lambda_.4} parent=11 // pred_fallthru
          _
        // Predicated region
        $region17: #{_lambda_.4} parent=11 // pred_check
          %p322 = pneg %p89
        $region18: #{_lambda_.4} parent=11 // pred_check_branch
          %324 = sbr.rel (%p322) target = $region20
        $region19: #{_lambda_.4} parent=11 // pred_region
          %326 = vsyncadd [#allocation3], 0
          %s327 = sshll.u32 %s2, 4
          %s328 = int_to_ptr.hbm [resolvable:$true] %s327
          %s329 = sshll.u32 [#allocation2], 4
          %s330 = int_to_ptr.vmem [resolvable:$true] %s329
          %335 = dma.hbm_to_vmem [thread:$0]  %s328, 8192, %s330, [#allocation3], 256, 256, 16
        $region20: #{_lambda_.4} parent=11 // pred_fallthru
          _
        // Predicated region
        $region21: #{_lambda_.4} parent=11 // pred_check
          %p336 = pneg %p110
        $region22: #{_lambda_.4} parent=11 // pred_check_branch
          %338 = sbr.rel (%p336) target = $region24
        $region23: #{_lambda_.4} parent=11 // pred_region
          %340 = vsyncadd [#allocation5], 0
          %s341 = sshll.u32 %s3, 4
          %s342 = int_to_ptr.hbm [resolvable:$true] %s341
          %s343 = sshll.u32 [#allocation4], 4
          %s344 = int_to_ptr.vmem [resolvable:$true] %s343
          %349 = dma.hbm_to_vmem [thread:$0]  %s342, 4096, %s344, [#allocation5], 128, 128, 8
        $region24: #{_lambda_.4} parent=11 // pred_fallthru
          _
        // Predicated region
        $region25: #{_lambda_.4} parent=11 // pred_check
          %p350 = pneg %p131
        $region26: #{_lambda_.4} parent=11 // pred_check_branch
          %352 = sbr.rel (%p350) target = $region28
        $region27: #{_lambda_.4} parent=11 // pred_region
          _
        $region28: #{_lambda_.4} parent=11 // pred_fallthru
          _
        // Predicated region
        $region29: #{_lambda_.4} parent=11 // pred_check
          %p353 = pneg %p152
        $region30: #{_lambda_.4} parent=11 // pred_check_branch
          %355 = sbr.rel (%p353) target = $region32
        $region31: #{_lambda_.4} parent=11 // pred_region
          %357 = vsyncadd [#allocation5], 0
          %s358 = sshll.u32 %s5, 4
          %s359 = int_to_ptr.hbm [resolvable:$true] %s358
          %s360 = sshll.u32 [#allocation6], 4
          %s361 = int_to_ptr.vmem [resolvable:$true] %s360
          %366 = dma.hbm_to_vmem [thread:$0]  %s359, 16384, %s361, [#allocation5], 512, 512, 32
        $region32: #{_lambda_.4} parent=11 // pred_fallthru
          _
        // Predicated region
        $region33: #{_lambda_.4} parent=11 // pred_check
          %p367 = pneg %p173
        $region34: #{_lambda_.4} parent=11 // pred_check_branch
          %369 = sbr.rel (%p367) target = $region36
        $region35: #{_lambda_.4} parent=11 // pred_region
          %371 = vsyncadd [#allocation8], 0
          %s372 = sshll.u32 %s6, 4
          %s373 = int_to_ptr.hbm [resolvable:$true] %s372
          %s374 = sshll.u32 [#allocation7], 4
          %s375 = int_to_ptr.vmem [resolvable:$true] %s374
          %380 = dma.hbm_to_vmem [thread:$0]  %s373, 8192, %s375, [#allocation8], 128, 128, 8
        $region36: #{_lambda_.4} parent=11 // pred_fallthru
          _
        // Predicated region
        $region37: #{_lambda_.4} parent=11 // pred_check
          %p381 = pneg %p194
        $region38: #{_lambda_.4} parent=11 // pred_check_branch
          %383 = sbr.rel (%p381) target = $region40
        $region39: #{_lambda_.4} parent=11 // pred_region
          _
        $region40: #{_lambda_.4} parent=11 // pred_fallthru
          _
        // Predicated region
        $region41: #{_lambda_.4} parent=11 // pred_check
          %p384 = pneg %p215
        $region42: #{_lambda_.4} parent=11 // pred_check_branch
          %386 = sbr.rel (%p384) target = $region44
        $region43: #{_lambda_.4} parent=11 // pred_region
          _
        $region44: #{_lambda_.4} parent=11 // pred_fallthru
          _
        // Predicated region
        $region45: #{_lambda_.4} parent=11 // pred_check
          %p387 = pneg %p236
        $region46: #{_lambda_.4} parent=11 // pred_check_branch
          %389 = sbr.rel (%p387) target = $region48
        $region47: #{_lambda_.4} parent=11 // pred_region
          _
        $region48: #{_lambda_.4} parent=11 // pred_fallthru
          _
        // Predicated region
        $region49: #{_lambda_.4} parent=11 // pred_check
          %p390 = pneg %p257
        $region50: #{_lambda_.4} parent=11 // pred_check_branch
          %392 = sbr.rel (%p390) target = $region52
        $region51: #{_lambda_.4} parent=11 // pred_region
          _
        $region52: #{_lambda_.4} parent=11 // pred_fallthru
          _
        // Predicated region
        $region53: #{_lambda_.4} parent=11 // pred_check
          %p393 = pneg %p278
        $region54: #{_lambda_.4} parent=11 // pred_check_branch
          %395 = sbr.rel (%p393) target = $region56
        $region55: #{_lambda_.4} parent=11 // pred_region
          _
        $region56: #{_lambda_.4} parent=11 // pred_fallthru
          _
      $region12: #{_lambda_.4} parent=5 // pred_fallthru
        _
      %p396 = scmp.lt.s32.totalorder %s21, 2
      // Predicated region
      $region57: #{_lambda_.4} parent=5 // pred_check
        %p397 = pneg %p396
      $region58: #{_lambda_.4} parent=5 // pred_check_branch
        %399 = sbr.rel (%p397) target = $region60
      $region59: #{_lambda_.4} parent=5 // pred_region
        // Predicated region
        $region61: #{_lambda_.4} parent=59 // pred_check
          %p400 = pneg %p41
        $region62: #{_lambda_.4} parent=59 // pred_check_branch
          %402 = sbr.rel (%p400) target = $region64
        $region63: #{_lambda_.4} parent=59 // pred_region
          %p403 = scmp.lt.s32.totalorder %s21, 1
          %s404 = scalar_select %p403, %s21, 1
          %s405 = smul.addr %s404, 2
          %s406 = smul.addr %s405, 4
          %s407 = scalar_lea.vmem %s0, %s406
        $region64: #{_lambda_.4} parent=59 // pred_fallthru
          _
      $region60: #{_lambda_.4} parent=5 // pred_fallthru
        _
      %p408 = scmp.le.s32.totalorder 1, %s21
      %p409 = scmp.lt.s32.totalorder %s21, 3
      %p410 = pnand %p408, %p409
      %p411 = pneg %p410
      // Predicated region
      $region65: #{_lambda_.4} parent=5 // pred_check
        _
      $region66: #{_lambda_.4} parent=5 // pred_check_branch
        %413 = sbr.rel (%p410) target = $region68
      $region67: #{_lambda_.4} parent=5 // pred_region
        %s414 = ssub.s32 %s21, 1
        // Predicated region
        $region69: #{_lambda_.4} parent=67 // pred_check
          %p415 = pneg %p89
        $region70: #{_lambda_.4} parent=67 // pred_check_branch
          %417 = sbr.rel (%p415) target = $region72
        $region71: #{_lambda_.4} parent=67 // pred_region
          %419 = dma.done [#allocation3], 8192
        $region72: #{_lambda_.4} parent=67 // pred_fallthru
          _
        // Predicated region
        $region73: #{_lambda_.4} parent=67 // pred_check
          %p420 = pneg %p110
        $region74: #{_lambda_.4} parent=67 // pred_check_branch
          %422 = sbr.rel (%p420) target = $region76
        $region75: #{_lambda_.4} parent=67 // pred_region
          %424 = dma.done [#allocation5], 4096
        $region76: #{_lambda_.4} parent=67 // pred_fallthru
          _
        // Predicated region
        $region77: #{_lambda_.4} parent=67 // pred_check
          %p425 = pneg %p152
        $region78: #{_lambda_.4} parent=67 // pred_check_branch
          %427 = sbr.rel (%p425) target = $region80
        $region79: #{_lambda_.4} parent=67 // pred_region
          %429 = dma.done [#allocation5], 16384
        $region80: #{_lambda_.4} parent=67 // pred_fallthru
          _
        // Predicated region
        $region81: #{_lambda_.4} parent=67 // pred_check
          %p430 = pneg %p173
        $region82: #{_lambda_.4} parent=67 // pred_check_branch
          %432 = sbr.rel (%p430) target = $region84
        $region83: #{_lambda_.4} parent=67 // pred_region
          %434 = dma.done [#allocation8], 8192
        $region84: #{_lambda_.4} parent=67 // pred_fallthru
          _
        %p435 = scmp.lt.s32.totalorder %s26, 1
        %s436 = scalar_select %p435, %s26, 1
        %s437 = smul.addr %s436, 2
        %s438 = smul.addr %s437, 4
        %s439 = scalar_lea.vmem %s0, %s438
        %p440 = pneg %p47
        %p441 = pneg %p44
        %p442 = pneg %p68
        %p443 = pneg %p65
        %p444 = pneg %p89
        %p445 = pneg %p86
        %p446 = pneg %p110
        %p447 = pneg %p107
        %p448 = pneg %p131
        %p449 = pneg %p128
        %p450 = pneg %p152
        %p451 = pneg %p149
        %p452 = pneg %p173
        %p453 = pneg %p170
        %p454 = pneg %p194
        %p455 = pneg %p191
        %p456 = pneg %p215
        %p457 = pneg %p212
        %p458 = pneg %p236
        %p459 = pneg %p233
        %p460 = pneg %p257
        %p461 = pneg %p254
        %p462 = pneg %p278
        %p463 = pneg %p275
        %p464 = pneg %p304
        %p465 = pneg %p301
        %p466 = scmp.lt.s32.totalorder %s26, 1
        %s467 = scalar_select %p466, %s26, 1
        %s468 = smul.addr %s467, 2
        %s469 = smul.addr %s468, 4
        %s470 = scalar_lea.vmem %s12, %s469
        %p471 = scmp.lt.s32.totalorder %s26, 1
        %s472 = scalar_select %p471, %s26, 1
        %s473 = smul.addr %s472, 2
        %s474 = smul.addr %s473, 4
        %s475 = scalar_lea.vmem %s0, %s474
        %p476 = scmp.lt.s32.totalorder %s26, 1
        %s477 = scalar_select %p476, %s26, 1
        %s478 = smul.addr %s477, 2
        %s479 = smul.addr %s478, 4
        %s480 = scalar_lea.vmem %s12, %s479
        %v482 = vld [vmem:[%s475] sm:$0xff]
        %v483 = vunpack.c.l.bf16 %v482
        %v484 = vunpack.c.h.bf16 %v482
        %v485 = vmul.f32 %v483, %v483
        %v486 = vmul.f32 %v484, %v484
        %v487 = vadd.f32 %v485, %v486
        %488 = vadd.xlane.f32.xlu0 %v487
        %v489 = vpop.xlane.xlu0 %488
        %v490 = vrcp.pop 256.0
        %v491 = vmul.f32 256.0, %v490
        %v492 = vsub.f32 1.0, %v491
        %v493 = vmul.f32 %v490, %v492
        %v494 = vadd.f32 %v490, %v493
        %vm495 = vweird.f32 %v490
        %v496 = vsel %vm495, %v490, %v494
        %v497 = vmul.f32 %v489, %v496
        %v498 = vadd.f32 %v497, 1e-05
        %v499 = vrsqrt.pop %v498
        %v500 = vmul.f32 %v499, %v498
        %v501 = vmul.f32 %v500, %v499
        %v502 = vmul.f32 0.5, %v501
        %v503 = vsub.f32 1.5, %v502
        %v504 = vmul.f32 %v499, %v503
        %vm505 = vweird.f32 %v498
        %vm506 = vweird.f32 %v499
        %vm507 = vmor %vm505, %vm506
        %v508 = vsel %vm507, %v499, %v504
        %v509 = vmul.f32 %v483, %v508
        %v510 = vmul.f32 %v484, %v508
        %v511 = vld [vmem:[%s1] sm:$0x3]
        %v513 = vperm.slane %v511, 0
        %v514 = vperm.slane %v511, 1
        %v517 = vmul.f32 %v509, %v513
        %v518 = vmul.f32 %v510, %v514
        %v519 = vpack.c.bf16 %v517, %v517
        %v520 = vpack.c.bf16 %v518, %v518
        %v521 = vld [vmem:[#allocation2] sm:$0xff]
        %v522 = vld [vmem:[#allocation2 + $0x8] sm:$0xff]
        %v523 = vld [vmem:[#allocation2 + $0x10] sm:$0xff]
        %v524 = vld [vmem:[#allocation2 + $0x18] sm:$0xff]
        %v525 = vld [vmem:[#allocation2 + $0x20] sm:$0xff]
        %v526 = vld [vmem:[#allocation2 + $0x28] sm:$0xff]
        %v527 = vld [vmem:[#allocation2 + $0x30] sm:$0xff]
        %v528 = vld [vmem:[#allocation2 + $0x38] sm:$0xff]
        %v529 = vld [vmem:[#allocation2 + $0x40] sm:$0xff]
        %v530 = vld [vmem:[#allocation2 + $0x48] sm:$0xff]
        %v531 = vld [vmem:[#allocation2 + $0x50] sm:$0xff]
        %v532 = vld [vmem:[#allocation2 + $0x58] sm:$0xff]
        %v533 = vld [vmem:[#allocation2 + $0x60] sm:$0xff]
        %v534 = vld [vmem:[#allocation2 + $0x68] sm:$0xff]
        %v535 = vld [vmem:[#allocation2 + $0x70] sm:$0xff]
        %v536 = vld [vmem:[#allocation2 + $0x78] sm:$0xff]
        %v537 = vld [vmem:[#allocation2 + $0x80] sm:$0xff]
        %v538 = vld [vmem:[#allocation2 + $0x88] sm:$0xff]
        %v539 = vld [vmem:[#allocation2 + $0x90] sm:$0xff]
        %v540 = vld [vmem:[#allocation2 + $0x98] sm:$0xff]
        %v541 = vld [vmem:[#allocation2 + $0xa0] sm:$0xff]
        %v542 = vld [vmem:[#allocation2 + $0xa8] sm:$0xff]
        %v543 = vld [vmem:[#allocation2 + $0xb0] sm:$0xff]
        %v544 = vld [vmem:[#allocation2 + $0xb8] sm:$0xff]
        %v545 = vld [vmem:[#allocation2 + $0xc0] sm:$0xff]
        %v546 = vld [vmem:[#allocation2 + $0xc8] sm:$0xff]
        %v547 = vld [vmem:[#allocation2 + $0xd0] sm:$0xff]
        %v548 = vld [vmem:[#allocation2 + $0xd8] sm:$0xff]
        %v549 = vld [vmem:[#allocation2 + $0xe0] sm:$0xff]
        %v550 = vld [vmem:[#allocation2 + $0xe8] sm:$0xff]
        %v551 = vld [vmem:[#allocation2 + $0xf0] sm:$0xff]
        %v552 = vld [vmem:[#allocation2 + $0xf8] sm:$0xff]
        %v553 = vld [vmem:[#allocation2 + $0x100] sm:$0xff]
        %v554 = vld [vmem:[#allocation2 + $0x108] sm:$0xff]
        %v555 = vld [vmem:[#allocation2 + $0x110] sm:$0xff]
        %v556 = vld [vmem:[#allocation2 + $0x118] sm:$0xff]
        %v557 = vld [vmem:[#allocation2 + $0x120] sm:$0xff]
        %v558 = vld [vmem:[#allocation2 + $0x128] sm:$0xff]
        %v559 = vld [vmem:[#allocation2 + $0x130] sm:$0xff]
        %v560 = vld [vmem:[#allocation2 + $0x138] sm:$0xff]
        %v561 = vld [vmem:[#allocation2 + $0x140] sm:$0xff]
        %v562 = vld [vmem:[#allocation2 + $0x148] sm:$0xff]
        %v563 = vld [vmem:[#allocation2 + $0x150] sm:$0xff]
        %v564 = vld [vmem:[#allocation2 + $0x158] sm:$0xff]
        %v565 = vld [vmem:[#allocation2 + $0x160] sm:$0xff]
        %v566 = vld [vmem:[#allocation2 + $0x168] sm:$0xff]
        %v567 = vld [vmem:[#allocation2 + $0x170] sm:$0xff]
        %v568 = vld [vmem:[#allocation2 + $0x178] sm:$0xff]
        %v569 = vld [vmem:[#allocation2 + $0x180] sm:$0xff]
        %v570 = vld [vmem:[#allocation2 + $0x188] sm:$0xff]
        %v571 = vld [vmem:[#allocation2 + $0x190] sm:$0xff]
        %v572 = vld [vmem:[#allocation2 + $0x198] sm:$0xff]
        %v573 = vld [vmem:[#allocation2 + $0x1a0] sm:$0xff]
        %v574 = vld [vmem:[#allocation2 + $0x1a8] sm:$0xff]
        %v575 = vld [vmem:[#allocation2 + $0x1b0] sm:$0xff]
        %v576 = vld [vmem:[#allocation2 + $0x1b8] sm:$0xff]
        %v577 = vld [vmem:[#allocation2 + $0x1c0] sm:$0xff]
        %v578 = vld [vmem:[#allocation2 + $0x1c8] sm:$0xff]
        %v579 = vld [vmem:[#allocation2 + $0x1d0] sm:$0xff]
        %v580 = vld [vmem:[#allocation2 + $0x1d8] sm:$0xff]
        %v581 = vld [vmem:[#allocation2 + $0x1e0] sm:$0xff]
        %v582 = vld [vmem:[#allocation2 + $0x1e8] sm:$0xff]
        %v583 = vld [vmem:[#allocation2 + $0x1f0] sm:$0xff]
        %v584 = vld [vmem:[#allocation2 + $0x1f8] sm:$0xff]
        %v649 = vunpack.c.l.b16 %v521
        %v650 = vunpack.c.h.b16 %v521
        %v651 = vunpack.c.l.b16 %v522
        %v652 = vunpack.c.h.b16 %v522
        %v653 = vunpack.c.l.b16 %v523
        %v654 = vunpack.c.h.b16 %v523
        %v655 = vunpack.c.l.b16 %v524
        %v656 = vunpack.c.h.b16 %v524
        %v657 = vunpack.c.l.b16 %v525
        %v658 = vunpack.c.h.b16 %v525
        %v659 = vunpack.c.l.b16 %v526
        %v660 = vunpack.c.h.b16 %v526
        %v661 = vunpack.c.l.b16 %v527
        %v662 = vunpack.c.h.b16 %v527
        %v663 = vunpack.c.l.b16 %v528
        %v664 = vunpack.c.h.b16 %v528
        %v665 = vunpack.c.l.b16 %v529
        %v666 = vunpack.c.h.b16 %v529
        %v667 = vunpack.c.l.b16 %v530
        %v668 = vunpack.c.h.b16 %v530
        %v669 = vunpack.c.l.b16 %v531
        %v670 = vunpack.c.h.b16 %v531
        %v671 = vunpack.c.l.b16 %v532
        %v672 = vunpack.c.h.b16 %v532
        %v673 = vunpack.c.l.b16 %v533
        %v674 = vunpack.c.h.b16 %v533
        %v675 = vunpack.c.l.b16 %v534
        %v676 = vunpack.c.h.b16 %v534
        %v677 = vunpack.c.l.b16 %v535
        %v678 = vunpack.c.h.b16 %v535
        %v679 = vunpack.c.l.b16 %v536
        %v680 = vunpack.c.h.b16 %v536
        %v681 = vunpack.c.l.b16 %v537
        %v682 = vunpack.c.h.b16 %v537
        %v683 = vunpack.c.l.b16 %v538
        %v684 = vunpack.c.h.b16 %v538
        %v685 = vunpack.c.l.b16 %v539
        %v686 = vunpack.c.h.b16 %v539
        %v687 = vunpack.c.l.b16 %v540
        %v688 = vunpack.c.h.b16 %v540
        %v689 = vunpack.c.l.b16 %v541
        %v690 = vunpack.c.h.b16 %v541
        %v691 = vunpack.c.l.b16 %v542
        %v692 = vunpack.c.h.b16 %v542
        %v693 = vunpack.c.l.b16 %v543
        %v694 = vunpack.c.h.b16 %v543
        %v695 = vunpack.c.l.b16 %v544
        %v696 = vunpack.c.h.b16 %v544
        %v697 = vunpack.c.l.b16 %v545
        %v698 = vunpack.c.h.b16 %v545
        %v699 = vunpack.c.l.b16 %v546
        %v700 = vunpack.c.h.b16 %v546
        %v701 = vunpack.c.l.b16 %v547
        %v702 = vunpack.c.h.b16 %v547
        %v703 = vunpack.c.l.b16 %v548
        %v704 = vunpack.c.h.b16 %v548
        %v705 = vunpack.c.l.b16 %v549
        %v706 = vunpack.c.h.b16 %v549
        %v707 = vunpack.c.l.b16 %v550
        %v708 = vunpack.c.h.b16 %v550
        %v709 = vunpack.c.l.b16 %v551
        %v710 = vunpack.c.h.b16 %v551
        %v711 = vunpack.c.l.b16 %v552
        %v712 = vunpack.c.h.b16 %v552
        %v713 = vunpack.c.l.b16 %v553
        %v714 = vunpack.c.h.b16 %v553
        %v715 = vunpack.c.l.b16 %v554
        %v716 = vunpack.c.h.b16 %v554
        %v717 = vunpack.c.l.b16 %v555
        %v718 = vunpack.c.h.b16 %v555
        %v719 = vunpack.c.l.b16 %v556
        %v720 = vunpack.c.h.b16 %v556
        %v721 = vunpack.c.l.b16 %v557
        %v722 = vunpack.c.h.b16 %v557
        %v723 = vunpack.c.l.b16 %v558
        %v724 = vunpack.c.h.b16 %v558
        %v725 = vunpack.c.l.b16 %v559
        %v726 = vunpack.c.h.b16 %v559
        %v727 = vunpack.c.l.b16 %v560
        %v728 = vunpack.c.h.b16 %v560
        %v729 = vunpack.c.l.b16 %v561
        %v730 = vunpack.c.h.b16 %v561
        %v731 = vunpack.c.l.b16 %v562
        %v732 = vunpack.c.h.b16 %v562
        %v733 = vunpack.c.l.b16 %v563
        %v734 = vunpack.c.h.b16 %v563
        %v735 = vunpack.c.l.b16 %v564
        %v736 = vunpack.c.h.b16 %v564
        %v737 = vunpack.c.l.b16 %v565
        %v738 = vunpack.c.h.b16 %v565
        %v739 = vunpack.c.l.b16 %v566
        %v740 = vunpack.c.h.b16 %v566
        %v741 = vunpack.c.l.b16 %v567
        %v742 = vunpack.c.h.b16 %v567
        %v743 = vunpack.c.l.b16 %v568
        %v744 = vunpack.c.h.b16 %v568
        %v745 = vunpack.c.l.b16 %v569
        %v746 = vunpack.c.h.b16 %v569
        %v747 = vunpack.c.l.b16 %v570
        %v748 = vunpack.c.h.b16 %v570
        %v749 = vunpack.c.l.b16 %v571
        %v750 = vunpack.c.h.b16 %v571
        %v751 = vunpack.c.l.b16 %v572
        %v752 = vunpack.c.h.b16 %v572
        %v753 = vunpack.c.l.b16 %v573
        %v754 = vunpack.c.h.b16 %v573
        %v755 = vunpack.c.l.b16 %v574
        %v756 = vunpack.c.h.b16 %v574
        %v757 = vunpack.c.l.b16 %v575
        %v758 = vunpack.c.h.b16 %v575
        %v759 = vunpack.c.l.b16 %v576
        %v760 = vunpack.c.h.b16 %v576
        %v761 = vunpack.c.l.b16 %v577
        %v762 = vunpack.c.h.b16 %v577
        %v763 = vunpack.c.l.b16 %v578
        %v764 = vunpack.c.h.b16 %v578
        %v765 = vunpack.c.l.b16 %v579
        %v766 = vunpack.c.h.b16 %v579
        %v767 = vunpack.c.l.b16 %v580
        %v768 = vunpack.c.h.b16 %v580
        %v769 = vunpack.c.l.b16 %v581
        %v770 = vunpack.c.h.b16 %v581
        %v771 = vunpack.c.l.b16 %v582
        %v772 = vunpack.c.h.b16 %v582
        %v773 = vunpack.c.l.b16 %v583
        %v774 = vunpack.c.h.b16 %v583
        %v775 = vunpack.c.l.b16 %v584
        %v776 = vunpack.c.h.b16 %v584
        %v777 = vpack.c.b16 %v653, %v649
        %v778 = vpack.c.b16 %v654, %v650
        %v779 = vpack.c.b16 %v655, %v651
        %v780 = vpack.c.b16 %v656, %v652
        %v781 = vpack.c.b16 %v661, %v657
        %v782 = vpack.c.b16 %v662, %v658
        %v783 = vpack.c.b16 %v663, %v659
        %v784 = vpack.c.b16 %v664, %v660
        %v785 = vpack.c.b16 %v669, %v665
        %v786 = vpack.c.b16 %v670, %v666
        %v787 = vpack.c.b16 %v671, %v667
        %v788 = vpack.c.b16 %v672, %v668
        %v789 = vpack.c.b16 %v677, %v673
        %v790 = vpack.c.b16 %v678, %v674
        %v791 = vpack.c.b16 %v679, %v675
        %v792 = vpack.c.b16 %v680, %v676
        %v793 = vpack.c.b16 %v685, %v681
        %v794 = vpack.c.b16 %v686, %v682
        %v795 = vpack.c.b16 %v687, %v683
        %v796 = vpack.c.b16 %v688, %v684
        %v797 = vpack.c.b16 %v693, %v689
        %v798 = vpack.c.b16 %v694, %v690
        %v799 = vpack.c.b16 %v695, %v691
        %v800 = vpack.c.b16 %v696, %v692
        %v801 = vpack.c.b16 %v701, %v697
        %v802 = vpack.c.b16 %v702, %v698
        %v803 = vpack.c.b16 %v703, %v699
        %v804 = vpack.c.b16 %v704, %v700
        %v805 = vpack.c.b16 %v709, %v705
        %v806 = vpack.c.b16 %v710, %v706
        %v807 = vpack.c.b16 %v711, %v707
        %v808 = vpack.c.b16 %v712, %v708
        %v809 = vpack.c.b16 %v717, %v713
        %v810 = vpack.c.b16 %v718, %v714
        %v811 = vpack.c.b16 %v719, %v715
        %v812 = vpack.c.b16 %v720, %v716
        %v813 = vpack.c.b16 %v725, %v721
        %v814 = vpack.c.b16 %v726, %v722
        %v815 = vpack.c.b16 %v727, %v723
        %v816 = vpack.c.b16 %v728, %v724
        %v817 = vpack.c.b16 %v733, %v729
        %v818 = vpack.c.b16 %v734, %v730
        %v819 = vpack.c.b16 %v735, %v731
        %v820 = vpack.c.b16 %v736, %v732
        %v821 = vpack.c.b16 %v741, %v737
        %v822 = vpack.c.b16 %v742, %v738
        %v823 = vpack.c.b16 %v743, %v739
        %v824 = vpack.c.b16 %v744, %v740
        %v825 = vpack.c.b16 %v749, %v745
        %v826 = vpack.c.b16 %v750, %v746
        %v827 = vpack.c.b16 %v751, %v747
        %v828 = vpack.c.b16 %v752, %v748
        %v829 = vpack.c.b16 %v757, %v753
        %v830 = vpack.c.b16 %v758, %v754
        %v831 = vpack.c.b16 %v759, %v755
        %v832 = vpack.c.b16 %v760, %v756
        %v833 = vpack.c.b16 %v765, %v761
        %v834 = vpack.c.b16 %v766, %v762
        %v835 = vpack.c.b16 %v767, %v763
        %v836 = vpack.c.b16 %v768, %v764
        %v837 = vpack.c.b16 %v773, %v769
        %v838 = vpack.c.b16 %v774, %v770
        %v839 = vpack.c.b16 %v775, %v771
        %v840 = vpack.c.b16 %v776, %v772
        %905 = vmatpush.bf16.msra.mxu0 %v805
        %906 = vmatpush.bf16.msra.mxu0 %v801
        %907 = vmatpush.bf16.msra.mxu0 %v797
        %908 = vmatpush.bf16.msra.mxu0 %v793
        %909 = vmatpush.bf16.msra.mxu0 %v789
        %910 = vmatpush.bf16.msra.mxu0 %v785
        %911 = vmatpush.bf16.msra.mxu0 %v781
        %912 = vmatpush.bf16.msra.mxu0 %v777
        %913 = vmatmul.bf16.gmra.mxu0 %v519
        %v914 = vpop.f32.mrf.mxu0
        %v915 = vadd.f32 0.0, %v914
        %v916 = vpop.f32.mrf.mxu0
        %917 = vdwg.mxu0
        %918 = vmatpush.bf16.msra.mxu0 %v837
        %919 = vmatpush.bf16.msra.mxu0 %v833
        %920 = vmatpush.bf16.msra.mxu0 %v829
        %921 = vmatpush.bf16.msra.mxu0 %v825
        %922 = vmatpush.bf16.msra.mxu0 %v821
        %923 = vmatpush.bf16.msra.mxu0 %v817
        %924 = vmatpush.bf16.msra.mxu0 %v813
        %925 = vmatpush.bf16.msra.mxu0 %v809
        %926 = vmatmul.bf16.gmra.mxu0 %v520
        %v927 = vpop.f32.mrf.mxu0
        %v928 = vadd.f32 %v915, %v927
        %v929 = vpop.f32.mrf.mxu0
        %930 = vdwg.mxu0
        %931 = vmatpush.bf16.msra.mxu0 %v806
        %932 = vmatpush.bf16.msra.mxu0 %v802
        %933 = vmatpush.bf16.msra.mxu0 %v798
        %934 = vmatpush.bf16.msra.mxu0 %v794
        %935 = vmatpush.bf16.msra.mxu0 %v790
        %936 = vmatpush.bf16.msra.mxu0 %v786
        %937 = vmatpush.bf16.msra.mxu0 %v782
        %938 = vmatpush.bf16.msra.mxu0 %v778
        %939 = vmatmul.bf16.gmra.mxu0 %v519
        %v940 = vpop.f32.mrf.mxu0
        %v941 = vadd.f32 0.0, %v940
        %v942 = vpop.f32.mrf.mxu0
        %943 = vdwg.mxu0
        %944 = vmatpush.bf16.msra.mxu0 %v838
        %945 = vmatpush.bf16.msra.mxu0 %v834
        %946 = vmatpush.bf16.msra.mxu0 %v830
        %947 = vmatpush.bf16.msra.mxu0 %v826
        %948 = vmatpush.bf16.msra.mxu0 %v822
        %949 = vmatpush.bf16.msra.mxu0 %v818
        %950 = vmatpush.bf16.msra.mxu0 %v814
        %951 = vmatpush.bf16.msra.mxu0 %v810
        %952 = vmatmul.bf16.gmra.mxu0 %v520
        %v953 = vpop.f32.mrf.mxu0
        %v954 = vadd.f32 %v941, %v953
        %v955 = vpop.f32.mrf.mxu0
        %956 = vdwg.mxu0
        %957 = vmatpush.bf16.msra.mxu0 %v807
        %958 = vmatpush.bf16.msra.mxu0 %v803
        %959 = vmatpush.bf16.msra.mxu0 %v799
        %960 = vmatpush.bf16.msra.mxu0 %v795
        %961 = vmatpush.bf16.msra.mxu0 %v791
        %962 = vmatpush.bf16.msra.mxu0 %v787
        %963 = vmatpush.bf16.msra.mxu0 %v783
        %964 = vmatpush.bf16.msra.mxu0 %v779
        %965 = vmatmul.bf16.gmra.mxu0 %v519
        %v966 = vpop.f32.mrf.mxu0
        %v967 = vadd.f32 0.0, %v966
        %v968 = vpop.f32.mrf.mxu0
        %969 = vdwg.mxu0
        %970 = vmatpush.bf16.msra.mxu0 %v839
        %971 = vmatpush.bf16.msra.mxu0 %v835
        %972 = vmatpush.bf16.msra.mxu0 %v831
        %973 = vmatpush.bf16.msra.mxu0 %v827
        %974 = vmatpush.bf16.msra.mxu0 %v823
        %975 = vmatpush.bf16.msra.mxu0 %v819
        %976 = vmatpush.bf16.msra.mxu0 %v815
        %977 = vmatpush.bf16.msra.mxu0 %v811
        %978 = vmatmul.bf16.gmra.mxu0 %v520
        %v979 = vpop.f32.mrf.mxu0
        %v980 = vadd.f32 %v967, %v979
        %v981 = vpop.f32.mrf.mxu0
        %982 = vdwg.mxu0
        %983 = vmatpush.bf16.msra.mxu0 %v808
        %984 = vmatpush.bf16.msra.mxu0 %v804
        %985 = vmatpush.bf16.msra.mxu0 %v800
        %986 = vmatpush.bf16.msra.mxu0 %v796
        %987 = vmatpush.bf16.msra.mxu0 %v792
        %988 = vmatpush.bf16.msra.mxu0 %v788
        %989 = vmatpush.bf16.msra.mxu0 %v784
        %990 = vmatpush.bf16.msra.mxu0 %v780
        %991 = vmatmul.bf16.gmra.mxu0 %v519
        %v992 = vpop.f32.mrf.mxu0
        %v993 = vadd.f32 0.0, %v992
        %v994 = vpop.f32.mrf.mxu0
        %995 = vdwg.mxu0
        %996 = vmatpush.bf16.msra.mxu0 %v840
        %997 = vmatpush.bf16.msra.mxu0 %v836
        %998 = vmatpush.bf16.msra.mxu0 %v832
        %999 = vmatpush.bf16.msra.mxu0 %v828
        %1000 = vmatpush.bf16.msra.mxu0 %v824
        %1001 = vmatpush.bf16.msra.mxu0 %v820
        %1002 = vmatpush.bf16.msra.mxu0 %v816
        %1003 = vmatpush.bf16.msra.mxu0 %v812
        %1004 = vmatmul.bf16.gmra.mxu0 %v520
        %v1005 = vpop.f32.mrf.mxu0
        %v1006 = vadd.f32 %v993, %v1005
        %v1007 = vpop.f32.mrf.mxu0
        %1008 = vdwg.mxu0
        %v1009 = vpack.c.bf16 %v1006, %v1006
        %v1010 = vld [vmem:[%s7] sm:$0xff]
        %v1011 = vld [vmem:[%s7 + $0x8] sm:$0xff]
        %v1012 = vmul.f32 %v928, %v1010
        %v1013 = vmul.f32 %v954, %v1011
        %v1014 = vld [vmem:[%s8] sm:$0xff]
        %v1015 = vld [vmem:[%s8 + $0x8] sm:$0xff]
        %v1016 = vmul.f32 %v954, %v1014
        %v1017 = vmul.f32 %v928, %v1015
        %v1018 = vadd.f32 %v1012, %v1016
        %v1019 = vadd.f32 %v1013, %v1017
        %v1020 = vld [vmem:[%s9] sm:$0xff]
        %v1021 = vmul.f32 %v980, %v1020
        %1022 = vrot.lane.b32.xlu0 %v980, 64
        %v1023 = vpop.permute.xlu0 %1022
        %v1024 = vld [vmem:[%s10] sm:$0xff]
        %v1025 = vmul.f32 %v1023, %v1024
        %v1026 = vadd.f32 %v1021, %v1025
        %v1027 = vpack.c.bf16 %v1019, %v1018
        %v1028 = vpack.c.bf16 %v1026, %v1026
        %v1030 = vunpack.c.h.b16 %v1027
        %v1031 = vpack.c.b16 %v1030, %v1030
        %1032 = vrot.lane.b32.xlu0 %v1031, 32
        %v1033 = vpop.permute.xlu0 %1032
        %vm1034 = vcmask 261120
        %v1037 = vsel %vm1034, %v1027, %v1033
        %v1038 = vunpack.c.l.b16 %v1027
        %v1039 = vpack.c.b16 %v1038, %v1038
        %1040 = vrot.lane.b32.xlu0 %v1039, 96
        %v1041 = vpop.permute.xlu0 %1040
        %v1044 = vsel %vm1034, %v1041, %v1031
        %1045 = vrot.lane.b32.xlu0 %v1039, 64
        %v1046 = vpop.permute.xlu0 %1045
        %1047 = vrot.lane.b32.xlu0 %v1031, 96
        %v1048 = vpop.permute.xlu0 %1047
        %v1051 = vsel %vm1034, %v1046, %v1048
        %1052 = vrot.lane.b32.xlu0 %v1039, 32
        %v1053 = vpop.permute.xlu0 %1052
        %1054 = vrot.lane.b32.xlu0 %v1031, 64
        %v1055 = vpop.permute.xlu0 %1054
        %v1058 = vsel %vm1034, %v1053, %v1055
        %v1060 = vunpack.c.l.b16 %v1028
        %v1061 = vpack.c.b16 %v1060, %v1060
        %1062 = vrot.lane.b32.xlu0 %v1061, 96
        %v1063 = vpop.permute.xlu0 %1062
        %v1066 = vsel %vm1034, %v1028, %v1063
        %1067 = vrot.lane.b32.xlu0 %v1061, 64
        %v1068 = vpop.permute.xlu0 %1067
        %v1070 = vsel %vm1034, %v1063, %v1068
        %1072 = vrot.lane.b32.xlu0 %v1009, 64
        %v1073 = vpop.permute.xlu0 %1072
        %v1074 = vld [vmem:[%s11] sm:$0xff]
        %vm1075 = vcmask 523264
        %v1076 = vsel %vm1075, %v1037, 0
        %v1078 = vsel %vm1075, %v1066, 0
        %1080 = vmatpush.bf16.xpose.msra.mxu0 0
        %1081 = vmatpush.bf16.xpose.msra.mxu0 0
        %1082 = vmatpush.bf16.xpose.msra.mxu0 0
        %1083 = vmatpush.bf16.xpose.msra.mxu0 0
        %1084 = vmatpush.bf16.xpose.msra.mxu0 0
        %1085 = vmatpush.bf16.xpose.msra.mxu0 0
        %1086 = vmatpush.bf16.xpose.msra.mxu0 0
        %1087 = vmatpush.bf16.xpose.msra.mxu0 %v1078
        %1088 = vmatmul.bf16.gmra.mxu0 %v1076
        %v1089 = vpop.f32.mrf.mxu0
        %v1090 = vadd.f32 %v1074, %v1089
        %v1091 = vpop.f32.mrf.mxu0
        %1092 = vdwg.mxu0
        %v1093 = vsel %vm1075, %v1044, 0
        %1095 = vmatpush.bf16.xpose.msra.mxu0 0
        %1096 = vmatpush.bf16.xpose.msra.mxu0 0
        %1097 = vmatpush.bf16.xpose.msra.mxu0 0
        %1098 = vmatpush.bf16.xpose.msra.mxu0 0
        %1099 = vmatpush.bf16.xpose.msra.mxu0 0
        %1100 = vmatpush.bf16.xpose.msra.mxu0 0
        %1101 = vmatpush.bf16.xpose.msra.mxu0 0
        %1102 = vmatpush.bf16.xpose.msra.mxu0 %v1078
        %1103 = vmatmul.bf16.gmra.mxu0 %v1093
        %v1104 = vpop.f32.mrf.mxu0
        %v1105 = vadd.f32 %v1074, %v1104
        %v1106 = vpop.f32.mrf.mxu0
        %1107 = vdwg.mxu0
        %v1108 = vsel %vm1075, %v1051, 0
        %v1110 = vsel %vm1075, %v1070, 0
        %1112 = vmatpush.bf16.xpose.msra.mxu0 0
        %1113 = vmatpush.bf16.xpose.msra.mxu0 0
        %1114 = vmatpush.bf16.xpose.msra.mxu0 0
        %1115 = vmatpush.bf16.xpose.msra.mxu0 0
        %1116 = vmatpush.bf16.xpose.msra.mxu0 0
        %1117 = vmatpush.bf16.xpose.msra.mxu0 0
        %1118 = vmatpush.bf16.xpose.msra.mxu0 0
        %1119 = vmatpush.bf16.xpose.msra.mxu0 %v1110
        %1120 = vmatmul.bf16.gmra.mxu0 %v1108
        %v1121 = vpop.f32.mrf.mxu0
        %v1122 = vadd.f32 %v1074, %v1121
        %v1123 = vpop.f32.mrf.mxu0
        %1124 = vdwg.mxu0
        %v1125 = vsel %vm1075, %v1058, 0
        %1127 = vmatpush.bf16.xpose.msra.mxu0 0
        %1128 = vmatpush.bf16.xpose.msra.mxu0 0
        %1129 = vmatpush.bf16.xpose.msra.mxu0 0
        %1130 = vmatpush.bf16.xpose.msra.mxu0 0
        %1131 = vmatpush.bf16.xpose.msra.mxu0 0
        %1132 = vmatpush.bf16.xpose.msra.mxu0 0
        %1133 = vmatpush.bf16.xpose.msra.mxu0 0
        %1134 = vmatpush.bf16.xpose.msra.mxu0 %v1110
        %1135 = vmatmul.bf16.gmra.mxu0 %v1125
        %v1136 = vpop.f32.mrf.mxu0
        %v1137 = vadd.f32 %v1074, %v1136
        %v1138 = vpop.f32.mrf.mxu0
        %1139 = vdwg.mxu0
        %vm1140 = vcmask 64512
        %v1141 = vsel %vm1140, %v1090, -inf
        %1142 = vmax.xlane.f32.xlu0 %v1141
        %v1143 = vpop.xlane.xlu0 %1142
        %v1144 = vsel %vm1140, %v1105, -inf
        %1145 = vmax.xlane.f32.xlu0 %v1144
        %v1146 = vpop.xlane.xlu0 %1145
        %v1147 = vsel %vm1140, %v1122, -inf
        %1148 = vmax.xlane.f32.xlu0 %v1147
        %v1149 = vpop.xlane.xlu0 %1148
        %v1150 = vsel %vm1140, %v1137, -inf
        %1151 = vmax.xlane.f32.xlu0 %v1150
        %v1152 = vpop.xlane.xlu0 %1151
        %v1153 = vsub.f32 %v1090, %v1143
        %v1154 = vsub.f32 %v1105, %v1146
        %v1155 = vsub.f32 %v1122, %v1149
        %v1156 = vsub.f32 %v1137, %v1152
        %v1157 = vmul.f32 %v1153, 1.442695
        %v1158 = vpow.pop %v1157
        %v1159 = vmul.f32 %v1154, 1.442695
        %v1160 = vpow.pop %v1159
        %v1161 = vmul.f32 %v1155, 1.442695
        %v1162 = vpow.pop %v1161
        %v1163 = vmul.f32 %v1156, 1.442695
        %v1164 = vpow.pop %v1163
        %v1165 = vsel %vm1140, %v1158, 0.0
        %1166 = vadd.xlane.f32.xlu0 %v1165
        %v1167 = vpop.xlane.xlu0 %1166
        %v1168 = vsel %vm1140, %v1160, 0.0
        %1169 = vadd.xlane.f32.xlu0 %v1168
        %v1170 = vpop.xlane.xlu0 %1169
        %v1171 = vsel %vm1140, %v1162, 0.0
        %1172 = vadd.xlane.f32.xlu0 %v1171
        %v1173 = vpop.xlane.xlu0 %1172
        %v1174 = vsel %vm1140, %v1164, 0.0
        %1175 = vadd.xlane.f32.xlu0 %v1174
        %v1176 = vpop.xlane.xlu0 %1175
        %v1177 = vrcp.pop %v1167
        %v1178 = vrcp.pop %v1170
        %v1179 = vrcp.pop %v1173
        %v1180 = vrcp.pop %v1176
        %v1181 = vmul.f32 %v1158, %v1177
        %v1182 = vmul.f32 %v1160, %v1178
        %v1183 = vmul.f32 %v1162, %v1179
        %v1184 = vmul.f32 %v1164, %v1180
        %v1185 = vpack.c.bf16 %v1181, %v1181
        %v1186 = vpack.c.bf16 %v1182, %v1182
        %v1187 = vpack.c.bf16 %v1183, %v1183
        %v1188 = vpack.c.bf16 %v1184, %v1184
        %v1190 = vsel %vm1140, %v1185, 0
        %vm1192 = vcmask 1043456
        %v1194 = vsel %vm1192, %v1009, 0
        %1196 = vmatpush.bf16.msra.mxu0 0
        %1197 = vmatpush.bf16.msra.mxu0 0
        %1198 = vmatpush.bf16.msra.mxu0 0
        %1199 = vmatpush.bf16.msra.mxu0 0
        %1200 = vmatpush.bf16.msra.mxu0 0
        %1201 = vmatpush.bf16.msra.mxu0 0
        %1202 = vmatpush.bf16.msra.mxu0 0
        %1203 = vmatpush.bf16.msra.mxu0 %v1194
        %1204 = vmatmul.bf16.gmra.mxu0 %v1190
        %v1205 = vpop.f32.mrf.mxu0
        %v1206 = vadd.f32 0.0, %v1205
        %v1207 = vpop.f32.mrf.mxu0
        %1208 = vdwg.mxu0
        %v1210 = vsel %vm1140, %v1186, 0
        %1212 = vmatpush.bf16.msra.mxu0 0
        %1213 = vmatpush.bf16.msra.mxu0 0
        %1214 = vmatpush.bf16.msra.mxu0 0
        %1215 = vmatpush.bf16.msra.mxu0 0
        %1216 = vmatpush.bf16.msra.mxu0 0
        %1217 = vmatpush.bf16.msra.mxu0 0
        %1218 = vmatpush.bf16.msra.mxu0 0
        %1219 = vmatpush.bf16.msra.mxu0 %v1194
        %1220 = vmatmul.bf16.gmra.mxu0 %v1210
        %v1221 = vpop.f32.mrf.mxu0
        %v1222 = vadd.f32 0.0, %v1221
        %v1223 = vpop.f32.mrf.mxu0
        %1224 = vdwg.mxu0
        %v1226 = vsel %vm1140, %v1187, 0
        %v1229 = vsel %vm1192, %v1073, 0
        %1231 = vmatpush.bf16.msra.mxu0 0
        %1232 = vmatpush.bf16.msra.mxu0 0
        %1233 = vmatpush.bf16.msra.mxu0 0
        %1234 = vmatpush.bf16.msra.mxu0 0
        %1235 = vmatpush.bf16.msra.mxu0 0
        %1236 = vmatpush.bf16.msra.mxu0 0
        %1237 = vmatpush.bf16.msra.mxu0 0
        %1238 = vmatpush.bf16.msra.mxu0 %v1229
        %1239 = vmatmul.bf16.gmra.mxu0 %v1226
        %v1240 = vpop.f32.mrf.mxu0
        %v1241 = vadd.f32 0.0, %v1240
        %v1242 = vpop.f32.mrf.mxu0
        %1243 = vdwg.mxu0
        %v1245 = vsel %vm1140, %v1188, 0
        %1247 = vmatpush.bf16.msra.mxu0 0
        %1248 = vmatpush.bf16.msra.mxu0 0
        %1249 = vmatpush.bf16.msra.mxu0 0
        %1250 = vmatpush.bf16.msra.mxu0 0
        %1251 = vmatpush.bf16.msra.mxu0 0
        %1252 = vmatpush.bf16.msra.mxu0 0
        %1253 = vmatpush.bf16.msra.mxu0 0
        %1254 = vmatpush.bf16.msra.mxu0 %v1229
        %1255 = vmatmul.bf16.gmra.mxu0 %v1245
        %v1256 = vpop.f32.mrf.mxu0
        %v1257 = vadd.f32 0.0, %v1256
        %v1258 = vpop.f32.mrf.mxu0
        %1259 = vdwg.mxu0
        %1261 = vrot.lane.b32.xlu0 %v1222, 64
        %v1262 = vpop.permute.xlu0 %1261
        %1265 = vrot.lane.b32.xlu0 %v1257, 64
        %v1266 = vpop.permute.xlu0 %1265
        %v1268 = vsel %vm1075, %v1206, %v1262
        %v1269 = vsel %vm1075, %v1241, %v1266
        %v1270 = vpack.c.bf16 %v1268, %v1268
        %v1271 = vpack.c.bf16 %v1269, %v1269
        %v1272 = vld [vmem:[#allocation4] sm:$0xff]
        %v1273 = vld [vmem:[#allocation4 + $0x8] sm:$0xff]
        %v1274 = vld [vmem:[#allocation4 + $0x10] sm:$0xff]
        %v1275 = vld [vmem:[#allocation4 + $0x18] sm:$0xff]
        %v1276 = vld [vmem:[#allocation4 + $0x20] sm:$0xff]
        %v1277 = vld [vmem:[#allocation4 + $0x28] sm:$0xff]
        %v1278 = vld [vmem:[#allocation4 + $0x30] sm:$0xff]
        %v1279 = vld [vmem:[#allocation4 + $0x38] sm:$0xff]
        %v1280 = vld [vmem:[#allocation4 + $0x40] sm:$0xff]
        %v1281 = vld [vmem:[#allocation4 + $0x48] sm:$0xff]
        %v1282 = vld [vmem:[#allocation4 + $0x50] sm:$0xff]
        %v1283 = vld [vmem:[#allocation4 + $0x58] sm:$0xff]
        %v1284 = vld [vmem:[#allocation4 + $0x60] sm:$0xff]
        %v1285 = vld [vmem:[#allocation4 + $0x68] sm:$0xff]
        %v1286 = vld [vmem:[#allocation4 + $0x70] sm:$0xff]
        %v1287 = vld [vmem:[#allocation4 + $0x78] sm:$0xff]
        %v1288 = vld [vmem:[#allocation4 + $0x80] sm:$0xff]
        %v1289 = vld [vmem:[#allocation4 + $0x88] sm:$0xff]
        %v1290 = vld [vmem:[#allocation4 + $0x90] sm:$0xff]
        %v1291 = vld [vmem:[#allocation4 + $0x98] sm:$0xff]
        %v1292 = vld [vmem:[#allocation4 + $0xa0] sm:$0xff]
        %v1293 = vld [vmem:[#allocation4 + $0xa8] sm:$0xff]
        %v1294 = vld [vmem:[#allocation4 + $0xb0] sm:$0xff]
        %v1295 = vld [vmem:[#allocation4 + $0xb8] sm:$0xff]
        %v1296 = vld [vmem:[#allocation4 + $0xc0] sm:$0xff]
        %v1297 = vld [vmem:[#allocation4 + $0xc8] sm:$0xff]
        %v1298 = vld [vmem:[#allocation4 + $0xd0] sm:$0xff]
        %v1299 = vld [vmem:[#allocation4 + $0xd8] sm:$0xff]
        %v1300 = vld [vmem:[#allocation4 + $0xe0] sm:$0xff]
        %v1301 = vld [vmem:[#allocation4 + $0xe8] sm:$0xff]
        %v1302 = vld [vmem:[#allocation4 + $0xf0] sm:$0xff]
        %v1303 = vld [vmem:[#allocation4 + $0xf8] sm:$0xff]
        %v1336 = vunpack.c.l.b16 %v1272
        %v1337 = vunpack.c.h.b16 %v1272
        %v1338 = vunpack.c.l.b16 %v1273
        %v1339 = vunpack.c.h.b16 %v1273
        %v1340 = vunpack.c.l.b16 %v1274
        %v1341 = vunpack.c.h.b16 %v1274
        %v1342 = vunpack.c.l.b16 %v1275
        %v1343 = vunpack.c.h.b16 %v1275
        %v1344 = vunpack.c.l.b16 %v1276
        %v1345 = vunpack.c.h.b16 %v1276
        %v1346 = vunpack.c.l.b16 %v1277
        %v1347 = vunpack.c.h.b16 %v1277
        %v1348 = vunpack.c.l.b16 %v1278
        %v1349 = vunpack.c.h.b16 %v1278
        %v1350 = vunpack.c.l.b16 %v1279
        %v1351 = vunpack.c.h.b16 %v1279
        %v1352 = vunpack.c.l.b16 %v1280
        %v1353 = vunpack.c.h.b16 %v1280
        %v1354 = vunpack.c.l.b16 %v1281
        %v1355 = vunpack.c.h.b16 %v1281
        %v1356 = vunpack.c.l.b16 %v1282
        %v1357 = vunpack.c.h.b16 %v1282
        %v1358 = vunpack.c.l.b16 %v1283
        %v1359 = vunpack.c.h.b16 %v1283
        %v1360 = vunpack.c.l.b16 %v1284
        %v1361 = vunpack.c.h.b16 %v1284
        %v1362 = vunpack.c.l.b16 %v1285
        %v1363 = vunpack.c.h.b16 %v1285
        %v1364 = vunpack.c.l.b16 %v1286
        %v1365 = vunpack.c.h.b16 %v1286
        %v1366 = vunpack.c.l.b16 %v1287
        %v1367 = vunpack.c.h.b16 %v1287
        %v1368 = vunpack.c.l.b16 %v1288
        %v1369 = vunpack.c.h.b16 %v1288
        %v1370 = vunpack.c.l.b16 %v1289
        %v1371 = vunpack.c.h.b16 %v1289
        %v1372 = vunpack.c.l.b16 %v1290
        %v1373 = vunpack.c.h.b16 %v1290
        %v1374 = vunpack.c.l.b16 %v1291
        %v1375 = vunpack.c.h.b16 %v1291
        %v1376 = vunpack.c.l.b16 %v1292
        %v1377 = vunpack.c.h.b16 %v1292
        %v1378 = vunpack.c.l.b16 %v1293
        %v1379 = vunpack.c.h.b16 %v1293
        %v1380 = vunpack.c.l.b16 %v1294
        %v1381 = vunpack.c.h.b16 %v1294
        %v1382 = vunpack.c.l.b16 %v1295
        %v1383 = vunpack.c.h.b16 %v1295
        %v1384 = vunpack.c.l.b16 %v1296
        %v1385 = vunpack.c.h.b16 %v1296
        %v1386 = vunpack.c.l.b16 %v1297
        %v1387 = vunpack.c.h.b16 %v1297
        %v1388 = vunpack.c.l.b16 %v1298
        %v1389 = vunpack.c.h.b16 %v1298
        %v1390 = vunpack.c.l.b16 %v1299
        %v1391 = vunpack.c.h.b16 %v1299
        %v1392 = vunpack.c.l.b16 %v1300
        %v1393 = vunpack.c.h.b16 %v1300
        %v1394 = vunpack.c.l.b16 %v1301
        %v1395 = vunpack.c.h.b16 %v1301
        %v1396 = vunpack.c.l.b16 %v1302
        %v1397 = vunpack.c.h.b16 %v1302
        %v1398 = vunpack.c.l.b16 %v1303
        %v1399 = vunpack.c.h.b16 %v1303
        %v1400 = vpack.c.b16 %v1338, %v1336
        %v1401 = vpack.c.b16 %v1339, %v1337
        %v1402 = vpack.c.b16 %v1342, %v1340
        %v1403 = vpack.c.b16 %v1343, %v1341
        %v1404 = vpack.c.b16 %v1346, %v1344
        %v1405 = vpack.c.b16 %v1347, %v1345
        %v1406 = vpack.c.b16 %v1350, %v1348
        %v1407 = vpack.c.b16 %v1351, %v1349
        %v1408 = vpack.c.b16 %v1354, %v1352
        %v1409 = vpack.c.b16 %v1355, %v1353
        %v1410 = vpack.c.b16 %v1358, %v1356
        %v1411 = vpack.c.b16 %v1359, %v1357
        %v1412 = vpack.c.b16 %v1362, %v1360
        %v1413 = vpack.c.b16 %v1363, %v1361
        %v1414 = vpack.c.b16 %v1366, %v1364
        %v1415 = vpack.c.b16 %v1367, %v1365
        %v1416 = vpack.c.b16 %v1370, %v1368
        %v1417 = vpack.c.b16 %v1371, %v1369
        %v1418 = vpack.c.b16 %v1374, %v1372
        %v1419 = vpack.c.b16 %v1375, %v1373
        %v1420 = vpack.c.b16 %v1378, %v1376
        %v1421 = vpack.c.b16 %v1379, %v1377
        %v1422 = vpack.c.b16 %v1382, %v1380
        %v1423 = vpack.c.b16 %v1383, %v1381
        %v1424 = vpack.c.b16 %v1386, %v1384
        %v1425 = vpack.c.b16 %v1387, %v1385
        %v1426 = vpack.c.b16 %v1390, %v1388
        %v1427 = vpack.c.b16 %v1391, %v1389
        %v1428 = vpack.c.b16 %v1394, %v1392
        %v1429 = vpack.c.b16 %v1395, %v1393
        %v1430 = vpack.c.b16 %v1398, %v1396
        %v1431 = vpack.c.b16 %v1399, %v1397
        %1464 = vmatpush.bf16.msra.mxu0 %v1414
        %1465 = vmatpush.bf16.msra.mxu0 %v1412
        %1466 = vmatpush.bf16.msra.mxu0 %v1410
        %1467 = vmatpush.bf16.msra.mxu0 %v1408
        %1468 = vmatpush.bf16.msra.mxu0 %v1406
        %1469 = vmatpush.bf16.msra.mxu0 %v1404
        %1470 = vmatpush.bf16.msra.mxu0 %v1402
        %1471 = vmatpush.bf16.msra.mxu0 %v1400
        %1472 = vmatmul.bf16.gmra.mxu0 %v1270
        %v1473 = vpop.f32.mrf.mxu0
        %v1474 = vadd.f32 %v483, %v1473
        %v1475 = vpop.f32.mrf.mxu0
        %1476 = vdwg.mxu0
        %1477 = vmatpush.bf16.msra.mxu0 %v1430
        %1478 = vmatpush.bf16.msra.mxu0 %v1428
        %1479 = vmatpush.bf16.msra.mxu0 %v1426
        %1480 = vmatpush.bf16.msra.mxu0 %v1424
        %1481 = vmatpush.bf16.msra.mxu0 %v1422
        %1482 = vmatpush.bf16.msra.mxu0 %v1420
        %1483 = vmatpush.bf16.msra.mxu0 %v1418
        %1484 = vmatpush.bf16.msra.mxu0 %v1416
        %1485 = vmatmul.bf16.gmra.mxu0 %v1271
        %v1486 = vpop.f32.mrf.mxu0
        %v1487 = vadd.f32 %v1474, %v1486
        %v1488 = vpop.f32.mrf.mxu0
        %1489 = vdwg.mxu0
        %1490 = vmatpush.bf16.msra.mxu0 %v1415
        %1491 = vmatpush.bf16.msra.mxu0 %v1413
        %1492 = vmatpush.bf16.msra.mxu0 %v1411
        %1493 = vmatpush.bf16.msra.mxu0 %v1409
        %1494 = vmatpush.bf16.msra.mxu0 %v1407
        %1495 = vmatpush.bf16.msra.mxu0 %v1405
        %1496 = vmatpush.bf16.msra.mxu0 %v1403
        %1497 = vmatpush.bf16.msra.mxu0 %v1401
        %1498 = vmatmul.bf16.gmra.mxu0 %v1270
        %v1499 = vpop.f32.mrf.mxu0
        %v1500 = vadd.f32 %v484, %v1499
        %v1501 = vpop.f32.mrf.mxu0
        %1502 = vdwg.mxu0
        %1503 = vmatpush.bf16.msra.mxu0 %v1431
        %1504 = vmatpush.bf16.msra.mxu0 %v1429
        %1505 = vmatpush.bf16.msra.mxu0 %v1427
        %1506 = vmatpush.bf16.msra.mxu0 %v1425
        %1507 = vmatpush.bf16.msra.mxu0 %v1423
        %1508 = vmatpush.bf16.msra.mxu0 %v1421
        %1509 = vmatpush.bf16.msra.mxu0 %v1419
        %1510 = vmatpush.bf16.msra.mxu0 %v1417
        %1511 = vmatmul.bf16.gmra.mxu0 %v1271
        %v1512 = vpop.f32.mrf.mxu0
        %v1513 = vadd.f32 %v1500, %v1512
        %v1514 = vpop.f32.mrf.mxu0
        %1515 = vdwg.mxu0
        %v1516 = vmul.f32 %v1487, %v1487
        %v1517 = vmul.f32 %v1513, %v1513
        %v1518 = vadd.f32 %v1516, %v1517
        %1519 = vadd.xlane.f32.xlu0 %v1518
        %v1520 = vpop.xlane.xlu0 %1519
        %v1521 = vmul.f32 %v1520, %v496
        %v1522 = vadd.f32 %v1521, 1e-05
        %v1523 = vrsqrt.pop %v1522
        %v1524 = vmul.f32 %v1523, %v1522
        %v1525 = vmul.f32 %v1524, %v1523
        %v1526 = vmul.f32 0.5, %v1525
        %v1527 = vsub.f32 1.5, %v1526
        %v1528 = vmul.f32 %v1523, %v1527
        %vm1529 = vweird.f32 %v1522
        %vm1530 = vweird.f32 %v1523
        %vm1531 = vmor %vm1529, %vm1530
        %v1532 = vsel %vm1531, %v1523, %v1528
        %v1533 = vmul.f32 %v1487, %v1532
        %v1534 = vmul.f32 %v1513, %v1532
        %v1535 = vld [vmem:[%s4] sm:$0x3]
        %v1537 = vperm.slane %v1535, 0
        %v1538 = vperm.slane %v1535, 1
        %v1541 = vmul.f32 %v1533, %v1537
        %v1542 = vmul.f32 %v1534, %v1538
        %v1543 = vpack.c.bf16 %v1541, %v1541
        %v1544 = vpack.c.bf16 %v1542, %v1542
        %v1545 = vld [vmem:[#allocation6] sm:$0xff]
        %v1546 = vld [vmem:[#allocation6 + $0x8] sm:$0xff]
        %v1547 = vld [vmem:[#allocation6 + $0x10] sm:$0xff]
        %v1548 = vld [vmem:[#allocation6 + $0x18] sm:$0xff]
        %v1549 = vld [vmem:[#allocation6 + $0x20] sm:$0xff]
        %v1550 = vld [vmem:[#allocation6 + $0x28] sm:$0xff]
        %v1551 = vld [vmem:[#allocation6 + $0x30] sm:$0xff]
        %v1552 = vld [vmem:[#allocation6 + $0x38] sm:$0xff]
        %v1553 = vld [vmem:[#allocation6 + $0x40] sm:$0xff]
        %v1554 = vld [vmem:[#allocation6 + $0x48] sm:$0xff]
        %v1555 = vld [vmem:[#allocation6 + $0x50] sm:$0xff]
        %v1556 = vld [vmem:[#allocation6 + $0x58] sm:$0xff]
        %v1557 = vld [vmem:[#allocation6 + $0x60] sm:$0xff]
        %v1558 = vld [vmem:[#allocation6 + $0x68] sm:$0xff]
        %v1559 = vld [vmem:[#allocation6 + $0x70] sm:$0xff]
        %v1560 = vld [vmem:[#allocation6 + $0x78] sm:$0xff]
        %v1561 = vld [vmem:[#allocation6 + $0x80] sm:$0xff]
        %v1562 = vld [vmem:[#allocation6 + $0x88] sm:$0xff]
        %v1563 = vld [vmem:[#allocation6 + $0x90] sm:$0xff]
        %v1564 = vld [vmem:[#allocation6 + $0x98] sm:$0xff]
        %v1565 = vld [vmem:[#allocation6 + $0xa0] sm:$0xff]
        %v1566 = vld [vmem:[#allocation6 + $0xa8] sm:$0xff]
        %v1567 = vld [vmem:[#allocation6 + $0xb0] sm:$0xff]
        %v1568 = vld [vmem:[#allocation6 + $0xb8] sm:$0xff]
        %v1569 = vld [vmem:[#allocation6 + $0xc0] sm:$0xff]
        %v1570 = vld [vmem:[#allocation6 + $0xc8] sm:$0xff]
        %v1571 = vld [vmem:[#allocation6 + $0xd0] sm:$0xff]
        %v1572 = vld [vmem:[#allocation6 + $0xd8] sm:$0xff]
        %v1573 = vld [vmem:[#allocation6 + $0xe0] sm:$0xff]
        %v1574 = vld [vmem:[#allocation6 + $0xe8] sm:$0xff]
        %v1575 = vld [vmem:[#allocation6 + $0xf0] sm:$0xff]
        %v1576 = vld [vmem:[#allocation6 + $0xf8] sm:$0xff]
        %v1577 = vld [vmem:[#allocation6 + $0x100] sm:$0xff]
        %v1578 = vld [vmem:[#allocation6 + $0x108] sm:$0xff]
        %v1579 = vld [vmem:[#allocation6 + $0x110] sm:$0xff]
        %v1580 = vld [vmem:[#allocation6 + $0x118] sm:$0xff]
        %v1581 = vld [vmem:[#allocation6 + $0x120] sm:$0xff]
        %v1582 = vld [vmem:[#allocation6 + $0x128] sm:$0xff]
        %v1583 = vld [vmem:[#allocation6 + $0x130] sm:$0xff]
        %v1584 = vld [vmem:[#allocation6 + $0x138] sm:$0xff]
        %v1585 = vld [vmem:[#allocation6 + $0x140] sm:$0xff]
        %v1586 = vld [vmem:[#allocation6 + $0x148] sm:$0xff]
        %v1587 = vld [vmem:[#allocation6 + $0x150] sm:$0xff]
        %v1588 = vld [vmem:[#allocation6 + $0x158] sm:$0xff]
        %v1589 = vld [vmem:[#allocation6 + $0x160] sm:$0xff]
        %v1590 = vld [vmem:[#allocation6 + $0x168] sm:$0xff]
        %v1591 = vld [vmem:[#allocation6 + $0x170] sm:$0xff]
        %v1592 = vld [vmem:[#allocation6 + $0x178] sm:$0xff]
        %v1593 = vld [vmem:[#allocation6 + $0x180] sm:$0xff]
        %v1594 = vld [vmem:[#allocation6 + $0x188] sm:$0xff]
        %v1595 = vld [vmem:[#allocation6 + $0x190] sm:$0xff]
        %v1596 = vld [vmem:[#allocation6 + $0x198] sm:$0xff]
        %v1597 = vld [vmem:[#allocation6 + $0x1a0] sm:$0xff]
        %v1598 = vld [vmem:[#allocation6 + $0x1a8] sm:$0xff]
        %v1599 = vld [vmem:[#allocation6 + $0x1b0] sm:$0xff]
        %v1600 = vld [vmem:[#allocation6 + $0x1b8] sm:$0xff]
        %v1601 = vld [vmem:[#allocation6 + $0x1c0] sm:$0xff]
        %v1602 = vld [vmem:[#allocation6 + $0x1c8] sm:$0xff]
        %v1603 = vld [vmem:[#allocation6 + $0x1d0] sm:$0xff]
        %v1604 = vld [vmem:[#allocation6 + $0x1d8] sm:$0xff]
        %v1605 = vld [vmem:[#allocation6 + $0x1e0] sm:$0xff]
        %v1606 = vld [vmem:[#allocation6 + $0x1e8] sm:$0xff]
        %v1607 = vld [vmem:[#allocation6 + $0x1f0] sm:$0xff]
        %v1608 = vld [vmem:[#allocation6 + $0x1f8] sm:$0xff]
        %v1609 = vld [vmem:[#allocation6 + $0x200] sm:$0xff]
        %v1610 = vld [vmem:[#allocation6 + $0x208] sm:$0xff]
        %v1611 = vld [vmem:[#allocation6 + $0x210] sm:$0xff]
        %v1612 = vld [vmem:[#allocation6 + $0x218] sm:$0xff]
        %v1613 = vld [vmem:[#allocation6 + $0x220] sm:$0xff]
        %v1614 = vld [vmem:[#allocation6 + $0x228] sm:$0xff]
        %v1615 = vld [vmem:[#allocation6 + $0x230] sm:$0xff]
        %v1616 = vld [vmem:[#allocation6 + $0x238] sm:$0xff]
        %v1617 = vld [vmem:[#allocation6 + $0x240] sm:$0xff]
        %v1618 = vld [vmem:[#allocation6 + $0x248] sm:$0xff]
        %v1619 = vld [vmem:[#allocation6 + $0x250] sm:$0xff]
        %v1620 = vld [vmem:[#allocation6 + $0x258] sm:$0xff]
        %v1621 = vld [vmem:[#allocation6 + $0x260] sm:$0xff]
        %v1622 = vld [vmem:[#allocation6 + $0x268] sm:$0xff]
        %v1623 = vld [vmem:[#allocation6 + $0x270] sm:$0xff]
        %v1624 = vld [vmem:[#allocation6 + $0x278] sm:$0xff]
        %v1625 = vld [vmem:[#allocation6 + $0x280] sm:$0xff]
        %v1626 = vld [vmem:[#allocation6 + $0x288] sm:$0xff]
        %v1627 = vld [vmem:[#allocation6 + $0x290] sm:$0xff]
        %v1628 = vld [vmem:[#allocation6 + $0x298] sm:$0xff]
        %v1629 = vld [vmem:[#allocation6 + $0x2a0] sm:$0xff]
        %v1630 = vld [vmem:[#allocation6 + $0x2a8] sm:$0xff]
        %v1631 = vld [vmem:[#allocation6 + $0x2b0] sm:$0xff]
        %v1632 = vld [vmem:[#allocation6 + $0x2b8] sm:$0xff]
        %v1633 = vld [vmem:[#allocation6 + $0x2c0] sm:$0xff]
        %v1634 = vld [vmem:[#allocation6 + $0x2c8] sm:$0xff]
        %v1635 = vld [vmem:[#allocation6 + $0x2d0] sm:$0xff]
        %v1636 = vld [vmem:[#allocation6 + $0x2d8] sm:$0xff]
        %v1637 = vld [vmem:[#allocation6 + $0x2e0] sm:$0xff]
        %v1638 = vld [vmem:[#allocation6 + $0x2e8] sm:$0xff]
        %v1639 = vld [vmem:[#allocation6 + $0x2f0] sm:$0xff]
        %v1640 = vld [vmem:[#allocation6 + $0x2f8] sm:$0xff]
        %v1641 = vld [vmem:[#allocation6 + $0x300] sm:$0xff]
        %v1642 = vld [vmem:[#allocation6 + $0x308] sm:$0xff]
        %v1643 = vld [vmem:[#allocation6 + $0x310] sm:$0xff]
        %v1644 = vld [vmem:[#allocation6 + $0x318] sm:$0xff]
        %v1645 = vld [vmem:[#allocation6 + $0x320] sm:$0xff]
        %v1646 = vld [vmem:[#allocation6 + $0x328] sm:$0xff]
        %v1647 = vld [vmem:[#allocation6 + $0x330] sm:$0xff]
        %v1648 = vld [vmem:[#allocation6 + $0x338] sm:$0xff]
        %v1649 = vld [vmem:[#allocation6 + $0x340] sm:$0xff]
        %v1650 = vld [vmem:[#allocation6 + $0x348] sm:$0xff]
        %v1651 = vld [vmem:[#allocation6 + $0x350] sm:$0xff]
        %v1652 = vld [vmem:[#allocation6 + $0x358] sm:$0xff]
        %v1653 = vld [vmem:[#allocation6 + $0x360] sm:$0xff]
        %v1654 = vld [vmem:[#allocation6 + $0x368] sm:$0xff]
        %v1655 = vld [vmem:[#allocation6 + $0x370] sm:$0xff]
        %v1656 = vld [vmem:[#allocation6 + $0x378] sm:$0xff]
        %v1657 = vld [vmem:[#allocation6 + $0x380] sm:$0xff]
        %v1658 = vld [vmem:[#allocation6 + $0x388] sm:$0xff]
        %v1659 = vld [vmem:[#allocation6 + $0x390] sm:$0xff]
        %v1660 = vld [vmem:[#allocation6 + $0x398] sm:$0xff]
        %v1661 = vld [vmem:[#allocation6 + $0x3a0] sm:$0xff]
        %v1662 = vld [vmem:[#allocation6 + $0x3a8] sm:$0xff]
        %v1663 = vld [vmem:[#allocation6 + $0x3b0] sm:$0xff]
        %v1664 = vld [vmem:[#allocation6 + $0x3b8] sm:$0xff]
        %v1665 = vld [vmem:[#allocation6 + $0x3c0] sm:$0xff]
        %v1666 = vld [vmem:[#allocation6 + $0x3c8] sm:$0xff]
        %v1667 = vld [vmem:[#allocation6 + $0x3d0] sm:$0xff]
        %v1668 = vld [vmem:[#allocation6 + $0x3d8] sm:$0xff]
        %v1669 = vld [vmem:[#allocation6 + $0x3e0] sm:$0xff]
        %v1670 = vld [vmem:[#allocation6 + $0x3e8] sm:$0xff]
        %v1671 = vld [vmem:[#allocation6 + $0x3f0] sm:$0xff]
        %v1672 = vld [vmem:[#allocation6 + $0x3f8] sm:$0xff]
        %v1801 = vunpack.c.l.b16 %v1545
        %v1802 = vunpack.c.h.b16 %v1545
        %v1803 = vunpack.c.l.b16 %v1546
        %v1804 = vunpack.c.h.b16 %v1546
        %v1805 = vunpack.c.l.b16 %v1547
        %v1806 = vunpack.c.h.b16 %v1547
        %v1807 = vunpack.c.l.b16 %v1548
        %v1808 = vunpack.c.h.b16 %v1548
        %v1809 = vunpack.c.l.b16 %v1549
        %v1810 = vunpack.c.h.b16 %v1549
        %v1811 = vunpack.c.l.b16 %v1550
        %v1812 = vunpack.c.h.b16 %v1550
        %v1813 = vunpack.c.l.b16 %v1551
        %v1814 = vunpack.c.h.b16 %v1551
        %v1815 = vunpack.c.l.b16 %v1552
        %v1816 = vunpack.c.h.b16 %v1552
        %v1817 = vunpack.c.l.b16 %v1553
        %v1818 = vunpack.c.h.b16 %v1553
        %v1819 = vunpack.c.l.b16 %v1554
        %v1820 = vunpack.c.h.b16 %v1554
        %v1821 = vunpack.c.l.b16 %v1555
        %v1822 = vunpack.c.h.b16 %v1555
        %v1823 = vunpack.c.l.b16 %v1556
        %v1824 = vunpack.c.h.b16 %v1556
        %v1825 = vunpack.c.l.b16 %v1557
        %v1826 = vunpack.c.h.b16 %v1557
        %v1827 = vunpack.c.l.b16 %v1558
        %v1828 = vunpack.c.h.b16 %v1558
        %v1829 = vunpack.c.l.b16 %v1559
        %v1830 = vunpack.c.h.b16 %v1559
        %v1831 = vunpack.c.l.b16 %v1560
        %v1832 = vunpack.c.h.b16 %v1560
        %v1833 = vunpack.c.l.b16 %v1561
        %v1834 = vunpack.c.h.b16 %v1561
        %v1835 = vunpack.c.l.b16 %v1562
        %v1836 = vunpack.c.h.b16 %v1562
        %v1837 = vunpack.c.l.b16 %v1563
        %v1838 = vunpack.c.h.b16 %v1563
        %v1839 = vunpack.c.l.b16 %v1564
        %v1840 = vunpack.c.h.b16 %v1564
        %v1841 = vunpack.c.l.b16 %v1565
        %v1842 = vunpack.c.h.b16 %v1565
        %v1843 = vunpack.c.l.b16 %v1566
        %v1844 = vunpack.c.h.b16 %v1566
        %v1845 = vunpack.c.l.b16 %v1567
        %v1846 = vunpack.c.h.b16 %v1567
        %v1847 = vunpack.c.l.b16 %v1568
        %v1848 = vunpack.c.h.b16 %v1568
        %v1849 = vunpack.c.l.b16 %v1569
        %v1850 = vunpack.c.h.b16 %v1569
        %v1851 = vunpack.c.l.b16 %v1570
        %v1852 = vunpack.c.h.b16 %v1570
        %v1853 = vunpack.c.l.b16 %v1571
        %v1854 = vunpack.c.h.b16 %v1571
        %v1855 = vunpack.c.l.b16 %v1572
        %v1856 = vunpack.c.h.b16 %v1572
        %v1857 = vunpack.c.l.b16 %v1573
        %v1858 = vunpack.c.h.b16 %v1573
        %v1859 = vunpack.c.l.b16 %v1574
        %v1860 = vunpack.c.h.b16 %v1574
        %v1861 = vunpack.c.l.b16 %v1575
        %v1862 = vunpack.c.h.b16 %v1575
        %v1863 = vunpack.c.l.b16 %v1576
        %v1864 = vunpack.c.h.b16 %v1576
        %v1865 = vunpack.c.l.b16 %v1577
        %v1866 = vunpack.c.h.b16 %v1577
        %v1867 = vunpack.c.l.b16 %v1578
        %v1868 = vunpack.c.h.b16 %v1578
        %v1869 = vunpack.c.l.b16 %v1579
        %v1870 = vunpack.c.h.b16 %v1579
        %v1871 = vunpack.c.l.b16 %v1580
        %v1872 = vunpack.c.h.b16 %v1580
        %v1873 = vunpack.c.l.b16 %v1581
        %v1874 = vunpack.c.h.b16 %v1581
        %v1875 = vunpack.c.l.b16 %v1582
        %v1876 = vunpack.c.h.b16 %v1582
        %v1877 = vunpack.c.l.b16 %v1583
        %v1878 = vunpack.c.h.b16 %v1583
        %v1879 = vunpack.c.l.b16 %v1584
        %v1880 = vunpack.c.h.b16 %v1584
        %v1881 = vunpack.c.l.b16 %v1585
        %v1882 = vunpack.c.h.b16 %v1585
        %v1883 = vunpack.c.l.b16 %v1586
        %v1884 = vunpack.c.h.b16 %v1586
        %v1885 = vunpack.c.l.b16 %v1587
        %v1886 = vunpack.c.h.b16 %v1587
        %v1887 = vunpack.c.l.b16 %v1588
        %v1888 = vunpack.c.h.b16 %v1588
        %v1889 = vunpack.c.l.b16 %v1589
        %v1890 = vunpack.c.h.b16 %v1589
        %v1891 = vunpack.c.l.b16 %v1590
        %v1892 = vunpack.c.h.b16 %v1590
        %v1893 = vunpack.c.l.b16 %v1591
        %v1894 = vunpack.c.h.b16 %v1591
        %v1895 = vunpack.c.l.b16 %v1592
        %v1896 = vunpack.c.h.b16 %v1592
        %v1897 = vunpack.c.l.b16 %v1593
        %v1898 = vunpack.c.h.b16 %v1593
        %v1899 = vunpack.c.l.b16 %v1594
        %v1900 = vunpack.c.h.b16 %v1594
        %v1901 = vunpack.c.l.b16 %v1595
        %v1902 = vunpack.c.h.b16 %v1595
        %v1903 = vunpack.c.l.b16 %v1596
        %v1904 = vunpack.c.h.b16 %v1596
        %v1905 = vunpack.c.l.b16 %v1597
        %v1906 = vunpack.c.h.b16 %v1597
        %v1907 = vunpack.c.l.b16 %v1598
        %v1908 = vunpack.c.h.b16 %v1598
        %v1909 = vunpack.c.l.b16 %v1599
        %v1910 = vunpack.c.h.b16 %v1599
        %v1911 = vunpack.c.l.b16 %v1600
        %v1912 = vunpack.c.h.b16 %v1600
        %v1913 = vunpack.c.l.b16 %v1601
        %v1914 = vunpack.c.h.b16 %v1601
        %v1915 = vunpack.c.l.b16 %v1602
        %v1916 = vunpack.c.h.b16 %v1602
        %v1917 = vunpack.c.l.b16 %v1603
        %v1918 = vunpack.c.h.b16 %v1603
        %v1919 = vunpack.c.l.b16 %v1604
        %v1920 = vunpack.c.h.b16 %v1604
        %v1921 = vunpack.c.l.b16 %v1605
        %v1922 = vunpack.c.h.b16 %v1605
        %v1923 = vunpack.c.l.b16 %v1606
        %v1924 = vunpack.c.h.b16 %v1606
        %v1925 = vunpack.c.l.b16 %v1607
        %v1926 = vunpack.c.h.b16 %v1607
        %v1927 = vunpack.c.l.b16 %v1608
        %v1928 = vunpack.c.h.b16 %v1608
        %v1929 = vunpack.c.l.b16 %v1609
        %v1930 = vunpack.c.h.b16 %v1609
        %v1931 = vunpack.c.l.b16 %v1610
        %v1932 = vunpack.c.h.b16 %v1610
        %v1933 = vunpack.c.l.b16 %v1611
        %v1934 = vunpack.c.h.b16 %v1611
        %v1935 = vunpack.c.l.b16 %v1612
        %v1936 = vunpack.c.h.b16 %v1612
        %v1937 = vunpack.c.l.b16 %v1613
        %v1938 = vunpack.c.h.b16 %v1613
        %v1939 = vunpack.c.l.b16 %v1614
        %v1940 = vunpack.c.h.b16 %v1614
        %v1941 = vunpack.c.l.b16 %v1615
        %v1942 = vunpack.c.h.b16 %v1615
        %v1943 = vunpack.c.l.b16 %v1616
        %v1944 = vunpack.c.h.b16 %v1616
        %v1945 = vunpack.c.l.b16 %v1617
        %v1946 = vunpack.c.h.b16 %v1617
        %v1947 = vunpack.c.l.b16 %v1618
        %v1948 = vunpack.c.h.b16 %v1618
        %v1949 = vunpack.c.l.b16 %v1619
        %v1950 = vunpack.c.h.b16 %v1619
        %v1951 = vunpack.c.l.b16 %v1620
        %v1952 = vunpack.c.h.b16 %v1620
        %v1953 = vunpack.c.l.b16 %v1621
        %v1954 = vunpack.c.h.b16 %v1621
        %v1955 = vunpack.c.l.b16 %v1622
        %v1956 = vunpack.c.h.b16 %v1622
        %v1957 = vunpack.c.l.b16 %v1623
        %v1958 = vunpack.c.h.b16 %v1623
        %v1959 = vunpack.c.l.b16 %v1624
        %v1960 = vunpack.c.h.b16 %v1624
        %v1961 = vunpack.c.l.b16 %v1625
        %v1962 = vunpack.c.h.b16 %v1625
        %v1963 = vunpack.c.l.b16 %v1626
        %v1964 = vunpack.c.h.b16 %v1626
        %v1965 = vunpack.c.l.b16 %v1627
        %v1966 = vunpack.c.h.b16 %v1627
        %v1967 = vunpack.c.l.b16 %v1628
        %v1968 = vunpack.c.h.b16 %v1628
        %v1969 = vunpack.c.l.b16 %v1629
        %v1970 = vunpack.c.h.b16 %v1629
        %v1971 = vunpack.c.l.b16 %v1630
        %v1972 = vunpack.c.h.b16 %v1630
        %v1973 = vunpack.c.l.b16 %v1631
        %v1974 = vunpack.c.h.b16 %v1631
        %v1975 = vunpack.c.l.b16 %v1632
        %v1976 = vunpack.c.h.b16 %v1632
        %v1977 = vunpack.c.l.b16 %v1633
        %v1978 = vunpack.c.h.b16 %v1633
        %v1979 = vunpack.c.l.b16 %v1634
        %v1980 = vunpack.c.h.b16 %v1634
        %v1981 = vunpack.c.l.b16 %v1635
        %v1982 = vunpack.c.h.b16 %v1635
        %v1983 = vunpack.c.l.b16 %v1636
        %v1984 = vunpack.c.h.b16 %v1636
        %v1985 = vunpack.c.l.b16 %v1637
        %v1986 = vunpack.c.h.b16 %v1637
        %v1987 = vunpack.c.l.b16 %v1638
        %v1988 = vunpack.c.h.b16 %v1638
        %v1989 = vunpack.c.l.b16 %v1639
        %v1990 = vunpack.c.h.b16 %v1639
        %v1991 = vunpack.c.l.b16 %v1640
        %v1992 = vunpack.c.h.b16 %v1640
        %v1993 = vunpack.c.l.b16 %v1641
        %v1994 = vunpack.c.h.b16 %v1641
        %v1995 = vunpack.c.l.b16 %v1642
        %v1996 = vunpack.c.h.b16 %v1642
        %v1997 = vunpack.c.l.b16 %v1643
        %v1998 = vunpack.c.h.b16 %v1643
        %v1999 = vunpack.c.l.b16 %v1644
        %v2000 = vunpack.c.h.b16 %v1644
        %v2001 = vunpack.c.l.b16 %v1645
        %v2002 = vunpack.c.h.b16 %v1645
        %v2003 = vunpack.c.l.b16 %v1646
        %v2004 = vunpack.c.h.b16 %v1646
        %v2005 = vunpack.c.l.b16 %v1647
        %v2006 = vunpack.c.h.b16 %v1647
        %v2007 = vunpack.c.l.b16 %v1648
        %v2008 = vunpack.c.h.b16 %v1648
        %v2009 = vunpack.c.l.b16 %v1649
        %v2010 = vunpack.c.h.b16 %v1649
        %v2011 = vunpack.c.l.b16 %v1650
        %v2012 = vunpack.c.h.b16 %v1650
        %v2013 = vunpack.c.l.b16 %v1651
        %v2014 = vunpack.c.h.b16 %v1651
        %v2015 = vunpack.c.l.b16 %v1652
        %v2016 = vunpack.c.h.b16 %v1652
        %v2017 = vunpack.c.l.b16 %v1653
        %v2018 = vunpack.c.h.b16 %v1653
        %v2019 = vunpack.c.l.b16 %v1654
        %v2020 = vunpack.c.h.b16 %v1654
        %v2021 = vunpack.c.l.b16 %v1655
        %v2022 = vunpack.c.h.b16 %v1655
        %v2023 = vunpack.c.l.b16 %v1656
        %v2024 = vunpack.c.h.b16 %v1656
        %v2025 = vunpack.c.l.b16 %v1657
        %v2026 = vunpack.c.h.b16 %v1657
        %v2027 = vunpack.c.l.b16 %v1658
        %v2028 = vunpack.c.h.b16 %v1658
        %v2029 = vunpack.c.l.b16 %v1659
        %v2030 = vunpack.c.h.b16 %v1659
        %v2031 = vunpack.c.l.b16 %v1660
        %v2032 = vunpack.c.h.b16 %v1660
        %v2033 = vunpack.c.l.b16 %v1661
        %v2034 = vunpack.c.h.b16 %v1661
        %v2035 = vunpack.c.l.b16 %v1662
        %v2036 = vunpack.c.h.b16 %v1662
        %v2037 = vunpack.c.l.b16 %v1663
        %v2038 = vunpack.c.h.b16 %v1663
        %v2039 = vunpack.c.l.b16 %v1664
        %v2040 = vunpack.c.h.b16 %v1664
        %v2041 = vunpack.c.l.b16 %v1665
        %v2042 = vunpack.c.h.b16 %v1665
        %v2043 = vunpack.c.l.b16 %v1666
        %v2044 = vunpack.c.h.b16 %v1666
        %v2045 = vunpack.c.l.b16 %v1667
        %v2046 = vunpack.c.h.b16 %v1667
        %v2047 = vunpack.c.l.b16 %v1668
        %v2048 = vunpack.c.h.b16 %v1668
        %v2049 = vunpack.c.l.b16 %v1669
        %v2050 = vunpack.c.h.b16 %v1669
        %v2051 = vunpack.c.l.b16 %v1670
        %v2052 = vunpack.c.h.b16 %v1670
        %v2053 = vunpack.c.l.b16 %v1671
        %v2054 = vunpack.c.h.b16 %v1671
        %v2055 = vunpack.c.l.b16 %v1672
        %v2056 = vunpack.c.h.b16 %v1672
        %v2057 = vpack.c.b16 %v1809, %v1801
        %v2058 = vpack.c.b16 %v1810, %v1802
        %v2059 = vpack.c.b16 %v1811, %v1803
        %v2060 = vpack.c.b16 %v1812, %v1804
        %v2061 = vpack.c.b16 %v1813, %v1805
        %v2062 = vpack.c.b16 %v1814, %v1806
        %v2063 = vpack.c.b16 %v1815, %v1807
        %v2064 = vpack.c.b16 %v1816, %v1808
        %v2065 = vpack.c.b16 %v1825, %v1817
        %v2066 = vpack.c.b16 %v1826, %v1818
        %v2067 = vpack.c.b16 %v1827, %v1819
        %v2068 = vpack.c.b16 %v1828, %v1820
        %v2069 = vpack.c.b16 %v1829, %v1821
        %v2070 = vpack.c.b16 %v1830, %v1822
        %v2071 = vpack.c.b16 %v1831, %v1823
        %v2072 = vpack.c.b16 %v1832, %v1824
        %v2073 = vpack.c.b16 %v1841, %v1833
        %v2074 = vpack.c.b16 %v1842, %v1834
        %v2075 = vpack.c.b16 %v1843, %v1835
        %v2076 = vpack.c.b16 %v1844, %v1836
        %v2077 = vpack.c.b16 %v1845, %v1837
        %v2078 = vpack.c.b16 %v1846, %v1838
        %v2079 = vpack.c.b16 %v1847, %v1839
        %v2080 = vpack.c.b16 %v1848, %v1840
        %v2081 = vpack.c.b16 %v1857, %v1849
        %v2082 = vpack.c.b16 %v1858, %v1850
        %v2083 = vpack.c.b16 %v1859, %v1851
        %v2084 = vpack.c.b16 %v1860, %v1852
        %v2085 = vpack.c.b16 %v1861, %v1853
        %v2086 = vpack.c.b16 %v1862, %v1854
        %v2087 = vpack.c.b16 %v1863, %v1855
        %v2088 = vpack.c.b16 %v1864, %v1856
        %v2089 = vpack.c.b16 %v1873, %v1865
        %v2090 = vpack.c.b16 %v1874, %v1866
        %v2091 = vpack.c.b16 %v1875, %v1867
        %v2092 = vpack.c.b16 %v1876, %v1868
        %v2093 = vpack.c.b16 %v1877, %v1869
        %v2094 = vpack.c.b16 %v1878, %v1870
        %v2095 = vpack.c.b16 %v1879, %v1871
        %v2096 = vpack.c.b16 %v1880, %v1872
        %v2097 = vpack.c.b16 %v1889, %v1881
        %v2098 = vpack.c.b16 %v1890, %v1882
        %v2099 = vpack.c.b16 %v1891, %v1883
        %v2100 = vpack.c.b16 %v1892, %v1884
        %v2101 = vpack.c.b16 %v1893, %v1885
        %v2102 = vpack.c.b16 %v1894, %v1886
        %v2103 = vpack.c.b16 %v1895, %v1887
        %v2104 = vpack.c.b16 %v1896, %v1888
        %v2105 = vpack.c.b16 %v1905, %v1897
        %v2106 = vpack.c.b16 %v1906, %v1898
        %v2107 = vpack.c.b16 %v1907, %v1899
        %v2108 = vpack.c.b16 %v1908, %v1900
        %v2109 = vpack.c.b16 %v1909, %v1901
        %v2110 = vpack.c.b16 %v1910, %v1902
        %v2111 = vpack.c.b16 %v1911, %v1903
        %v2112 = vpack.c.b16 %v1912, %v1904
        %v2113 = vpack.c.b16 %v1921, %v1913
        %v2114 = vpack.c.b16 %v1922, %v1914
        %v2115 = vpack.c.b16 %v1923, %v1915
        %v2116 = vpack.c.b16 %v1924, %v1916
        %v2117 = vpack.c.b16 %v1925, %v1917
        %v2118 = vpack.c.b16 %v1926, %v1918
        %v2119 = vpack.c.b16 %v1927, %v1919
        %v2120 = vpack.c.b16 %v1928, %v1920
        %v2121 = vpack.c.b16 %v1937, %v1929
        %v2122 = vpack.c.b16 %v1938, %v1930
        %v2123 = vpack.c.b16 %v1939, %v1931
        %v2124 = vpack.c.b16 %v1940, %v1932
        %v2125 = vpack.c.b16 %v1941, %v1933
        %v2126 = vpack.c.b16 %v1942, %v1934
        %v2127 = vpack.c.b16 %v1943, %v1935
        %v2128 = vpack.c.b16 %v1944, %v1936
        %v2129 = vpack.c.b16 %v1953, %v1945
        %v2130 = vpack.c.b16 %v1954, %v1946
        %v2131 = vpack.c.b16 %v1955, %v1947
        %v2132 = vpack.c.b16 %v1956, %v1948
        %v2133 = vpack.c.b16 %v1957, %v1949
        %v2134 = vpack.c.b16 %v1958, %v1950
        %v2135 = vpack.c.b16 %v1959, %v1951
        %v2136 = vpack.c.b16 %v1960, %v1952
        %v2137 = vpack.c.b16 %v1969, %v1961
        %v2138 = vpack.c.b16 %v1970, %v1962
        %v2139 = vpack.c.b16 %v1971, %v1963
        %v2140 = vpack.c.b16 %v1972, %v1964
        %v2141 = vpack.c.b16 %v1973, %v1965
        %v2142 = vpack.c.b16 %v1974, %v1966
        %v2143 = vpack.c.b16 %v1975, %v1967
        %v2144 = vpack.c.b16 %v1976, %v1968
        %v2145 = vpack.c.b16 %v1985, %v1977
        %v2146 = vpack.c.b16 %v1986, %v1978
        %v2147 = vpack.c.b16 %v1987, %v1979
        %v2148 = vpack.c.b16 %v1988, %v1980
        %v2149 = vpack.c.b16 %v1989, %v1981
        %v2150 = vpack.c.b16 %v1990, %v1982
        %v2151 = vpack.c.b16 %v1991, %v1983
        %v2152 = vpack.c.b16 %v1992, %v1984
        %v2153 = vpack.c.b16 %v2001, %v1993
        %v2154 = vpack.c.b16 %v2002, %v1994
        %v2155 = vpack.c.b16 %v2003, %v1995
        %v2156 = vpack.c.b16 %v2004, %v1996
        %v2157 = vpack.c.b16 %v2005, %v1997
        %v2158 = vpack.c.b16 %v2006, %v1998
        %v2159 = vpack.c.b16 %v2007, %v1999
        %v2160 = vpack.c.b16 %v2008, %v2000
        %v2161 = vpack.c.b16 %v2017, %v2009
        %v2162 = vpack.c.b16 %v2018, %v2010
        %v2163 = vpack.c.b16 %v2019, %v2011
        %v2164 = vpack.c.b16 %v2020, %v2012
        %v2165 = vpack.c.b16 %v2021, %v2013
        %v2166 = vpack.c.b16 %v2022, %v2014
        %v2167 = vpack.c.b16 %v2023, %v2015
        %v2168 = vpack.c.b16 %v2024, %v2016
        %v2169 = vpack.c.b16 %v2033, %v2025
        %v2170 = vpack.c.b16 %v2034, %v2026
        %v2171 = vpack.c.b16 %v2035, %v2027
        %v2172 = vpack.c.b16 %v2036, %v2028
        %v2173 = vpack.c.b16 %v2037, %v2029
        %v2174 = vpack.c.b16 %v2038, %v2030
        %v2175 = vpack.c.b16 %v2039, %v2031
        %v2176 = vpack.c.b16 %v2040, %v2032
        %v2177 = vpack.c.b16 %v2049, %v2041
        %v2178 = vpack.c.b16 %v2050, %v2042
        %v2179 = vpack.c.b16 %v2051, %v2043
        %v2180 = vpack.c.b16 %v2052, %v2044
        %v2181 = vpack.c.b16 %v2053, %v2045
        %v2182 = vpack.c.b16 %v2054, %v2046
        %v2183 = vpack.c.b16 %v2055, %v2047
        %v2184 = vpack.c.b16 %v2056, %v2048
        %2313 = vmatpush.bf16.msra.mxu0 %v2113
        %2314 = vmatpush.bf16.msra.mxu0 %v2105
        %2315 = vmatpush.bf16.msra.mxu0 %v2097
        %2316 = vmatpush.bf16.msra.mxu0 %v2089
        %2317 = vmatpush.bf16.msra.mxu0 %v2081
        %2318 = vmatpush.bf16.msra.mxu0 %v2073
        %2319 = vmatpush.bf16.msra.mxu0 %v2065
        %2320 = vmatpush.bf16.msra.mxu0 %v2057
        %2321 = vmatmul.bf16.gmra.mxu0 %v1543
        %v2322 = vpop.f32.mrf.mxu0
        %v2323 = vadd.f32 0.0, %v2322
        %v2324 = vpop.f32.mrf.mxu0
        %2325 = vdwg.mxu0
        %2326 = vmatpush.bf16.msra.mxu0 %v2177
        %2327 = vmatpush.bf16.msra.mxu0 %v2169
        %2328 = vmatpush.bf16.msra.mxu0 %v2161
        %2329 = vmatpush.bf16.msra.mxu0 %v2153
        %2330 = vmatpush.bf16.msra.mxu0 %v2145
        %2331 = vmatpush.bf16.msra.mxu0 %v2137
        %2332 = vmatpush.bf16.msra.mxu0 %v2129
        %2333 = vmatpush.bf16.msra.mxu0 %v2121
        %2334 = vmatmul.bf16.gmra.mxu0 %v1544
        %v2335 = vpop.f32.mrf.mxu0
        %v2336 = vadd.f32 %v2323, %v2335
        %v2337 = vpop.f32.mrf.mxu0
        %2338 = vdwg.mxu0
        %2339 = vmatpush.bf16.msra.mxu0 %v2114
        %2340 = vmatpush.bf16.msra.mxu0 %v2106
        %2341 = vmatpush.bf16.msra.mxu0 %v2098
        %2342 = vmatpush.bf16.msra.mxu0 %v2090
        %2343 = vmatpush.bf16.msra.mxu0 %v2082
        %2344 = vmatpush.bf16.msra.mxu0 %v2074
        %2345 = vmatpush.bf16.msra.mxu0 %v2066
        %2346 = vmatpush.bf16.msra.mxu0 %v2058
        %2347 = vmatmul.bf16.gmra.mxu0 %v1543
        %v2348 = vpop.f32.mrf.mxu0
        %v2349 = vadd.f32 0.0, %v2348
        %v2350 = vpop.f32.mrf.mxu0
        %2351 = vdwg.mxu0
        %2352 = vmatpush.bf16.msra.mxu0 %v2178
        %2353 = vmatpush.bf16.msra.mxu0 %v2170
        %2354 = vmatpush.bf16.msra.mxu0 %v2162
        %2355 = vmatpush.bf16.msra.mxu0 %v2154
        %2356 = vmatpush.bf16.msra.mxu0 %v2146
        %2357 = vmatpush.bf16.msra.mxu0 %v2138
        %2358 = vmatpush.bf16.msra.mxu0 %v2130
        %2359 = vmatpush.bf16.msra.mxu0 %v2122
        %2360 = vmatmul.bf16.gmra.mxu0 %v1544
        %v2361 = vpop.f32.mrf.mxu0
        %v2362 = vadd.f32 %v2349, %v2361
        %v2363 = vpop.f32.mrf.mxu0
        %2364 = vdwg.mxu0
        %2365 = vmatpush.bf16.msra.mxu0 %v2115
        %2366 = vmatpush.bf16.msra.mxu0 %v2107
        %2367 = vmatpush.bf16.msra.mxu0 %v2099
        %2368 = vmatpush.bf16.msra.mxu0 %v2091
        %2369 = vmatpush.bf16.msra.mxu0 %v2083
        %2370 = vmatpush.bf16.msra.mxu0 %v2075
        %2371 = vmatpush.bf16.msra.mxu0 %v2067
        %2372 = vmatpush.bf16.msra.mxu0 %v2059
        %2373 = vmatmul.bf16.gmra.mxu0 %v1543
        %v2374 = vpop.f32.mrf.mxu0
        %v2375 = vadd.f32 0.0, %v2374
        %v2376 = vpop.f32.mrf.mxu0
        %2377 = vdwg.mxu0
        %2378 = vmatpush.bf16.msra.mxu0 %v2179
        %2379 = vmatpush.bf16.msra.mxu0 %v2171
        %2380 = vmatpush.bf16.msra.mxu0 %v2163
        %2381 = vmatpush.bf16.msra.mxu0 %v2155
        %2382 = vmatpush.bf16.msra.mxu0 %v2147
        %2383 = vmatpush.bf16.msra.mxu0 %v2139
        %2384 = vmatpush.bf16.msra.mxu0 %v2131
        %2385 = vmatpush.bf16.msra.mxu0 %v2123
        %2386 = vmatmul.bf16.gmra.mxu0 %v1544
        %v2387 = vpop.f32.mrf.mxu0
        %v2388 = vadd.f32 %v2375, %v2387
        %v2389 = vpop.f32.mrf.mxu0
        %2390 = vdwg.mxu0
        %2391 = vmatpush.bf16.msra.mxu0 %v2116
        %2392 = vmatpush.bf16.msra.mxu0 %v2108
        %2393 = vmatpush.bf16.msra.mxu0 %v2100
        %2394 = vmatpush.bf16.msra.mxu0 %v2092
        %2395 = vmatpush.bf16.msra.mxu0 %v2084
        %2396 = vmatpush.bf16.msra.mxu0 %v2076
        %2397 = vmatpush.bf16.msra.mxu0 %v2068
        %2398 = vmatpush.bf16.msra.mxu0 %v2060
        %2399 = vmatmul.bf16.gmra.mxu0 %v1543
        %v2400 = vpop.f32.mrf.mxu0
        %v2401 = vadd.f32 0.0, %v2400
        %v2402 = vpop.f32.mrf.mxu0
        %2403 = vdwg.mxu0
        %2404 = vmatpush.bf16.msra.mxu0 %v2180
        %2405 = vmatpush.bf16.msra.mxu0 %v2172
        %2406 = vmatpush.bf16.msra.mxu0 %v2164
        %2407 = vmatpush.bf16.msra.mxu0 %v2156
        %2408 = vmatpush.bf16.msra.mxu0 %v2148
        %2409 = vmatpush.bf16.msra.mxu0 %v2140
        %2410 = vmatpush.bf16.msra.mxu0 %v2132
        %2411 = vmatpush.bf16.msra.mxu0 %v2124
        %2412 = vmatmul.bf16.gmra.mxu0 %v1544
        %v2413 = vpop.f32.mrf.mxu0
        %v2414 = vadd.f32 %v2401, %v2413
        %v2415 = vpop.f32.mrf.mxu0
        %2416 = vdwg.mxu0
        %2417 = vmatpush.bf16.msra.mxu0 %v2117
        %2418 = vmatpush.bf16.msra.mxu0 %v2109
        %2419 = vmatpush.bf16.msra.mxu0 %v2101
        %2420 = vmatpush.bf16.msra.mxu0 %v2093
        %2421 = vmatpush.bf16.msra.mxu0 %v2085
        %2422 = vmatpush.bf16.msra.mxu0 %v2077
        %2423 = vmatpush.bf16.msra.mxu0 %v2069
        %2424 = vmatpush.bf16.msra.mxu0 %v2061
        %2425 = vmatmul.bf16.gmra.mxu0 %v1543
        %v2426 = vpop.f32.mrf.mxu0
        %v2427 = vadd.f32 0.0, %v2426
        %v2428 = vpop.f32.mrf.mxu0
        %2429 = vdwg.mxu0
        %2430 = vmatpush.bf16.msra.mxu0 %v2181
        %2431 = vmatpush.bf16.msra.mxu0 %v2173
        %2432 = vmatpush.bf16.msra.mxu0 %v2165
        %2433 = vmatpush.bf16.msra.mxu0 %v2157
        %2434 = vmatpush.bf16.msra.mxu0 %v2149
        %2435 = vmatpush.bf16.msra.mxu0 %v2141
        %2436 = vmatpush.bf16.msra.mxu0 %v2133
        %2437 = vmatpush.bf16.msra.mxu0 %v2125
        %2438 = vmatmul.bf16.gmra.mxu0 %v1544
        %v2439 = vpop.f32.mrf.mxu0
        %v2440 = vadd.f32 %v2427, %v2439
        %v2441 = vpop.f32.mrf.mxu0
        %2442 = vdwg.mxu0
        %2443 = vmatpush.bf16.msra.mxu0 %v2118
        %2444 = vmatpush.bf16.msra.mxu0 %v2110
        %2445 = vmatpush.bf16.msra.mxu0 %v2102
        %2446 = vmatpush.bf16.msra.mxu0 %v2094
        %2447 = vmatpush.bf16.msra.mxu0 %v2086
        %2448 = vmatpush.bf16.msra.mxu0 %v2078
        %2449 = vmatpush.bf16.msra.mxu0 %v2070
        %2450 = vmatpush.bf16.msra.mxu0 %v2062
        %2451 = vmatmul.bf16.gmra.mxu0 %v1543
        %v2452 = vpop.f32.mrf.mxu0
        %v2453 = vadd.f32 0.0, %v2452
        %v2454 = vpop.f32.mrf.mxu0
        %2455 = vdwg.mxu0
        %2456 = vmatpush.bf16.msra.mxu0 %v2182
        %2457 = vmatpush.bf16.msra.mxu0 %v2174
        %2458 = vmatpush.bf16.msra.mxu0 %v2166
        %2459 = vmatpush.bf16.msra.mxu0 %v2158
        %2460 = vmatpush.bf16.msra.mxu0 %v2150
        %2461 = vmatpush.bf16.msra.mxu0 %v2142
        %2462 = vmatpush.bf16.msra.mxu0 %v2134
        %2463 = vmatpush.bf16.msra.mxu0 %v2126
        %2464 = vmatmul.bf16.gmra.mxu0 %v1544
        %v2465 = vpop.f32.mrf.mxu0
        %v2466 = vadd.f32 %v2453, %v2465
        %v2467 = vpop.f32.mrf.mxu0
        %2468 = vdwg.mxu0
        %2469 = vmatpush.bf16.msra.mxu0 %v2119
        %2470 = vmatpush.bf16.msra.mxu0 %v2111
        %2471 = vmatpush.bf16.msra.mxu0 %v2103
        %2472 = vmatpush.bf16.msra.mxu0 %v2095
        %2473 = vmatpush.bf16.msra.mxu0 %v2087
        %2474 = vmatpush.bf16.msra.mxu0 %v2079
        %2475 = vmatpush.bf16.msra.mxu0 %v2071
        %2476 = vmatpush.bf16.msra.mxu0 %v2063
        %2477 = vmatmul.bf16.gmra.mxu0 %v1543
        %v2478 = vpop.f32.mrf.mxu0
        %v2479 = vadd.f32 0.0, %v2478
        %v2480 = vpop.f32.mrf.mxu0
        %2481 = vdwg.mxu0
        %2482 = vmatpush.bf16.msra.mxu0 %v2183
        %2483 = vmatpush.bf16.msra.mxu0 %v2175
        %2484 = vmatpush.bf16.msra.mxu0 %v2167
        %2485 = vmatpush.bf16.msra.mxu0 %v2159
        %2486 = vmatpush.bf16.msra.mxu0 %v2151
        %2487 = vmatpush.bf16.msra.mxu0 %v2143
        %2488 = vmatpush.bf16.msra.mxu0 %v2135
        %2489 = vmatpush.bf16.msra.mxu0 %v2127
        %2490 = vmatmul.bf16.gmra.mxu0 %v1544
        %v2491 = vpop.f32.mrf.mxu0
        %v2492 = vadd.f32 %v2479, %v2491
        %v2493 = vpop.f32.mrf.mxu0
        %2494 = vdwg.mxu0
        %2495 = vmatpush.bf16.msra.mxu0 %v2120
        %2496 = vmatpush.bf16.msra.mxu0 %v2112
        %2497 = vmatpush.bf16.msra.mxu0 %v2104
        %2498 = vmatpush.bf16.msra.mxu0 %v2096
        %2499 = vmatpush.bf16.msra.mxu0 %v2088
        %2500 = vmatpush.bf16.msra.mxu0 %v2080
        %2501 = vmatpush.bf16.msra.mxu0 %v2072
        %2502 = vmatpush.bf16.msra.mxu0 %v2064
        %2503 = vmatmul.bf16.gmra.mxu0 %v1543
        %v2504 = vpop.f32.mrf.mxu0
        %v2505 = vadd.f32 0.0, %v2504
        %v2506 = vpop.f32.mrf.mxu0
        %2507 = vdwg.mxu0
        %2508 = vmatpush.bf16.msra.mxu0 %v2184
        %2509 = vmatpush.bf16.msra.mxu0 %v2176
        %2510 = vmatpush.bf16.msra.mxu0 %v2168
        %2511 = vmatpush.bf16.msra.mxu0 %v2160
        %2512 = vmatpush.bf16.msra.mxu0 %v2152
        %2513 = vmatpush.bf16.msra.mxu0 %v2144
        %2514 = vmatpush.bf16.msra.mxu0 %v2136
        %2515 = vmatpush.bf16.msra.mxu0 %v2128
        %2516 = vmatmul.bf16.gmra.mxu0 %v1544
        %v2517 = vpop.f32.mrf.mxu0
        %v2518 = vadd.f32 %v2505, %v2517
        %v2519 = vpop.f32.mrf.mxu0
        %2520 = vdwg.mxu0
        %v2521 = vxor.u32 %v2336, 2147483648
        %v2522 = vxor.u32 %v2362, 2147483648
        %v2523 = vxor.u32 %v2388, 2147483648
        %v2524 = vxor.u32 %v2414, 2147483648
        %v2525 = vmul.f32 %v2521, 1.442695
        %v2526 = vpow.pop %v2525
        %v2527 = vmul.f32 %v2522, 1.442695
        %v2528 = vpow.pop %v2527
        %v2529 = vmul.f32 %v2523, 1.442695
        %v2530 = vpow.pop %v2529
        %v2531 = vmul.f32 %v2524, 1.442695
        %v2532 = vpow.pop %v2531
        %v2533 = vadd.f32 %v2526, 1.0
        %v2534 = vadd.f32 %v2528, 1.0
        %v2535 = vadd.f32 %v2530, 1.0
        %v2536 = vadd.f32 %v2532, 1.0
        %v2537 = vrcp.pop %v2533
        %v2538 = vmul.f32 %v2533, %v2537
        %v2539 = vsub.f32 1.0, %v2538
        %v2540 = vmul.f32 %v2537, %v2539
        %v2541 = vadd.f32 %v2537, %v2540
        %vm2542 = vweird.f32 %v2533
        %vm2543 = vweird.f32 %v2537
        %vm2544 = vmor %vm2542, %vm2543
        %v2545 = vsel %vm2544, %v2537, %v2541
        %v2546 = vand.u32 2147483647, %v2533
        %vm2547 = vcmp.eq.f32.partialorder %v2546, 8.507059e+37
        %v2548 = vand.u32 %v2533, 2147483648
        %v2549 = vor.u32 1.1754944e-38, %v2548
        %v2550 = vsel %vm2547, %v2549, %v2545
        %v2551 = vmul.f32 1.0, %v2550
        %v2552 = vrcp.pop %v2534
        %v2553 = vmul.f32 %v2534, %v2552
        %v2554 = vsub.f32 1.0, %v2553
        %v2555 = vmul.f32 %v2552, %v2554
        %v2556 = vadd.f32 %v2552, %v2555
        %vm2557 = vweird.f32 %v2534
        %vm2558 = vweird.f32 %v2552
        %vm2559 = vmor %vm2557, %vm2558
        %v2560 = vsel %vm2559, %v2552, %v2556
        %v2561 = vand.u32 2147483647, %v2534
        %vm2562 = vcmp.eq.f32.partialorder %v2561, 8.507059e+37
        %v2563 = vand.u32 %v2534, 2147483648
        %v2564 = vor.u32 1.1754944e-38, %v2563
        %v2565 = vsel %vm2562, %v2564, %v2560
        %v2566 = vmul.f32 1.0, %v2565
        %v2567 = vrcp.pop %v2535
        %v2568 = vmul.f32 %v2535, %v2567
        %v2569 = vsub.f32 1.0, %v2568
        %v2570 = vmul.f32 %v2567, %v2569
        %v2571 = vadd.f32 %v2567, %v2570
        %vm2572 = vweird.f32 %v2535
        %vm2573 = vweird.f32 %v2567
        %vm2574 = vmor %vm2572, %vm2573
        %v2575 = vsel %vm2574, %v2567, %v2571
        %v2576 = vand.u32 2147483647, %v2535
        %vm2577 = vcmp.eq.f32.partialorder %v2576, 8.507059e+37
        %v2578 = vand.u32 %v2535, 2147483648
        %v2579 = vor.u32 1.1754944e-38, %v2578
        %v2580 = vsel %vm2577, %v2579, %v2575
        %v2581 = vmul.f32 1.0, %v2580
        %v2582 = vrcp.pop %v2536
        %v2583 = vmul.f32 %v2536, %v2582
        %v2584 = vsub.f32 1.0, %v2583
        %v2585 = vmul.f32 %v2582, %v2584
        %v2586 = vadd.f32 %v2582, %v2585
        %vm2587 = vweird.f32 %v2536
        %vm2588 = vweird.f32 %v2582
        %vm2589 = vmor %vm2587, %vm2588
        %v2590 = vsel %vm2589, %v2582, %v2586
        %v2591 = vand.u32 2147483647, %v2536
        %vm2592 = vcmp.eq.f32.partialorder %v2591, 8.507059e+37
        %v2593 = vand.u32 %v2536, 2147483648
        %v2594 = vor.u32 1.1754944e-38, %v2593
        %v2595 = vsel %vm2592, %v2594, %v2590
        %v2596 = vmul.f32 1.0, %v2595
        %v2597 = vmul.f32 %v2336, %v2551
        %v2598 = vmul.f32 %v2362, %v2566
        %v2599 = vmul.f32 %v2388, %v2581
        %v2600 = vmul.f32 %v2414, %v2596
        %v2601 = vmul.f32 %v2597, %v2440
        %v2602 = vmul.f32 %v2598, %v2466
        %v2603 = vmul.f32 %v2599, %v2492
        %v2604 = vmul.f32 %v2600, %v2518
        %v2605 = vpack.c.bf16 %v2601, %v2601
        %v2606 = vpack.c.bf16 %v2602, %v2602
        %v2607 = vpack.c.bf16 %v2603, %v2603
        %v2608 = vpack.c.bf16 %v2604, %v2604
        %v2609 = vld [vmem:[#allocation7] sm:$0xff]
        %v2610 = vld [vmem:[#allocation7 + $0x8] sm:$0xff]
        %v2611 = vld [vmem:[#allocation7 + $0x10] sm:$0xff]
        %v2612 = vld [vmem:[#allocation7 + $0x18] sm:$0xff]
        %v2613 = vld [vmem:[#allocation7 + $0x20] sm:$0xff]
        %v2614 = vld [vmem:[#allocation7 + $0x28] sm:$0xff]
        %v2615 = vld [vmem:[#allocation7 + $0x30] sm:$0xff]
        %v2616 = vld [vmem:[#allocation7 + $0x38] sm:$0xff]
        %v2617 = vld [vmem:[#allocation7 + $0x40] sm:$0xff]
        %v2618 = vld [vmem:[#allocation7 + $0x48] sm:$0xff]
        %v2619 = vld [vmem:[#allocation7 + $0x50] sm:$0xff]
        %v2620 = vld [vmem:[#allocation7 + $0x58] sm:$0xff]
        %v2621 = vld [vmem:[#allocation7 + $0x60] sm:$0xff]
        %v2622 = vld [vmem:[#allocation7 + $0x68] sm:$0xff]
        %v2623 = vld [vmem:[#allocation7 + $0x70] sm:$0xff]
        %v2624 = vld [vmem:[#allocation7 + $0x78] sm:$0xff]
        %v2625 = vld [vmem:[#allocation7 + $0x80] sm:$0xff]
        %v2626 = vld [vmem:[#allocation7 + $0x88] sm:$0xff]
        %v2627 = vld [vmem:[#allocation7 + $0x90] sm:$0xff]
        %v2628 = vld [vmem:[#allocation7 + $0x98] sm:$0xff]
        %v2629 = vld [vmem:[#allocation7 + $0xa0] sm:$0xff]
        %v2630 = vld [vmem:[#allocation7 + $0xa8] sm:$0xff]
        %v2631 = vld [vmem:[#allocation7 + $0xb0] sm:$0xff]
        %v2632 = vld [vmem:[#allocation7 + $0xb8] sm:$0xff]
        %v2633 = vld [vmem:[#allocation7 + $0xc0] sm:$0xff]
        %v2634 = vld [vmem:[#allocation7 + $0xc8] sm:$0xff]
        %v2635 = vld [vmem:[#allocation7 + $0xd0] sm:$0xff]
        %v2636 = vld [vmem:[#allocation7 + $0xd8] sm:$0xff]
        %v2637 = vld [vmem:[#allocation7 + $0xe0] sm:$0xff]
        %v2638 = vld [vmem:[#allocation7 + $0xe8] sm:$0xff]
        %v2639 = vld [vmem:[#allocation7 + $0xf0] sm:$0xff]
        %v2640 = vld [vmem:[#allocation7 + $0xf8] sm:$0xff]
        %v2641 = vld [vmem:[#allocation7 + $0x100] sm:$0xff]
        %v2642 = vld [vmem:[#allocation7 + $0x108] sm:$0xff]
        %v2643 = vld [vmem:[#allocation7 + $0x110] sm:$0xff]
        %v2644 = vld [vmem:[#allocation7 + $0x118] sm:$0xff]
        %v2645 = vld [vmem:[#allocation7 + $0x120] sm:$0xff]
        %v2646 = vld [vmem:[#allocation7 + $0x128] sm:$0xff]
        %v2647 = vld [vmem:[#allocation7 + $0x130] sm:$0xff]
        %v2648 = vld [vmem:[#allocation7 + $0x138] sm:$0xff]
        %v2649 = vld [vmem:[#allocation7 + $0x140] sm:$0xff]
        %v2650 = vld [vmem:[#allocation7 + $0x148] sm:$0xff]
        %v2651 = vld [vmem:[#allocation7 + $0x150] sm:$0xff]
        %v2652 = vld [vmem:[#allocation7 + $0x158] sm:$0xff]
        %v2653 = vld [vmem:[#allocation7 + $0x160] sm:$0xff]
        %v2654 = vld [vmem:[#allocation7 + $0x168] sm:$0xff]
        %v2655 = vld [vmem:[#allocation7 + $0x170] sm:$0xff]
        %v2656 = vld [vmem:[#allocation7 + $0x178] sm:$0xff]
        %v2657 = vld [vmem:[#allocation7 + $0x180] sm:$0xff]
        %v2658 = vld [vmem:[#allocation7 + $0x188] sm:$0xff]
        %v2659 = vld [vmem:[#allocation7 + $0x190] sm:$0xff]
        %v2660 = vld [vmem:[#allocation7 + $0x198] sm:$0xff]
        %v2661 = vld [vmem:[#allocation7 + $0x1a0] sm:$0xff]
        %v2662 = vld [vmem:[#allocation7 + $0x1a8] sm:$0xff]
        %v2663 = vld [vmem:[#allocation7 + $0x1b0] sm:$0xff]
        %v2664 = vld [vmem:[#allocation7 + $0x1b8] sm:$0xff]
        %v2665 = vld [vmem:[#allocation7 + $0x1c0] sm:$0xff]
        %v2666 = vld [vmem:[#allocation7 + $0x1c8] sm:$0xff]
        %v2667 = vld [vmem:[#allocation7 + $0x1d0] sm:$0xff]
        %v2668 = vld [vmem:[#allocation7 + $0x1d8] sm:$0xff]
        %v2669 = vld [vmem:[#allocation7 + $0x1e0] sm:$0xff]
        %v2670 = vld [vmem:[#allocation7 + $0x1e8] sm:$0xff]
        %v2671 = vld [vmem:[#allocation7 + $0x1f0] sm:$0xff]
        %v2672 = vld [vmem:[#allocation7 + $0x1f8] sm:$0xff]
        %v2737 = vunpack.c.l.b16 %v2609
        %v2738 = vunpack.c.h.b16 %v2609
        %v2739 = vunpack.c.l.b16 %v2610
        %v2740 = vunpack.c.h.b16 %v2610
        %v2741 = vunpack.c.l.b16 %v2611
        %v2742 = vunpack.c.h.b16 %v2611
        %v2743 = vunpack.c.l.b16 %v2612
        %v2744 = vunpack.c.h.b16 %v2612
        %v2745 = vunpack.c.l.b16 %v2613
        %v2746 = vunpack.c.h.b16 %v2613
        %v2747 = vunpack.c.l.b16 %v2614
        %v2748 = vunpack.c.h.b16 %v2614
        %v2749 = vunpack.c.l.b16 %v2615
        %v2750 = vunpack.c.h.b16 %v2615
        %v2751 = vunpack.c.l.b16 %v2616
        %v2752 = vunpack.c.h.b16 %v2616
        %v2753 = vunpack.c.l.b16 %v2617
        %v2754 = vunpack.c.h.b16 %v2617
        %v2755 = vunpack.c.l.b16 %v2618
        %v2756 = vunpack.c.h.b16 %v2618
        %v2757 = vunpack.c.l.b16 %v2619
        %v2758 = vunpack.c.h.b16 %v2619
        %v2759 = vunpack.c.l.b16 %v2620
        %v2760 = vunpack.c.h.b16 %v2620
        %v2761 = vunpack.c.l.b16 %v2621
        %v2762 = vunpack.c.h.b16 %v2621
        %v2763 = vunpack.c.l.b16 %v2622
        %v2764 = vunpack.c.h.b16 %v2622
        %v2765 = vunpack.c.l.b16 %v2623
        %v2766 = vunpack.c.h.b16 %v2623
        %v2767 = vunpack.c.l.b16 %v2624
        %v2768 = vunpack.c.h.b16 %v2624
        %v2769 = vunpack.c.l.b16 %v2625
        %v2770 = vunpack.c.h.b16 %v2625
        %v2771 = vunpack.c.l.b16 %v2626
        %v2772 = vunpack.c.h.b16 %v2626
        %v2773 = vunpack.c.l.b16 %v2627
        %v2774 = vunpack.c.h.b16 %v2627
        %v2775 = vunpack.c.l.b16 %v2628
        %v2776 = vunpack.c.h.b16 %v2628
        %v2777 = vunpack.c.l.b16 %v2629
        %v2778 = vunpack.c.h.b16 %v2629
        %v2779 = vunpack.c.l.b16 %v2630
        %v2780 = vunpack.c.h.b16 %v2630
        %v2781 = vunpack.c.l.b16 %v2631
        %v2782 = vunpack.c.h.b16 %v2631
        %v2783 = vunpack.c.l.b16 %v2632
        %v2784 = vunpack.c.h.b16 %v2632
        %v2785 = vunpack.c.l.b16 %v2633
        %v2786 = vunpack.c.h.b16 %v2633
        %v2787 = vunpack.c.l.b16 %v2634
        %v2788 = vunpack.c.h.b16 %v2634
        %v2789 = vunpack.c.l.b16 %v2635
        %v2790 = vunpack.c.h.b16 %v2635
        %v2791 = vunpack.c.l.b16 %v2636
        %v2792 = vunpack.c.h.b16 %v2636
        %v2793 = vunpack.c.l.b16 %v2637
        %v2794 = vunpack.c.h.b16 %v2637
        %v2795 = vunpack.c.l.b16 %v2638
        %v2796 = vunpack.c.h.b16 %v2638
        %v2797 = vunpack.c.l.b16 %v2639
        %v2798 = vunpack.c.h.b16 %v2639
        %v2799 = vunpack.c.l.b16 %v2640
        %v2800 = vunpack.c.h.b16 %v2640
        %v2801 = vunpack.c.l.b16 %v2641
        %v2802 = vunpack.c.h.b16 %v2641
        %v2803 = vunpack.c.l.b16 %v2642
        %v2804 = vunpack.c.h.b16 %v2642
        %v2805 = vunpack.c.l.b16 %v2643
        %v2806 = vunpack.c.h.b16 %v2643
        %v2807 = vunpack.c.l.b16 %v2644
        %v2808 = vunpack.c.h.b16 %v2644
        %v2809 = vunpack.c.l.b16 %v2645
        %v2810 = vunpack.c.h.b16 %v2645
        %v2811 = vunpack.c.l.b16 %v2646
        %v2812 = vunpack.c.h.b16 %v2646
        %v2813 = vunpack.c.l.b16 %v2647
        %v2814 = vunpack.c.h.b16 %v2647
        %v2815 = vunpack.c.l.b16 %v2648
        %v2816 = vunpack.c.h.b16 %v2648
        %v2817 = vunpack.c.l.b16 %v2649
        %v2818 = vunpack.c.h.b16 %v2649
        %v2819 = vunpack.c.l.b16 %v2650
        %v2820 = vunpack.c.h.b16 %v2650
        %v2821 = vunpack.c.l.b16 %v2651
        %v2822 = vunpack.c.h.b16 %v2651
        %v2823 = vunpack.c.l.b16 %v2652
        %v2824 = vunpack.c.h.b16 %v2652
        %v2825 = vunpack.c.l.b16 %v2653
        %v2826 = vunpack.c.h.b16 %v2653
        %v2827 = vunpack.c.l.b16 %v2654
        %v2828 = vunpack.c.h.b16 %v2654
        %v2829 = vunpack.c.l.b16 %v2655
        %v2830 = vunpack.c.h.b16 %v2655
        %v2831 = vunpack.c.l.b16 %v2656
        %v2832 = vunpack.c.h.b16 %v2656
        %v2833 = vunpack.c.l.b16 %v2657
        %v2834 = vunpack.c.h.b16 %v2657
        %v2835 = vunpack.c.l.b16 %v2658
        %v2836 = vunpack.c.h.b16 %v2658
        %v2837 = vunpack.c.l.b16 %v2659
        %v2838 = vunpack.c.h.b16 %v2659
        %v2839 = vunpack.c.l.b16 %v2660
        %v2840 = vunpack.c.h.b16 %v2660
        %v2841 = vunpack.c.l.b16 %v2661
        %v2842 = vunpack.c.h.b16 %v2661
        %v2843 = vunpack.c.l.b16 %v2662
        %v2844 = vunpack.c.h.b16 %v2662
        %v2845 = vunpack.c.l.b16 %v2663
        %v2846 = vunpack.c.h.b16 %v2663
        %v2847 = vunpack.c.l.b16 %v2664
        %v2848 = vunpack.c.h.b16 %v2664
        %v2849 = vunpack.c.l.b16 %v2665
        %v2850 = vunpack.c.h.b16 %v2665
        %v2851 = vunpack.c.l.b16 %v2666
        %v2852 = vunpack.c.h.b16 %v2666
        %v2853 = vunpack.c.l.b16 %v2667
        %v2854 = vunpack.c.h.b16 %v2667
        %v2855 = vunpack.c.l.b16 %v2668
        %v2856 = vunpack.c.h.b16 %v2668
        %v2857 = vunpack.c.l.b16 %v2669
        %v2858 = vunpack.c.h.b16 %v2669
        %v2859 = vunpack.c.l.b16 %v2670
        %v2860 = vunpack.c.h.b16 %v2670
        %v2861 = vunpack.c.l.b16 %v2671
        %v2862 = vunpack.c.h.b16 %v2671
        %v2863 = vunpack.c.l.b16 %v2672
        %v2864 = vunpack.c.h.b16 %v2672
        %v2865 = vpack.c.b16 %v2739, %v2737
        %v2866 = vpack.c.b16 %v2740, %v2738
        %v2867 = vpack.c.b16 %v2743, %v2741
        %v2868 = vpack.c.b16 %v2744, %v2742
        %v2869 = vpack.c.b16 %v2747, %v2745
        %v2870 = vpack.c.b16 %v2748, %v2746
        %v2871 = vpack.c.b16 %v2751, %v2749
        %v2872 = vpack.c.b16 %v2752, %v2750
        %v2873 = vpack.c.b16 %v2755, %v2753
        %v2874 = vpack.c.b16 %v2756, %v2754
        %v2875 = vpack.c.b16 %v2759, %v2757
        %v2876 = vpack.c.b16 %v2760, %v2758
        %v2877 = vpack.c.b16 %v2763, %v2761
        %v2878 = vpack.c.b16 %v2764, %v2762
        %v2879 = vpack.c.b16 %v2767, %v2765
        %v2880 = vpack.c.b16 %v2768, %v2766
        %v2881 = vpack.c.b16 %v2771, %v2769
        %v2882 = vpack.c.b16 %v2772, %v2770
        %v2883 = vpack.c.b16 %v2775, %v2773
        %v2884 = vpack.c.b16 %v2776, %v2774
        %v2885 = vpack.c.b16 %v2779, %v2777
        %v2886 = vpack.c.b16 %v2780, %v2778
        %v2887 = vpack.c.b16 %v2783, %v2781
        %v2888 = vpack.c.b16 %v2784, %v2782
        %v2889 = vpack.c.b16 %v2787, %v2785
        %v2890 = vpack.c.b16 %v2788, %v2786
        %v2891 = vpack.c.b16 %v2791, %v2789
        %v2892 = vpack.c.b16 %v2792, %v2790
        %v2893 = vpack.c.b16 %v2795, %v2793
        %v2894 = vpack.c.b16 %v2796, %v2794
        %v2895 = vpack.c.b16 %v2799, %v2797
        %v2896 = vpack.c.b16 %v2800, %v2798
        %v2897 = vpack.c.b16 %v2803, %v2801
        %v2898 = vpack.c.b16 %v2804, %v2802
        %v2899 = vpack.c.b16 %v2807, %v2805
        %v2900 = vpack.c.b16 %v2808, %v2806
        %v2901 = vpack.c.b16 %v2811, %v2809
        %v2902 = vpack.c.b16 %v2812, %v2810
        %v2903 = vpack.c.b16 %v2815, %v2813
        %v2904 = vpack.c.b16 %v2816, %v2814
        %v2905 = vpack.c.b16 %v2819, %v2817
        %v2906 = vpack.c.b16 %v2820, %v2818
        %v2907 = vpack.c.b16 %v2823, %v2821
        %v2908 = vpack.c.b16 %v2824, %v2822
        %v2909 = vpack.c.b16 %v2827, %v2825
        %v2910 = vpack.c.b16 %v2828, %v2826
        %v2911 = vpack.c.b16 %v2831, %v2829
        %v2912 = vpack.c.b16 %v2832, %v2830
        %v2913 = vpack.c.b16 %v2835, %v2833
        %v2914 = vpack.c.b16 %v2836, %v2834
        %v2915 = vpack.c.b16 %v2839, %v2837
        %v2916 = vpack.c.b16 %v2840, %v2838
        %v2917 = vpack.c.b16 %v2843, %v2841
        %v2918 = vpack.c.b16 %v2844, %v2842
        %v2919 = vpack.c.b16 %v2847, %v2845
        %v2920 = vpack.c.b16 %v2848, %v2846
        %v2921 = vpack.c.b16 %v2851, %v2849
        %v2922 = vpack.c.b16 %v2852, %v2850
        %v2923 = vpack.c.b16 %v2855, %v2853
        %v2924 = vpack.c.b16 %v2856, %v2854
        %v2925 = vpack.c.b16 %v2859, %v2857
        %v2926 = vpack.c.b16 %v2860, %v2858
        %v2927 = vpack.c.b16 %v2863, %v2861
        %v2928 = vpack.c.b16 %v2864, %v2862
        %2993 = vmatpush.bf16.msra.mxu0 %v2879
        %2994 = vmatpush.bf16.msra.mxu0 %v2877
        %2995 = vmatpush.bf16.msra.mxu0 %v2875
        %2996 = vmatpush.bf16.msra.mxu0 %v2873
        %2997 = vmatpush.bf16.msra.mxu0 %v2871
        %2998 = vmatpush.bf16.msra.mxu0 %v2869
        %2999 = vmatpush.bf16.msra.mxu0 %v2867
        %3000 = vmatpush.bf16.msra.mxu0 %v2865
        %3001 = vmatmul.bf16.gmra.mxu0 %v2605
        %v3002 = vpop.f32.mrf.mxu0
        %v3003 = vadd.f32 %v1487, %v3002
        %v3004 = vpop.f32.mrf.mxu0
        %3005 = vdwg.mxu0
        %3006 = vmatpush.bf16.msra.mxu0 %v2895
        %3007 = vmatpush.bf16.msra.mxu0 %v2893
        %3008 = vmatpush.bf16.msra.mxu0 %v2891
        %3009 = vmatpush.bf16.msra.mxu0 %v2889
        %3010 = vmatpush.bf16.msra.mxu0 %v2887
        %3011 = vmatpush.bf16.msra.mxu0 %v2885
        %3012 = vmatpush.bf16.msra.mxu0 %v2883
        %3013 = vmatpush.bf16.msra.mxu0 %v2881
        %3014 = vmatmul.bf16.gmra.mxu0 %v2606
        %v3015 = vpop.f32.mrf.mxu0
        %v3016 = vadd.f32 %v3003, %v3015
        %v3017 = vpop.f32.mrf.mxu0
        %3018 = vdwg.mxu0
        %3019 = vmatpush.bf16.msra.mxu0 %v2911
        %3020 = vmatpush.bf16.msra.mxu0 %v2909
        %3021 = vmatpush.bf16.msra.mxu0 %v2907
        %3022 = vmatpush.bf16.msra.mxu0 %v2905
        %3023 = vmatpush.bf16.msra.mxu0 %v2903
        %3024 = vmatpush.bf16.msra.mxu0 %v2901
        %3025 = vmatpush.bf16.msra.mxu0 %v2899
        %3026 = vmatpush.bf16.msra.mxu0 %v2897
        %3027 = vmatmul.bf16.gmra.mxu0 %v2607
        %v3028 = vpop.f32.mrf.mxu0
        %v3029 = vadd.f32 %v3016, %v3028
        %v3030 = vpop.f32.mrf.mxu0
        %3031 = vdwg.mxu0
        %3032 = vmatpush.bf16.msra.mxu0 %v2927
        %3033 = vmatpush.bf16.msra.mxu0 %v2925
        %3034 = vmatpush.bf16.msra.mxu0 %v2923
        %3035 = vmatpush.bf16.msra.mxu0 %v2921
        %3036 = vmatpush.bf16.msra.mxu0 %v2919
        %3037 = vmatpush.bf16.msra.mxu0 %v2917
        %3038 = vmatpush.bf16.msra.mxu0 %v2915
        %3039 = vmatpush.bf16.msra.mxu0 %v2913
        %3040 = vmatmul.bf16.gmra.mxu0 %v2608
        %v3041 = vpop.f32.mrf.mxu0
        %v3042 = vadd.f32 %v3029, %v3041
        %v3043 = vpop.f32.mrf.mxu0
        %3044 = vdwg.mxu0
        %3045 = vmatpush.bf16.msra.mxu0 %v2880
        %3046 = vmatpush.bf16.msra.mxu0 %v2878
        %3047 = vmatpush.bf16.msra.mxu0 %v2876
        %3048 = vmatpush.bf16.msra.mxu0 %v2874
        %3049 = vmatpush.bf16.msra.mxu0 %v2872
        %3050 = vmatpush.bf16.msra.mxu0 %v2870
        %3051 = vmatpush.bf16.msra.mxu0 %v2868
        %3052 = vmatpush.bf16.msra.mxu0 %v2866
        %3053 = vmatmul.bf16.gmra.mxu0 %v2605
        %v3054 = vpop.f32.mrf.mxu0
        %v3055 = vadd.f32 %v1513, %v3054
        %v3056 = vpop.f32.mrf.mxu0
        %3057 = vdwg.mxu0
        %3058 = vmatpush.bf16.msra.mxu0 %v2896
        %3059 = vmatpush.bf16.msra.mxu0 %v2894
        %3060 = vmatpush.bf16.msra.mxu0 %v2892
        %3061 = vmatpush.bf16.msra.mxu0 %v2890
        %3062 = vmatpush.bf16.msra.mxu0 %v2888
        %3063 = vmatpush.bf16.msra.mxu0 %v2886
        %3064 = vmatpush.bf16.msra.mxu0 %v2884
        %3065 = vmatpush.bf16.msra.mxu0 %v2882
        %3066 = vmatmul.bf16.gmra.mxu0 %v2606
        %v3067 = vpop.f32.mrf.mxu0
        %v3068 = vadd.f32 %v3055, %v3067
        %v3069 = vpop.f32.mrf.mxu0
        %3070 = vdwg.mxu0
        %3071 = vmatpush.bf16.msra.mxu0 %v2912
        %3072 = vmatpush.bf16.msra.mxu0 %v2910
        %3073 = vmatpush.bf16.msra.mxu0 %v2908
        %3074 = vmatpush.bf16.msra.mxu0 %v2906
        %3075 = vmatpush.bf16.msra.mxu0 %v2904
        %3076 = vmatpush.bf16.msra.mxu0 %v2902
        %3077 = vmatpush.bf16.msra.mxu0 %v2900
        %3078 = vmatpush.bf16.msra.mxu0 %v2898
        %3079 = vmatmul.bf16.gmra.mxu0 %v2607
        %v3080 = vpop.f32.mrf.mxu0
        %v3081 = vadd.f32 %v3068, %v3080
        %v3082 = vpop.f32.mrf.mxu0
        %3083 = vdwg.mxu0
        %3084 = vmatpush.bf16.msra.mxu0 %v2928
        %3085 = vmatpush.bf16.msra.mxu0 %v2926
        %3086 = vmatpush.bf16.msra.mxu0 %v2924
        %3087 = vmatpush.bf16.msra.mxu0 %v2922
        %3088 = vmatpush.bf16.msra.mxu0 %v2920
        %3089 = vmatpush.bf16.msra.mxu0 %v2918
        %3090 = vmatpush.bf16.msra.mxu0 %v2916
        %3091 = vmatpush.bf16.msra.mxu0 %v2914
        %3092 = vmatmul.bf16.gmra.mxu0 %v2608
        %v3093 = vpop.f32.mrf.mxu0
        %v3094 = vadd.f32 %v3081, %v3093
        %v3095 = vpop.f32.mrf.mxu0
        %3096 = vdwg.mxu0
        %v3097 = vpack.c.bf16 %v3094, %v3042
        %3098 = vst [vmem:[%s480] sm:$0xff] %v3097
        %p3099 = scmp.lt.s32.totalorder %s26, 1
        %s3100 = scalar_select %p3099, %s26, 1
        %s3101 = smul.addr %s3100, 2
        %s3102 = smul.addr %s3101, 4
        %s3103 = scalar_lea.vmem %s12, %s3102
        // Predicated region
        $region85: #{_lambda_.4} parent=67 // pred_check
          %p3104 = pneg %p301
        $region86: #{_lambda_.4} parent=67 // pred_check_branch
          %3106 = sbr.rel (%p3104) target = $region88
        $region87: #{_lambda_.4} parent=67 // pred_region
          _
        $region88: #{_lambda_.4} parent=67 // pred_fallthru
          _
      $region68: #{_lambda_.4} parent=5 // pred_fallthru
        _
      %p3107 = scmp.le.s32.totalorder 2, %s21
      // Predicated region
      $region89: #{_lambda_.4} parent=5 // pred_check
        %p3108 = pneg %p3107
      $region90: #{_lambda_.4} parent=5 // pred_check_branch
        %3110 = sbr.rel (%p3108) target = $region92
      $region91: #{_lambda_.4} parent=5 // pred_region
        %s3111 = ssub.s32 %s21, 2
        // Predicated region
        $region93: #{_lambda_.4} parent=91 // pred_check
          %p3112 = pneg %p307
        $region94: #{_lambda_.4} parent=91 // pred_check_branch
          %3114 = sbr.rel (%p3112) target = $region96
        $region95: #{_lambda_.4} parent=91 // pred_region
          %p3115 = scmp.lt.s32.totalorder %s27, 1
          %s3116 = scalar_select %p3115, %s27, 1
          %s3117 = smul.addr %s3116, 2
          %s3118 = smul.addr %s3117, 4
          %s3119 = scalar_lea.vmem %s12, %s3118
        $region96: #{_lambda_.4} parent=91 // pred_fallthru
          _
      $region92: #{_lambda_.4} parent=5 // pred_fallthru
        _
    $region6: #{_lambda_.4} parent=1 // loop_footer
      %s25 = sadd.s32 1, %s21
    $region7: #{_lambda_.4} parent=1 // loop_footer_branch
      %20 = sbr.rel target = $region3
    $region8: #{_lambda_.4} parent=1 // loop_exit
      _
    %3120 = vsyncpa [#allocation3], 1
    %s3121 = scalar_lea.sflag [#allocation3], 1
    %3122 = vsyncpa %s3121, 1
    %3123 = vsyncpa [#allocation5], 1
    %3124 = vsyncpa [#allocation8], 1

// kernel: _lambda_.3
$region0: #{_lambda_.3}
  #allocation0 [shape = 'u32[]', space=smem, size = 0x4, offset = 0x4, fixed_abs, tag = 'smem constant byte address 0x4 - core index']
  #allocation1 [shape = 'u32[72,128]{1,0:T(1,128)}', space=vmem, size = 0x9000, scoped, tag = 'internal scratch']
  %s0 = inlined_call_operand.vmem [shape: bf16[16,256], index: 0, kind: input, shape index: {}]
  %s1 = inlined_call_operand.vmem [shape: f32[1,256], index: 1, kind: input, shape index: {}]
  %s2 = inlined_call_operand.hbm [shape: bf16[256,512], index: 2, kind: input, shape index: {}]
  %s3 = inlined_call_operand.vmem [shape: bf16[256,256], index: 3, kind: input, shape index: {}]
  %s4 = inlined_call_operand.vmem [shape: f32[1,256], index: 4, kind: input, shape index: {}]
  %s5 = inlined_call_operand.hbm [shape: bf16[256,1024], index: 5, kind: input, shape index: {}]
  %s6 = inlined_call_operand.hbm [shape: bf16[512,256], index: 6, kind: input, shape index: {}]
  %s7 = inlined_call_operand.vmem [shape: f32[8,256], index: 7, kind: input, shape index: {}]
  %s8 = inlined_call_operand.vmem [shape: f32[8,256], index: 8, kind: input, shape index: {}]
  %s9 = inlined_call_operand.vmem [shape: f32[8,128], index: 9, kind: input, shape index: {}]
  %s10 = inlined_call_operand.vmem [shape: f32[8,128], index: 10, kind: input, shape index: {}]
  %s11 = inlined_call_operand.vmem [shape: f32[8,8], index: 11, kind: input, shape index: {}]
  %s12 = inlined_call_operand.vmem [shape: bf16[16,256], index: 12, kind: output, shape index: {}]
  %s13 = sld [smem:[#allocation0]]
  $region93: #{_lambda_.3} parent=0
    _
  %s15 = ssub.s32 1, %s13
  %s16 = scalar_select 0, %s15, %s13
  $region1: #{_lambda_.3} parent=0
    #allocation2 [shape = 'u8[262144]{0}', space=vmem, size = 0x40000, scoped, tag = 'input window, operand 2, single buffered']
    #allocation3 [shape = 's32[2]{0}', space=sflag, size = 0x8, scoped, tag = 'scoped memory for _lambda_.3']
    #allocation4 [shape = 'u8[524288]{0}', space=vmem, size = 0x80000, scoped, tag = 'input window, operand 5, single buffered']
    #allocation5 [shape = 's32[1]{0}', space=sflag, size = 0x4, scoped, tag = 'scoped memory for _lambda_.3']
    #allocation6 [shape = 'u8[262144]{0}', space=vmem, size = 0x40000, scoped, tag = 'input window, operand 6, single buffered']
    %17 = vsyncpa [#allocation3], 0
    %18 = vsyncpa [#allocation5], 0
    loop: start=0, step=1, limit=4
    $region2: #{_lambda_.3} parent=1 // loop_pre_header
      _
    $region3: #{_lambda_.3} parent=1 // loop_header
      %s20 = sphi 0, %s24
      %p21 = scmp.ge.s32.totalorder %s20, 4
      %s30 = sphi 0, %s32
      %s33 = sphi 0, %s30
      %s34 = sphi 0, %s33
      %s50 = sphi 0, %s34
      %s54 = sphi 0, %s54
      %s56 = sphi 0, %s54
      %s57 = sphi 0, %s56
      %s71 = sphi 0, %s57
      %s75 = sphi 0, %s75
      %s77 = sphi 0, %s75
      %s78 = sphi 0, %s77
      %s92 = sphi 0, %s78
      %s96 = sphi 0, %s96
      %s98 = sphi 0, %s96
      %s99 = sphi 0, %s98
      %s113 = sphi 0, %s99
      %s117 = sphi 0, %s117
      %s119 = sphi 0, %s117
      %s120 = sphi 0, %s119
      %s134 = sphi 0, %s120
      %s138 = sphi 0, %s138
      %s140 = sphi 0, %s138
      %s141 = sphi 0, %s140
      %s155 = sphi 0, %s141
      %s159 = sphi 0, %s159
      %s161 = sphi 0, %s159
      %s162 = sphi 0, %s161
      %s176 = sphi 0, %s162
      %s180 = sphi 0, %s180
      %s182 = sphi 0, %s180
      %s183 = sphi 0, %s182
      %s197 = sphi 0, %s183
      %s201 = sphi 0, %s201
      %s203 = sphi 0, %s201
      %s204 = sphi 0, %s203
      %s218 = sphi 0, %s204
      %s222 = sphi 0, %s222
      %s224 = sphi 0, %s222
      %s225 = sphi 0, %s224
      %s239 = sphi 0, %s225
      %s243 = sphi 0, %s243
      %s245 = sphi 0, %s243
      %s246 = sphi 0, %s245
      %s260 = sphi 0, %s246
      %s264 = sphi 0, %s264
      %s266 = sphi 0, %s264
      %s267 = sphi 0, %s266
      %s281 = sphi 0, %s267
      %s287 = sphi 0, %s289
      %s290 = sphi 0, %s287
      %s291 = sphi 0, %s290
      %s307 = sphi 0, %s291
    $region4: #{_lambda_.3} parent=1 // loop_header_branch
      %23 = sbr.rel (%p21) target = $region8
    $region5: #{_lambda_.3} parent=1 // loop_body
      %s25 = ssub.s32 %s20, 1
      %s26 = ssub.s32 %s20, 2
      %s27 = sadd.s32 %s20, 1
      %s28 = ssub.s32 %s20, %s27
      %p29 = scmp.eq.s32.totalorder %s28, 0
      %s31 = sadd.s32 %s30, 1
      %s32 = scalar_select %p29, %s30, %s31
      %p35 = pneg %p29
      %p36 = scmp.eq.s32.totalorder %s20, 1
      %p37 = por %p35, %p36
      %p38 = scmp.ne.s32.totalorder %s30, %s33
      %p39 = scmp.eq.s32.totalorder %s20, 0
      %p40 = por %p38, %p39
      %p41 = scmp.ne.s32.totalorder %s30, %s33
      %p42 = scmp.eq.s32.totalorder %s25, 1
      %p43 = por %p41, %p42
      %p44 = scmp.ne.s32.totalorder %s33, %s34
      %p45 = scmp.eq.s32.totalorder %s25, 0
      %p46 = por %p44, %p45
      %p47 = scmp.ne.s32.totalorder %s33, %s34
      %p48 = scmp.eq.s32.totalorder %s26, 1
      %p49 = por %p47, %p48
      %p51 = scmp.ne.s32.totalorder %s34, %s50
      %p52 = scmp.eq.s32.totalorder %s26, 0
      %p53 = por %p51, %p52
      %s55 = sadd.s32 %s54, 1
      %p58 = scmp.eq.s32.totalorder %s20, 1
      %p59 = scmp.ne.s32.totalorder %s54, %s56
      %p60 = scmp.eq.s32.totalorder %s20, 0
      %p61 = por %p59, %p60
      %p62 = scmp.ne.s32.totalorder %s54, %s56
      %p63 = scmp.eq.s32.totalorder %s25, 1
      %p64 = por %p62, %p63
      %p65 = scmp.ne.s32.totalorder %s56, %s57
      %p66 = scmp.eq.s32.totalorder %s25, 0
      %p67 = por %p65, %p66
      %p68 = scmp.ne.s32.totalorder %s56, %s57
      %p69 = scmp.eq.s32.totalorder %s26, 1
      %p70 = por %p68, %p69
      %p72 = scmp.ne.s32.totalorder %s57, %s71
      %p73 = scmp.eq.s32.totalorder %s26, 0
      %p74 = por %p72, %p73
      %s76 = sadd.s32 %s75, 1
      %p79 = scmp.eq.s32.totalorder %s20, 1
      %p80 = scmp.ne.s32.totalorder %s75, %s77
      %p81 = scmp.eq.s32.totalorder %s20, 0
      %p82 = por %p80, %p81
      %p83 = scmp.ne.s32.totalorder %s75, %s77
      %p84 = scmp.eq.s32.totalorder %s25, 1
      %p85 = por %p83, %p84
      %p86 = scmp.ne.s32.totalorder %s77, %s78
      %p87 = scmp.eq.s32.totalorder %s25, 0
      %p88 = por %p86, %p87
      %p89 = scmp.ne.s32.totalorder %s77, %s78
      %p90 = scmp.eq.s32.totalorder %s26, 1
      %p91 = por %p89, %p90
      %p93 = scmp.ne.s32.totalorder %s78, %s92
      %p94 = scmp.eq.s32.totalorder %s26, 0
      %p95 = por %p93, %p94
      %s97 = sadd.s32 %s96, 1
      %p100 = scmp.eq.s32.totalorder %s20, 1
      %p101 = scmp.ne.s32.totalorder %s96, %s98
      %p102 = scmp.eq.s32.totalorder %s20, 0
      %p103 = por %p101, %p102
      %p104 = scmp.ne.s32.totalorder %s96, %s98
      %p105 = scmp.eq.s32.totalorder %s25, 1
      %p106 = por %p104, %p105
      %p107 = scmp.ne.s32.totalorder %s98, %s99
      %p108 = scmp.eq.s32.totalorder %s25, 0
      %p109 = por %p107, %p108
      %p110 = scmp.ne.s32.totalorder %s98, %s99
      %p111 = scmp.eq.s32.totalorder %s26, 1
      %p112 = por %p110, %p111
      %p114 = scmp.ne.s32.totalorder %s99, %s113
      %p115 = scmp.eq.s32.totalorder %s26, 0
      %p116 = por %p114, %p115
      %s118 = sadd.s32 %s117, 1
      %p121 = scmp.eq.s32.totalorder %s20, 1
      %p122 = scmp.ne.s32.totalorder %s117, %s119
      %p123 = scmp.eq.s32.totalorder %s20, 0
      %p124 = por %p122, %p123
      %p125 = scmp.ne.s32.totalorder %s117, %s119
      %p126 = scmp.eq.s32.totalorder %s25, 1
      %p127 = por %p125, %p126
      %p128 = scmp.ne.s32.totalorder %s119, %s120
      %p129 = scmp.eq.s32.totalorder %s25, 0
      %p130 = por %p128, %p129
      %p131 = scmp.ne.s32.totalorder %s119, %s120
      %p132 = scmp.eq.s32.totalorder %s26, 1
      %p133 = por %p131, %p132
      %p135 = scmp.ne.s32.totalorder %s120, %s134
      %p136 = scmp.eq.s32.totalorder %s26, 0
      %p137 = por %p135, %p136
      %s139 = sadd.s32 %s138, 1
      %p142 = scmp.eq.s32.totalorder %s20, 1
      %p143 = scmp.ne.s32.totalorder %s138, %s140
      %p144 = scmp.eq.s32.totalorder %s20, 0
      %p145 = por %p143, %p144
      %p146 = scmp.ne.s32.totalorder %s138, %s140
      %p147 = scmp.eq.s32.totalorder %s25, 1
      %p148 = por %p146, %p147
      %p149 = scmp.ne.s32.totalorder %s140, %s141
      %p150 = scmp.eq.s32.totalorder %s25, 0
      %p151 = por %p149, %p150
      %p152 = scmp.ne.s32.totalorder %s140, %s141
      %p153 = scmp.eq.s32.totalorder %s26, 1
      %p154 = por %p152, %p153
      %p156 = scmp.ne.s32.totalorder %s141, %s155
      %p157 = scmp.eq.s32.totalorder %s26, 0
      %p158 = por %p156, %p157
      %s160 = sadd.s32 %s159, 1
      %p163 = scmp.eq.s32.totalorder %s20, 1
      %p164 = scmp.ne.s32.totalorder %s159, %s161
      %p165 = scmp.eq.s32.totalorder %s20, 0
      %p166 = por %p164, %p165
      %p167 = scmp.ne.s32.totalorder %s159, %s161
      %p168 = scmp.eq.s32.totalorder %s25, 1
      %p169 = por %p167, %p168
      %p170 = scmp.ne.s32.totalorder %s161, %s162
      %p171 = scmp.eq.s32.totalorder %s25, 0
      %p172 = por %p170, %p171
      %p173 = scmp.ne.s32.totalorder %s161, %s162
      %p174 = scmp.eq.s32.totalorder %s26, 1
      %p175 = por %p173, %p174
      %p177 = scmp.ne.s32.totalorder %s162, %s176
      %p178 = scmp.eq.s32.totalorder %s26, 0
      %p179 = por %p177, %p178
      %s181 = sadd.s32 %s180, 1
      %p184 = scmp.eq.s32.totalorder %s20, 1
      %p185 = scmp.ne.s32.totalorder %s180, %s182
      %p186 = scmp.eq.s32.totalorder %s20, 0
      %p187 = por %p185, %p186
      %p188 = scmp.ne.s32.totalorder %s180, %s182
      %p189 = scmp.eq.s32.totalorder %s25, 1
      %p190 = por %p188, %p189
      %p191 = scmp.ne.s32.totalorder %s182, %s183
      %p192 = scmp.eq.s32.totalorder %s25, 0
      %p193 = por %p191, %p192
      %p194 = scmp.ne.s32.totalorder %s182, %s183
      %p195 = scmp.eq.s32.totalorder %s26, 1
      %p196 = por %p194, %p195
      %p198 = scmp.ne.s32.totalorder %s183, %s197
      %p199 = scmp.eq.s32.totalorder %s26, 0
      %p200 = por %p198, %p199
      %s202 = sadd.s32 %s201, 1
      %p205 = scmp.eq.s32.totalorder %s20, 1
      %p206 = scmp.ne.s32.totalorder %s201, %s203
      %p207 = scmp.eq.s32.totalorder %s20, 0
      %p208 = por %p206, %p207
      %p209 = scmp.ne.s32.totalorder %s201, %s203
      %p210 = scmp.eq.s32.totalorder %s25, 1
      %p211 = por %p209, %p210
      %p212 = scmp.ne.s32.totalorder %s203, %s204
      %p213 = scmp.eq.s32.totalorder %s25, 0
      %p214 = por %p212, %p213
      %p215 = scmp.ne.s32.totalorder %s203, %s204
      %p216 = scmp.eq.s32.totalorder %s26, 1
      %p217 = por %p215, %p216
      %p219 = scmp.ne.s32.totalorder %s204, %s218
      %p220 = scmp.eq.s32.totalorder %s26, 0
      %p221 = por %p219, %p220
      %s223 = sadd.s32 %s222, 1
      %p226 = scmp.eq.s32.totalorder %s20, 1
      %p227 = scmp.ne.s32.totalorder %s222, %s224
      %p228 = scmp.eq.s32.totalorder %s20, 0
      %p229 = por %p227, %p228
      %p230 = scmp.ne.s32.totalorder %s222, %s224
      %p231 = scmp.eq.s32.totalorder %s25, 1
      %p232 = por %p230, %p231
      %p233 = scmp.ne.s32.totalorder %s224, %s225
      %p234 = scmp.eq.s32.totalorder %s25, 0
      %p235 = por %p233, %p234
      %p236 = scmp.ne.s32.totalorder %s224, %s225
      %p237 = scmp.eq.s32.totalorder %s26, 1
      %p238 = por %p236, %p237
      %p240 = scmp.ne.s32.totalorder %s225, %s239
      %p241 = scmp.eq.s32.totalorder %s26, 0
      %p242 = por %p240, %p241
      %s244 = sadd.s32 %s243, 1
      %p247 = scmp.eq.s32.totalorder %s20, 1
      %p248 = scmp.ne.s32.totalorder %s243, %s245
      %p249 = scmp.eq.s32.totalorder %s20, 0
      %p250 = por %p248, %p249
      %p251 = scmp.ne.s32.totalorder %s243, %s245
      %p252 = scmp.eq.s32.totalorder %s25, 1
      %p253 = por %p251, %p252
      %p254 = scmp.ne.s32.totalorder %s245, %s246
      %p255 = scmp.eq.s32.totalorder %s25, 0
      %p256 = por %p254, %p255
      %p257 = scmp.ne.s32.totalorder %s245, %s246
      %p258 = scmp.eq.s32.totalorder %s26, 1
      %p259 = por %p257, %p258
      %p261 = scmp.ne.s32.totalorder %s246, %s260
      %p262 = scmp.eq.s32.totalorder %s26, 0
      %p263 = por %p261, %p262
      %s265 = sadd.s32 %s264, 1
      %p268 = scmp.eq.s32.totalorder %s20, 1
      %p269 = scmp.ne.s32.totalorder %s264, %s266
      %p270 = scmp.eq.s32.totalorder %s20, 0
      %p271 = por %p269, %p270
      %p272 = scmp.ne.s32.totalorder %s264, %s266
      %p273 = scmp.eq.s32.totalorder %s25, 1
      %p274 = por %p272, %p273
      %p275 = scmp.ne.s32.totalorder %s266, %s267
      %p276 = scmp.eq.s32.totalorder %s25, 0
      %p277 = por %p275, %p276
      %p278 = scmp.ne.s32.totalorder %s266, %s267
      %p279 = scmp.eq.s32.totalorder %s26, 1
      %p280 = por %p278, %p279
      %p282 = scmp.ne.s32.totalorder %s267, %s281
      %p283 = scmp.eq.s32.totalorder %s26, 0
      %p284 = por %p282, %p283
      %s285 = ssub.s32 %s20, %s27
      %p286 = scmp.eq.s32.totalorder %s285, 0
      %s288 = sadd.s32 %s287, 1
      %s289 = scalar_select %p286, %s287, %s288
      %p292 = pneg %p286
      %p293 = scmp.eq.s32.totalorder %s20, 1
      %p294 = por %p292, %p293
      %p295 = scmp.ne.s32.totalorder %s287, %s290
      %p296 = scmp.eq.s32.totalorder %s20, 0
      %p297 = por %p295, %p296
      %p298 = scmp.ne.s32.totalorder %s287, %s290
      %p299 = scmp.eq.s32.totalorder %s25, 1
      %p300 = por %p298, %p299
      %p301 = scmp.ne.s32.totalorder %s290, %s291
      %p302 = scmp.eq.s32.totalorder %s25, 0
      %p303 = por %p301, %p302
      %p304 = scmp.ne.s32.totalorder %s290, %s291
      %p305 = scmp.eq.s32.totalorder %s26, 1
      %p306 = por %p304, %p305
      %p308 = scmp.ne.s32.totalorder %s291, %s307
      %p309 = scmp.eq.s32.totalorder %s26, 0
      %p310 = por %p308, %p309
      %p311 = scmp.le.s32.totalorder 1, %s20
      %p312 = scmp.lt.s32.totalorder %s20, 3
      %p313 = pnand %p311, %p312
      %p314 = pneg %p313
      // Predicated region
      $region9: #{_lambda_.3} parent=5 // pred_check
        _
      $region10: #{_lambda_.3} parent=5 // pred_check_branch
        %316 = sbr.rel (%p313) target = $region12
      $region11: #{_lambda_.3} parent=5 // pred_region
        %s317 = ssub.s32 %s20, 1
        // Predicated region
        $region13: #{_lambda_.3} parent=11 // pred_check
          %p318 = pneg %p67
        $region14: #{_lambda_.3} parent=11 // pred_check_branch
          %320 = sbr.rel (%p318) target = $region16
        $region15: #{_lambda_.3} parent=11 // pred_region
          _
        $region16: #{_lambda_.3} parent=11 // pred_fallthru
          _
        // Predicated region
        $region17: #{_lambda_.3} parent=11 // pred_check
          %p321 = pneg %p88
        $region18: #{_lambda_.3} parent=11 // pred_check_branch
          %323 = sbr.rel (%p321) target = $region20
        $region19: #{_lambda_.3} parent=11 // pred_region
          %325 = vsyncadd [#allocation3], 0
          %s326 = sshll.u32 %s2, 4
          %s327 = int_to_ptr.hbm [resolvable:$true] %s326
          %s328 = sshll.u32 [#allocation2], 4
          %s329 = int_to_ptr.vmem [resolvable:$true] %s328
          %334 = dma.hbm_to_vmem [thread:$0]  %s327, 8192, %s329, [#allocation3], 256, 256, 16
        $region20: #{_lambda_.3} parent=11 // pred_fallthru
          _
        // Predicated region
        $region21: #{_lambda_.3} parent=11 // pred_check
          %p335 = pneg %p109
        $region22: #{_lambda_.3} parent=11 // pred_check_branch
          %337 = sbr.rel (%p335) target = $region24
        $region23: #{_lambda_.3} parent=11 // pred_region
          _
        $region24: #{_lambda_.3} parent=11 // pred_fallthru
          _
        // Predicated region
        $region25: #{_lambda_.3} parent=11 // pred_check
          %p338 = pneg %p130
        $region26: #{_lambda_.3} parent=11 // pred_check_branch
          %340 = sbr.rel (%p338) target = $region28
        $region27: #{_lambda_.3} parent=11 // pred_region
          _
        $region28: #{_lambda_.3} parent=11 // pred_fallthru
          _
        // Predicated region
        $region29: #{_lambda_.3} parent=11 // pred_check
          %p341 = pneg %p151
        $region30: #{_lambda_.3} parent=11 // pred_check_branch
          %343 = sbr.rel (%p341) target = $region32
        $region31: #{_lambda_.3} parent=11 // pred_region
          %345 = vsyncadd [#allocation5], 0
          %s346 = sshll.u32 %s5, 4
          %s347 = int_to_ptr.hbm [resolvable:$true] %s346
          %s348 = sshll.u32 [#allocation4], 4
          %s349 = int_to_ptr.vmem [resolvable:$true] %s348
          %354 = dma.hbm_to_vmem [thread:$0]  %s347, 16384, %s349, [#allocation5], 512, 512, 32
        $region32: #{_lambda_.3} parent=11 // pred_fallthru
          _
        // Predicated region
        $region33: #{_lambda_.3} parent=11 // pred_check
          %p355 = pneg %p172
        $region34: #{_lambda_.3} parent=11 // pred_check_branch
          %357 = sbr.rel (%p355) target = $region36
        $region35: #{_lambda_.3} parent=11 // pred_region
          %359 = vsyncadd [#allocation5], 0
          %s360 = sshll.u32 %s6, 4
          %s361 = int_to_ptr.hbm [resolvable:$true] %s360
          %s362 = sshll.u32 [#allocation6], 4
          %s363 = int_to_ptr.vmem [resolvable:$true] %s362
          %368 = dma.hbm_to_vmem [thread:$0]  %s361, 8192, %s363, [#allocation5], 128, 128, 8
        $region36: #{_lambda_.3} parent=11 // pred_fallthru
          _
        // Predicated region
        $region37: #{_lambda_.3} parent=11 // pred_check
          %p369 = pneg %p193
        $region38: #{_lambda_.3} parent=11 // pred_check_branch
          %371 = sbr.rel (%p369) target = $region40
        $region39: #{_lambda_.3} parent=11 // pred_region
          _
        $region40: #{_lambda_.3} parent=11 // pred_fallthru
          _
        // Predicated region
        $region41: #{_lambda_.3} parent=11 // pred_check
          %p372 = pneg %p214
        $region42: #{_lambda_.3} parent=11 // pred_check_branch
          %374 = sbr.rel (%p372) target = $region44
        $region43: #{_lambda_.3} parent=11 // pred_region
          _
        $region44: #{_lambda_.3} parent=11 // pred_fallthru
          _
        // Predicated region
        $region45: #{_lambda_.3} parent=11 // pred_check
          %p375 = pneg %p235
        $region46: #{_lambda_.3} parent=11 // pred_check_branch
          %377 = sbr.rel (%p375) target = $region48
        $region47: #{_lambda_.3} parent=11 // pred_region
          _
        $region48: #{_lambda_.3} parent=11 // pred_fallthru
          _
        // Predicated region
        $region49: #{_lambda_.3} parent=11 // pred_check
          %p378 = pneg %p256
        $region50: #{_lambda_.3} parent=11 // pred_check_branch
          %380 = sbr.rel (%p378) target = $region52
        $region51: #{_lambda_.3} parent=11 // pred_region
          _
        $region52: #{_lambda_.3} parent=11 // pred_fallthru
          _
        // Predicated region
        $region53: #{_lambda_.3} parent=11 // pred_check
          %p381 = pneg %p277
        $region54: #{_lambda_.3} parent=11 // pred_check_branch
          %383 = sbr.rel (%p381) target = $region56
        $region55: #{_lambda_.3} parent=11 // pred_region
          _
        $region56: #{_lambda_.3} parent=11 // pred_fallthru
          _
      $region12: #{_lambda_.3} parent=5 // pred_fallthru
        _
      %p384 = scmp.lt.s32.totalorder %s20, 2
      // Predicated region
      $region57: #{_lambda_.3} parent=5 // pred_check
        %p385 = pneg %p384
      $region58: #{_lambda_.3} parent=5 // pred_check_branch
        %387 = sbr.rel (%p385) target = $region60
      $region59: #{_lambda_.3} parent=5 // pred_region
        // Predicated region
        $region61: #{_lambda_.3} parent=59 // pred_check
          %p388 = pneg %p40
        $region62: #{_lambda_.3} parent=59 // pred_check_branch
          %390 = sbr.rel (%p388) target = $region64
        $region63: #{_lambda_.3} parent=59 // pred_region
          %p391 = scmp.lt.s32.totalorder %s20, 1
          %s392 = scalar_select %p391, %s20, 1
          %s393 = smul.addr %s392, 2
          %s394 = smul.addr %s393, 4
          %s395 = scalar_lea.vmem %s0, %s394
        $region64: #{_lambda_.3} parent=59 // pred_fallthru
          _
      $region60: #{_lambda_.3} parent=5 // pred_fallthru
        _
      %p396 = scmp.le.s32.totalorder 1, %s20
      %p397 = scmp.lt.s32.totalorder %s20, 3
      %p398 = pnand %p396, %p397
      %p399 = pneg %p398
      // Predicated region
      $region65: #{_lambda_.3} parent=5 // pred_check
        _
      $region66: #{_lambda_.3} parent=5 // pred_check_branch
        %401 = sbr.rel (%p398) target = $region68
      $region67: #{_lambda_.3} parent=5 // pred_region
        %s402 = ssub.s32 %s20, 1
        // Predicated region
        $region69: #{_lambda_.3} parent=67 // pred_check
          %p403 = pneg %p88
        $region70: #{_lambda_.3} parent=67 // pred_check_branch
          %405 = sbr.rel (%p403) target = $region72
        $region71: #{_lambda_.3} parent=67 // pred_region
          %407 = dma.done [#allocation3], 8192
        $region72: #{_lambda_.3} parent=67 // pred_fallthru
          _
        // Predicated region
        $region73: #{_lambda_.3} parent=67 // pred_check
          %p408 = pneg %p151
        $region74: #{_lambda_.3} parent=67 // pred_check_branch
          %410 = sbr.rel (%p408) target = $region76
        $region75: #{_lambda_.3} parent=67 // pred_region
          %412 = dma.done [#allocation5], 16384
        $region76: #{_lambda_.3} parent=67 // pred_fallthru
          _
        // Predicated region
        $region77: #{_lambda_.3} parent=67 // pred_check
          %p413 = pneg %p172
        $region78: #{_lambda_.3} parent=67 // pred_check_branch
          %415 = sbr.rel (%p413) target = $region80
        $region79: #{_lambda_.3} parent=67 // pred_region
          %417 = dma.done [#allocation5], 8192
        $region80: #{_lambda_.3} parent=67 // pred_fallthru
          _
        %p418 = scmp.lt.s32.totalorder %s25, 1
        %s419 = scalar_select %p418, %s25, 1
        %s420 = smul.addr %s419, 2
        %s421 = smul.addr %s420, 4
        %s422 = scalar_lea.vmem %s0, %s421
        %p423 = pneg %p46
        %p424 = pneg %p43
        %p425 = pneg %p67
        %p426 = pneg %p64
        %p427 = pneg %p88
        %p428 = pneg %p85
        %p429 = pneg %p109
        %p430 = pneg %p106
        %p431 = pneg %p130
        %p432 = pneg %p127
        %p433 = pneg %p151
        %p434 = pneg %p148
        %p435 = pneg %p172
        %p436 = pneg %p169
        %p437 = pneg %p193
        %p438 = pneg %p190
        %p439 = pneg %p214
        %p440 = pneg %p211
        %p441 = pneg %p235
        %p442 = pneg %p232
        %p443 = pneg %p256
        %p444 = pneg %p253
        %p445 = pneg %p277
        %p446 = pneg %p274
        %p447 = pneg %p303
        %p448 = pneg %p300
        %p449 = scmp.lt.s32.totalorder %s25, 1
        %s450 = scalar_select %p449, %s25, 1
        %s451 = smul.addr %s450, 2
        %s452 = smul.addr %s451, 4
        %s453 = scalar_lea.vmem %s12, %s452
        %p454 = scmp.lt.s32.totalorder %s25, 1
        %s455 = scalar_select %p454, %s25, 1
        %s456 = smul.addr %s455, 2
        %s457 = smul.addr %s456, 4
        %s458 = scalar_lea.vmem %s0, %s457
        %p459 = scmp.lt.s32.totalorder %s25, 1
        %s460 = scalar_select %p459, %s25, 1
        %s461 = smul.addr %s460, 2
        %s462 = smul.addr %s461, 4
        %s463 = scalar_lea.vmem %s12, %s462
        %v465 = vld [vmem:[%s458] sm:$0xff]
        %v466 = vunpack.c.l.bf16 %v465
        %v467 = vunpack.c.h.bf16 %v465
        %v468 = vmul.f32 %v466, %v466
        %v469 = vmul.f32 %v467, %v467
        %v470 = vadd.f32 %v468, %v469
        %471 = vadd.xlane.f32.xlu0 %v470
        %v472 = vpop.xlane.xlu0 %471
        %v473 = vrcp.pop 256.0
        %v474 = vmul.f32 256.0, %v473
        %v475 = vsub.f32 1.0, %v474
        %v476 = vmul.f32 %v473, %v475
        %v477 = vadd.f32 %v473, %v476
        %vm478 = vweird.f32 %v473
        %v479 = vsel %vm478, %v473, %v477
        %v480 = vmul.f32 %v472, %v479
        %v481 = vadd.f32 %v480, 1e-05
        %v482 = vrsqrt.pop %v481
        %v483 = vmul.f32 %v482, %v481
        %v484 = vmul.f32 %v483, %v482
        %v485 = vmul.f32 0.5, %v484
        %v486 = vsub.f32 1.5, %v485
        %v487 = vmul.f32 %v482, %v486
        %vm488 = vweird.f32 %v481
        %vm489 = vweird.f32 %v482
        %vm490 = vmor %vm488, %vm489
        %v491 = vsel %vm490, %v482, %v487
        %v492 = vmul.f32 %v466, %v491
        %v493 = vmul.f32 %v467, %v491
        %v494 = vld [vmem:[%s1] sm:$0x3]
        %v496 = vperm.slane %v494, 0
        %v497 = vperm.slane %v494, 1
        %v500 = vmul.f32 %v492, %v496
        %v501 = vmul.f32 %v493, %v497
        %v502 = vpack.c.bf16 %v500, %v500
        %v503 = vpack.c.bf16 %v501, %v501
        %v504 = vld [vmem:[#allocation2] sm:$0xff]
        %v505 = vld [vmem:[#allocation2 + $0x8] sm:$0xff]
        %v506 = vld [vmem:[#allocation2 + $0x10] sm:$0xff]
        %v507 = vld [vmem:[#allocation2 + $0x18] sm:$0xff]
        %v508 = vld [vmem:[#allocation2 + $0x20] sm:$0xff]
        %v509 = vld [vmem:[#allocation2 + $0x28] sm:$0xff]
        %v510 = vld [vmem:[#allocation2 + $0x30] sm:$0xff]
        %v511 = vld [vmem:[#allocation2 + $0x38] sm:$0xff]
        %v512 = vld [vmem:[#allocation2 + $0x40] sm:$0xff]
        %v513 = vld [vmem:[#allocation2 + $0x48] sm:$0xff]
        %v514 = vld [vmem:[#allocation2 + $0x50] sm:$0xff]
        %v515 = vld [vmem:[#allocation2 + $0x58] sm:$0xff]
        %v516 = vld [vmem:[#allocation2 + $0x60] sm:$0xff]
        %v517 = vld [vmem:[#allocation2 + $0x68] sm:$0xff]
        %v518 = vld [vmem:[#allocation2 + $0x70] sm:$0xff]
        %v519 = vld [vmem:[#allocation2 + $0x78] sm:$0xff]
        %v520 = vld [vmem:[#allocation2 + $0x80] sm:$0xff]
        %v521 = vld [vmem:[#allocation2 + $0x88] sm:$0xff]
        %v522 = vld [vmem:[#allocation2 + $0x90] sm:$0xff]
        %v523 = vld [vmem:[#allocation2 + $0x98] sm:$0xff]
        %v524 = vld [vmem:[#allocation2 + $0xa0] sm:$0xff]
        %v525 = vld [vmem:[#allocation2 + $0xa8] sm:$0xff]
        %v526 = vld [vmem:[#allocation2 + $0xb0] sm:$0xff]
        %v527 = vld [vmem:[#allocation2 + $0xb8] sm:$0xff]
        %v528 = vld [vmem:[#allocation2 + $0xc0] sm:$0xff]
        %v529 = vld [vmem:[#allocation2 + $0xc8] sm:$0xff]
        %v530 = vld [vmem:[#allocation2 + $0xd0] sm:$0xff]
        %v531 = vld [vmem:[#allocation2 + $0xd8] sm:$0xff]
        %v532 = vld [vmem:[#allocation2 + $0xe0] sm:$0xff]
        %v533 = vld [vmem:[#allocation2 + $0xe8] sm:$0xff]
        %v534 = vld [vmem:[#allocation2 + $0xf0] sm:$0xff]
        %v535 = vld [vmem:[#allocation2 + $0xf8] sm:$0xff]
        %v536 = vld [vmem:[#allocation2 + $0x100] sm:$0xff]
        %v537 = vld [vmem:[#allocation2 + $0x108] sm:$0xff]
        %v538 = vld [vmem:[#allocation2 + $0x110] sm:$0xff]
        %v539 = vld [vmem:[#allocation2 + $0x118] sm:$0xff]
        %v540 = vld [vmem:[#allocation2 + $0x120] sm:$0xff]
        %v541 = vld [vmem:[#allocation2 + $0x128] sm:$0xff]
        %v542 = vld [vmem:[#allocation2 + $0x130] sm:$0xff]
        %v543 = vld [vmem:[#allocation2 + $0x138] sm:$0xff]
        %v544 = vld [vmem:[#allocation2 + $0x140] sm:$0xff]
        %v545 = vld [vmem:[#allocation2 + $0x148] sm:$0xff]
        %v546 = vld [vmem:[#allocation2 + $0x150] sm:$0xff]
        %v547 = vld [vmem:[#allocation2 + $0x158] sm:$0xff]
        %v548 = vld [vmem:[#allocation2 + $0x160] sm:$0xff]
        %v549 = vld [vmem:[#allocation2 + $0x168] sm:$0xff]
        %v550 = vld [vmem:[#allocation2 + $0x170] sm:$0xff]
        %v551 = vld [vmem:[#allocation2 + $0x178] sm:$0xff]
        %v552 = vld [vmem:[#allocation2 + $0x180] sm:$0xff]
        %v553 = vld [vmem:[#allocation2 + $0x188] sm:$0xff]
        %v554 = vld [vmem:[#allocation2 + $0x190] sm:$0xff]
        %v555 = vld [vmem:[#allocation2 + $0x198] sm:$0xff]
        %v556 = vld [vmem:[#allocation2 + $0x1a0] sm:$0xff]
        %v557 = vld [vmem:[#allocation2 + $0x1a8] sm:$0xff]
        %v558 = vld [vmem:[#allocation2 + $0x1b0] sm:$0xff]
        %v559 = vld [vmem:[#allocation2 + $0x1b8] sm:$0xff]
        %v560 = vld [vmem:[#allocation2 + $0x1c0] sm:$0xff]
        %v561 = vld [vmem:[#allocation2 + $0x1c8] sm:$0xff]
        %v562 = vld [vmem:[#allocation2 + $0x1d0] sm:$0xff]
        %v563 = vld [vmem:[#allocation2 + $0x1d8] sm:$0xff]
        %v564 = vld [vmem:[#allocation2 + $0x1e0] sm:$0xff]
        %v565 = vld [vmem:[#allocation2 + $0x1e8] sm:$0xff]
        %v566 = vld [vmem:[#allocation2 + $0x1f0] sm:$0xff]
        %v567 = vld [vmem:[#allocation2 + $0x1f8] sm:$0xff]
        %v632 = vunpack.c.l.b16 %v504
        %v633 = vunpack.c.h.b16 %v504
        %v634 = vunpack.c.l.b16 %v505
        %v635 = vunpack.c.h.b16 %v505
        %v636 = vunpack.c.l.b16 %v506
        %v637 = vunpack.c.h.b16 %v506
        %v638 = vunpack.c.l.b16 %v507
        %v639 = vunpack.c.h.b16 %v507
        %v640 = vunpack.c.l.b16 %v508
        %v641 = vunpack.c.h.b16 %v508
        %v642 = vunpack.c.l.b16 %v509
        %v643 = vunpack.c.h.b16 %v509
        %v644 = vunpack.c.l.b16 %v510
        %v645 = vunpack.c.h.b16 %v510
        %v646 = vunpack.c.l.b16 %v511
        %v647 = vunpack.c.h.b16 %v511
        %v648 = vunpack.c.l.b16 %v512
        %v649 = vunpack.c.h.b16 %v512
        %v650 = vunpack.c.l.b16 %v513
        %v651 = vunpack.c.h.b16 %v513
        %v652 = vunpack.c.l.b16 %v514
        %v653 = vunpack.c.h.b16 %v514
        %v654 = vunpack.c.l.b16 %v515
        %v655 = vunpack.c.h.b16 %v515
        %v656 = vunpack.c.l.b16 %v516
        %v657 = vunpack.c.h.b16 %v516
        %v658 = vunpack.c.l.b16 %v517
        %v659 = vunpack.c.h.b16 %v517
        %v660 = vunpack.c.l.b16 %v518
        %v661 = vunpack.c.h.b16 %v518
        %v662 = vunpack.c.l.b16 %v519
        %v663 = vunpack.c.h.b16 %v519
        %v664 = vunpack.c.l.b16 %v520
        %v665 = vunpack.c.h.b16 %v520
        %v666 = vunpack.c.l.b16 %v521
        %v667 = vunpack.c.h.b16 %v521
        %v668 = vunpack.c.l.b16 %v522
        %v669 = vunpack.c.h.b16 %v522
        %v670 = vunpack.c.l.b16 %v523
        %v671 = vunpack.c.h.b16 %v523
        %v672 = vunpack.c.l.b16 %v524
        %v673 = vunpack.c.h.b16 %v524
        %v674 = vunpack.c.l.b16 %v525
        %v675 = vunpack.c.h.b16 %v525
        %v676 = vunpack.c.l.b16 %v526
        %v677 = vunpack.c.h.b16 %v526
        %v678 = vunpack.c.l.b16 %v527
        %v679 = vunpack.c.h.b16 %v527
        %v680 = vunpack.c.l.b16 %v528
        %v681 = vunpack.c.h.b16 %v528
        %v682 = vunpack.c.l.b16 %v529
        %v683 = vunpack.c.h.b16 %v529
        %v684 = vunpack.c.l.b16 %v530
        %v685 = vunpack.c.h.b16 %v530
        %v686 = vunpack.c.l.b16 %v531
        %v687 = vunpack.c.h.b16 %v531
        %v688 = vunpack.c.l.b16 %v532
        %v689 = vunpack.c.h.b16 %v532
        %v690 = vunpack.c.l.b16 %v533
        %v691 = vunpack.c.h.b16 %v533
        %v692 = vunpack.c.l.b16 %v534
        %v693 = vunpack.c.h.b16 %v534
        %v694 = vunpack.c.l.b16 %v535
        %v695 = vunpack.c.h.b16 %v535
        %v696 = vunpack.c.l.b16 %v536
        %v697 = vunpack.c.h.b16 %v536
        %v698 = vunpack.c.l.b16 %v537
        %v699 = vunpack.c.h.b16 %v537
        %v700 = vunpack.c.l.b16 %v538
        %v701 = vunpack.c.h.b16 %v538
        %v702 = vunpack.c.l.b16 %v539
        %v703 = vunpack.c.h.b16 %v539
        %v704 = vunpack.c.l.b16 %v540
        %v705 = vunpack.c.h.b16 %v540
        %v706 = vunpack.c.l.b16 %v541
        %v707 = vunpack.c.h.b16 %v541
        %v708 = vunpack.c.l.b16 %v542
        %v709 = vunpack.c.h.b16 %v542
        %v710 = vunpack.c.l.b16 %v543
        %v711 = vunpack.c.h.b16 %v543
        %v712 = vunpack.c.l.b16 %v544
        %v713 = vunpack.c.h.b16 %v544
        %v714 = vunpack.c.l.b16 %v545
        %v715 = vunpack.c.h.b16 %v545
        %v716 = vunpack.c.l.b16 %v546
        %v717 = vunpack.c.h.b16 %v546
        %v718 = vunpack.c.l.b16 %v547
        %v719 = vunpack.c.h.b16 %v547
        %v720 = vunpack.c.l.b16 %v548
        %v721 = vunpack.c.h.b16 %v548
        %v722 = vunpack.c.l.b16 %v549
        %v723 = vunpack.c.h.b16 %v549
        %v724 = vunpack.c.l.b16 %v550
        %v725 = vunpack.c.h.b16 %v550
        %v726 = vunpack.c.l.b16 %v551
        %v727 = vunpack.c.h.b16 %v551
        %v728 = vunpack.c.l.b16 %v552
        %v729 = vunpack.c.h.b16 %v552
        %v730 = vunpack.c.l.b16 %v553
        %v731 = vunpack.c.h.b16 %v553
        %v732 = vunpack.c.l.b16 %v554
        %v733 = vunpack.c.h.b16 %v554
        %v734 = vunpack.c.l.b16 %v555
        %v735 = vunpack.c.h.b16 %v555
        %v736 = vunpack.c.l.b16 %v556
        %v737 = vunpack.c.h.b16 %v556
        %v738 = vunpack.c.l.b16 %v557
        %v739 = vunpack.c.h.b16 %v557
        %v740 = vunpack.c.l.b16 %v558
        %v741 = vunpack.c.h.b16 %v558
        %v742 = vunpack.c.l.b16 %v559
        %v743 = vunpack.c.h.b16 %v559
        %v744 = vunpack.c.l.b16 %v560
        %v745 = vunpack.c.h.b16 %v560
        %v746 = vunpack.c.l.b16 %v561
        %v747 = vunpack.c.h.b16 %v561
        %v748 = vunpack.c.l.b16 %v562
        %v749 = vunpack.c.h.b16 %v562
        %v750 = vunpack.c.l.b16 %v563
        %v751 = vunpack.c.h.b16 %v563
        %v752 = vunpack.c.l.b16 %v564
        %v753 = vunpack.c.h.b16 %v564
        %v754 = vunpack.c.l.b16 %v565
        %v755 = vunpack.c.h.b16 %v565
        %v756 = vunpack.c.l.b16 %v566
        %v757 = vunpack.c.h.b16 %v566
        %v758 = vunpack.c.l.b16 %v567
        %v759 = vunpack.c.h.b16 %v567
        %v760 = vpack.c.b16 %v636, %v632
        %v761 = vpack.c.b16 %v637, %v633
        %v762 = vpack.c.b16 %v638, %v634
        %v763 = vpack.c.b16 %v639, %v635
        %v764 = vpack.c.b16 %v644, %v640
        %v765 = vpack.c.b16 %v645, %v641
        %v766 = vpack.c.b16 %v646, %v642
        %v767 = vpack.c.b16 %v647, %v643
        %v768 = vpack.c.b16 %v652, %v648
        %v769 = vpack.c.b16 %v653, %v649
        %v770 = vpack.c.b16 %v654, %v650
        %v771 = vpack.c.b16 %v655, %v651
        %v772 = vpack.c.b16 %v660, %v656
        %v773 = vpack.c.b16 %v661, %v657
        %v774 = vpack.c.b16 %v662, %v658
        %v775 = vpack.c.b16 %v663, %v659
        %v776 = vpack.c.b16 %v668, %v664
        %v777 = vpack.c.b16 %v669, %v665
        %v778 = vpack.c.b16 %v670, %v666
        %v779 = vpack.c.b16 %v671, %v667
        %v780 = vpack.c.b16 %v676, %v672
        %v781 = vpack.c.b16 %v677, %v673
        %v782 = vpack.c.b16 %v678, %v674
        %v783 = vpack.c.b16 %v679, %v675
        %v784 = vpack.c.b16 %v684, %v680
        %v785 = vpack.c.b16 %v685, %v681
        %v786 = vpack.c.b16 %v686, %v682
        %v787 = vpack.c.b16 %v687, %v683
        %v788 = vpack.c.b16 %v692, %v688
        %v789 = vpack.c.b16 %v693, %v689
        %v790 = vpack.c.b16 %v694, %v690
        %v791 = vpack.c.b16 %v695, %v691
        %v792 = vpack.c.b16 %v700, %v696
        %v793 = vpack.c.b16 %v701, %v697
        %v794 = vpack.c.b16 %v702, %v698
        %v795 = vpack.c.b16 %v703, %v699
        %v796 = vpack.c.b16 %v708, %v704
        %v797 = vpack.c.b16 %v709, %v705
        %v798 = vpack.c.b16 %v710, %v706
        %v799 = vpack.c.b16 %v711, %v707
        %v800 = vpack.c.b16 %v716, %v712
        %v801 = vpack.c.b16 %v717, %v713
        %v802 = vpack.c.b16 %v718, %v714
        %v803 = vpack.c.b16 %v719, %v715
        %v804 = vpack.c.b16 %v724, %v720
        %v805 = vpack.c.b16 %v725, %v721
        %v806 = vpack.c.b16 %v726, %v722
        %v807 = vpack.c.b16 %v727, %v723
        %v808 = vpack.c.b16 %v732, %v728
        %v809 = vpack.c.b16 %v733, %v729
        %v810 = vpack.c.b16 %v734, %v730
        %v811 = vpack.c.b16 %v735, %v731
        %v812 = vpack.c.b16 %v740, %v736
        %v813 = vpack.c.b16 %v741, %v737
        %v814 = vpack.c.b16 %v742, %v738
        %v815 = vpack.c.b16 %v743, %v739
        %v816 = vpack.c.b16 %v748, %v744
        %v817 = vpack.c.b16 %v749, %v745
        %v818 = vpack.c.b16 %v750, %v746
        %v819 = vpack.c.b16 %v751, %v747
        %v820 = vpack.c.b16 %v756, %v752
        %v821 = vpack.c.b16 %v757, %v753
        %v822 = vpack.c.b16 %v758, %v754
        %v823 = vpack.c.b16 %v759, %v755
        %888 = vmatpush.bf16.msra.mxu0 %v788
        %889 = vmatpush.bf16.msra.mxu0 %v784
        %890 = vmatpush.bf16.msra.mxu0 %v780
        %891 = vmatpush.bf16.msra.mxu0 %v776
        %892 = vmatpush.bf16.msra.mxu0 %v772
        %893 = vmatpush.bf16.msra.mxu0 %v768
        %894 = vmatpush.bf16.msra.mxu0 %v764
        %895 = vmatpush.bf16.msra.mxu0 %v760
        %896 = vmatmul.bf16.gmra.mxu0 %v502
        %v897 = vpop.f32.mrf.mxu0
        %v898 = vadd.f32 0.0, %v897
        %v899 = vpop.f32.mrf.mxu0
        %900 = vdwg.mxu0
        %901 = vmatpush.bf16.msra.mxu0 %v820
        %902 = vmatpush.bf16.msra.mxu0 %v816
        %903 = vmatpush.bf16.msra.mxu0 %v812
        %904 = vmatpush.bf16.msra.mxu0 %v808
        %905 = vmatpush.bf16.msra.mxu0 %v804
        %906 = vmatpush.bf16.msra.mxu0 %v800
        %907 = vmatpush.bf16.msra.mxu0 %v796
        %908 = vmatpush.bf16.msra.mxu0 %v792
        %909 = vmatmul.bf16.gmra.mxu0 %v503
        %v910 = vpop.f32.mrf.mxu0
        %v911 = vadd.f32 %v898, %v910
        %v912 = vpop.f32.mrf.mxu0
        %913 = vdwg.mxu0
        %914 = vmatpush.bf16.msra.mxu0 %v789
        %915 = vmatpush.bf16.msra.mxu0 %v785
        %916 = vmatpush.bf16.msra.mxu0 %v781
        %917 = vmatpush.bf16.msra.mxu0 %v777
        %918 = vmatpush.bf16.msra.mxu0 %v773
        %919 = vmatpush.bf16.msra.mxu0 %v769
        %920 = vmatpush.bf16.msra.mxu0 %v765
        %921 = vmatpush.bf16.msra.mxu0 %v761
        %922 = vmatmul.bf16.gmra.mxu0 %v502
        %v923 = vpop.f32.mrf.mxu0
        %v924 = vadd.f32 0.0, %v923
        %v925 = vpop.f32.mrf.mxu0
        %926 = vdwg.mxu0
        %927 = vmatpush.bf16.msra.mxu0 %v821
        %928 = vmatpush.bf16.msra.mxu0 %v817
        %929 = vmatpush.bf16.msra.mxu0 %v813
        %930 = vmatpush.bf16.msra.mxu0 %v809
        %931 = vmatpush.bf16.msra.mxu0 %v805
        %932 = vmatpush.bf16.msra.mxu0 %v801
        %933 = vmatpush.bf16.msra.mxu0 %v797
        %934 = vmatpush.bf16.msra.mxu0 %v793
        %935 = vmatmul.bf16.gmra.mxu0 %v503
        %v936 = vpop.f32.mrf.mxu0
        %v937 = vadd.f32 %v924, %v936
        %v938 = vpop.f32.mrf.mxu0
        %939 = vdwg.mxu0
        %940 = vmatpush.bf16.msra.mxu0 %v790
        %941 = vmatpush.bf16.msra.mxu0 %v786
        %942 = vmatpush.bf16.msra.mxu0 %v782
        %943 = vmatpush.bf16.msra.mxu0 %v778
        %944 = vmatpush.bf16.msra.mxu0 %v774
        %945 = vmatpush.bf16.msra.mxu0 %v770
        %946 = vmatpush.bf16.msra.mxu0 %v766
        %947 = vmatpush.bf16.msra.mxu0 %v762
        %948 = vmatmul.bf16.gmra.mxu0 %v502
        %v949 = vpop.f32.mrf.mxu0
        %v950 = vadd.f32 0.0, %v949
        %v951 = vpop.f32.mrf.mxu0
        %952 = vdwg.mxu0
        %953 = vmatpush.bf16.msra.mxu0 %v822
        %954 = vmatpush.bf16.msra.mxu0 %v818
        %955 = vmatpush.bf16.msra.mxu0 %v814
        %956 = vmatpush.bf16.msra.mxu0 %v810
        %957 = vmatpush.bf16.msra.mxu0 %v806
        %958 = vmatpush.bf16.msra.mxu0 %v802
        %959 = vmatpush.bf16.msra.mxu0 %v798
        %960 = vmatpush.bf16.msra.mxu0 %v794
        %961 = vmatmul.bf16.gmra.mxu0 %v503
        %v962 = vpop.f32.mrf.mxu0
        %v963 = vadd.f32 %v950, %v962
        %v964 = vpop.f32.mrf.mxu0
        %965 = vdwg.mxu0
        %966 = vmatpush.bf16.msra.mxu0 %v791
        %967 = vmatpush.bf16.msra.mxu0 %v787
        %968 = vmatpush.bf16.msra.mxu0 %v783
        %969 = vmatpush.bf16.msra.mxu0 %v779
        %970 = vmatpush.bf16.msra.mxu0 %v775
        %971 = vmatpush.bf16.msra.mxu0 %v771
        %972 = vmatpush.bf16.msra.mxu0 %v767
        %973 = vmatpush.bf16.msra.mxu0 %v763
        %974 = vmatmul.bf16.gmra.mxu0 %v502
        %v975 = vpop.f32.mrf.mxu0
        %v976 = vadd.f32 0.0, %v975
        %v977 = vpop.f32.mrf.mxu0
        %978 = vdwg.mxu0
        %979 = vmatpush.bf16.msra.mxu0 %v823
        %980 = vmatpush.bf16.msra.mxu0 %v819
        %981 = vmatpush.bf16.msra.mxu0 %v815
        %982 = vmatpush.bf16.msra.mxu0 %v811
        %983 = vmatpush.bf16.msra.mxu0 %v807
        %984 = vmatpush.bf16.msra.mxu0 %v803
        %985 = vmatpush.bf16.msra.mxu0 %v799
        %986 = vmatpush.bf16.msra.mxu0 %v795
        %987 = vmatmul.bf16.gmra.mxu0 %v503
        %v988 = vpop.f32.mrf.mxu0
        %v989 = vadd.f32 %v976, %v988
        %v990 = vpop.f32.mrf.mxu0
        %991 = vdwg.mxu0
        %v992 = vpack.c.bf16 %v989, %v989
        %v993 = vld [vmem:[%s7] sm:$0xff]
        %v994 = vld [vmem:[%s7 + $0x8] sm:$0xff]
        %v995 = vmul.f32 %v911, %v993
        %v996 = vmul.f32 %v937, %v994
        %v997 = vld [vmem:[%s8] sm:$0xff]
        %v998 = vld [vmem:[%s8 + $0x8] sm:$0xff]
        %v999 = vmul.f32 %v937, %v997
        %v1000 = vmul.f32 %v911, %v998
        %v1001 = vadd.f32 %v995, %v999
        %v1002 = vadd.f32 %v996, %v1000
        %v1003 = vld [vmem:[%s9] sm:$0xff]
        %v1004 = vmul.f32 %v963, %v1003
        %1005 = vrot.lane.b32.xlu0 %v963, 64
        %v1006 = vpop.permute.xlu0 %1005
        %v1007 = vld [vmem:[%s10] sm:$0xff]
        %v1008 = vmul.f32 %v1006, %v1007
        %v1009 = vadd.f32 %v1004, %v1008
        %v1010 = vpack.c.bf16 %v1002, %v1001
        %v1011 = vpack.c.bf16 %v1009, %v1009
        %v1013 = vunpack.c.h.b16 %v1010
        %v1014 = vpack.c.b16 %v1013, %v1013
        %1015 = vrot.lane.b32.xlu0 %v1014, 32
        %v1016 = vpop.permute.xlu0 %1015
        %vm1017 = vcmask 261120
        %v1020 = vsel %vm1017, %v1010, %v1016
        %v1021 = vunpack.c.l.b16 %v1010
        %v1022 = vpack.c.b16 %v1021, %v1021
        %1023 = vrot.lane.b32.xlu0 %v1022, 96
        %v1024 = vpop.permute.xlu0 %1023
        %v1027 = vsel %vm1017, %v1024, %v1014
        %1028 = vrot.lane.b32.xlu0 %v1022, 64
        %v1029 = vpop.permute.xlu0 %1028
        %1030 = vrot.lane.b32.xlu0 %v1014, 96
        %v1031 = vpop.permute.xlu0 %1030
        %v1034 = vsel %vm1017, %v1029, %v1031
        %1035 = vrot.lane.b32.xlu0 %v1022, 32
        %v1036 = vpop.permute.xlu0 %1035
        %1037 = vrot.lane.b32.xlu0 %v1014, 64
        %v1038 = vpop.permute.xlu0 %1037
        %v1041 = vsel %vm1017, %v1036, %v1038
        %v1043 = vunpack.c.l.b16 %v1011
        %v1044 = vpack.c.b16 %v1043, %v1043
        %1045 = vrot.lane.b32.xlu0 %v1044, 96
        %v1046 = vpop.permute.xlu0 %1045
        %v1049 = vsel %vm1017, %v1011, %v1046
        %1050 = vrot.lane.b32.xlu0 %v1044, 64
        %v1051 = vpop.permute.xlu0 %1050
        %v1053 = vsel %vm1017, %v1046, %v1051
        %1055 = vrot.lane.b32.xlu0 %v992, 64
        %v1056 = vpop.permute.xlu0 %1055
        %v1057 = vld [vmem:[%s11] sm:$0xff]
        %vm1058 = vcmask 523264
        %v1059 = vsel %vm1058, %v1020, 0
        %v1061 = vsel %vm1058, %v1049, 0
        %1063 = vmatpush.bf16.xpose.msra.mxu0 0
        %1064 = vmatpush.bf16.xpose.msra.mxu0 0
        %1065 = vmatpush.bf16.xpose.msra.mxu0 0
        %1066 = vmatpush.bf16.xpose.msra.mxu0 0
        %1067 = vmatpush.bf16.xpose.msra.mxu0 0
        %1068 = vmatpush.bf16.xpose.msra.mxu0 0
        %1069 = vmatpush.bf16.xpose.msra.mxu0 0
        %1070 = vmatpush.bf16.xpose.msra.mxu0 %v1061
        %1071 = vmatmul.bf16.gmra.mxu0 %v1059
        %v1072 = vpop.f32.mrf.mxu0
        %v1073 = vadd.f32 %v1057, %v1072
        %v1074 = vpop.f32.mrf.mxu0
        %1075 = vdwg.mxu0
        %v1076 = vsel %vm1058, %v1027, 0
        %1078 = vmatpush.bf16.xpose.msra.mxu0 0
        %1079 = vmatpush.bf16.xpose.msra.mxu0 0
        %1080 = vmatpush.bf16.xpose.msra.mxu0 0
        %1081 = vmatpush.bf16.xpose.msra.mxu0 0
        %1082 = vmatpush.bf16.xpose.msra.mxu0 0
        %1083 = vmatpush.bf16.xpose.msra.mxu0 0
        %1084 = vmatpush.bf16.xpose.msra.mxu0 0
        %1085 = vmatpush.bf16.xpose.msra.mxu0 %v1061
        %1086 = vmatmul.bf16.gmra.mxu0 %v1076
        %v1087 = vpop.f32.mrf.mxu0
        %v1088 = vadd.f32 %v1057, %v1087
        %v1089 = vpop.f32.mrf.mxu0
        %1090 = vdwg.mxu0
        %v1091 = vsel %vm1058, %v1034, 0
        %v1093 = vsel %vm1058, %v1053, 0
        %1095 = vmatpush.bf16.xpose.msra.mxu0 0
        %1096 = vmatpush.bf16.xpose.msra.mxu0 0
        %1097 = vmatpush.bf16.xpose.msra.mxu0 0
        %1098 = vmatpush.bf16.xpose.msra.mxu0 0
        %1099 = vmatpush.bf16.xpose.msra.mxu0 0
        %1100 = vmatpush.bf16.xpose.msra.mxu0 0
        %1101 = vmatpush.bf16.xpose.msra.mxu0 0
        %1102 = vmatpush.bf16.xpose.msra.mxu0 %v1093
        %1103 = vmatmul.bf16.gmra.mxu0 %v1091
        %v1104 = vpop.f32.mrf.mxu0
        %v1105 = vadd.f32 %v1057, %v1104
        %v1106 = vpop.f32.mrf.mxu0
        %1107 = vdwg.mxu0
        %v1108 = vsel %vm1058, %v1041, 0
        %1110 = vmatpush.bf16.xpose.msra.mxu0 0
        %1111 = vmatpush.bf16.xpose.msra.mxu0 0
        %1112 = vmatpush.bf16.xpose.msra.mxu0 0
        %1113 = vmatpush.bf16.xpose.msra.mxu0 0
        %1114 = vmatpush.bf16.xpose.msra.mxu0 0
        %1115 = vmatpush.bf16.xpose.msra.mxu0 0
        %1116 = vmatpush.bf16.xpose.msra.mxu0 0
        %1117 = vmatpush.bf16.xpose.msra.mxu0 %v1093
        %1118 = vmatmul.bf16.gmra.mxu0 %v1108
        %v1119 = vpop.f32.mrf.mxu0
        %v1120 = vadd.f32 %v1057, %v1119
        %v1121 = vpop.f32.mrf.mxu0
        %1122 = vdwg.mxu0
        %vm1123 = vcmask 64512
        %v1124 = vsel %vm1123, %v1073, -inf
        %1125 = vmax.xlane.f32.xlu0 %v1124
        %v1126 = vpop.xlane.xlu0 %1125
        %v1127 = vsel %vm1123, %v1088, -inf
        %1128 = vmax.xlane.f32.xlu0 %v1127
        %v1129 = vpop.xlane.xlu0 %1128
        %v1130 = vsel %vm1123, %v1105, -inf
        %1131 = vmax.xlane.f32.xlu0 %v1130
        %v1132 = vpop.xlane.xlu0 %1131
        %v1133 = vsel %vm1123, %v1120, -inf
        %1134 = vmax.xlane.f32.xlu0 %v1133
        %v1135 = vpop.xlane.xlu0 %1134
        %v1136 = vsub.f32 %v1073, %v1126
        %v1137 = vsub.f32 %v1088, %v1129
        %v1138 = vsub.f32 %v1105, %v1132
        %v1139 = vsub.f32 %v1120, %v1135
        %v1140 = vmul.f32 %v1136, 1.442695
        %v1141 = vpow.pop %v1140
        %v1142 = vmul.f32 %v1137, 1.442695
        %v1143 = vpow.pop %v1142
        %v1144 = vmul.f32 %v1138, 1.442695
        %v1145 = vpow.pop %v1144
        %v1146 = vmul.f32 %v1139, 1.442695
        %v1147 = vpow.pop %v1146
        %v1148 = vsel %vm1123, %v1141, 0.0
        %1149 = vadd.xlane.f32.xlu0 %v1148
        %v1150 = vpop.xlane.xlu0 %1149
        %v1151 = vsel %vm1123, %v1143, 0.0
        %1152 = vadd.xlane.f32.xlu0 %v1151
        %v1153 = vpop.xlane.xlu0 %1152
        %v1154 = vsel %vm1123, %v1145, 0.0
        %1155 = vadd.xlane.f32.xlu0 %v1154
        %v1156 = vpop.xlane.xlu0 %1155
        %v1157 = vsel %vm1123, %v1147, 0.0
        %1158 = vadd.xlane.f32.xlu0 %v1157
        %v1159 = vpop.xlane.xlu0 %1158
        %v1160 = vrcp.pop %v1150
        %v1161 = vrcp.pop %v1153
        %v1162 = vrcp.pop %v1156
        %v1163 = vrcp.pop %v1159
        %v1164 = vmul.f32 %v1141, %v1160
        %v1165 = vmul.f32 %v1143, %v1161
        %v1166 = vmul.f32 %v1145, %v1162
        %v1167 = vmul.f32 %v1147, %v1163
        %v1168 = vpack.c.bf16 %v1164, %v1164
        %v1169 = vpack.c.bf16 %v1165, %v1165
        %v1170 = vpack.c.bf16 %v1166, %v1166
        %v1171 = vpack.c.bf16 %v1167, %v1167
        %v1173 = vsel %vm1123, %v1168, 0
        %vm1175 = vcmask 1043456
        %v1177 = vsel %vm1175, %v992, 0
        %1179 = vmatpush.bf16.msra.mxu0 0
        %1180 = vmatpush.bf16.msra.mxu0 0
        %1181 = vmatpush.bf16.msra.mxu0 0
        %1182 = vmatpush.bf16.msra.mxu0 0
        %1183 = vmatpush.bf16.msra.mxu0 0
        %1184 = vmatpush.bf16.msra.mxu0 0
        %1185 = vmatpush.bf16.msra.mxu0 0
        %1186 = vmatpush.bf16.msra.mxu0 %v1177
        %1187 = vmatmul.bf16.gmra.mxu0 %v1173
        %v1188 = vpop.f32.mrf.mxu0
        %v1189 = vadd.f32 0.0, %v1188
        %v1190 = vpop.f32.mrf.mxu0
        %1191 = vdwg.mxu0
        %v1193 = vsel %vm1123, %v1169, 0
        %1195 = vmatpush.bf16.msra.mxu0 0
        %1196 = vmatpush.bf16.msra.mxu0 0
        %1197 = vmatpush.bf16.msra.mxu0 0
        %1198 = vmatpush.bf16.msra.mxu0 0
        %1199 = vmatpush.bf16.msra.mxu0 0
        %1200 = vmatpush.bf16.msra.mxu0 0
        %1201 = vmatpush.bf16.msra.mxu0 0
        %1202 = vmatpush.bf16.msra.mxu0 %v1177
        %1203 = vmatmul.bf16.gmra.mxu0 %v1193
        %v1204 = vpop.f32.mrf.mxu0
        %v1205 = vadd.f32 0.0, %v1204
        %v1206 = vpop.f32.mrf.mxu0
        %1207 = vdwg.mxu0
        %v1209 = vsel %vm1123, %v1170, 0
        %v1212 = vsel %vm1175, %v1056, 0
        %1214 = vmatpush.bf16.msra.mxu0 0
        %1215 = vmatpush.bf16.msra.mxu0 0
        %1216 = vmatpush.bf16.msra.mxu0 0
        %1217 = vmatpush.bf16.msra.mxu0 0
        %1218 = vmatpush.bf16.msra.mxu0 0
        %1219 = vmatpush.bf16.msra.mxu0 0
        %1220 = vmatpush.bf16.msra.mxu0 0
        %1221 = vmatpush.bf16.msra.mxu0 %v1212
        %1222 = vmatmul.bf16.gmra.mxu0 %v1209
        %v1223 = vpop.f32.mrf.mxu0
        %v1224 = vadd.f32 0.0, %v1223
        %v1225 = vpop.f32.mrf.mxu0
        %1226 = vdwg.mxu0
        %v1228 = vsel %vm1123, %v1171, 0
        %1230 = vmatpush.bf16.msra.mxu0 0
        %1231 = vmatpush.bf16.msra.mxu0 0
        %1232 = vmatpush.bf16.msra.mxu0 0
        %1233 = vmatpush.bf16.msra.mxu0 0
        %1234 = vmatpush.bf16.msra.mxu0 0
        %1235 = vmatpush.bf16.msra.mxu0 0
        %1236 = vmatpush.bf16.msra.mxu0 0
        %1237 = vmatpush.bf16.msra.mxu0 %v1212
        %1238 = vmatmul.bf16.gmra.mxu0 %v1228
        %v1239 = vpop.f32.mrf.mxu0
        %v1240 = vadd.f32 0.0, %v1239
        %v1241 = vpop.f32.mrf.mxu0
        %1242 = vdwg.mxu0
        %1244 = vrot.lane.b32.xlu0 %v1205, 64
        %v1245 = vpop.permute.xlu0 %1244
        %1248 = vrot.lane.b32.xlu0 %v1240, 64
        %v1249 = vpop.permute.xlu0 %1248
        %v1251 = vsel %vm1058, %v1189, %v1245
        %v1252 = vsel %vm1058, %v1224, %v1249
        %v1253 = vpack.c.bf16 %v1251, %v1251
        %v1254 = vpack.c.bf16 %v1252, %v1252
        %v1255 = vld [vmem:[%s3] sm:$0xff]
        %v1256 = vld [vmem:[%s3 + $0x8] sm:$0xff]
        %v1257 = vld [vmem:[%s3 + $0x10] sm:$0xff]
        %v1258 = vld [vmem:[%s3 + $0x18] sm:$0xff]
        %v1259 = vld [vmem:[%s3 + $0x20] sm:$0xff]
        %v1260 = vld [vmem:[%s3 + $0x28] sm:$0xff]
        %v1261 = vld [vmem:[%s3 + $0x30] sm:$0xff]
        %v1262 = vld [vmem:[%s3 + $0x38] sm:$0xff]
        %v1263 = vld [vmem:[%s3 + $0x40] sm:$0xff]
        %v1264 = vld [vmem:[%s3 + $0x48] sm:$0xff]
        %v1265 = vld [vmem:[%s3 + $0x50] sm:$0xff]
        %v1266 = vld [vmem:[%s3 + $0x58] sm:$0xff]
        %v1267 = vld [vmem:[%s3 + $0x60] sm:$0xff]
        %v1268 = vld [vmem:[%s3 + $0x68] sm:$0xff]
        %v1269 = vld [vmem:[%s3 + $0x70] sm:$0xff]
        %v1270 = vld [vmem:[%s3 + $0x78] sm:$0xff]
        %v1271 = vld [vmem:[%s3 + $0x80] sm:$0xff]
        %v1272 = vld [vmem:[%s3 + $0x88] sm:$0xff]
        %v1273 = vld [vmem:[%s3 + $0x90] sm:$0xff]
        %v1274 = vld [vmem:[%s3 + $0x98] sm:$0xff]
        %v1275 = vld [vmem:[%s3 + $0xa0] sm:$0xff]
        %v1276 = vld [vmem:[%s3 + $0xa8] sm:$0xff]
        %v1277 = vld [vmem:[%s3 + $0xb0] sm:$0xff]
        %v1278 = vld [vmem:[%s3 + $0xb8] sm:$0xff]
        %v1279 = vld [vmem:[%s3 + $0xc0] sm:$0xff]
        %v1280 = vld [vmem:[%s3 + $0xc8] sm:$0xff]
        %v1281 = vld [vmem:[%s3 + $0xd0] sm:$0xff]
        %v1282 = vld [vmem:[%s3 + $0xd8] sm:$0xff]
        %v1283 = vld [vmem:[%s3 + $0xe0] sm:$0xff]
        %v1284 = vld [vmem:[%s3 + $0xe8] sm:$0xff]
        %v1285 = vld [vmem:[%s3 + $0xf0] sm:$0xff]
        %v1286 = vld [vmem:[%s3 + $0xf8] sm:$0xff]
        %v1319 = vunpack.c.l.b16 %v1255
        %v1320 = vunpack.c.h.b16 %v1255
        %v1321 = vunpack.c.l.b16 %v1256
        %v1322 = vunpack.c.h.b16 %v1256
        %v1323 = vunpack.c.l.b16 %v1257
        %v1324 = vunpack.c.h.b16 %v1257
        %v1325 = vunpack.c.l.b16 %v1258
        %v1326 = vunpack.c.h.b16 %v1258
        %v1327 = vunpack.c.l.b16 %v1259
        %v1328 = vunpack.c.h.b16 %v1259
        %v1329 = vunpack.c.l.b16 %v1260
        %v1330 = vunpack.c.h.b16 %v1260
        %v1331 = vunpack.c.l.b16 %v1261
        %v1332 = vunpack.c.h.b16 %v1261
        %v1333 = vunpack.c.l.b16 %v1262
        %v1334 = vunpack.c.h.b16 %v1262
        %v1335 = vunpack.c.l.b16 %v1263
        %v1336 = vunpack.c.h.b16 %v1263
        %v1337 = vunpack.c.l.b16 %v1264
        %v1338 = vunpack.c.h.b16 %v1264
        %v1339 = vunpack.c.l.b16 %v1265
        %v1340 = vunpack.c.h.b16 %v1265
        %v1341 = vunpack.c.l.b16 %v1266
        %v1342 = vunpack.c.h.b16 %v1266
        %v1343 = vunpack.c.l.b16 %v1267
        %v1344 = vunpack.c.h.b16 %v1267
        %v1345 = vunpack.c.l.b16 %v1268
        %v1346 = vunpack.c.h.b16 %v1268
        %v1347 = vunpack.c.l.b16 %v1269
        %v1348 = vunpack.c.h.b16 %v1269
        %v1349 = vunpack.c.l.b16 %v1270
        %v1350 = vunpack.c.h.b16 %v1270
        %v1351 = vunpack.c.l.b16 %v1271
        %v1352 = vunpack.c.h.b16 %v1271
        %v1353 = vunpack.c.l.b16 %v1272
        %v1354 = vunpack.c.h.b16 %v1272
        %v1355 = vunpack.c.l.b16 %v1273
        %v1356 = vunpack.c.h.b16 %v1273
        %v1357 = vunpack.c.l.b16 %v1274
        %v1358 = vunpack.c.h.b16 %v1274
        %v1359 = vunpack.c.l.b16 %v1275
        %v1360 = vunpack.c.h.b16 %v1275
        %v1361 = vunpack.c.l.b16 %v1276
        %v1362 = vunpack.c.h.b16 %v1276
        %v1363 = vunpack.c.l.b16 %v1277
        %v1364 = vunpack.c.h.b16 %v1277
        %v1365 = vunpack.c.l.b16 %v1278
        %v1366 = vunpack.c.h.b16 %v1278
        %v1367 = vunpack.c.l.b16 %v1279
        %v1368 = vunpack.c.h.b16 %v1279
        %v1369 = vunpack.c.l.b16 %v1280
        %v1370 = vunpack.c.h.b16 %v1280
        %v1371 = vunpack.c.l.b16 %v1281
        %v1372 = vunpack.c.h.b16 %v1281
        %v1373 = vunpack.c.l.b16 %v1282
        %v1374 = vunpack.c.h.b16 %v1282
        %v1375 = vunpack.c.l.b16 %v1283
        %v1376 = vunpack.c.h.b16 %v1283
        %v1377 = vunpack.c.l.b16 %v1284
        %v1378 = vunpack.c.h.b16 %v1284
        %v1379 = vunpack.c.l.b16 %v1285
        %v1380 = vunpack.c.h.b16 %v1285
        %v1381 = vunpack.c.l.b16 %v1286
        %v1382 = vunpack.c.h.b16 %v1286
        %v1383 = vpack.c.b16 %v1321, %v1319
        %v1384 = vpack.c.b16 %v1322, %v1320
        %v1385 = vpack.c.b16 %v1325, %v1323
        %v1386 = vpack.c.b16 %v1326, %v1324
        %v1387 = vpack.c.b16 %v1329, %v1327
        %v1388 = vpack.c.b16 %v1330, %v1328
        %v1389 = vpack.c.b16 %v1333, %v1331
        %v1390 = vpack.c.b16 %v1334, %v1332
        %v1391 = vpack.c.b16 %v1337, %v1335
        %v1392 = vpack.c.b16 %v1338, %v1336
        %v1393 = vpack.c.b16 %v1341, %v1339
        %v1394 = vpack.c.b16 %v1342, %v1340
        %v1395 = vpack.c.b16 %v1345, %v1343
        %v1396 = vpack.c.b16 %v1346, %v1344
        %v1397 = vpack.c.b16 %v1349, %v1347
        %v1398 = vpack.c.b16 %v1350, %v1348
        %v1399 = vpack.c.b16 %v1353, %v1351
        %v1400 = vpack.c.b16 %v1354, %v1352
        %v1401 = vpack.c.b16 %v1357, %v1355
        %v1402 = vpack.c.b16 %v1358, %v1356
        %v1403 = vpack.c.b16 %v1361, %v1359
        %v1404 = vpack.c.b16 %v1362, %v1360
        %v1405 = vpack.c.b16 %v1365, %v1363
        %v1406 = vpack.c.b16 %v1366, %v1364
        %v1407 = vpack.c.b16 %v1369, %v1367
        %v1408 = vpack.c.b16 %v1370, %v1368
        %v1409 = vpack.c.b16 %v1373, %v1371
        %v1410 = vpack.c.b16 %v1374, %v1372
        %v1411 = vpack.c.b16 %v1377, %v1375
        %v1412 = vpack.c.b16 %v1378, %v1376
        %v1413 = vpack.c.b16 %v1381, %v1379
        %v1414 = vpack.c.b16 %v1382, %v1380
        %1447 = vmatpush.bf16.msra.mxu0 %v1397
        %1448 = vmatpush.bf16.msra.mxu0 %v1395
        %1449 = vmatpush.bf16.msra.mxu0 %v1393
        %1450 = vmatpush.bf16.msra.mxu0 %v1391
        %1451 = vmatpush.bf16.msra.mxu0 %v1389
        %1452 = vmatpush.bf16.msra.mxu0 %v1387
        %1453 = vmatpush.bf16.msra.mxu0 %v1385
        %1454 = vmatpush.bf16.msra.mxu0 %v1383
        %1455 = vmatmul.bf16.gmra.mxu0 %v1253
        %v1456 = vpop.f32.mrf.mxu0
        %v1457 = vadd.f32 %v466, %v1456
        %v1458 = vpop.f32.mrf.mxu0
        %1459 = vdwg.mxu0
        %1460 = vmatpush.bf16.msra.mxu0 %v1413
        %1461 = vmatpush.bf16.msra.mxu0 %v1411
        %1462 = vmatpush.bf16.msra.mxu0 %v1409
        %1463 = vmatpush.bf16.msra.mxu0 %v1407
        %1464 = vmatpush.bf16.msra.mxu0 %v1405
        %1465 = vmatpush.bf16.msra.mxu0 %v1403
        %1466 = vmatpush.bf16.msra.mxu0 %v1401
        %1467 = vmatpush.bf16.msra.mxu0 %v1399
        %1468 = vmatmul.bf16.gmra.mxu0 %v1254
        %v1469 = vpop.f32.mrf.mxu0
        %v1470 = vadd.f32 %v1457, %v1469
        %v1471 = vpop.f32.mrf.mxu0
        %1472 = vdwg.mxu0
        %1473 = vmatpush.bf16.msra.mxu0 %v1398
        %1474 = vmatpush.bf16.msra.mxu0 %v1396
        %1475 = vmatpush.bf16.msra.mxu0 %v1394
        %1476 = vmatpush.bf16.msra.mxu0 %v1392
        %1477 = vmatpush.bf16.msra.mxu0 %v1390
        %1478 = vmatpush.bf16.msra.mxu0 %v1388
        %1479 = vmatpush.bf16.msra.mxu0 %v1386
        %1480 = vmatpush.bf16.msra.mxu0 %v1384
        %1481 = vmatmul.bf16.gmra.mxu0 %v1253
        %v1482 = vpop.f32.mrf.mxu0
        %v1483 = vadd.f32 %v467, %v1482
        %v1484 = vpop.f32.mrf.mxu0
        %1485 = vdwg.mxu0
        %1486 = vmatpush.bf16.msra.mxu0 %v1414
        %1487 = vmatpush.bf16.msra.mxu0 %v1412
        %1488 = vmatpush.bf16.msra.mxu0 %v1410
        %1489 = vmatpush.bf16.msra.mxu0 %v1408
        %1490 = vmatpush.bf16.msra.mxu0 %v1406
        %1491 = vmatpush.bf16.msra.mxu0 %v1404
        %1492 = vmatpush.bf16.msra.mxu0 %v1402
        %1493 = vmatpush.bf16.msra.mxu0 %v1400
        %1494 = vmatmul.bf16.gmra.mxu0 %v1254
        %v1495 = vpop.f32.mrf.mxu0
        %v1496 = vadd.f32 %v1483, %v1495
        %v1497 = vpop.f32.mrf.mxu0
        %1498 = vdwg.mxu0
        %v1499 = vmul.f32 %v1470, %v1470
        %v1500 = vmul.f32 %v1496, %v1496
        %v1501 = vadd.f32 %v1499, %v1500
        %1502 = vadd.xlane.f32.xlu0 %v1501
        %v1503 = vpop.xlane.xlu0 %1502
        %v1504 = vmul.f32 %v1503, %v479
        %v1505 = vadd.f32 %v1504, 1e-05
        %v1506 = vrsqrt.pop %v1505
        %v1507 = vmul.f32 %v1506, %v1505
        %v1508 = vmul.f32 %v1507, %v1506
        %v1509 = vmul.f32 0.5, %v1508
        %v1510 = vsub.f32 1.5, %v1509
        %v1511 = vmul.f32 %v1506, %v1510
        %vm1512 = vweird.f32 %v1505
        %vm1513 = vweird.f32 %v1506
        %vm1514 = vmor %vm1512, %vm1513
        %v1515 = vsel %vm1514, %v1506, %v1511
        %v1516 = vmul.f32 %v1470, %v1515
        %v1517 = vmul.f32 %v1496, %v1515
        %v1518 = vld [vmem:[%s4] sm:$0x3]
        %v1520 = vperm.slane %v1518, 0
        %v1521 = vperm.slane %v1518, 1
        %v1524 = vmul.f32 %v1516, %v1520
        %v1525 = vmul.f32 %v1517, %v1521
        %v1526 = vpack.c.bf16 %v1524, %v1524
        %v1527 = vpack.c.bf16 %v1525, %v1525
        %v1528 = vld [vmem:[#allocation4] sm:$0xff]
        %v1529 = vld [vmem:[#allocation4 + $0x8] sm:$0xff]
        %v1530 = vld [vmem:[#allocation4 + $0x10] sm:$0xff]
        %v1531 = vld [vmem:[#allocation4 + $0x18] sm:$0xff]
        %v1532 = vld [vmem:[#allocation4 + $0x20] sm:$0xff]
        %v1533 = vld [vmem:[#allocation4 + $0x28] sm:$0xff]
        %v1534 = vld [vmem:[#allocation4 + $0x30] sm:$0xff]
        %v1535 = vld [vmem:[#allocation4 + $0x38] sm:$0xff]
        %v1536 = vld [vmem:[#allocation4 + $0x40] sm:$0xff]
        %v1537 = vld [vmem:[#allocation4 + $0x48] sm:$0xff]
        %v1538 = vld [vmem:[#allocation4 + $0x50] sm:$0xff]
        %v1539 = vld [vmem:[#allocation4 + $0x58] sm:$0xff]
        %v1540 = vld [vmem:[#allocation4 + $0x60] sm:$0xff]
        %v1541 = vld [vmem:[#allocation4 + $0x68] sm:$0xff]
        %v1542 = vld [vmem:[#allocation4 + $0x70] sm:$0xff]
        %v1543 = vld [vmem:[#allocation4 + $0x78] sm:$0xff]
        %v1544 = vld [vmem:[#allocation4 + $0x80] sm:$0xff]
        %v1545 = vld [vmem:[#allocation4 + $0x88] sm:$0xff]
        %v1546 = vld [vmem:[#allocation4 + $0x90] sm:$0xff]
        %v1547 = vld [vmem:[#allocation4 + $0x98] sm:$0xff]
        %v1548 = vld [vmem:[#allocation4 + $0xa0] sm:$0xff]
        %v1549 = vld [vmem:[#allocation4 + $0xa8] sm:$0xff]
        %v1550 = vld [vmem:[#allocation4 + $0xb0] sm:$0xff]
        %v1551 = vld [vmem:[#allocation4 + $0xb8] sm:$0xff]
        %v1552 = vld [vmem:[#allocation4 + $0xc0] sm:$0xff]
        %v1553 = vld [vmem:[#allocation4 + $0xc8] sm:$0xff]
        %v1554 = vld [vmem:[#allocation4 + $0xd0] sm:$0xff]
        %v1555 = vld [vmem:[#allocation4 + $0xd8] sm:$0xff]
        %v1556 = vld [vmem:[#allocation4 + $0xe0] sm:$0xff]
        %v1557 = vld [vmem:[#allocation4 + $0xe8] sm:$0xff]
        %v1558 = vld [vmem:[#allocation4 + $0xf0] sm:$0xff]
        %v1559 = vld [vmem:[#allocation4 + $0xf8] sm:$0xff]
        %v1560 = vld [vmem:[#allocation4 + $0x100] sm:$0xff]
        %v1561 = vld [vmem:[#allocation4 + $0x108] sm:$0xff]
        %v1562 = vld [vmem:[#allocation4 + $0x110] sm:$0xff]
        %v1563 = vld [vmem:[#allocation4 + $0x118] sm:$0xff]
        %v1564 = vld [vmem:[#allocation4 + $0x120] sm:$0xff]
        %v1565 = vld [vmem:[#allocation4 + $0x128] sm:$0xff]
        %v1566 = vld [vmem:[#allocation4 + $0x130] sm:$0xff]
        %v1567 = vld [vmem:[#allocation4 + $0x138] sm:$0xff]
        %v1568 = vld [vmem:[#allocation4 + $0x140] sm:$0xff]
        %v1569 = vld [vmem:[#allocation4 + $0x148] sm:$0xff]
        %v1570 = vld [vmem:[#allocation4 + $0x150] sm:$0xff]
        %v1571 = vld [vmem:[#allocation4 + $0x158] sm:$0xff]
        %v1572 = vld [vmem:[#allocation4 + $0x160] sm:$0xff]
        %v1573 = vld [vmem:[#allocation4 + $0x168] sm:$0xff]
        %v1574 = vld [vmem:[#allocation4 + $0x170] sm:$0xff]
        %v1575 = vld [vmem:[#allocation4 + $0x178] sm:$0xff]
        %v1576 = vld [vmem:[#allocation4 + $0x180] sm:$0xff]
        %v1577 = vld [vmem:[#allocation4 + $0x188] sm:$0xff]
        %v1578 = vld [vmem:[#allocation4 + $0x190] sm:$0xff]
        %v1579 = vld [vmem:[#allocation4 + $0x198] sm:$0xff]
        %v1580 = vld [vmem:[#allocation4 + $0x1a0] sm:$0xff]
        %v1581 = vld [vmem:[#allocation4 + $0x1a8] sm:$0xff]
        %v1582 = vld [vmem:[#allocation4 + $0x1b0] sm:$0xff]
        %v1583 = vld [vmem:[#allocation4 + $0x1b8] sm:$0xff]
        %v1584 = vld [vmem:[#allocation4 + $0x1c0] sm:$0xff]
        %v1585 = vld [vmem:[#allocation4 + $0x1c8] sm:$0xff]
        %v1586 = vld [vmem:[#allocation4 + $0x1d0] sm:$0xff]
        %v1587 = vld [vmem:[#allocation4 + $0x1d8] sm:$0xff]
        %v1588 = vld [vmem:[#allocation4 + $0x1e0] sm:$0xff]
        %v1589 = vld [vmem:[#allocation4 + $0x1e8] sm:$0xff]
        %v1590 = vld [vmem:[#allocation4 + $0x1f0] sm:$0xff]
        %v1591 = vld [vmem:[#allocation4 + $0x1f8] sm:$0xff]
        %v1592 = vld [vmem:[#allocation4 + $0x200] sm:$0xff]
        %v1593 = vld [vmem:[#allocation4 + $0x208] sm:$0xff]
        %v1594 = vld [vmem:[#allocation4 + $0x210] sm:$0xff]
        %v1595 = vld [vmem:[#allocation4 + $0x218] sm:$0xff]
        %v1596 = vld [vmem:[#allocation4 + $0x220] sm:$0xff]
        %v1597 = vld [vmem:[#allocation4 + $0x228] sm:$0xff]
        %v1598 = vld [vmem:[#allocation4 + $0x230] sm:$0xff]
        %v1599 = vld [vmem:[#allocation4 + $0x238] sm:$0xff]
        %v1600 = vld [vmem:[#allocation4 + $0x240] sm:$0xff]
        %v1601 = vld [vmem:[#allocation4 + $0x248] sm:$0xff]
        %v1602 = vld [vmem:[#allocation4 + $0x250] sm:$0xff]
        %v1603 = vld [vmem:[#allocation4 + $0x258] sm:$0xff]
        %v1604 = vld [vmem:[#allocation4 + $0x260] sm:$0xff]
        %v1605 = vld [vmem:[#allocation4 + $0x268] sm:$0xff]
        %v1606 = vld [vmem:[#allocation4 + $0x270] sm:$0xff]
        %v1607 = vld [vmem:[#allocation4 + $0x278] sm:$0xff]
        %v1608 = vld [vmem:[#allocation4 + $0x280] sm:$0xff]
        %v1609 = vld [vmem:[#allocation4 + $0x288] sm:$0xff]
        %v1610 = vld [vmem:[#allocation4 + $0x290] sm:$0xff]
        %v1611 = vld [vmem:[#allocation4 + $0x298] sm:$0xff]
        %v1612 = vld [vmem:[#allocation4 + $0x2a0] sm:$0xff]
        %v1613 = vld [vmem:[#allocation4 + $0x2a8] sm:$0xff]
        %v1614 = vld [vmem:[#allocation4 + $0x2b0] sm:$0xff]
        %v1615 = vld [vmem:[#allocation4 + $0x2b8] sm:$0xff]
        %v1616 = vld [vmem:[#allocation4 + $0x2c0] sm:$0xff]
        %v1617 = vld [vmem:[#allocation4 + $0x2c8] sm:$0xff]
        %v1618 = vld [vmem:[#allocation4 + $0x2d0] sm:$0xff]
        %v1619 = vld [vmem:[#allocation4 + $0x2d8] sm:$0xff]
        %v1620 = vld [vmem:[#allocation4 + $0x2e0] sm:$0xff]
        %v1621 = vld [vmem:[#allocation4 + $0x2e8] sm:$0xff]
        %v1622 = vld [vmem:[#allocation4 + $0x2f0] sm:$0xff]
        %v1623 = vld [vmem:[#allocation4 + $0x2f8] sm:$0xff]
        %v1624 = vld [vmem:[#allocation4 + $0x300] sm:$0xff]
        %v1625 = vld [vmem:[#allocation4 + $0x308] sm:$0xff]
        %v1626 = vld [vmem:[#allocation4 + $0x310] sm:$0xff]
        %v1627 = vld [vmem:[#allocation4 + $0x318] sm:$0xff]
        %v1628 = vld [vmem:[#allocation4 + $0x320] sm:$0xff]
        %v1629 = vld [vmem:[#allocation4 + $0x328] sm:$0xff]
        %v1630 = vld [vmem:[#allocation4 + $0x330] sm:$0xff]
        %v1631 = vld [vmem:[#allocation4 + $0x338] sm:$0xff]
        %v1632 = vld [vmem:[#allocation4 + $0x340] sm:$0xff]
        %v1633 = vld [vmem:[#allocation4 + $0x348] sm:$0xff]
        %v1634 = vld [vmem:[#allocation4 + $0x350] sm:$0xff]
        %v1635 = vld [vmem:[#allocation4 + $0x358] sm:$0xff]
        %v1636 = vld [vmem:[#allocation4 + $0x360] sm:$0xff]
        %v1637 = vld [vmem:[#allocation4 + $0x368] sm:$0xff]
        %v1638 = vld [vmem:[#allocation4 + $0x370] sm:$0xff]
        %v1639 = vld [vmem:[#allocation4 + $0x378] sm:$0xff]
        %v1640 = vld [vmem:[#allocation4 + $0x380] sm:$0xff]
        %v1641 = vld [vmem:[#allocation4 + $0x388] sm:$0xff]
        %v1642 = vld [vmem:[#allocation4 + $0x390] sm:$0xff]
        %v1643 = vld [vmem:[#allocation4 + $0x398] sm:$0xff]
        %v1644 = vld [vmem:[#allocation4 + $0x3a0] sm:$0xff]
        %v1645 = vld [vmem:[#allocation4 + $0x3a8] sm:$0xff]
        %v1646 = vld [vmem:[#allocation4 + $0x3b0] sm:$0xff]
        %v1647 = vld [vmem:[#allocation4 + $0x3b8] sm:$0xff]
        %v1648 = vld [vmem:[#allocation4 + $0x3c0] sm:$0xff]
        %v1649 = vld [vmem:[#allocation4 + $0x3c8] sm:$0xff]
        %v1650 = vld [vmem:[#allocation4 + $0x3d0] sm:$0xff]
        %v1651 = vld [vmem:[#allocation4 + $0x3d8] sm:$0xff]
        %v1652 = vld [vmem:[#allocation4 + $0x3e0] sm:$0xff]
        %v1653 = vld [vmem:[#allocation4 + $0x3e8] sm:$0xff]
        %v1654 = vld [vmem:[#allocation4 + $0x3f0] sm:$0xff]
        %v1655 = vld [vmem:[#allocation4 + $0x3f8] sm:$0xff]
        %v1784 = vunpack.c.l.b16 %v1528
        %v1785 = vunpack.c.h.b16 %v1528
        %v1786 = vunpack.c.l.b16 %v1529
        %v1787 = vunpack.c.h.b16 %v1529
        %v1788 = vunpack.c.l.b16 %v1530
        %v1789 = vunpack.c.h.b16 %v1530
        %v1790 = vunpack.c.l.b16 %v1531
        %v1791 = vunpack.c.h.b16 %v1531
        %v1792 = vunpack.c.l.b16 %v1532
        %v1793 = vunpack.c.h.b16 %v1532
        %v1794 = vunpack.c.l.b16 %v1533
        %v1795 = vunpack.c.h.b16 %v1533
        %v1796 = vunpack.c.l.b16 %v1534
        %v1797 = vunpack.c.h.b16 %v1534
        %v1798 = vunpack.c.l.b16 %v1535
        %v1799 = vunpack.c.h.b16 %v1535
        %v1800 = vunpack.c.l.b16 %v1536
        %v1801 = vunpack.c.h.b16 %v1536
        %v1802 = vunpack.c.l.b16 %v1537
        %v1803 = vunpack.c.h.b16 %v1537
        %v1804 = vunpack.c.l.b16 %v1538
        %v1805 = vunpack.c.h.b16 %v1538
        %v1806 = vunpack.c.l.b16 %v1539
        %v1807 = vunpack.c.h.b16 %v1539
        %v1808 = vunpack.c.l.b16 %v1540
        %v1809 = vunpack.c.h.b16 %v1540
        %v1810 = vunpack.c.l.b16 %v1541
        %v1811 = vunpack.c.h.b16 %v1541
        %v1812 = vunpack.c.l.b16 %v1542
        %v1813 = vunpack.c.h.b16 %v1542
        %v1814 = vunpack.c.l.b16 %v1543
        %v1815 = vunpack.c.h.b16 %v1543
        %v1816 = vunpack.c.l.b16 %v1544
        %v1817 = vunpack.c.h.b16 %v1544
        %v1818 = vunpack.c.l.b16 %v1545
        %v1819 = vunpack.c.h.b16 %v1545
        %v1820 = vunpack.c.l.b16 %v1546
        %v1821 = vunpack.c.h.b16 %v1546
        %v1822 = vunpack.c.l.b16 %v1547
        %v1823 = vunpack.c.h.b16 %v1547
        %v1824 = vunpack.c.l.b16 %v1548
        %v1825 = vunpack.c.h.b16 %v1548
        %v1826 = vunpack.c.l.b16 %v1549
        %v1827 = vunpack.c.h.b16 %v1549
        %v1828 = vunpack.c.l.b16 %v1550
        %v1829 = vunpack.c.h.b16 %v1550
        %v1830 = vunpack.c.l.b16 %v1551
        %v1831 = vunpack.c.h.b16 %v1551
        %v1832 = vunpack.c.l.b16 %v1552
        %v1833 = vunpack.c.h.b16 %v1552
        %v1834 = vunpack.c.l.b16 %v1553
        %v1835 = vunpack.c.h.b16 %v1553
        %v1836 = vunpack.c.l.b16 %v1554
        %v1837 = vunpack.c.h.b16 %v1554
        %v1838 = vunpack.c.l.b16 %v1555
        %v1839 = vunpack.c.h.b16 %v1555
        %v1840 = vunpack.c.l.b16 %v1556
        %v1841 = vunpack.c.h.b16 %v1556
        %v1842 = vunpack.c.l.b16 %v1557
        %v1843 = vunpack.c.h.b16 %v1557
        %v1844 = vunpack.c.l.b16 %v1558
        %v1845 = vunpack.c.h.b16 %v1558
        %v1846 = vunpack.c.l.b16 %v1559
        %v1847 = vunpack.c.h.b16 %v1559
        %v1848 = vunpack.c.l.b16 %v1560
        %v1849 = vunpack.c.h.b16 %v1560
        %v1850 = vunpack.c.l.b16 %v1561
        %v1851 = vunpack.c.h.b16 %v1561
        %v1852 = vunpack.c.l.b16 %v1562
        %v1853 = vunpack.c.h.b16 %v1562
        %v1854 = vunpack.c.l.b16 %v1563
        %v1855 = vunpack.c.h.b16 %v1563
        %v1856 = vunpack.c.l.b16 %v1564
        %v1857 = vunpack.c.h.b16 %v1564
        %v1858 = vunpack.c.l.b16 %v1565
        %v1859 = vunpack.c.h.b16 %v1565
        %v1860 = vunpack.c.l.b16 %v1566
        %v1861 = vunpack.c.h.b16 %v1566
        %v1862 = vunpack.c.l.b16 %v1567
        %v1863 = vunpack.c.h.b16 %v1567
        %v1864 = vunpack.c.l.b16 %v1568
        %v1865 = vunpack.c.h.b16 %v1568
        %v1866 = vunpack.c.l.b16 %v1569
        %v1867 = vunpack.c.h.b16 %v1569
        %v1868 = vunpack.c.l.b16 %v1570
        %v1869 = vunpack.c.h.b16 %v1570
        %v1870 = vunpack.c.l.b16 %v1571
        %v1871 = vunpack.c.h.b16 %v1571
        %v1872 = vunpack.c.l.b16 %v1572
        %v1873 = vunpack.c.h.b16 %v1572
        %v1874 = vunpack.c.l.b16 %v1573
        %v1875 = vunpack.c.h.b16 %v1573
        %v1876 = vunpack.c.l.b16 %v1574
        %v1877 = vunpack.c.h.b16 %v1574
        %v1878 = vunpack.c.l.b16 %v1575
        %v1879 = vunpack.c.h.b16 %v1575
        %v1880 = vunpack.c.l.b16 %v1576
        %v1881 = vunpack.c.h.b16 %v1576
        %v1882 = vunpack.c.l.b16 %v1577
        %v1883 = vunpack.c.h.b16 %v1577
        %v1884 = vunpack.c.l.b16 %v1578
        %v1885 = vunpack.c.h.b16 %v1578
        %v1886 = vunpack.c.l.b16 %v1579
        %v1887 = vunpack.c.h.b16 %v1579
        %v1888 = vunpack.c.l.b16 %v1580
        %v1889 = vunpack.c.h.b16 %v1580
        %v1890 = vunpack.c.l.b16 %v1581
        %v1891 = vunpack.c.h.b16 %v1581
        %v1892 = vunpack.c.l.b16 %v1582
        %v1893 = vunpack.c.h.b16 %v1582
        %v1894 = vunpack.c.l.b16 %v1583
        %v1895 = vunpack.c.h.b16 %v1583
        %v1896 = vunpack.c.l.b16 %v1584
        %v1897 = vunpack.c.h.b16 %v1584
        %v1898 = vunpack.c.l.b16 %v1585
        %v1899 = vunpack.c.h.b16 %v1585
        %v1900 = vunpack.c.l.b16 %v1586
        %v1901 = vunpack.c.h.b16 %v1586
        %v1902 = vunpack.c.l.b16 %v1587
        %v1903 = vunpack.c.h.b16 %v1587
        %v1904 = vunpack.c.l.b16 %v1588
        %v1905 = vunpack.c.h.b16 %v1588
        %v1906 = vunpack.c.l.b16 %v1589
        %v1907 = vunpack.c.h.b16 %v1589
        %v1908 = vunpack.c.l.b16 %v1590
        %v1909 = vunpack.c.h.b16 %v1590
        %v1910 = vunpack.c.l.b16 %v1591
        %v1911 = vunpack.c.h.b16 %v1591
        %v1912 = vunpack.c.l.b16 %v1592
        %v1913 = vunpack.c.h.b16 %v1592
        %v1914 = vunpack.c.l.b16 %v1593
        %v1915 = vunpack.c.h.b16 %v1593
        %v1916 = vunpack.c.l.b16 %v1594
        %v1917 = vunpack.c.h.b16 %v1594
        %v1918 = vunpack.c.l.b16 %v1595
        %v1919 = vunpack.c.h.b16 %v1595
        %v1920 = vunpack.c.l.b16 %v1596
        %v1921 = vunpack.c.h.b16 %v1596
        %v1922 = vunpack.c.l.b16 %v1597
        %v1923 = vunpack.c.h.b16 %v1597
        %v1924 = vunpack.c.l.b16 %v1598
        %v1925 = vunpack.c.h.b16 %v1598
        %v1926 = vunpack.c.l.b16 %v1599
        %v1927 = vunpack.c.h.b16 %v1599
        %v1928 = vunpack.c.l.b16 %v1600
        %v1929 = vunpack.c.h.b16 %v1600
        %v1930 = vunpack.c.l.b16 %v1601
        %v1931 = vunpack.c.h.b16 %v1601
        %v1932 = vunpack.c.l.b16 %v1602
        %v1933 = vunpack.c.h.b16 %v1602
        %v1934 = vunpack.c.l.b16 %v1603
        %v1935 = vunpack.c.h.b16 %v1603
        %v1936 = vunpack.c.l.b16 %v1604
        %v1937 = vunpack.c.h.b16 %v1604
        %v1938 = vunpack.c.l.b16 %v1605
        %v1939 = vunpack.c.h.b16 %v1605
        %v1940 = vunpack.c.l.b16 %v1606
        %v1941 = vunpack.c.h.b16 %v1606
        %v1942 = vunpack.c.l.b16 %v1607
        %v1943 = vunpack.c.h.b16 %v1607
        %v1944 = vunpack.c.l.b16 %v1608
        %v1945 = vunpack.c.h.b16 %v1608
        %v1946 = vunpack.c.l.b16 %v1609
        %v1947 = vunpack.c.h.b16 %v1609
        %v1948 = vunpack.c.l.b16 %v1610
        %v1949 = vunpack.c.h.b16 %v1610
        %v1950 = vunpack.c.l.b16 %v1611
        %v1951 = vunpack.c.h.b16 %v1611
        %v1952 = vunpack.c.l.b16 %v1612
        %v1953 = vunpack.c.h.b16 %v1612
        %v1954 = vunpack.c.l.b16 %v1613
        %v1955 = vunpack.c.h.b16 %v1613
        %v1956 = vunpack.c.l.b16 %v1614
        %v1957 = vunpack.c.h.b16 %v1614
        %v1958 = vunpack.c.l.b16 %v1615
        %v1959 = vunpack.c.h.b16 %v1615
        %v1960 = vunpack.c.l.b16 %v1616
        %v1961 = vunpack.c.h.b16 %v1616
        %v1962 = vunpack.c.l.b16 %v1617
        %v1963 = vunpack.c.h.b16 %v1617
        %v1964 = vunpack.c.l.b16 %v1618
        %v1965 = vunpack.c.h.b16 %v1618
        %v1966 = vunpack.c.l.b16 %v1619
        %v1967 = vunpack.c.h.b16 %v1619
        %v1968 = vunpack.c.l.b16 %v1620
        %v1969 = vunpack.c.h.b16 %v1620
        %v1970 = vunpack.c.l.b16 %v1621
        %v1971 = vunpack.c.h.b16 %v1621
        %v1972 = vunpack.c.l.b16 %v1622
        %v1973 = vunpack.c.h.b16 %v1622
        %v1974 = vunpack.c.l.b16 %v1623
        %v1975 = vunpack.c.h.b16 %v1623
        %v1976 = vunpack.c.l.b16 %v1624
        %v1977 = vunpack.c.h.b16 %v1624
        %v1978 = vunpack.c.l.b16 %v1625
        %v1979 = vunpack.c.h.b16 %v1625
        %v1980 = vunpack.c.l.b16 %v1626
        %v1981 = vunpack.c.h.b16 %v1626
        %v1982 = vunpack.c.l.b16 %v1627
        %v1983 = vunpack.c.h.b16 %v1627
        %v1984 = vunpack.c.l.b16 %v1628
        %v1985 = vunpack.c.h.b16 %v1628
        %v1986 = vunpack.c.l.b16 %v1629
        %v1987 = vunpack.c.h.b16 %v1629
        %v1988 = vunpack.c.l.b16 %v1630
        %v1989 = vunpack.c.h.b16 %v1630
        %v1990 = vunpack.c.l.b16 %v1631
        %v1991 = vunpack.c.h.b16 %v1631
        %v1992 = vunpack.c.l.b16 %v1632
        %v1993 = vunpack.c.h.b16 %v1632
        %v1994 = vunpack.c.l.b16 %v1633
        %v1995 = vunpack.c.h.b16 %v1633
        %v1996 = vunpack.c.l.b16 %v1634
        %v1997 = vunpack.c.h.b16 %v1634
        %v1998 = vunpack.c.l.b16 %v1635
        %v1999 = vunpack.c.h.b16 %v1635
        %v2000 = vunpack.c.l.b16 %v1636
        %v2001 = vunpack.c.h.b16 %v1636
        %v2002 = vunpack.c.l.b16 %v1637
        %v2003 = vunpack.c.h.b16 %v1637
        %v2004 = vunpack.c.l.b16 %v1638
        %v2005 = vunpack.c.h.b16 %v1638
        %v2006 = vunpack.c.l.b16 %v1639
        %v2007 = vunpack.c.h.b16 %v1639
        %v2008 = vunpack.c.l.b16 %v1640
        %v2009 = vunpack.c.h.b16 %v1640
        %v2010 = vunpack.c.l.b16 %v1641
        %v2011 = vunpack.c.h.b16 %v1641
        %v2012 = vunpack.c.l.b16 %v1642
        %v2013 = vunpack.c.h.b16 %v1642
        %v2014 = vunpack.c.l.b16 %v1643
        %v2015 = vunpack.c.h.b16 %v1643
        %v2016 = vunpack.c.l.b16 %v1644
        %v2017 = vunpack.c.h.b16 %v1644
        %v2018 = vunpack.c.l.b16 %v1645
        %v2019 = vunpack.c.h.b16 %v1645
        %v2020 = vunpack.c.l.b16 %v1646
        %v2021 = vunpack.c.h.b16 %v1646
        %v2022 = vunpack.c.l.b16 %v1647
        %v2023 = vunpack.c.h.b16 %v1647
        %v2024 = vunpack.c.l.b16 %v1648
        %v2025 = vunpack.c.h.b16 %v1648
        %v2026 = vunpack.c.l.b16 %v1649
        %v2027 = vunpack.c.h.b16 %v1649
        %v2028 = vunpack.c.l.b16 %v1650
        %v2029 = vunpack.c.h.b16 %v1650
        %v2030 = vunpack.c.l.b16 %v1651
        %v2031 = vunpack.c.h.b16 %v1651
        %v2032 = vunpack.c.l.b16 %v1652
        %v2033 = vunpack.c.h.b16 %v1652
        %v2034 = vunpack.c.l.b16 %v1653
        %v2035 = vunpack.c.h.b16 %v1653
        %v2036 = vunpack.c.l.b16 %v1654
        %v2037 = vunpack.c.h.b16 %v1654
        %v2038 = vunpack.c.l.b16 %v1655
        %v2039 = vunpack.c.h.b16 %v1655
        %v2040 = vpack.c.b16 %v1792, %v1784
        %v2041 = vpack.c.b16 %v1793, %v1785
        %v2042 = vpack.c.b16 %v1794, %v1786
        %v2043 = vpack.c.b16 %v1795, %v1787
        %v2044 = vpack.c.b16 %v1796, %v1788
        %v2045 = vpack.c.b16 %v1797, %v1789
        %v2046 = vpack.c.b16 %v1798, %v1790
        %v2047 = vpack.c.b16 %v1799, %v1791
        %v2048 = vpack.c.b16 %v1808, %v1800
        %v2049 = vpack.c.b16 %v1809, %v1801
        %v2050 = vpack.c.b16 %v1810, %v1802
        %v2051 = vpack.c.b16 %v1811, %v1803
        %v2052 = vpack.c.b16 %v1812, %v1804
        %v2053 = vpack.c.b16 %v1813, %v1805
        %v2054 = vpack.c.b16 %v1814, %v1806
        %v2055 = vpack.c.b16 %v1815, %v1807
        %v2056 = vpack.c.b16 %v1824, %v1816
        %v2057 = vpack.c.b16 %v1825, %v1817
        %v2058 = vpack.c.b16 %v1826, %v1818
        %v2059 = vpack.c.b16 %v1827, %v1819
        %v2060 = vpack.c.b16 %v1828, %v1820
        %v2061 = vpack.c.b16 %v1829, %v1821
        %v2062 = vpack.c.b16 %v1830, %v1822
        %v2063 = vpack.c.b16 %v1831, %v1823
        %v2064 = vpack.c.b16 %v1840, %v1832
        %v2065 = vpack.c.b16 %v1841, %v1833
        %v2066 = vpack.c.b16 %v1842, %v1834
        %v2067 = vpack.c.b16 %v1843, %v1835
        %v2068 = vpack.c.b16 %v1844, %v1836
        %v2069 = vpack.c.b16 %v1845, %v1837
        %v2070 = vpack.c.b16 %v1846, %v1838
        %v2071 = vpack.c.b16 %v1847, %v1839
        %v2072 = vpack.c.b16 %v1856, %v1848
        %v2073 = vpack.c.b16 %v1857, %v1849
        %v2074 = vpack.c.b16 %v1858, %v1850
        %v2075 = vpack.c.b16 %v1859, %v1851
        %v2076 = vpack.c.b16 %v1860, %v1852
        %v2077 = vpack.c.b16 %v1861, %v1853
        %v2078 = vpack.c.b16 %v1862, %v1854
        %v2079 = vpack.c.b16 %v1863, %v1855
        %v2080 = vpack.c.b16 %v1872, %v1864
        %v2081 = vpack.c.b16 %v1873, %v1865
        %v2082 = vpack.c.b16 %v1874, %v1866
        %v2083 = vpack.c.b16 %v1875, %v1867
        %v2084 = vpack.c.b16 %v1876, %v1868
        %v2085 = vpack.c.b16 %v1877, %v1869
        %v2086 = vpack.c.b16 %v1878, %v1870
        %v2087 = vpack.c.b16 %v1879, %v1871
        %v2088 = vpack.c.b16 %v1888, %v1880
        %v2089 = vpack.c.b16 %v1889, %v1881
        %v2090 = vpack.c.b16 %v1890, %v1882
        %v2091 = vpack.c.b16 %v1891, %v1883
        %v2092 = vpack.c.b16 %v1892, %v1884
        %v2093 = vpack.c.b16 %v1893, %v1885
        %v2094 = vpack.c.b16 %v1894, %v1886
        %v2095 = vpack.c.b16 %v1895, %v1887
        %v2096 = vpack.c.b16 %v1904, %v1896
        %v2097 = vpack.c.b16 %v1905, %v1897
        %v2098 = vpack.c.b16 %v1906, %v1898
        %v2099 = vpack.c.b16 %v1907, %v1899
        %v2100 = vpack.c.b16 %v1908, %v1900
        %v2101 = vpack.c.b16 %v1909, %v1901
        %v2102 = vpack.c.b16 %v1910, %v1902
        %v2103 = vpack.c.b16 %v1911, %v1903
        %v2104 = vpack.c.b16 %v1920, %v1912
        %v2105 = vpack.c.b16 %v1921, %v1913
        %v2106 = vpack.c.b16 %v1922, %v1914
        %v2107 = vpack.c.b16 %v1923, %v1915
        %v2108 = vpack.c.b16 %v1924, %v1916
        %v2109 = vpack.c.b16 %v1925, %v1917
        %v2110 = vpack.c.b16 %v1926, %v1918
        %v2111 = vpack.c.b16 %v1927, %v1919
        %v2112 = vpack.c.b16 %v1936, %v1928
        %v2113 = vpack.c.b16 %v1937, %v1929
        %v2114 = vpack.c.b16 %v1938, %v1930
        %v2115 = vpack.c.b16 %v1939, %v1931
        %v2116 = vpack.c.b16 %v1940, %v1932
        %v2117 = vpack.c.b16 %v1941, %v1933
        %v2118 = vpack.c.b16 %v1942, %v1934
        %v2119 = vpack.c.b16 %v1943, %v1935
        %v2120 = vpack.c.b16 %v1952, %v1944
        %v2121 = vpack.c.b16 %v1953, %v1945
        %v2122 = vpack.c.b16 %v1954, %v1946
        %v2123 = vpack.c.b16 %v1955, %v1947
        %v2124 = vpack.c.b16 %v1956, %v1948
        %v2125 = vpack.c.b16 %v1957, %v1949
        %v2126 = vpack.c.b16 %v1958, %v1950
        %v2127 = vpack.c.b16 %v1959, %v1951
        %v2128 = vpack.c.b16 %v1968, %v1960
        %v2129 = vpack.c.b16 %v1969, %v1961
        %v2130 = vpack.c.b16 %v1970, %v1962
        %v2131 = vpack.c.b16 %v1971, %v1963
        %v2132 = vpack.c.b16 %v1972, %v1964
        %v2133 = vpack.c.b16 %v1973, %v1965
        %v2134 = vpack.c.b16 %v1974, %v1966
        %v2135 = vpack.c.b16 %v1975, %v1967
        %v2136 = vpack.c.b16 %v1984, %v1976
        %v2137 = vpack.c.b16 %v1985, %v1977
        %v2138 = vpack.c.b16 %v1986, %v1978
        %v2139 = vpack.c.b16 %v1987, %v1979
        %v2140 = vpack.c.b16 %v1988, %v1980
        %v2141 = vpack.c.b16 %v1989, %v1981
        %v2142 = vpack.c.b16 %v1990, %v1982
        %v2143 = vpack.c.b16 %v1991, %v1983
        %v2144 = vpack.c.b16 %v2000, %v1992
        %v2145 = vpack.c.b16 %v2001, %v1993
        %v2146 = vpack.c.b16 %v2002, %v1994
        %v2147 = vpack.c.b16 %v2003, %v1995
        %v2148 = vpack.c.b16 %v2004, %v1996
        %v2149 = vpack.c.b16 %v2005, %v1997
        %v2150 = vpack.c.b16 %v2006, %v1998
        %v2151 = vpack.c.b16 %v2007, %v1999
        %v2152 = vpack.c.b16 %v2016, %v2008
        %v2153 = vpack.c.b16 %v2017, %v2009
        %v2154 = vpack.c.b16 %v2018, %v2010
        %v2155 = vpack.c.b16 %v2019, %v2011
        %v2156 = vpack.c.b16 %v2020, %v2012
        %v2157 = vpack.c.b16 %v2021, %v2013
        %v2158 = vpack.c.b16 %v2022, %v2014
        %v2159 = vpack.c.b16 %v2023, %v2015
        %v2160 = vpack.c.b16 %v2032, %v2024
        %v2161 = vpack.c.b16 %v2033, %v2025
        %v2162 = vpack.c.b16 %v2034, %v2026
        %v2163 = vpack.c.b16 %v2035, %v2027
        %v2164 = vpack.c.b16 %v2036, %v2028
        %v2165 = vpack.c.b16 %v2037, %v2029
        %v2166 = vpack.c.b16 %v2038, %v2030
        %v2167 = vpack.c.b16 %v2039, %v2031
        %2296 = vmatpush.bf16.msra.mxu0 %v2096
        %2297 = vmatpush.bf16.msra.mxu0 %v2088
        %2298 = vmatpush.bf16.msra.mxu0 %v2080
        %2299 = vmatpush.bf16.msra.mxu0 %v2072
        %2300 = vmatpush.bf16.msra.mxu0 %v2064
        %2301 = vmatpush.bf16.msra.mxu0 %v2056
        %2302 = vmatpush.bf16.msra.mxu0 %v2048
        %2303 = vmatpush.bf16.msra.mxu0 %v2040
        %2304 = vmatmul.bf16.gmra.mxu0 %v1526
        %v2305 = vpop.f32.mrf.mxu0
        %v2306 = vadd.f32 0.0, %v2305
        %v2307 = vpop.f32.mrf.mxu0
        %2308 = vdwg.mxu0
        %2309 = vmatpush.bf16.msra.mxu0 %v2160
        %2310 = vmatpush.bf16.msra.mxu0 %v2152
        %2311 = vmatpush.bf16.msra.mxu0 %v2144
        %2312 = vmatpush.bf16.msra.mxu0 %v2136
        %2313 = vmatpush.bf16.msra.mxu0 %v2128
        %2314 = vmatpush.bf16.msra.mxu0 %v2120
        %2315 = vmatpush.bf16.msra.mxu0 %v2112
        %2316 = vmatpush.bf16.msra.mxu0 %v2104
        %2317 = vmatmul.bf16.gmra.mxu0 %v1527
        %v2318 = vpop.f32.mrf.mxu0
        %v2319 = vadd.f32 %v2306, %v2318
        %v2320 = vpop.f32.mrf.mxu0
        %2321 = vdwg.mxu0
        %2322 = vmatpush.bf16.msra.mxu0 %v2097
        %2323 = vmatpush.bf16.msra.mxu0 %v2089
        %2324 = vmatpush.bf16.msra.mxu0 %v2081
        %2325 = vmatpush.bf16.msra.mxu0 %v2073
        %2326 = vmatpush.bf16.msra.mxu0 %v2065
        %2327 = vmatpush.bf16.msra.mxu0 %v2057
        %2328 = vmatpush.bf16.msra.mxu0 %v2049
        %2329 = vmatpush.bf16.msra.mxu0 %v2041
        %2330 = vmatmul.bf16.gmra.mxu0 %v1526
        %v2331 = vpop.f32.mrf.mxu0
        %v2332 = vadd.f32 0.0, %v2331
        %v2333 = vpop.f32.mrf.mxu0
        %2334 = vdwg.mxu0
        %2335 = vmatpush.bf16.msra.mxu0 %v2161
        %2336 = vmatpush.bf16.msra.mxu0 %v2153
        %2337 = vmatpush.bf16.msra.mxu0 %v2145
        %2338 = vmatpush.bf16.msra.mxu0 %v2137
        %2339 = vmatpush.bf16.msra.mxu0 %v2129
        %2340 = vmatpush.bf16.msra.mxu0 %v2121
        %2341 = vmatpush.bf16.msra.mxu0 %v2113
        %2342 = vmatpush.bf16.msra.mxu0 %v2105
        %2343 = vmatmul.bf16.gmra.mxu0 %v1527
        %v2344 = vpop.f32.mrf.mxu0
        %v2345 = vadd.f32 %v2332, %v2344
        %v2346 = vpop.f32.mrf.mxu0
        %2347 = vdwg.mxu0
        %2348 = vmatpush.bf16.msra.mxu0 %v2098
        %2349 = vmatpush.bf16.msra.mxu0 %v2090
        %2350 = vmatpush.bf16.msra.mxu0 %v2082
        %2351 = vmatpush.bf16.msra.mxu0 %v2074
        %2352 = vmatpush.bf16.msra.mxu0 %v2066
        %2353 = vmatpush.bf16.msra.mxu0 %v2058
        %2354 = vmatpush.bf16.msra.mxu0 %v2050
        %2355 = vmatpush.bf16.msra.mxu0 %v2042
        %2356 = vmatmul.bf16.gmra.mxu0 %v1526
        %v2357 = vpop.f32.mrf.mxu0
        %v2358 = vadd.f32 0.0, %v2357
        %v2359 = vpop.f32.mrf.mxu0
        %2360 = vdwg.mxu0
        %2361 = vmatpush.bf16.msra.mxu0 %v2162
        %2362 = vmatpush.bf16.msra.mxu0 %v2154
        %2363 = vmatpush.bf16.msra.mxu0 %v2146
        %2364 = vmatpush.bf16.msra.mxu0 %v2138
        %2365 = vmatpush.bf16.msra.mxu0 %v2130
        %2366 = vmatpush.bf16.msra.mxu0 %v2122
        %2367 = vmatpush.bf16.msra.mxu0 %v2114
        %2368 = vmatpush.bf16.msra.mxu0 %v2106
        %2369 = vmatmul.bf16.gmra.mxu0 %v1527
        %v2370 = vpop.f32.mrf.mxu0
        %v2371 = vadd.f32 %v2358, %v2370
        %v2372 = vpop.f32.mrf.mxu0
        %2373 = vdwg.mxu0
        %2374 = vmatpush.bf16.msra.mxu0 %v2099
        %2375 = vmatpush.bf16.msra.mxu0 %v2091
        %2376 = vmatpush.bf16.msra.mxu0 %v2083
        %2377 = vmatpush.bf16.msra.mxu0 %v2075
        %2378 = vmatpush.bf16.msra.mxu0 %v2067
        %2379 = vmatpush.bf16.msra.mxu0 %v2059
        %2380 = vmatpush.bf16.msra.mxu0 %v2051
        %2381 = vmatpush.bf16.msra.mxu0 %v2043
        %2382 = vmatmul.bf16.gmra.mxu0 %v1526
        %v2383 = vpop.f32.mrf.mxu0
        %v2384 = vadd.f32 0.0, %v2383
        %v2385 = vpop.f32.mrf.mxu0
        %2386 = vdwg.mxu0
        %2387 = vmatpush.bf16.msra.mxu0 %v2163
        %2388 = vmatpush.bf16.msra.mxu0 %v2155
        %2389 = vmatpush.bf16.msra.mxu0 %v2147
        %2390 = vmatpush.bf16.msra.mxu0 %v2139
        %2391 = vmatpush.bf16.msra.mxu0 %v2131
        %2392 = vmatpush.bf16.msra.mxu0 %v2123
        %2393 = vmatpush.bf16.msra.mxu0 %v2115
        %2394 = vmatpush.bf16.msra.mxu0 %v2107
        %2395 = vmatmul.bf16.gmra.mxu0 %v1527
        %v2396 = vpop.f32.mrf.mxu0
        %v2397 = vadd.f32 %v2384, %v2396
        %v2398 = vpop.f32.mrf.mxu0
        %2399 = vdwg.mxu0
        %2400 = vmatpush.bf16.msra.mxu0 %v2100
        %2401 = vmatpush.bf16.msra.mxu0 %v2092
        %2402 = vmatpush.bf16.msra.mxu0 %v2084
        %2403 = vmatpush.bf16.msra.mxu0 %v2076
        %2404 = vmatpush.bf16.msra.mxu0 %v2068
        %2405 = vmatpush.bf16.msra.mxu0 %v2060
        %2406 = vmatpush.bf16.msra.mxu0 %v2052
        %2407 = vmatpush.bf16.msra.mxu0 %v2044
        %2408 = vmatmul.bf16.gmra.mxu0 %v1526
        %v2409 = vpop.f32.mrf.mxu0
        %v2410 = vadd.f32 0.0, %v2409
        %v2411 = vpop.f32.mrf.mxu0
        %2412 = vdwg.mxu0
        %2413 = vmatpush.bf16.msra.mxu0 %v2164
        %2414 = vmatpush.bf16.msra.mxu0 %v2156
        %2415 = vmatpush.bf16.msra.mxu0 %v2148
        %2416 = vmatpush.bf16.msra.mxu0 %v2140
        %2417 = vmatpush.bf16.msra.mxu0 %v2132
        %2418 = vmatpush.bf16.msra.mxu0 %v2124
        %2419 = vmatpush.bf16.msra.mxu0 %v2116
        %2420 = vmatpush.bf16.msra.mxu0 %v2108
        %2421 = vmatmul.bf16.gmra.mxu0 %v1527
        %v2422 = vpop.f32.mrf.mxu0
        %v2423 = vadd.f32 %v2410, %v2422
        %v2424 = vpop.f32.mrf.mxu0
        %2425 = vdwg.mxu0
        %2426 = vmatpush.bf16.msra.mxu0 %v2101
        %2427 = vmatpush.bf16.msra.mxu0 %v2093
        %2428 = vmatpush.bf16.msra.mxu0 %v2085
        %2429 = vmatpush.bf16.msra.mxu0 %v2077
        %2430 = vmatpush.bf16.msra.mxu0 %v2069
        %2431 = vmatpush.bf16.msra.mxu0 %v2061
        %2432 = vmatpush.bf16.msra.mxu0 %v2053
        %2433 = vmatpush.bf16.msra.mxu0 %v2045
        %2434 = vmatmul.bf16.gmra.mxu0 %v1526
        %v2435 = vpop.f32.mrf.mxu0
        %v2436 = vadd.f32 0.0, %v2435
        %v2437 = vpop.f32.mrf.mxu0
        %2438 = vdwg.mxu0
        %2439 = vmatpush.bf16.msra.mxu0 %v2165
        %2440 = vmatpush.bf16.msra.mxu0 %v2157
        %2441 = vmatpush.bf16.msra.mxu0 %v2149
        %2442 = vmatpush.bf16.msra.mxu0 %v2141
        %2443 = vmatpush.bf16.msra.mxu0 %v2133
        %2444 = vmatpush.bf16.msra.mxu0 %v2125
        %2445 = vmatpush.bf16.msra.mxu0 %v2117
        %2446 = vmatpush.bf16.msra.mxu0 %v2109
        %2447 = vmatmul.bf16.gmra.mxu0 %v1527
        %v2448 = vpop.f32.mrf.mxu0
        %v2449 = vadd.f32 %v2436, %v2448
        %v2450 = vpop.f32.mrf.mxu0
        %2451 = vdwg.mxu0
        %2452 = vmatpush.bf16.msra.mxu0 %v2102
        %2453 = vmatpush.bf16.msra.mxu0 %v2094
        %2454 = vmatpush.bf16.msra.mxu0 %v2086
        %2455 = vmatpush.bf16.msra.mxu0 %v2078
        %2456 = vmatpush.bf16.msra.mxu0 %v2070
        %2457 = vmatpush.bf16.msra.mxu0 %v2062
        %2458 = vmatpush.bf16.msra.mxu0 %v2054
        %2459 = vmatpush.bf16.msra.mxu0 %v2046
        %2460 = vmatmul.bf16.gmra.mxu0 %v1526
        %v2461 = vpop.f32.mrf.mxu0
        %v2462 = vadd.f32 0.0, %v2461
        %v2463 = vpop.f32.mrf.mxu0
        %2464 = vdwg.mxu0
        %2465 = vmatpush.bf16.msra.mxu0 %v2166
        %2466 = vmatpush.bf16.msra.mxu0 %v2158
        %2467 = vmatpush.bf16.msra.mxu0 %v2150
        %2468 = vmatpush.bf16.msra.mxu0 %v2142
        %2469 = vmatpush.bf16.msra.mxu0 %v2134
        %2470 = vmatpush.bf16.msra.mxu0 %v2126
        %2471 = vmatpush.bf16.msra.mxu0 %v2118
        %2472 = vmatpush.bf16.msra.mxu0 %v2110
        %2473 = vmatmul.bf16.gmra.mxu0 %v1527
        %v2474 = vpop.f32.mrf.mxu0
        %v2475 = vadd.f32 %v2462, %v2474
        %v2476 = vpop.f32.mrf.mxu0
        %2477 = vdwg.mxu0
        %2478 = vmatpush.bf16.msra.mxu0 %v2103
        %2479 = vmatpush.bf16.msra.mxu0 %v2095
        %2480 = vmatpush.bf16.msra.mxu0 %v2087
        %2481 = vmatpush.bf16.msra.mxu0 %v2079
        %2482 = vmatpush.bf16.msra.mxu0 %v2071
        %2483 = vmatpush.bf16.msra.mxu0 %v2063
        %2484 = vmatpush.bf16.msra.mxu0 %v2055
        %2485 = vmatpush.bf16.msra.mxu0 %v2047
        %2486 = vmatmul.bf16.gmra.mxu0 %v1526
        %v2487 = vpop.f32.mrf.mxu0
        %v2488 = vadd.f32 0.0, %v2487
        %v2489 = vpop.f32.mrf.mxu0
        %2490 = vdwg.mxu0
        %2491 = vmatpush.bf16.msra.mxu0 %v2167
        %2492 = vmatpush.bf16.msra.mxu0 %v2159
        %2493 = vmatpush.bf16.msra.mxu0 %v2151
        %2494 = vmatpush.bf16.msra.mxu0 %v2143
        %2495 = vmatpush.bf16.msra.mxu0 %v2135
        %2496 = vmatpush.bf16.msra.mxu0 %v2127
        %2497 = vmatpush.bf16.msra.mxu0 %v2119
        %2498 = vmatpush.bf16.msra.mxu0 %v2111
        %2499 = vmatmul.bf16.gmra.mxu0 %v1527
        %v2500 = vpop.f32.mrf.mxu0
        %v2501 = vadd.f32 %v2488, %v2500
        %v2502 = vpop.f32.mrf.mxu0
        %2503 = vdwg.mxu0
        %v2504 = vxor.u32 %v2319, 2147483648
        %v2505 = vxor.u32 %v2345, 2147483648
        %v2506 = vxor.u32 %v2371, 2147483648
        %v2507 = vxor.u32 %v2397, 2147483648
        %v2508 = vmul.f32 %v2504, 1.442695
        %v2509 = vpow.pop %v2508
        %v2510 = vmul.f32 %v2505, 1.442695
        %v2511 = vpow.pop %v2510
        %v2512 = vmul.f32 %v2506, 1.442695
        %v2513 = vpow.pop %v2512
        %v2514 = vmul.f32 %v2507, 1.442695
        %v2515 = vpow.pop %v2514
        %v2516 = vadd.f32 %v2509, 1.0
        %v2517 = vadd.f32 %v2511, 1.0
        %v2518 = vadd.f32 %v2513, 1.0
        %v2519 = vadd.f32 %v2515, 1.0
        %v2520 = vrcp.pop %v2516
        %v2521 = vmul.f32 %v2516, %v2520
        %v2522 = vsub.f32 1.0, %v2521
        %v2523 = vmul.f32 %v2520, %v2522
        %v2524 = vadd.f32 %v2520, %v2523
        %vm2525 = vweird.f32 %v2516
        %vm2526 = vweird.f32 %v2520
        %vm2527 = vmor %vm2525, %vm2526
        %v2528 = vsel %vm2527, %v2520, %v2524
        %v2529 = vand.u32 2147483647, %v2516
        %vm2530 = vcmp.eq.f32.partialorder %v2529, 8.507059e+37
        %v2531 = vand.u32 %v2516, 2147483648
        %v2532 = vor.u32 1.1754944e-38, %v2531
        %v2533 = vsel %vm2530, %v2532, %v2528
        %v2534 = vmul.f32 1.0, %v2533
        %v2535 = vrcp.pop %v2517
        %v2536 = vmul.f32 %v2517, %v2535
        %v2537 = vsub.f32 1.0, %v2536
        %v2538 = vmul.f32 %v2535, %v2537
        %v2539 = vadd.f32 %v2535, %v2538
        %vm2540 = vweird.f32 %v2517
        %vm2541 = vweird.f32 %v2535
        %vm2542 = vmor %vm2540, %vm2541
        %v2543 = vsel %vm2542, %v2535, %v2539
        %v2544 = vand.u32 2147483647, %v2517
        %vm2545 = vcmp.eq.f32.partialorder %v2544, 8.507059e+37
        %v2546 = vand.u32 %v2517, 2147483648
        %v2547 = vor.u32 1.1754944e-38, %v2546
        %v2548 = vsel %vm2545, %v2547, %v2543
        %v2549 = vmul.f32 1.0, %v2548
        %v2550 = vrcp.pop %v2518
        %v2551 = vmul.f32 %v2518, %v2550
        %v2552 = vsub.f32 1.0, %v2551
        %v2553 = vmul.f32 %v2550, %v2552
        %v2554 = vadd.f32 %v2550, %v2553
        %vm2555 = vweird.f32 %v2518
        %vm2556 = vweird.f32 %v2550
        %vm2557 = vmor %vm2555, %vm2556
        %v2558 = vsel %vm2557, %v2550, %v2554
        %v2559 = vand.u32 2147483647, %v2518
        %vm2560 = vcmp.eq.f32.partialorder %v2559, 8.507059e+37
        %v2561 = vand.u32 %v2518, 2147483648
        %v2562 = vor.u32 1.1754944e-38, %v2561
        %v2563 = vsel %vm2560, %v2562, %v2558
        %v2564 = vmul.f32 1.0, %v2563
        %v2565 = vrcp.pop %v2519
        %v2566 = vmul.f32 %v2519, %v2565
        %v2567 = vsub.f32 1.0, %v2566
        %v2568 = vmul.f32 %v2565, %v2567
        %v2569 = vadd.f32 %v2565, %v2568
        %vm2570 = vweird.f32 %v2519
        %vm2571 = vweird.f32 %v2565
        %vm2572 = vmor %vm2570, %vm2571
        %v2573 = vsel %vm2572, %v2565, %v2569
        %v2574 = vand.u32 2147483647, %v2519
        %vm2575 = vcmp.eq.f32.partialorder %v2574, 8.507059e+37
        %v2576 = vand.u32 %v2519, 2147483648
        %v2577 = vor.u32 1.1754944e-38, %v2576
        %v2578 = vsel %vm2575, %v2577, %v2573
        %v2579 = vmul.f32 1.0, %v2578
        %v2580 = vmul.f32 %v2319, %v2534
        %v2581 = vmul.f32 %v2345, %v2549
        %v2582 = vmul.f32 %v2371, %v2564
        %v2583 = vmul.f32 %v2397, %v2579
        %v2584 = vmul.f32 %v2580, %v2423
        %v2585 = vmul.f32 %v2581, %v2449
        %v2586 = vmul.f32 %v2582, %v2475
        %v2587 = vmul.f32 %v2583, %v2501
        %v2588 = vpack.c.bf16 %v2584, %v2584
        %v2589 = vpack.c.bf16 %v2585, %v2585
        %v2590 = vpack.c.bf16 %v2586, %v2586
        %v2591 = vpack.c.bf16 %v2587, %v2587
        %v2592 = vld [vmem:[#allocation6] sm:$0xff]
        %v2593 = vld [vmem:[#allocation6 + $0x8] sm:$0xff]
        %v2594 = vld [vmem:[#allocation6 + $0x10] sm:$0xff]
        %v2595 = vld [vmem:[#allocation6 + $0x18] sm:$0xff]
        %v2596 = vld [vmem:[#allocation6 + $0x20] sm:$0xff]
        %v2597 = vld [vmem:[#allocation6 + $0x28] sm:$0xff]
        %v2598 = vld [vmem:[#allocation6 + $0x30] sm:$0xff]
        %v2599 = vld [vmem:[#allocation6 + $0x38] sm:$0xff]
        %v2600 = vld [vmem:[#allocation6 + $0x40] sm:$0xff]
        %v2601 = vld [vmem:[#allocation6 + $0x48] sm:$0xff]
        %v2602 = vld [vmem:[#allocation6 + $0x50] sm:$0xff]
        %v2603 = vld [vmem:[#allocation6 + $0x58] sm:$0xff]
        %v2604 = vld [vmem:[#allocation6 + $0x60] sm:$0xff]
        %v2605 = vld [vmem:[#allocation6 + $0x68] sm:$0xff]
        %v2606 = vld [vmem:[#allocation6 + $0x70] sm:$0xff]
        %v2607 = vld [vmem:[#allocation6 + $0x78] sm:$0xff]
        %v2608 = vld [vmem:[#allocation6 + $0x80] sm:$0xff]
        %v2609 = vld [vmem:[#allocation6 + $0x88] sm:$0xff]
        %v2610 = vld [vmem:[#allocation6 + $0x90] sm:$0xff]
        %v2611 = vld [vmem:[#allocation6 + $0x98] sm:$0xff]
        %v2612 = vld [vmem:[#allocation6 + $0xa0] sm:$0xff]
        %v2613 = vld [vmem:[#allocation6 + $0xa8] sm:$0xff]
        %v2614 = vld [vmem:[#allocation6 + $0xb0] sm:$0xff]
        %v2615 = vld [vmem:[#allocation6 + $0xb8] sm:$0xff]
        %v2616 = vld [vmem:[#allocation6 + $0xc0] sm:$0xff]
        %v2617 = vld [vmem:[#allocation6 + $0xc8] sm:$0xff]
        %v2618 = vld [vmem:[#allocation6 + $0xd0] sm:$0xff]
        %v2619 = vld [vmem:[#allocation6 + $0xd8] sm:$0xff]
        %v2620 = vld [vmem:[#allocation6 + $0xe0] sm:$0xff]
        %v2621 = vld [vmem:[#allocation6 + $0xe8] sm:$0xff]
        %v2622 = vld [vmem:[#allocation6 + $0xf0] sm:$0xff]
        %v2623 = vld [vmem:[#allocation6 + $0xf8] sm:$0xff]
        %v2624 = vld [vmem:[#allocation6 + $0x100] sm:$0xff]
        %v2625 = vld [vmem:[#allocation6 + $0x108] sm:$0xff]
        %v2626 = vld [vmem:[#allocation6 + $0x110] sm:$0xff]
        %v2627 = vld [vmem:[#allocation6 + $0x118] sm:$0xff]
        %v2628 = vld [vmem:[#allocation6 + $0x120] sm:$0xff]
        %v2629 = vld [vmem:[#allocation6 + $0x128] sm:$0xff]
        %v2630 = vld [vmem:[#allocation6 + $0x130] sm:$0xff]
        %v2631 = vld [vmem:[#allocation6 + $0x138] sm:$0xff]
        %v2632 = vld [vmem:[#allocation6 + $0x140] sm:$0xff]
        %v2633 = vld [vmem:[#allocation6 + $0x148] sm:$0xff]
        %v2634 = vld [vmem:[#allocation6 + $0x150] sm:$0xff]
        %v2635 = vld [vmem:[#allocation6 + $0x158] sm:$0xff]
        %v2636 = vld [vmem:[#allocation6 + $0x160] sm:$0xff]
        %v2637 = vld [vmem:[#allocation6 + $0x168] sm:$0xff]
        %v2638 = vld [vmem:[#allocation6 + $0x170] sm:$0xff]
        %v2639 = vld [vmem:[#allocation6 + $0x178] sm:$0xff]
        %v2640 = vld [vmem:[#allocation6 + $0x180] sm:$0xff]
        %v2641 = vld [vmem:[#allocation6 + $0x188] sm:$0xff]
        %v2642 = vld [vmem:[#allocation6 + $0x190] sm:$0xff]
        %v2643 = vld [vmem:[#allocation6 + $0x198] sm:$0xff]
        %v2644 = vld [vmem:[#allocation6 + $0x1a0] sm:$0xff]
        %v2645 = vld [vmem:[#allocation6 + $0x1a8] sm:$0xff]
        %v2646 = vld [vmem:[#allocation6 + $0x1b0] sm:$0xff]
        %v2647 = vld [vmem:[#allocation6 + $0x1b8] sm:$0xff]
        %v2648 = vld [vmem:[#allocation6 + $0x1c0] sm:$0xff]
        %v2649 = vld [vmem:[#allocation6 + $0x1c8] sm:$0xff]
        %v2650 = vld [vmem:[#allocation6 + $0x1d0] sm:$0xff]
        %v2651 = vld [vmem:[#allocation6 + $0x1d8] sm:$0xff]
        %v2652 = vld [vmem:[#allocation6 + $0x1e0] sm:$0xff]
        %v2653 = vld [vmem:[#allocation6 + $0x1e8] sm:$0xff]
        %v2654 = vld [vmem:[#allocation6 + $0x1f0] sm:$0xff]
        %v2655 = vld [vmem:[#allocation6 + $0x1f8] sm:$0xff]
        %v2720 = vunpack.c.l.b16 %v2592
        %v2721 = vunpack.c.h.b16 %v2592
        %v2722 = vunpack.c.l.b16 %v2593
        %v2723 = vunpack.c.h.b16 %v2593
        %v2724 = vunpack.c.l.b16 %v2594
        %v2725 = vunpack.c.h.b16 %v2594
        %v2726 = vunpack.c.l.b16 %v2595
        %v2727 = vunpack.c.h.b16 %v2595
        %v2728 = vunpack.c.l.b16 %v2596
        %v2729 = vunpack.c.h.b16 %v2596
        %v2730 = vunpack.c.l.b16 %v2597
        %v2731 = vunpack.c.h.b16 %v2597
        %v2732 = vunpack.c.l.b16 %v2598
        %v2733 = vunpack.c.h.b16 %v2598
        %v2734 = vunpack.c.l.b16 %v2599
        %v2735 = vunpack.c.h.b16 %v2599
        %v2736 = vunpack.c.l.b16 %v2600
        %v2737 = vunpack.c.h.b16 %v2600
        %v2738 = vunpack.c.l.b16 %v2601
        %v2739 = vunpack.c.h.b16 %v2601
        %v2740 = vunpack.c.l.b16 %v2602
        %v2741 = vunpack.c.h.b16 %v2602
        %v2742 = vunpack.c.l.b16 %v2603
        %v2743 = vunpack.c.h.b16 %v2603
        %v2744 = vunpack.c.l.b16 %v2604
        %v2745 = vunpack.c.h.b16 %v2604
        %v2746 = vunpack.c.l.b16 %v2605
        %v2747 = vunpack.c.h.b16 %v2605
        %v2748 = vunpack.c.l.b16 %v2606
        %v2749 = vunpack.c.h.b16 %v2606
        %v2750 = vunpack.c.l.b16 %v2607
        %v2751 = vunpack.c.h.b16 %v2607
        %v2752 = vunpack.c.l.b16 %v2608
        %v2753 = vunpack.c.h.b16 %v2608
        %v2754 = vunpack.c.l.b16 %v2609
        %v2755 = vunpack.c.h.b16 %v2609
        %v2756 = vunpack.c.l.b16 %v2610
        %v2757 = vunpack.c.h.b16 %v2610
        %v2758 = vunpack.c.l.b16 %v2611
        %v2759 = vunpack.c.h.b16 %v2611
        %v2760 = vunpack.c.l.b16 %v2612
        %v2761 = vunpack.c.h.b16 %v2612
        %v2762 = vunpack.c.l.b16 %v2613
        %v2763 = vunpack.c.h.b16 %v2613
        %v2764 = vunpack.c.l.b16 %v2614
        %v2765 = vunpack.c.h.b16 %v2614
        %v2766 = vunpack.c.l.b16 %v2615
        %v2767 = vunpack.c.h.b16 %v2615
        %v2768 = vunpack.c.l.b16 %v2616
        %v2769 = vunpack.c.h.b16 %v2616
        %v2770 = vunpack.c.l.b16 %v2617
        %v2771 = vunpack.c.h.b16 %v2617
        %v2772 = vunpack.c.l.b16 %v2618
        %v2773 = vunpack.c.h.b16 %v2618
        %v2774 = vunpack.c.l.b16 %v2619
        %v2775 = vunpack.c.h.b16 %v2619
        %v2776 = vunpack.c.l.b16 %v2620
        %v2777 = vunpack.c.h.b16 %v2620
        %v2778 = vunpack.c.l.b16 %v2621
        %v2779 = vunpack.c.h.b16 %v2621
        %v2780 = vunpack.c.l.b16 %v2622
        %v2781 = vunpack.c.h.b16 %v2622
        %v2782 = vunpack.c.l.b16 %v2623
        %v2783 = vunpack.c.h.b16 %v2623
        %v2784 = vunpack.c.l.b16 %v2624
        %v2785 = vunpack.c.h.b16 %v2624
        %v2786 = vunpack.c.l.b16 %v2625
        %v2787 = vunpack.c.h.b16 %v2625
        %v2788 = vunpack.c.l.b16 %v2626
        %v2789 = vunpack.c.h.b16 %v2626
        %v2790 = vunpack.c.l.b16 %v2627
        %v2791 = vunpack.c.h.b16 %v2627
        %v2792 = vunpack.c.l.b16 %v2628
        %v2793 = vunpack.c.h.b16 %v2628
        %v2794 = vunpack.c.l.b16 %v2629
        %v2795 = vunpack.c.h.b16 %v2629
        %v2796 = vunpack.c.l.b16 %v2630
        %v2797 = vunpack.c.h.b16 %v2630
        %v2798 = vunpack.c.l.b16 %v2631
        %v2799 = vunpack.c.h.b16 %v2631
        %v2800 = vunpack.c.l.b16 %v2632
        %v2801 = vunpack.c.h.b16 %v2632
        %v2802 = vunpack.c.l.b16 %v2633
        %v2803 = vunpack.c.h.b16 %v2633
        %v2804 = vunpack.c.l.b16 %v2634
        %v2805 = vunpack.c.h.b16 %v2634
        %v2806 = vunpack.c.l.b16 %v2635
        %v2807 = vunpack.c.h.b16 %v2635
        %v2808 = vunpack.c.l.b16 %v2636
        %v2809 = vunpack.c.h.b16 %v2636
        %v2810 = vunpack.c.l.b16 %v2637
        %v2811 = vunpack.c.h.b16 %v2637
        %v2812 = vunpack.c.l.b16 %v2638
        %v2813 = vunpack.c.h.b16 %v2638
        %v2814 = vunpack.c.l.b16 %v2639
        %v2815 = vunpack.c.h.b16 %v2639
        %v2816 = vunpack.c.l.b16 %v2640
        %v2817 = vunpack.c.h.b16 %v2640
        %v2818 = vunpack.c.l.b16 %v2641
        %v2819 = vunpack.c.h.b16 %v2641
        %v2820 = vunpack.c.l.b16 %v2642
        %v2821 = vunpack.c.h.b16 %v2642
        %v2822 = vunpack.c.l.b16 %v2643
        %v2823 = vunpack.c.h.b16 %v2643
        %v2824 = vunpack.c.l.b16 %v2644
        %v2825 = vunpack.c.h.b16 %v2644
        %v2826 = vunpack.c.l.b16 %v2645
        %v2827 = vunpack.c.h.b16 %v2645
        %v2828 = vunpack.c.l.b16 %v2646
        %v2829 = vunpack.c.h.b16 %v2646
        %v2830 = vunpack.c.l.b16 %v2647
        %v2831 = vunpack.c.h.b16 %v2647
        %v2832 = vunpack.c.l.b16 %v2648
        %v2833 = vunpack.c.h.b16 %v2648
        %v2834 = vunpack.c.l.b16 %v2649
        %v2835 = vunpack.c.h.b16 %v2649
        %v2836 = vunpack.c.l.b16 %v2650
        %v2837 = vunpack.c.h.b16 %v2650
        %v2838 = vunpack.c.l.b16 %v2651
        %v2839 = vunpack.c.h.b16 %v2651
        %v2840 = vunpack.c.l.b16 %v2652
        %v2841 = vunpack.c.h.b16 %v2652
        %v2842 = vunpack.c.l.b16 %v2653
        %v2843 = vunpack.c.h.b16 %v2653
        %v2844 = vunpack.c.l.b16 %v2654
        %v2845 = vunpack.c.h.b16 %v2654
        %v2846 = vunpack.c.l.b16 %v2655
        %v2847 = vunpack.c.h.b16 %v2655
        %v2848 = vpack.c.b16 %v2722, %v2720
        %v2849 = vpack.c.b16 %v2723, %v2721
        %v2850 = vpack.c.b16 %v2726, %v2724
        %v2851 = vpack.c.b16 %v2727, %v2725
        %v2852 = vpack.c.b16 %v2730, %v2728
        %v2853 = vpack.c.b16 %v2731, %v2729
        %v2854 = vpack.c.b16 %v2734, %v2732
        %v2855 = vpack.c.b16 %v2735, %v2733
        %v2856 = vpack.c.b16 %v2738, %v2736
        %v2857 = vpack.c.b16 %v2739, %v2737
        %v2858 = vpack.c.b16 %v2742, %v2740
        %v2859 = vpack.c.b16 %v2743, %v2741
        %v2860 = vpack.c.b16 %v2746, %v2744
        %v2861 = vpack.c.b16 %v2747, %v2745
        %v2862 = vpack.c.b16 %v2750, %v2748
        %v2863 = vpack.c.b16 %v2751, %v2749
        %v2864 = vpack.c.b16 %v2754, %v2752
        %v2865 = vpack.c.b16 %v2755, %v2753
        %v2866 = vpack.c.b16 %v2758, %v2756
        %v2867 = vpack.c.b16 %v2759, %v2757
        %v2868 = vpack.c.b16 %v2762, %v2760
        %v2869 = vpack.c.b16 %v2763, %v2761
        %v2870 = vpack.c.b16 %v2766, %v2764
        %v2871 = vpack.c.b16 %v2767, %v2765
        %v2872 = vpack.c.b16 %v2770, %v2768
        %v2873 = vpack.c.b16 %v2771, %v2769
        %v2874 = vpack.c.b16 %v2774, %v2772
        %v2875 = vpack.c.b16 %v2775, %v2773
        %v2876 = vpack.c.b16 %v2778, %v2776
        %v2877 = vpack.c.b16 %v2779, %v2777
        %v2878 = vpack.c.b16 %v2782, %v2780
        %v2879 = vpack.c.b16 %v2783, %v2781
        %v2880 = vpack.c.b16 %v2786, %v2784
        %v2881 = vpack.c.b16 %v2787, %v2785
        %v2882 = vpack.c.b16 %v2790, %v2788
        %v2883 = vpack.c.b16 %v2791, %v2789
        %v2884 = vpack.c.b16 %v2794, %v2792
        %v2885 = vpack.c.b16 %v2795, %v2793
        %v2886 = vpack.c.b16 %v2798, %v2796
        %v2887 = vpack.c.b16 %v2799, %v2797
        %v2888 = vpack.c.b16 %v2802, %v2800
        %v2889 = vpack.c.b16 %v2803, %v2801
        %v2890 = vpack.c.b16 %v2806, %v2804
        %v2891 = vpack.c.b16 %v2807, %v2805
        %v2892 = vpack.c.b16 %v2810, %v2808
        %v2893 = vpack.c.b16 %v2811, %v2809
        %v2894 = vpack.c.b16 %v2814, %v2812
        %v2895 = vpack.c.b16 %v2815, %v2813
        %v2896 = vpack.c.b16 %v2818, %v2816
        %v2897 = vpack.c.b16 %v2819, %v2817
        %v2898 = vpack.c.b16 %v2822, %v2820
        %v2899 = vpack.c.b16 %v2823, %v2821
        %v2900 = vpack.c.b16 %v2826, %v2824
        %v2901 = vpack.c.b16 %v2827, %v2825
        %v2902 = vpack.c.b16 %v2830, %v2828
        %v2903 = vpack.c.b16 %v2831, %v2829
        %v2904 = vpack.c.b16 %v2834, %v2832
        %v2905 = vpack.c.b16 %v2835, %v2833
        %v2906 = vpack.c.b16 %v2838, %v2836
        %v2907 = vpack.c.b16 %v2839, %v2837
        %v2908 = vpack.c.b16 %v2842, %v2840
        %v2909 = vpack.c.b16 %v2843, %v2841
        %v2910 = vpack.c.b16 %v2846, %v2844
        %v2911 = vpack.c.b16 %v2847, %v2845
        %2976 = vmatpush.bf16.msra.mxu0 %v2862
        %2977 = vmatpush.bf16.msra.mxu0 %v2860
        %2978 = vmatpush.bf16.msra.mxu0 %v2858
        %2979 = vmatpush.bf16.msra.mxu0 %v2856
        %2980 = vmatpush.bf16.msra.mxu0 %v2854
        %2981 = vmatpush.bf16.msra.mxu0 %v2852
        %2982 = vmatpush.bf16.msra.mxu0 %v2850
        %2983 = vmatpush.bf16.msra.mxu0 %v2848
        %2984 = vmatmul.bf16.gmra.mxu0 %v2588
        %v2985 = vpop.f32.mrf.mxu0
        %v2986 = vadd.f32 %v1470, %v2985
        %v2987 = vpop.f32.mrf.mxu0
        %2988 = vdwg.mxu0
        %2989 = vmatpush.bf16.msra.mxu0 %v2878
        %2990 = vmatpush.bf16.msra.mxu0 %v2876
        %2991 = vmatpush.bf16.msra.mxu0 %v2874
        %2992 = vmatpush.bf16.msra.mxu0 %v2872
        %2993 = vmatpush.bf16.msra.mxu0 %v2870
        %2994 = vmatpush.bf16.msra.mxu0 %v2868
        %2995 = vmatpush.bf16.msra.mxu0 %v2866
        %2996 = vmatpush.bf16.msra.mxu0 %v2864
        %2997 = vmatmul.bf16.gmra.mxu0 %v2589
        %v2998 = vpop.f32.mrf.mxu0
        %v2999 = vadd.f32 %v2986, %v2998
        %v3000 = vpop.f32.mrf.mxu0
        %3001 = vdwg.mxu0
        %3002 = vmatpush.bf16.msra.mxu0 %v2894
        %3003 = vmatpush.bf16.msra.mxu0 %v2892
        %3004 = vmatpush.bf16.msra.mxu0 %v2890
        %3005 = vmatpush.bf16.msra.mxu0 %v2888
        %3006 = vmatpush.bf16.msra.mxu0 %v2886
        %3007 = vmatpush.bf16.msra.mxu0 %v2884
        %3008 = vmatpush.bf16.msra.mxu0 %v2882
        %3009 = vmatpush.bf16.msra.mxu0 %v2880
        %3010 = vmatmul.bf16.gmra.mxu0 %v2590
        %v3011 = vpop.f32.mrf.mxu0
        %v3012 = vadd.f32 %v2999, %v3011
        %v3013 = vpop.f32.mrf.mxu0
        %3014 = vdwg.mxu0
        %3015 = vmatpush.bf16.msra.mxu0 %v2910
        %3016 = vmatpush.bf16.msra.mxu0 %v2908
        %3017 = vmatpush.bf16.msra.mxu0 %v2906
        %3018 = vmatpush.bf16.msra.mxu0 %v2904
        %3019 = vmatpush.bf16.msra.mxu0 %v2902
        %3020 = vmatpush.bf16.msra.mxu0 %v2900
        %3021 = vmatpush.bf16.msra.mxu0 %v2898
        %3022 = vmatpush.bf16.msra.mxu0 %v2896
        %3023 = vmatmul.bf16.gmra.mxu0 %v2591
        %v3024 = vpop.f32.mrf.mxu0
        %v3025 = vadd.f32 %v3012, %v3024
        %v3026 = vpop.f32.mrf.mxu0
        %3027 = vdwg.mxu0
        %3028 = vmatpush.bf16.msra.mxu0 %v2863
        %3029 = vmatpush.bf16.msra.mxu0 %v2861
        %3030 = vmatpush.bf16.msra.mxu0 %v2859
        %3031 = vmatpush.bf16.msra.mxu0 %v2857
        %3032 = vmatpush.bf16.msra.mxu0 %v2855
        %3033 = vmatpush.bf16.msra.mxu0 %v2853
        %3034 = vmatpush.bf16.msra.mxu0 %v2851
        %3035 = vmatpush.bf16.msra.mxu0 %v2849
        %3036 = vmatmul.bf16.gmra.mxu0 %v2588
        %v3037 = vpop.f32.mrf.mxu0
        %v3038 = vadd.f32 %v1496, %v3037
        %v3039 = vpop.f32.mrf.mxu0
        %3040 = vdwg.mxu0
        %3041 = vmatpush.bf16.msra.mxu0 %v2879
        %3042 = vmatpush.bf16.msra.mxu0 %v2877
        %3043 = vmatpush.bf16.msra.mxu0 %v2875
        %3044 = vmatpush.bf16.msra.mxu0 %v2873
        %3045 = vmatpush.bf16.msra.mxu0 %v2871
        %3046 = vmatpush.bf16.msra.mxu0 %v2869
        %3047 = vmatpush.bf16.msra.mxu0 %v2867
        %3048 = vmatpush.bf16.msra.mxu0 %v2865
        %3049 = vmatmul.bf16.gmra.mxu0 %v2589
        %v3050 = vpop.f32.mrf.mxu0
        %v3051 = vadd.f32 %v3038, %v3050
        %v3052 = vpop.f32.mrf.mxu0
        %3053 = vdwg.mxu0
        %3054 = vmatpush.bf16.msra.mxu0 %v2895
        %3055 = vmatpush.bf16.msra.mxu0 %v2893
        %3056 = vmatpush.bf16.msra.mxu0 %v2891
        %3057 = vmatpush.bf16.msra.mxu0 %v2889
        %3058 = vmatpush.bf16.msra.mxu0 %v2887
        %3059 = vmatpush.bf16.msra.mxu0 %v2885
        %3060 = vmatpush.bf16.msra.mxu0 %v2883
        %3061 = vmatpush.bf16.msra.mxu0 %v2881
        %3062 = vmatmul.bf16.gmra.mxu0 %v2590
        %v3063 = vpop.f32.mrf.mxu0
        %v3064 = vadd.f32 %v3051, %v3063
        %v3065 = vpop.f32.mrf.mxu0
        %3066 = vdwg.mxu0
        %3067 = vmatpush.bf16.msra.mxu0 %v2911
        %3068 = vmatpush.bf16.msra.mxu0 %v2909
        %3069 = vmatpush.bf16.msra.mxu0 %v2907
        %3070 = vmatpush.bf16.msra.mxu0 %v2905
        %3071 = vmatpush.bf16.msra.mxu0 %v2903
        %3072 = vmatpush.bf16.msra.mxu0 %v2901
        %3073 = vmatpush.bf16.msra.mxu0 %v2899
        %3074 = vmatpush.bf16.msra.mxu0 %v2897
        %3075 = vmatmul.bf16.gmra.mxu0 %v2591
        %v3076 = vpop.f32.mrf.mxu0
        %v3077 = vadd.f32 %v3064, %v3076
        %v3078 = vpop.f32.mrf.mxu0
        %3079 = vdwg.mxu0
        %v3080 = vpack.c.bf16 %v3077, %v3025
        %3081 = vst [vmem:[%s463] sm:$0xff] %v3080
        %p3082 = scmp.lt.s32.totalorder %s25, 1
        %s3083 = scalar_select %p3082, %s25, 1
        %s3084 = smul.addr %s3083, 2
        %s3085 = smul.addr %s3084, 4
        %s3086 = scalar_lea.vmem %s12, %s3085
        // Predicated region
        $region81: #{_lambda_.3} parent=67 // pred_check
          %p3087 = pneg %p300
        $region82: #{_lambda_.3} parent=67 // pred_check_branch
          %3089 = sbr.rel (%p3087) target = $region84
        $region83: #{_lambda_.3} parent=67 // pred_region
          _
        $region84: #{_lambda_.3} parent=67 // pred_fallthru
          _
      $region68: #{_lambda_.3} parent=5 // pred_fallthru
        _
      %p3090 = scmp.le.s32.totalorder 2, %s20
      // Predicated region
      $region85: #{_lambda_.3} parent=5 // pred_check
        %p3091 = pneg %p3090
      $region86: #{_lambda_.3} parent=5 // pred_check_branch
        %3093 = sbr.rel (%p3091) target = $region88
      $region87: #{_lambda_.3} parent=5 // pred_region
        %s3094 = ssub.s32 %s20, 2
        // Predicated region
        $region89: #{_lambda_.3} parent=87 // pred_check
          %p3095 = pneg %p306
        $region90: #{_lambda_.3} parent=87 // pred_check_branch
          %3097 = sbr.rel (%p3095) target = $region92
        $region91: #{_lambda_.3} parent=87 // pred_region
          %p3098 = scmp.lt.s32.totalorder %s26, 1
          %s3099 = scalar_select %p3098, %s26, 1
          %s3100 = smul.addr %s3099, 2
          %s3101 = smul.addr %s3100, 4
          %s3102 = scalar_lea.vmem %s12, %s3101
        $region92: #{_lambda_.3} parent=87 // pred_fallthru
          _
      $region88: #{_lambda_.3} parent=5 // pred_fallthru
        _
    $region6: #{_lambda_.3} parent=1 // loop_footer
      %s24 = sadd.s32 1, %s20
    $region7: #{_lambda_.3} parent=1 // loop_footer_branch
      %19 = sbr.rel target = $region3
    $region8: #{_lambda_.3} parent=1 // loop_exit
      _
    %3103 = vsyncpa [#allocation3], 1
    %s3104 = scalar_lea.sflag [#allocation3], 1
    %3105 = vsyncpa %s3104, 1
    %3106 = vsyncpa [#allocation5], 1

</llo_original>
